<compile_context>
chip_gen: v5e
topology: v5e:2x2
jax: 0.10.0
libtpu: 0.0.40
codegen_flags: <defaults>
</compile_context>

<pallas_src>
import functools

import jax
import jax.numpy as jnp
from jax.experimental import pallas as pl
from jax.experimental.pallas import tpu as pltpu


def _round_up(a, b):
    return ((a + b - 1) // b) * b


def _pick_tile(dim, target, multiple):
    """Largest divisor of `dim` that is <= target and a multiple of `multiple`."""
    for cand in range(min(target, dim), multiple - 1, -1):
        if cand % multiple == 0 and dim % cand == 0:
            return cand
    return None


# ----------------------------- Pallas kernels -------------------------------

def _batched_matmul_kernel(x_ref, w_ref, bias_ref, o_ref, *, relu):
    """Branch-batched, K-tiled matmul accumulating into the resident f32
    output block, with fused bias (folded BN) + ReLU epilogue.  BN scale is
    pre-folded into the weight columns at init."""
    k = pl.program_id(3)

    @pl.when(k == 0)
    def _():
        o_ref[...] = jnp.zeros_like(o_ref)

    o_ref[...] += jnp.dot(x_ref[...], w_ref[...],
                          preferred_element_type=jnp.float32)

    @pl.when(k == pl.num_programs(3) - 1)
    def _():
        y = o_ref[...] + bias_ref[...]
        if relu:
            y = jnp.maximum(y, 0.0)
        o_ref[...] = y


def batched_fused_matmul(x, w, bias, *, relu=True,
                         tm_max=256, tn_max=512, tk_max=4608):
    """out[b] = [relu](x[b] @ w[b] + bias[b]) for every branch b, f32 output.

    x: (B, M, K) any float dtype (cast to bf16), w: (B, K, N) (cast to bf16),
    bias: (B, N) f32.  N must be a multiple of 128 (pad weights at init)."""
    B, M, K = x.shape
    Bw, Kw, N = w.shape
    assert B == Bw and K == Kw, (x.shape, w.shape)
    assert N % 128 == 0, N

    x = x.astype(jnp.bfloat16)
    w = w.astype(jnp.bfloat16)

    # M tiling (pad rows only; padded rows are sliced off afterwards).
    if M <= tm_max:
        m_pad = _round_up(M, 8)
        tm = m_pad
    else:
        m_pad = _round_up(M, tm_max)
        tm = tm_max
    if m_pad != M:
        x = jnp.pad(x, ((0, 0), (0, m_pad - M), (0, 0)))

    # N tile: a multiple-of-128 divisor of N.
    tn = _pick_tile(N, tn_max, 128)

    # K tile: a divisor of K so no per-call weight padding is ever needed.
    if K <= tk_max:
        tk = K
    else:
        tk = _pick_tile(K, tk_max, 128) or _pick_tile(K, tk_max, 8) or K

    bias3 = bias.reshape(B, 1, N).astype(jnp.float32)

    kernel = functools.partial(_batched_matmul_kernel, relu=relu)
    out = pl.pallas_call(
        kernel,
        out_shape=jax.ShapeDtypeStruct((B, m_pad, N), jnp.float32),
        grid_spec=pltpu.PrefetchScalarGridSpec(
            num_scalar_prefetch=0,
            grid=(B, m_pad // tm, N // tn, K // tk),
            in_specs=[
                pl.BlockSpec((None, tm, tk), lambda b, i, j, k: (b, i, k)),
                pl.BlockSpec((None, tk, tn), lambda b, i, j, k: (b, k, j)),
                pl.BlockSpec((None, 1, tn), lambda b, i, j, k: (b, 0, j)),
            ],
            out_specs=pl.BlockSpec((None, tm, tn), lambda b, i, j, k: (b, i, j)),
        ),
        compiler_params=pltpu.CompilerParams(
            dimension_semantics=("parallel", "parallel", "parallel",
                                 "arbitrary")),
        cost_estimate=pl.CostEstimate(
            flops=2 * B * m_pad * K * N,
            transcendentals=0,
            bytes_accessed=B * (m_pad * K * 2 + K * N * 2 + m_pad * N * 4
                                + N * 4)),
    )(x, w, bias3)

    if m_pad != M:
        out = out[:, :M]
    return out


def _batched_matmul_pool_kernel(x_ref, w_ref, bias_ref, o_ref, *, n_batch,
                                relu):
    """Single-K-step matmul + bias + ReLU with fused global average pool over
    the spatial rows: x rows are ordered (batch, spatial); only the pooled
    (batch, tn) block is written back."""
    y = jnp.dot(x_ref[...], w_ref[...], preferred_element_type=jnp.float32)
    y = y + bias_ref[...]
    if relu:
        y = jnp.maximum(y, 0.0)
    m, tn = y.shape
    spatial = m // n_batch
    o_ref[...] = jnp.mean(y.reshape(n_batch, spatial, tn), axis=1)


def batched_fused_matmul_pool(x, w, bias, n_batch, *, relu=True, tn_max=512):
    """out[b, n, :] = mean_spatial([relu](x[b] @ w[b] + bias[b]))  (f32).

    x: (B, n_batch*spatial, K) with K small enough to keep untiled in VMEM,
    w: (B, K, N), bias: (B, N).  Output: (B, n_batch, N)."""
    B, M, K = x.shape
    Bw, Kw, N = w.shape
    assert B == Bw and K == Kw, (x.shape, w.shape)
    assert M % n_batch == 0, (M, n_batch)
    assert N % 128 == 0, N

    x = x.astype(jnp.bfloat16)
    w = w.astype(jnp.bfloat16)
    tn = _pick_tile(N, tn_max, 128)
    bias3 = bias.reshape(B, 1, N).astype(jnp.float32)

    kernel = functools.partial(_batched_matmul_pool_kernel,
                               n_batch=n_batch, relu=relu)
    return pl.pallas_call(
        kernel,
        out_shape=jax.ShapeDtypeStruct((B, n_batch, N), jnp.float32),
        grid_spec=pltpu.PrefetchScalarGridSpec(
            num_scalar_prefetch=0,
            grid=(B, N // tn),
            in_specs=[
                pl.BlockSpec((None, M, K), lambda b, j: (b, 0, 0)),
                pl.BlockSpec((None, K, tn), lambda b, j: (b, 0, j)),
                pl.BlockSpec((None, 1, tn), lambda b, j: (b, 0, j)),
            ],
            out_specs=pl.BlockSpec((None, n_batch, tn), lambda b, j: (b, 0, j)),
        ),
        compiler_params=pltpu.CompilerParams(
            dimension_semantics=("parallel", "parallel")),
        cost_estimate=pl.CostEstimate(
            flops=2 * B * M * K * N,
            transcendentals=0,
            bytes_accessed=B * (M * K * 2 + K * N * 2 + n_batch * N * 4
                                + N * 4)),
    )(x, w, bias3)


# ----------------------------- glue: im2col --------------------------------

def im2col_3x3x3_s2(x):
    """x: (N, D, H, W, C) -> patches (N, Do, Ho, Wo, 27*C) for k=3, s=2, p=1.

    Patch channel ordering is (kd, kh, kw, Cin)."""
    # TODO(synk): 27-tap gather done in XLA (negligible at these spatial sizes).
    n, d, h, w, c = x.shape
    do, ho, wo = (d - 1) // 2 + 1, (h - 1) // 2 + 1, (w - 1) // 2 + 1
    xp = jnp.pad(x, ((0, 0), (1, 1), (1, 1), (1, 1), (0, 0)))
    patches = []
    for kd in range(3):
        for kh in range(3):
            for kw in range(3):
                patches.append(
                    xp[:, kd:kd + 2 * do - 1:2,
                          kh:kh + 2 * ho - 1:2,
                          kw:kw + 2 * wo - 1:2, :])
    p = jnp.stack(patches, axis=-2)  # (N, Do, Ho, Wo, 27, C)
    return p.reshape(n, do, ho, wo, 27 * c), (do, ho, wo)


# ----------------------------- parameters ----------------------------------

def fold_bn(conv_bias, gamma, beta, mean, var, eps=1e-5):
    s = gamma / jnp.sqrt(var + eps)
    b = (conv_bias - mean) * s + beta
    return s, b


def make_branch_params(key, c_in, c_in_max, c_out):
    """branchBottleNeck(c_in, c_out, kernel_size=3, stride=2) parameters.

    BN scale is folded into the weight columns (bias kept separately).
    Input channels are zero-padded to c_in_max (for branch batching); output
    channels are padded to multiples of 128 (mid->512, c_out->1024) with zero
    weights/bias so padded channels stay exactly zero through ReLU/pool."""
    mid = c_out // 2
    mid_pad = _round_up(mid, 128)
    c_out_pad = _round_up(c_out, 128)
    ks = jax.random.split(key, 9)

    def conv_w(k, kin, kout):
        return jax.random.normal(k, (kin, kout), jnp.float32) / jnp.sqrt(float(kin))

    def conv_b(k, kout):
        return 0.01 * jax.random.normal(k, (kout,), jnp.float32)

    def bn_params(k, c):
        k1, k2 = jax.random.split(k)
        gamma = 1.0 + 0.1 * jax.random.normal(k1, (c,), jnp.float32)
        beta = 0.05 * jax.random.normal(k2, (c,), jnp.float32)
        return gamma, beta, jnp.zeros((c,), jnp.float32), jnp.ones((c,), jnp.float32)

    # Conv3d(c_in, mid, 1) + BN + ReLU (scale folded into weights).
    w1_raw = conv_w(ks[0], c_in, mid)
    s1, b1 = fold_bn(conv_b(ks[1], mid), *bn_params(ks[2], mid))
    w1 = jnp.zeros((c_in_max, mid_pad), jnp.float32)
    w1 = w1.at[:c_in, :mid].set(w1_raw * s1[None, :])
    b1p = jnp.zeros((mid_pad,), jnp.float32).at[:mid].set(b1)

    # Conv3d(mid, mid, 3, stride=2, pad=1) + BN + ReLU: (27*mid_pad, mid_pad).
    w2_raw = conv_w(ks[3], 27 * mid, mid).reshape(27, mid, mid)
    s2, b2 = fold_bn(conv_b(ks[4], mid), *bn_params(ks[5], mid))
    w2 = jnp.zeros((27, mid_pad, mid_pad), jnp.float32)
    w2 = w2.at[:, :mid, :mid].set(w2_raw * s2[None, None, :])
    w2 = w2.reshape(27 * mid_pad, mid_pad)
    b2p = jnp.zeros((mid_pad,), jnp.float32).at[:mid].set(b2)

    # Conv3d(mid, c_out, 1) + BN + ReLU.
    w3_raw = conv_w(ks[6], mid, c_out)
    s3, b3 = fold_bn(conv_b(ks[7], c_out), *bn_params(ks[8], c_out))
    w3 = jnp.zeros((mid_pad, c_out_pad), jnp.float32)
    w3 = w3.at[:mid, :c_out].set(w3_raw * s3[None, :])
    b3p = jnp.zeros((c_out_pad,), jnp.float32).at[:c_out].set(b3)

    return dict(w1=w1.astype(jnp.bfloat16), b1=b1p,
                w2=w2.astype(jnp.bfloat16), b2=b2p,
                w3=w3.astype(jnp.bfloat16), b3=b3p)


def make_params(key, in_features, out_dim, c_out=1000):
    keys = jax.random.split(key, 5)
    c_in_max = in_features
    per_branch = [make_branch_params(keys[i], in_features // div, c_in_max, c_out)
                  for i, div in enumerate([8, 4, 2, 1])]
    params = {name: jnp.stack([p[name] for p in per_branch])
              for name in ("w1", "b1", "w2", "b2", "w3", "b3")}
    klw, klb = jax.random.split(keys[4])
    params["lin_w"] = (jax.random.normal(klw, (c_out, out_dim), jnp.float32)
                       / jnp.sqrt(float(c_out)))
    params["lin_b"] = 0.01 * jax.random.normal(klb, (out_dim,), jnp.float32)
    return params


# ----------------------------- forward pass --------------------------------

def aggregation_feature_forward(b1, b2, b3, b4, params):
    inputs = [b1, b2, b3, b4]
    n, d, h, w, _ = b1.shape
    c_in_max = params["w1"].shape[1]

    # Stage 1: all four 1x1x1 convs as ONE branch-batched matmul
    # (Cin zero-padded to the max so shapes match across branches).
    xs = []
    for x in inputs:
        c = x.shape[-1]
        xf = x.reshape(n * d * h * w, c)
        if c < c_in_max:
            xf = jnp.pad(xf, ((0, 0), (0, c_in_max - c)))
        xs.append(xf)
    x_stack = jnp.stack(xs, axis=0)                       # (4, M1, c_in_max)
    y = batched_fused_matmul(x_stack, params["w1"], params["b1"], relu=True)
    mid_pad = y.shape[-1]

    # Stage 2: 3x3x3 stride-2 pad-1 conv via bf16 im2col + batched matmul.
    y = y.astype(jnp.bfloat16).reshape(4 * n, d, h, w, mid_pad)
    patches, (do, ho, wo) = im2col_3x3x3_s2(y)
    patches = patches.reshape(4, n * do * ho * wo, 27 * mid_pad)
    y = batched_fused_matmul(patches, params["w2"], params["b2"], relu=True)

    # Stage 3: 1x1x1 conv + BN + ReLU + AdaptiveAvgPool3d((1,1,1)), fused.
    pooled = batched_fused_matmul_pool(y, params["w3"], params["b3"],
                                       n_batch=n, relu=True)   # (4, n, 1024)

    # (x1 + x2 + x3 + x4) / 4, drop padded (zero) channels, final linear.
    x = jnp.mean(pooled, axis=0)
    c_out = params["lin_w"].shape[0]
    x = x[:, :c_out]
    # Tiny (batch, 1000) @ (1000, out_dim): plain XLA dot beats a Pallas launch.
    return jnp.dot(x, params["lin_w"]) + params["lin_b"]


# ----------------------------- main -----------------------------------------

if __name__ == "__main__":
    key = jax.random.PRNGKey(0)
    in_features = 32
    out_dim = 10
    batch, D, H, W = 2, 4, 4, 4

    k_in, k_par = jax.random.split(key)
    kb = jax.random.split(k_in, 4)
    # inputs in NDHWC (PyTorch equivalents would be NCDHW)
    b1 = jax.random.normal(kb[0], (batch, D, H, W, in_features // 8), jnp.float32)
    b2 = jax.random.normal(kb[1], (batch, D, H, W, in_features // 4), jnp.float32)
    b3 = jax.random.normal(kb[2], (batch, D, H, W, in_features // 2), jnp.float32)
    b4 = jax.random.normal(kb[3], (batch, D, H, W, in_features // 1), jnp.float32)

    params = make_params(k_par, in_features, out_dim)

    fwd = jax.jit(aggregation_feature_forward)
    y = fwd(b1, b2, b3, b4, params)
    jax.block_until_ready(y)
    assert y.shape == (batch, out_dim), y.shape
    assert jnp.all(jnp.isfinite(y))
    print("KERNEL_OK")
</pallas_src>

<mosaic_0001>
module attributes {stable_mosaic.version = 11 : i64} {
  func.func @_batched_matmul_kernel(%arg0: i32, %arg1: i32, %arg2: i32, %arg3: i32, %arg4: memref<1x128x32xbf16, #tpu.memory_space<vmem>>, %arg5: memref<1x32x512xbf16, #tpu.memory_space<vmem>>, %arg6: memref<1x1x512xf32, #tpu.memory_space<vmem>>, %arg7: memref<1x128x512xf32, #tpu.memory_space<vmem>>) attributes {dimension_semantics = [#tpu.dimension_semantics<parallel>, #tpu.dimension_semantics<parallel>, #tpu.dimension_semantics<parallel>, #tpu.dimension_semantics<arbitrary>], iteration_bounds = array<i64: 4, 1, 1, 1>, scalar_prefetch = 0 : i64, scratch_operands = 0 : i64, tpu.core_type = #tpu.core_type<tc>, window_params = [{transform_indices = @transform_0, window_bounds = array<i64: 1, 128, 32>}, {transform_indices = @transform_1, window_bounds = array<i64: 1, 32, 512>}, {transform_indices = @transform_2, window_bounds = array<i64: 1, 1, 512>}, {transform_indices = @transform_3, window_bounds = array<i64: 1, 128, 512>}]} {
    %c0_i32 = arith.constant 0 : i32
    %0 = arith.cmpi eq, %arg3, %c0_i32 : i32
    %1 = arith.extui %0 : i1 to i32
    %c0_i32_0 = arith.constant 0 : i32
    %2 = arith.cmpi ne, %1, %c0_i32_0 : i32
    scf.if %2 {
      %cst_14 = arith.constant 0.000000e+00 : f32
      %17 = vector.broadcast %cst_14 : f32 to vector<128x512xf32>
      %c0_15 = arith.constant 0 : index
      %c0_16 = arith.constant 0 : index
      %c0_17 = arith.constant 0 : index
      %18 = vector.load %arg7[%c0_15, %c0_16, %c0_17] : memref<1x128x512xf32, #tpu.memory_space<vmem>>, vector<1x128x512xf32>
      %19 = vector.shape_cast %18 : vector<1x128x512xf32> to vector<128x512xf32>
      %20 = vector.shape_cast %17 : vector<128x512xf32> to vector<1x128x512xf32>
      tpu.vector_store %arg7[%c0_15, %c0_16, %c0_17], %20 {strides = array<i32>} : memref<1x128x512xf32, #tpu.memory_space<vmem>>, vector<1x128x512xf32>,
    } else {
    }
    %c0 = arith.constant 0 : index
    %c0_1 = arith.constant 0 : index
    %c0_2 = arith.constant 0 : index
    %3 = vector.load %arg7[%c0, %c0_1, %c0_2] : memref<1x128x512xf32, #tpu.memory_space<vmem>>, vector<1x128x512xf32>
    %4 = vector.shape_cast %3 : vector<1x128x512xf32> to vector<128x512xf32>
    %c0_3 = arith.constant 0 : index
    %c0_4 = arith.constant 0 : index
    %c0_5 = arith.constant 0 : index
    %5 = vector.load %arg4[%c0_3, %c0_4, %c0_5] : memref<1x128x32xbf16, #tpu.memory_space<vmem>>, vector<1x128x32xbf16>
    %6 = vector.shape_cast %5 : vector<1x128x32xbf16> to vector<128x32xbf16>
    %c0_6 = arith.constant 0 : index
    %c0_7 = arith.constant 0 : index
    %c0_8 = arith.constant 0 : index
    %7 = vector.load %arg5[%c0_6, %c0_7, %c0_8] : memref<1x32x512xbf16, #tpu.memory_space<vmem>>, vector<1x32x512xbf16>
    %8 = vector.shape_cast %7 : vector<1x32x512xbf16> to vector<32x512xbf16>
    %cst = arith.constant dense<0.000000e+00> : vector<128x512xf32>
    %9 = tpu.matmul %6, %8, %cst {dimension_numbers = #tpu.dot_dimension_numbers<[1], [0], [0], [1], [0, 0, 1, 1], [], []>} : vector<128x32xbf16>, vector<32x512xbf16>, vector<128x512xf32> -> vector<128x512xf32>
    %10 = arith.addf %4, %9 : vector<128x512xf32>
    %c0_9 = arith.constant 0 : index
    %c0_10 = arith.constant 0 : index
    %c0_11 = arith.constant 0 : index
    %11 = vector.load %arg7[%c0_9, %c0_10, %c0_11] : memref<1x128x512xf32, #tpu.memory_space<vmem>>, vector<1x128x512xf32>
    %12 = vector.shape_cast %11 : vector<1x128x512xf32> to vector<128x512xf32>
    %13 = vector.shape_cast %10 : vector<128x512xf32> to vector<1x128x512xf32>
    tpu.vector_store %arg7[%c0_9, %c0_10, %c0_11], %13 {strides = array<i32>} : memref<1x128x512xf32, #tpu.memory_space<vmem>>, vector<1x128x512xf32>,
    %c0_i32_12 = arith.constant 0 : i32
    %14 = arith.cmpi eq, %arg3, %c0_i32_12 : i32
    %15 = arith.extui %14 : i1 to i32
    %c0_i32_13 = arith.constant 0 : i32
    %16 = arith.cmpi ne, %15, %c0_i32_13 : i32
    scf.if %16 {
      %c0_14 = arith.constant 0 : index
      %c0_15 = arith.constant 0 : index
      %c0_16 = arith.constant 0 : index
      %17 = vector.load %arg7[%c0_14, %c0_15, %c0_16] : memref<1x128x512xf32, #tpu.memory_space<vmem>>, vector<1x128x512xf32>
      %18 = vector.shape_cast %17 : vector<1x128x512xf32> to vector<128x512xf32>
      %c0_17 = arith.constant 0 : index
      %c0_18 = arith.constant 0 : index
      %c0_19 = arith.constant 0 : index
      %19 = vector.load %arg6[%c0_17, %c0_18, %c0_19] : memref<1x1x512xf32, #tpu.memory_space<vmem>>, vector<1x1x512xf32>
      %20 = vector.shape_cast %19 : vector<1x1x512xf32> to vector<1x512xf32>
      %21 = vector.broadcast %20 : vector<1x512xf32> to vector<128x512xf32>
      %22 = arith.addf %18, %21 : vector<128x512xf32>
      %cst_20 = arith.constant 0.000000e+00 : f32
      %23 = vector.broadcast %cst_20 : f32 to vector<128x512xf32>
      %24 = arith.maximumf %22, %23 : vector<128x512xf32>
      %c0_21 = arith.constant 0 : index
      %c0_22 = arith.constant 0 : index
      %c0_23 = arith.constant 0 : index
      %25 = vector.load %arg7[%c0_21, %c0_22, %c0_23] : memref<1x128x512xf32, #tpu.memory_space<vmem>>, vector<1x128x512xf32>
      %26 = vector.shape_cast %25 : vector<1x128x512xf32> to vector<128x512xf32>
      %27 = vector.shape_cast %24 : vector<128x512xf32> to vector<1x128x512xf32>
      tpu.vector_store %arg7[%c0_21, %c0_22, %c0_23], %27 {strides = array<i32>} : memref<1x128x512xf32, #tpu.memory_space<vmem>>, vector<1x128x512xf32>,
    } else {
    }
    return
  }
  func.func @transform_0(%arg0: i32, %arg1: i32, %arg2: i32, %arg3: i32) -> (i32, i32, i32) {
    %c0_i32 = arith.constant 0 : i32
    return %arg0, %arg1, %arg3 : i32, i32, i32
  }
  func.func @transform_1(%arg0: i32, %arg1: i32, %arg2: i32, %arg3: i32) -> (i32, i32, i32) {
    %c0_i32 = arith.constant 0 : i32
    return %arg0, %arg3, %arg2 : i32, i32, i32
  }
  func.func @transform_2(%arg0: i32, %arg1: i32, %arg2: i32, %arg3: i32) -> (i32, i32, i32) {
    %c0_i32 = arith.constant 0 : i32
    %c0_i32_0 = arith.constant 0 : i32
    return %arg0, %c0_i32, %arg2 : i32, i32, i32
  }
  func.func @transform_3(%arg0: i32, %arg1: i32, %arg2: i32, %arg3: i32) -> (i32, i32, i32) {
    %c0_i32 = arith.constant 0 : i32
    return %arg0, %arg1, %arg2 : i32, i32, i32
  }
}

module attributes {stable_mosaic.version = 11 : i64} {
  func.func @_batched_matmul_kernel(%arg0: i32, %arg1: i32, %arg2: i32, %arg3: i32, %arg4: memref<1x16x4608xbf16, #tpu.memory_space<vmem>>, %arg5: memref<1x4608x512xbf16, #tpu.memory_space<vmem>>, %arg6: memref<1x1x512xf32, #tpu.memory_space<vmem>>, %arg7: memref<1x16x512xf32, #tpu.memory_space<vmem>>) attributes {dimension_semantics = [#tpu.dimension_semantics<parallel>, #tpu.dimension_semantics<parallel>, #tpu.dimension_semantics<parallel>, #tpu.dimension_semantics<arbitrary>], iteration_bounds = array<i64: 4, 1, 1, 3>, scalar_prefetch = 0 : i64, scratch_operands = 0 : i64, tpu.core_type = #tpu.core_type<tc>, window_params = [{transform_indices = @transform_0, window_bounds = array<i64: 1, 16, 4608>}, {transform_indices = @transform_1, window_bounds = array<i64: 1, 4608, 512>}, {transform_indices = @transform_2, window_bounds = array<i64: 1, 1, 512>}, {transform_indices = @transform_3, window_bounds = array<i64: 1, 16, 512>}]} {
    %c0_i32 = arith.constant 0 : i32
    %0 = arith.cmpi eq, %arg3, %c0_i32 : i32
    %1 = arith.extui %0 : i1 to i32
    %c0_i32_0 = arith.constant 0 : i32
    %2 = arith.cmpi ne, %1, %c0_i32_0 : i32
    scf.if %2 {
      %cst_13 = arith.constant 0.000000e+00 : f32
      %17 = vector.broadcast %cst_13 : f32 to vector<16x512xf32>
      %c0_14 = arith.constant 0 : index
      %c0_15 = arith.constant 0 : index
      %c0_16 = arith.constant 0 : index
      %18 = vector.load %arg7[%c0_14, %c0_15, %c0_16] : memref<1x16x512xf32, #tpu.memory_space<vmem>>, vector<1x16x512xf32>
      %19 = vector.shape_cast %18 : vector<1x16x512xf32> to vector<16x512xf32>
      %20 = vector.shape_cast %17 : vector<16x512xf32> to vector<1x16x512xf32>
      tpu.vector_store %arg7[%c0_14, %c0_15, %c0_16], %20 {strides = array<i32>} : memref<1x16x512xf32, #tpu.memory_space<vmem>>, vector<1x16x512xf32>,
    } else {
    }
    %c0 = arith.constant 0 : index
    %c0_1 = arith.constant 0 : index
    %c0_2 = arith.constant 0 : index
    %3 = vector.load %arg7[%c0, %c0_1, %c0_2] : memref<1x16x512xf32, #tpu.memory_space<vmem>>, vector<1x16x512xf32>
    %4 = vector.shape_cast %3 : vector<1x16x512xf32> to vector<16x512xf32>
    %c0_3 = arith.constant 0 : index
    %c0_4 = arith.constant 0 : index
    %c0_5 = arith.constant 0 : index
    %5 = vector.load %arg4[%c0_3, %c0_4, %c0_5] : memref<1x16x4608xbf16, #tpu.memory_space<vmem>>, vector<1x16x4608xbf16>
    %6 = vector.shape_cast %5 : vector<1x16x4608xbf16> to vector<16x4608xbf16>
    %c0_6 = arith.constant 0 : index
    %c0_7 = arith.constant 0 : index
    %c0_8 = arith.constant 0 : index
    %7 = vector.load %arg5[%c0_6, %c0_7, %c0_8] : memref<1x4608x512xbf16, #tpu.memory_space<vmem>>, vector<1x4608x512xbf16>
    %8 = vector.shape_cast %7 : vector<1x4608x512xbf16> to vector<4608x512xbf16>
    %cst = arith.constant dense<0.000000e+00> : vector<16x512xf32>
    %9 = tpu.matmul %6, %8, %cst {dimension_numbers = #tpu.dot_dimension_numbers<[1], [0], [0], [1], [0, 0, 1, 1], [], []>} : vector<16x4608xbf16>, vector<4608x512xbf16>, vector<16x512xf32> -> vector<16x512xf32>
    %10 = arith.addf %4, %9 : vector<16x512xf32>
    %c0_9 = arith.constant 0 : index
    %c0_10 = arith.constant 0 : index
    %c0_11 = arith.constant 0 : index
    %11 = vector.load %arg7[%c0_9, %c0_10, %c0_11] : memref<1x16x512xf32, #tpu.memory_space<vmem>>, vector<1x16x512xf32>
    %12 = vector.shape_cast %11 : vector<1x16x512xf32> to vector<16x512xf32>
    %13 = vector.shape_cast %10 : vector<16x512xf32> to vector<1x16x512xf32>
    tpu.vector_store %arg7[%c0_9, %c0_10, %c0_11], %13 {strides = array<i32>} : memref<1x16x512xf32, #tpu.memory_space<vmem>>, vector<1x16x512xf32>,
    %c2_i32 = arith.constant 2 : i32
    %14 = arith.cmpi eq, %arg3, %c2_i32 : i32
    %15 = arith.extui %14 : i1 to i32
    %c0_i32_12 = arith.constant 0 : i32
    %16 = arith.cmpi ne, %15, %c0_i32_12 : i32
    scf.if %16 {
      %c0_13 = arith.constant 0 : index
      %c0_14 = arith.constant 0 : index
      %c0_15 = arith.constant 0 : index
      %17 = vector.load %arg7[%c0_13, %c0_14, %c0_15] : memref<1x16x512xf32, #tpu.memory_space<vmem>>, vector<1x16x512xf32>
      %18 = vector.shape_cast %17 : vector<1x16x512xf32> to vector<16x512xf32>
      %c0_16 = arith.constant 0 : index
      %c0_17 = arith.constant 0 : index
      %c0_18 = arith.constant 0 : index
      %19 = vector.load %arg6[%c0_16, %c0_17, %c0_18] : memref<1x1x512xf32, #tpu.memory_space<vmem>>, vector<1x1x512xf32>
      %20 = vector.shape_cast %19 : vector<1x1x512xf32> to vector<1x512xf32>
      %21 = vector.broadcast %20 : vector<1x512xf32> to vector<16x512xf32>
      %22 = arith.addf %18, %21 : vector<16x512xf32>
      %cst_19 = arith.constant 0.000000e+00 : f32
      %23 = vector.broadcast %cst_19 : f32 to vector<16x512xf32>
      %24 = arith.maximumf %22, %23 : vector<16x512xf32>
      %c0_20 = arith.constant 0 : index
      %c0_21 = arith.constant 0 : index
      %c0_22 = arith.constant 0 : index
      %25 = vector.load %arg7[%c0_20, %c0_21, %c0_22] : memref<1x16x512xf32, #tpu.memory_space<vmem>>, vector<1x16x512xf32>
      %26 = vector.shape_cast %25 : vector<1x16x512xf32> to vector<16x512xf32>
      %27 = vector.shape_cast %24 : vector<16x512xf32> to vector<1x16x512xf32>
      tpu.vector_store %arg7[%c0_20, %c0_21, %c0_22], %27 {strides = array<i32>} : memref<1x16x512xf32, #tpu.memory_space<vmem>>, vector<1x16x512xf32>,
    } else {
    }
    return
  }
  func.func @transform_0(%arg0: i32, %arg1: i32, %arg2: i32, %arg3: i32) -> (i32, i32, i32) {
    %c0_i32 = arith.constant 0 : i32
    return %arg0, %arg1, %arg3 : i32, i32, i32
  }
  func.func @transform_1(%arg0: i32, %arg1: i32, %arg2: i32, %arg3: i32) -> (i32, i32, i32) {
    %c0_i32 = arith.constant 0 : i32
    return %arg0, %arg3, %arg2 : i32, i32, i32
  }
  func.func @transform_2(%arg0: i32, %arg1: i32, %arg2: i32, %arg3: i32) -> (i32, i32, i32) {
    %c0_i32 = arith.constant 0 : i32
    %c0_i32_0 = arith.constant 0 : i32
    return %arg0, %c0_i32, %arg2 : i32, i32, i32
  }
  func.func @transform_3(%arg0: i32, %arg1: i32, %arg2: i32, %arg3: i32) -> (i32, i32, i32) {
    %c0_i32 = arith.constant 0 : i32
    return %arg0, %arg1, %arg2 : i32, i32, i32
  }
}

module attributes {stable_mosaic.version = 11 : i64} {
  func.func @_batched_matmul_pool_kernel(%arg0: i32, %arg1: i32, %arg2: memref<1x16x512xbf16, #tpu.memory_space<vmem>>, %arg3: memref<1x512x512xbf16, #tpu.memory_space<vmem>>, %arg4: memref<1x1x512xf32, #tpu.memory_space<vmem>>, %arg5: memref<1x2x512xf32, #tpu.memory_space<vmem>>) attributes {dimension_semantics = [#tpu.dimension_semantics<parallel>, #tpu.dimension_semantics<parallel>], iteration_bounds = array<i64: 4, 2>, scalar_prefetch = 0 : i64, scratch_operands = 0 : i64, tpu.core_type = #tpu.core_type<tc>, window_params = [{transform_indices = @transform_0, window_bounds = array<i64: 1, 16, 512>}, {transform_indices = @transform_1, window_bounds = array<i64: 1, 512, 512>}, {transform_indices = @transform_2, window_bounds = array<i64: 1, 1, 512>}, {transform_indices = @transform_3, window_bounds = array<i64: 1, 2, 512>}]} {
    %c0 = arith.constant 0 : index
    %c0_0 = arith.constant 0 : index
    %c0_1 = arith.constant 0 : index
    %0 = vector.load %arg2[%c0, %c0_0, %c0_1] : memref<1x16x512xbf16, #tpu.memory_space<vmem>>, vector<1x16x512xbf16>
    %1 = vector.shape_cast %0 : vector<1x16x512xbf16> to vector<16x512xbf16>
    %c0_2 = arith.constant 0 : index
    %c0_3 = arith.constant 0 : index
    %c0_4 = arith.constant 0 : index
    %2 = vector.load %arg3[%c0_2, %c0_3, %c0_4] : memref<1x512x512xbf16, #tpu.memory_space<vmem>>, vector<1x512x512xbf16>
    %3 = vector.shape_cast %2 : vector<1x512x512xbf16> to vector<512x512xbf16>
    %cst = arith.constant dense<0.000000e+00> : vector<16x512xf32>
    %4 = tpu.matmul %1, %3, %cst {dimension_numbers = #tpu.dot_dimension_numbers<[1], [0], [0], [1], [0, 0, 1, 1], [], []>} : vector<16x512xbf16>, vector<512x512xbf16>, vector<16x512xf32> -> vector<16x512xf32>
    %c0_5 = arith.constant 0 : index
    %c0_6 = arith.constant 0 : index
    %c0_7 = arith.constant 0 : index
    %5 = vector.load %arg4[%c0_5, %c0_6, %c0_7] : memref<1x1x512xf32, #tpu.memory_space<vmem>>, vector<1x1x512xf32>
    %6 = vector.shape_cast %5 : vector<1x1x512xf32> to vector<1x512xf32>
    %7 = vector.broadcast %6 : vector<1x512xf32> to vector<16x512xf32>
    %8 = arith.addf %4, %7 : vector<16x512xf32>
    %cst_8 = arith.constant 0.000000e+00 : f32
    %9 = vector.broadcast %cst_8 : f32 to vector<16x512xf32>
    %10 = arith.maximumf %8, %9 : vector<16x512xf32>
    %11 = vector.shape_cast %10 : vector<16x512xf32> to vector<2x8x512xf32>
    %cst_9 = arith.constant dense<0.000000e+00> : vector<2x512xf32>
    %12 = vector.multi_reduction <add>, %11, %cst_9 [1] : vector<2x8x512xf32> to vector<2x512xf32>
    %cst_10 = arith.constant 8.000000e+00 : f32
    %13 = vector.broadcast %cst_10 : f32 to vector<2x512xf32>
    %14 = arith.divf %12, %13 : vector<2x512xf32>
    %c0_11 = arith.constant 0 : index
    %c0_12 = arith.constant 0 : index
    %c0_13 = arith.constant 0 : index
    %15 = vector.load %arg5[%c0_11, %c0_12, %c0_13] : memref<1x2x512xf32, #tpu.memory_space<vmem>>, vector<1x2x512xf32>
    %16 = vector.shape_cast %15 : vector<1x2x512xf32> to vector<2x512xf32>
    %17 = vector.shape_cast %14 : vector<2x512xf32> to vector<1x2x512xf32>
    tpu.vector_store %arg5[%c0_11, %c0_12, %c0_13], %17 {strides = array<i32>} : memref<1x2x512xf32, #tpu.memory_space<vmem>>, vector<1x2x512xf32>,
    return
  }
  func.func @transform_0(%arg0: i32, %arg1: i32) -> (i32, i32, i32) {
    %c0_i32 = arith.constant 0 : i32
    %c0_i32_0 = arith.constant 0 : i32
    %c0_i32_1 = arith.constant 0 : i32
    return %arg0, %c0_i32, %c0_i32_0 : i32, i32, i32
  }
  func.func @transform_1(%arg0: i32, %arg1: i32) -> (i32, i32, i32) {
    %c0_i32 = arith.constant 0 : i32
    %c0_i32_0 = arith.constant 0 : i32
    return %arg0, %c0_i32, %arg1 : i32, i32, i32
  }
  func.func @transform_2(%arg0: i32, %arg1: i32) -> (i32, i32, i32) {
    %c0_i32 = arith.constant 0 : i32
    %c0_i32_0 = arith.constant 0 : i32
    return %arg0, %c0_i32, %arg1 : i32, i32, i32
  }
  func.func @transform_3(%arg0: i32, %arg1: i32) -> (i32, i32, i32) {
    %c0_i32 = arith.constant 0 : i32
    %c0_i32_0 = arith.constant 0 : i32
    return %arg0, %c0_i32, %arg1 : i32, i32, i32
  }
}

</mosaic_0001>

<llo_original>
// kernel: aggregation_feature_forward.3
$region0: #{aggregation_feature_forward.3}
  #allocation0 [shape = 'u32[]', space=smem, size = 0x4, offset = 0x4, fixed_abs, tag = 'smem constant byte address 0x4 - core index']
  #allocation1 [shape = 'u32[72,128]{1,0:T(1,128)}', space=vmem, size = 0x9000, scoped, tag = 'internal scratch']
  %s0 = inlined_call_operand.vmem [shape: bf16[4,128,32], index: 0, kind: input, shape index: {}]
  %s1 = inlined_call_operand.hbm [shape: bf16[4,32,512], index: 1, kind: input, shape index: {}]
  %s2 = inlined_call_operand.vmem [shape: f32[4,1,512], index: 2, kind: input, shape index: {}]
  %s3 = inlined_call_operand.vmem [shape: f32[4,128,512], index: 3, kind: output, shape index: {}]
  %s4 = sld [smem:[#allocation0]]
  $region57: #{aggregation_feature_forward.3} parent=0
    _
  %s6 = ssub.s32 1, %s4
  %s7 = scalar_select 0, %s6, %s4
  $region1: #{aggregation_feature_forward.3} parent=0
    #allocation2 [shape = 'u8[65536]{0}', space=vmem, size = 0x10000, scoped, tag = 'input window, operand 1']
    #allocation3 [shape = 's32[2]{0}', space=sflag, size = 0x8, scoped, tag = 'scoped memory for aggregation_feature_forward.3']
    %8 = vsyncpa [#allocation3], 0
    %s9 = scalar_lea.sflag [#allocation3], 1
    %10 = vsyncpa %s9, 0
    loop: start=0, step=1, limit=6
    $region2: #{aggregation_feature_forward.3} parent=1 // loop_pre_header
      _
    $region3: #{aggregation_feature_forward.3} parent=1 // loop_header
      %s12 = sphi 0, %s16
      %p13 = scmp.ge.s32.totalorder %s12, 6
      %s19 = sphi 0, %s45
      %s20 = sphi 0, %s41
      %s21 = sphi 0, %s37
      %s22 = sphi 0, %s33
      %s23 = sphi 0, %s19
      %s24 = sphi 0, %s20
      %s25 = sphi 0, %s21
      %s26 = sphi 0, %s22
      %s27 = sphi 0, %s23
      %s28 = sphi 0, %s24
      %s29 = sphi 0, %s25
      %s30 = sphi 0, %s26
      %s52 = sphi 0, %s54
      %s55 = sphi 0, %s52
      %s56 = sphi 0, %s55
      %s72 = sphi 0, %s56
      %s82 = sphi 0, %s84
      %s85 = sphi 0, %s82
      %s86 = sphi 0, %s85
      %s102 = sphi 0, %s86
      %s110 = sphi 0, %s112
      %s113 = sphi 0, %s110
      %s114 = sphi 0, %s113
      %s130 = sphi 0, %s114
      %s140 = sphi 0, %s142
      %s143 = sphi 0, %s140
      %s144 = sphi 0, %s143
      %s160 = sphi 0, %s144
    $region4: #{aggregation_feature_forward.3} parent=1 // loop_header_branch
      %15 = sbr.rel (%p13) target = $region8
    $region5: #{aggregation_feature_forward.3} parent=1 // loop_body
      %s17 = ssub.s32 %s12, 1
      %s18 = ssub.s32 %s12, 2
      %s31 = sadd.s32 1, %s22
      %p32 = scmp.ge.s32.totalorder %s31, 1
      %s33 = scalar_select %p32, 0, %s31
      %s34 = sadd.s32 1, %s21
      %s35 = scalar_select %p32, %s34, %s21
      %p36 = scmp.ge.s32.totalorder %s35, 1
      %s37 = scalar_select %p36, 0, %s35
      %s38 = sadd.s32 1, %s20
      %s39 = scalar_select %p36, %s38, %s20
      %p40 = scmp.ge.s32.totalorder %s39, 1
      %s41 = scalar_select %p40, 0, %s39
      %s42 = sadd.s32 1, %s19
      %s43 = scalar_select %p40, %s42, %s19
      %p44 = scmp.ge.s32.totalorder %s43, 4
      %s45 = scalar_select %p44, 0, %s43
      %s46 = ssub.s32 %s19, %s45
      %s47 = ssub.s32 %s20, %s41
      %s48 = sor.u32 %s46, %s47
      %s49 = ssub.s32 %s22, %s33
      %s50 = sor.u32 %s48, %s49
      %p51 = scmp.eq.s32.totalorder %s50, 0
      %s53 = sadd.s32 %s52, 1
      %s54 = scalar_select %p51, %s52, %s53
      %p57 = pneg %p51
      %p58 = scmp.eq.s32.totalorder %s12, 3
      %p59 = por %p57, %p58
      %p60 = scmp.ne.s32.totalorder %s52, %s55
      %p61 = scmp.eq.s32.totalorder %s12, 0
      %p62 = por %p60, %p61
      %p63 = scmp.ne.s32.totalorder %s52, %s55
      %p64 = scmp.eq.s32.totalorder %s17, 3
      %p65 = por %p63, %p64
      %p66 = scmp.ne.s32.totalorder %s55, %s56
      %p67 = scmp.eq.s32.totalorder %s17, 0
      %p68 = por %p66, %p67
      %p69 = scmp.ne.s32.totalorder %s55, %s56
      %p70 = scmp.eq.s32.totalorder %s18, 3
      %p71 = por %p69, %p70
      %p73 = scmp.ne.s32.totalorder %s56, %s72
      %p74 = scmp.eq.s32.totalorder %s18, 0
      %p75 = por %p73, %p74
      %s76 = ssub.s32 %s19, %s45
      %s77 = ssub.s32 %s22, %s33
      %s78 = sor.u32 %s76, %s77
      %s79 = ssub.s32 %s21, %s37
      %s80 = sor.u32 %s78, %s79
      %p81 = scmp.eq.s32.totalorder %s80, 0
      %s83 = sadd.s32 %s82, 1
      %s84 = scalar_select %p81, %s82, %s83
      %p87 = pneg %p81
      %p88 = scmp.eq.s32.totalorder %s12, 3
      %p89 = por %p87, %p88
      %p90 = scmp.ne.s32.totalorder %s82, %s85
      %p91 = scmp.eq.s32.totalorder %s12, 0
      %p92 = por %p90, %p91
      %p93 = scmp.ne.s32.totalorder %s82, %s85
      %p94 = scmp.eq.s32.totalorder %s17, 3
      %p95 = por %p93, %p94
      %p96 = scmp.ne.s32.totalorder %s85, %s86
      %p97 = scmp.eq.s32.totalorder %s17, 0
      %p98 = por %p96, %p97
      %p99 = scmp.ne.s32.totalorder %s85, %s86
      %p100 = scmp.eq.s32.totalorder %s18, 3
      %p101 = por %p99, %p100
      %p103 = scmp.ne.s32.totalorder %s86, %s102
      %p104 = scmp.eq.s32.totalorder %s18, 0
      %p105 = por %p103, %p104
      %s106 = ssub.s32 %s19, %s45
      %s107 = ssub.s32 %s21, %s37
      %s108 = sor.u32 %s106, %s107
      %p109 = scmp.eq.s32.totalorder %s108, 0
      %s111 = sadd.s32 %s110, 1
      %s112 = scalar_select %p109, %s110, %s111
      %p115 = pneg %p109
      %p116 = scmp.eq.s32.totalorder %s12, 3
      %p117 = por %p115, %p116
      %p118 = scmp.ne.s32.totalorder %s110, %s113
      %p119 = scmp.eq.s32.totalorder %s12, 0
      %p120 = por %p118, %p119
      %p121 = scmp.ne.s32.totalorder %s110, %s113
      %p122 = scmp.eq.s32.totalorder %s17, 3
      %p123 = por %p121, %p122
      %p124 = scmp.ne.s32.totalorder %s113, %s114
      %p125 = scmp.eq.s32.totalorder %s17, 0
      %p126 = por %p124, %p125
      %p127 = scmp.ne.s32.totalorder %s113, %s114
      %p128 = scmp.eq.s32.totalorder %s18, 3
      %p129 = por %p127, %p128
      %p131 = scmp.ne.s32.totalorder %s114, %s130
      %p132 = scmp.eq.s32.totalorder %s18, 0
      %p133 = por %p131, %p132
      %s134 = ssub.s32 %s19, %s45
      %s135 = ssub.s32 %s20, %s41
      %s136 = sor.u32 %s134, %s135
      %s137 = ssub.s32 %s21, %s37
      %s138 = sor.u32 %s136, %s137
      %p139 = scmp.eq.s32.totalorder %s138, 0
      %s141 = sadd.s32 %s140, 1
      %s142 = scalar_select %p139, %s140, %s141
      %p145 = pneg %p139
      %p146 = scmp.eq.s32.totalorder %s12, 3
      %p147 = por %p145, %p146
      %p148 = scmp.ne.s32.totalorder %s140, %s143
      %p149 = scmp.eq.s32.totalorder %s12, 0
      %p150 = por %p148, %p149
      %p151 = scmp.ne.s32.totalorder %s140, %s143
      %p152 = scmp.eq.s32.totalorder %s17, 3
      %p153 = por %p151, %p152
      %p154 = scmp.ne.s32.totalorder %s143, %s144
      %p155 = scmp.eq.s32.totalorder %s17, 0
      %p156 = por %p154, %p155
      %p157 = scmp.ne.s32.totalorder %s143, %s144
      %p158 = scmp.eq.s32.totalorder %s18, 3
      %p159 = por %p157, %p158
      %p161 = scmp.ne.s32.totalorder %s144, %s160
      %p162 = scmp.eq.s32.totalorder %s18, 0
      %p163 = por %p161, %p162
      %p164 = scmp.le.s32.totalorder 1, %s12
      %p165 = scmp.lt.s32.totalorder %s12, 5
      %p166 = pnand %p164, %p165
      %p167 = pneg %p166
      // Predicated region
      $region9: #{aggregation_feature_forward.3} parent=5 // pred_check
        _
      $region10: #{aggregation_feature_forward.3} parent=5 // pred_check_branch
        %169 = sbr.rel (%p166) target = $region12
      $region11: #{aggregation_feature_forward.3} parent=5 // pred_region
        %s170 = ssub.s32 %s12, 1
      $region12: #{aggregation_feature_forward.3} parent=5 // pred_fallthru
        _
      %p171 = scmp.lt.s32.totalorder %s12, 4
      // Predicated region
      $region13: #{aggregation_feature_forward.3} parent=5 // pred_check
        %p172 = pneg %p171
      $region14: #{aggregation_feature_forward.3} parent=5 // pred_check_branch
        %174 = sbr.rel (%p172) target = $region16
      $region15: #{aggregation_feature_forward.3} parent=5 // pred_region
        // Predicated region
        $region17: #{aggregation_feature_forward.3} parent=15 // pred_check
          %p175 = pneg %p62
        $region18: #{aggregation_feature_forward.3} parent=15 // pred_check_branch
          %177 = sbr.rel (%p175) target = $region20
        $region19: #{aggregation_feature_forward.3} parent=15 // pred_region
          %s178 = smul.u32 16, %s20
          %p179 = scmp.lt.s32.totalorder %s19, 3
          %s180 = scalar_select %p179, %s19, 3
          %p181 = scmp.lt.s32.totalorder %s178, 15
          %s182 = scalar_select %p181, %s178, 15
          %p183 = scmp.lt.s32.totalorder %s22, 0
          %s184 = scalar_select %p183, %s22, 0
          %s185 = sadd.s32 %s184, %s182
          %s186 = smul.addr %s180, 16
          %s187 = sadd.s32 %s185, %s186
          %s188 = smul.addr %s187, 4
          %s189 = scalar_lea.vmem %s0, %s188
          %s190 = smul.u32 16, %s20
        $region20: #{aggregation_feature_forward.3} parent=15 // pred_fallthru
          _
        // Predicated region
        $region21: #{aggregation_feature_forward.3} parent=15 // pred_check
          %p191 = pneg %p92
        $region22: #{aggregation_feature_forward.3} parent=15 // pred_check_branch
          %193 = sbr.rel (%p191) target = $region24
        $region23: #{aggregation_feature_forward.3} parent=15 // pred_region
          %s194 = sand.u32 %s82, 1
          %s195 = scalar_lea.sflag [#allocation3], %s194
          %s196 = sand.u32 %s82, 1
          %s197 = smul.addr %s196, 64
          %s198 = scalar_lea.vmem [#allocation2], %s197
          %s199 = smul.u32 4, %s22
          %s200 = smul.u32 4, %s21
          %202 = vsyncadd %s195, 0
          %s203 = smul.addr %s199, 4
          %s204 = sadd.s32 %s200, %s203
          %s205 = smul.addr %s19, 16
          %s206 = sadd.s32 %s204, %s205
          %s207 = smul.addr %s206, 4
          %s208 = scalar_lea.hbm %s1, %s207
          %s209 = sshll.u32 %s208, 4
          %s210 = int_to_ptr.hbm [resolvable:$true] %s209
          %s211 = sshll.u32 %s198, 4
          %s212 = int_to_ptr.vmem [resolvable:$true] %s211
          %217 = dma.hbm_to_vmem [thread:$0]  %s210, 1024, %s212, %s195, 256, 256, 16
        $region24: #{aggregation_feature_forward.3} parent=15 // pred_fallthru
          _
        // Predicated region
        $region25: #{aggregation_feature_forward.3} parent=15 // pred_check
          %p218 = pneg %p120
        $region26: #{aggregation_feature_forward.3} parent=15 // pred_check_branch
          %220 = sbr.rel (%p218) target = $region28
        $region27: #{aggregation_feature_forward.3} parent=15 // pred_region
          %s221 = smul.u32 4, %s21
          %p222 = scmp.lt.s32.totalorder %s19, 3
          %s223 = scalar_select %p222, %s19, 3
          %p224 = scmp.lt.s32.totalorder %s221, 3
          %s225 = scalar_select %p224, %s221, 3
          %s226 = smul.addr %s223, 4
          %s227 = sadd.s32 %s225, %s226
          %s228 = scalar_lea.vmem %s2, %s227
          %s229 = smul.u32 4, %s21
        $region28: #{aggregation_feature_forward.3} parent=15 // pred_fallthru
          _
      $region16: #{aggregation_feature_forward.3} parent=5 // pred_fallthru
        _
      %p230 = scmp.le.s32.totalorder 1, %s12
      %p231 = scmp.lt.s32.totalorder %s12, 5
      %p232 = pnand %p230, %p231
      %p233 = pneg %p232
      // Predicated region
      $region29: #{aggregation_feature_forward.3} parent=5 // pred_check
        _
      $region30: #{aggregation_feature_forward.3} parent=5 // pred_check_branch
        %235 = sbr.rel (%p232) target = $region32
      $region31: #{aggregation_feature_forward.3} parent=5 // pred_region
        %s236 = ssub.s32 %s12, 1
        %s237 = sand.u32 %s85, 1
        %s238 = scalar_lea.sflag [#allocation3], %s237
        %s239 = sand.u32 %s85, 1
        %s240 = smul.addr %s239, 64
        %s241 = scalar_lea.vmem [#allocation2], %s240
        // Predicated region
        $region33: #{aggregation_feature_forward.3} parent=31 // pred_check
          %p242 = pneg %p98
        $region34: #{aggregation_feature_forward.3} parent=31 // pred_check_branch
          %244 = sbr.rel (%p242) target = $region36
        $region35: #{aggregation_feature_forward.3} parent=31 // pred_region
          %246 = dma.done %s238, 1024
        $region36: #{aggregation_feature_forward.3} parent=31 // pred_fallthru
          _
        %s247 = smul.u32 16, %s24
        %p248 = scmp.lt.s32.totalorder %s23, 3
        %s249 = scalar_select %p248, %s23, 3
        %p250 = scmp.lt.s32.totalorder %s247, 15
        %s251 = scalar_select %p250, %s247, 15
        %p252 = scmp.lt.s32.totalorder %s26, 0
        %s253 = scalar_select %p252, %s26, 0
        %s254 = sadd.s32 %s253, %s251
        %s255 = smul.addr %s249, 16
        %s256 = sadd.s32 %s254, %s255
        %s257 = smul.addr %s256, 4
        %s258 = scalar_lea.vmem %s0, %s257
        %p259 = pneg %p68
        %p260 = pneg %p65
        %s261 = sand.u32 %s85, 1
        %s262 = scalar_lea.sflag [#allocation3], %s261
        %s263 = sand.u32 %s85, 1
        %s264 = smul.addr %s263, 64
        %s265 = scalar_lea.vmem [#allocation2], %s264
        %p266 = pneg %p98
        %p267 = pneg %p95
        %s268 = smul.u32 4, %s25
        %p269 = scmp.lt.s32.totalorder %s23, 3
        %s270 = scalar_select %p269, %s23, 3
        %p271 = scmp.lt.s32.totalorder %s268, 3
        %s272 = scalar_select %p271, %s268, 3
        %s273 = smul.addr %s270, 4
        %s274 = sadd.s32 %s272, %s273
        %s275 = scalar_lea.vmem %s2, %s274
        %p276 = pneg %p126
        %p277 = pneg %p123
        %p278 = pneg %p156
        %p279 = pneg %p153
        %s280 = smul.u32 16, %s24
        %s281 = smul.u32 4, %s25
        %p282 = scmp.lt.s32.totalorder %s23, 3
        %s283 = scalar_select %p282, %s23, 3
        %p284 = scmp.lt.s32.totalorder %s280, 15
        %s285 = scalar_select %p284, %s280, 15
        %p286 = scmp.lt.s32.totalorder %s281, 3
        %s287 = scalar_select %p286, %s281, 3
        %s288 = smul.addr %s285, 4
        %s289 = sadd.s32 %s287, %s288
        %s290 = smul.addr %s283, 64
        %s291 = sadd.s32 %s289, %s290
        %s292 = smul.addr %s291, 8
        %s293 = scalar_lea.vmem %s3, %s292
        %s294 = smul.u32 16, %s24
        %p295 = scmp.lt.s32.totalorder %s23, 3
        %s296 = scalar_select %p295, %s23, 3
        %p297 = scmp.lt.s32.totalorder %s294, 15
        %s298 = scalar_select %p297, %s294, 15
        %p299 = scmp.lt.s32.totalorder %s26, 0
        %s300 = scalar_select %p299, %s26, 0
        %s301 = sadd.s32 %s300, %s298
        %s302 = smul.addr %s296, 16
        %s303 = sadd.s32 %s301, %s302
        %s304 = smul.addr %s303, 4
        %s305 = scalar_lea.vmem %s0, %s304
        %s306 = smul.u32 16, %s24
        %s307 = smul.u32 4, %s26
        %s308 = smul.u32 4, %s25
        %s309 = smul.u32 4, %s25
        %p310 = scmp.lt.s32.totalorder %s23, 3
        %s311 = scalar_select %p310, %s23, 3
        %p312 = scmp.lt.s32.totalorder %s309, 3
        %s313 = scalar_select %p312, %s309, 3
        %s314 = smul.addr %s311, 4
        %s315 = sadd.s32 %s313, %s314
        %s316 = scalar_lea.vmem %s2, %s315
        %s317 = smul.u32 4, %s25
        %s318 = smul.u32 16, %s24
        %s319 = smul.u32 4, %s25
        %p320 = scmp.lt.s32.totalorder %s23, 3
        %s321 = scalar_select %p320, %s23, 3
        %p322 = scmp.lt.s32.totalorder %s318, 15
        %s323 = scalar_select %p322, %s318, 15
        %p324 = scmp.lt.s32.totalorder %s319, 3
        %s325 = scalar_select %p324, %s319, 3
        %s326 = smul.addr %s323, 4
        %s327 = sadd.s32 %s325, %s326
        %s328 = smul.addr %s321, 64
        %s329 = sadd.s32 %s327, %s328
        %s330 = smul.addr %s329, 8
        %s331 = scalar_lea.vmem %s3, %s330
        %s332 = smul.u32 16, %s24
        %s333 = smul.u32 4, %s25
        %p335 = scmp.eq.s32.totalorder %s26, 0
        // Predicated region
        $region37: #{aggregation_feature_forward.3} parent=31 // pred_check
          %p336 = pneg %p335
        $region38: #{aggregation_feature_forward.3} parent=31 // pred_check_branch
          %338 = sbr.rel (%p336) target = $region40
        $region39: #{aggregation_feature_forward.3} parent=31 // pred_region
          %339 = vst [vmem:[%s331] sm:$0xff] 0.0
          %340 = vst [vmem:[%s331 + $0x8] sm:$0xff] 0.0
          %341 = vst [vmem:[%s331 + $0x10] sm:$0xff] 0.0
          %342 = vst [vmem:[%s331 + $0x18] sm:$0xff] 0.0
          %343 = vst [vmem:[%s331 + $0x20] sm:$0xff] 0.0
          %344 = vst [vmem:[%s331 + $0x28] sm:$0xff] 0.0
          %345 = vst [vmem:[%s331 + $0x30] sm:$0xff] 0.0
          %346 = vst [vmem:[%s331 + $0x38] sm:$0xff] 0.0
          %347 = vst [vmem:[%s331 + $0x40] sm:$0xff] 0.0
          %348 = vst [vmem:[%s331 + $0x48] sm:$0xff] 0.0
          %349 = vst [vmem:[%s331 + $0x50] sm:$0xff] 0.0
          %350 = vst [vmem:[%s331 + $0x58] sm:$0xff] 0.0
          %351 = vst [vmem:[%s331 + $0x60] sm:$0xff] 0.0
          %352 = vst [vmem:[%s331 + $0x68] sm:$0xff] 0.0
          %353 = vst [vmem:[%s331 + $0x70] sm:$0xff] 0.0
          %354 = vst [vmem:[%s331 + $0x78] sm:$0xff] 0.0
          %355 = vst [vmem:[%s331 + $0x80] sm:$0xff] 0.0
          %356 = vst [vmem:[%s331 + $0x88] sm:$0xff] 0.0
          %357 = vst [vmem:[%s331 + $0x90] sm:$0xff] 0.0
          %358 = vst [vmem:[%s331 + $0x98] sm:$0xff] 0.0
          %359 = vst [vmem:[%s331 + $0xa0] sm:$0xff] 0.0
          %360 = vst [vmem:[%s331 + $0xa8] sm:$0xff] 0.0
          %361 = vst [vmem:[%s331 + $0xb0] sm:$0xff] 0.0
          %362 = vst [vmem:[%s331 + $0xb8] sm:$0xff] 0.0
          %363 = vst [vmem:[%s331 + $0xc0] sm:$0xff] 0.0
          %364 = vst [vmem:[%s331 + $0xc8] sm:$0xff] 0.0
          %365 = vst [vmem:[%s331 + $0xd0] sm:$0xff] 0.0
          %366 = vst [vmem:[%s331 + $0xd8] sm:$0xff] 0.0
          %367 = vst [vmem:[%s331 + $0xe0] sm:$0xff] 0.0
          %368 = vst [vmem:[%s331 + $0xe8] sm:$0xff] 0.0
          %369 = vst [vmem:[%s331 + $0xf0] sm:$0xff] 0.0
          %370 = vst [vmem:[%s331 + $0xf8] sm:$0xff] 0.0
          %371 = vst [vmem:[%s331 + $0x100] sm:$0xff] 0.0
          %372 = vst [vmem:[%s331 + $0x108] sm:$0xff] 0.0
          %373 = vst [vmem:[%s331 + $0x110] sm:$0xff] 0.0
          %374 = vst [vmem:[%s331 + $0x118] sm:$0xff] 0.0
          %375 = vst [vmem:[%s331 + $0x120] sm:$0xff] 0.0
          %376 = vst [vmem:[%s331 + $0x128] sm:$0xff] 0.0
          %377 = vst [vmem:[%s331 + $0x130] sm:$0xff] 0.0
          %378 = vst [vmem:[%s331 + $0x138] sm:$0xff] 0.0
          %379 = vst [vmem:[%s331 + $0x140] sm:$0xff] 0.0
          %380 = vst [vmem:[%s331 + $0x148] sm:$0xff] 0.0
          %381 = vst [vmem:[%s331 + $0x150] sm:$0xff] 0.0
          %382 = vst [vmem:[%s331 + $0x158] sm:$0xff] 0.0
          %383 = vst [vmem:[%s331 + $0x160] sm:$0xff] 0.0
          %384 = vst [vmem:[%s331 + $0x168] sm:$0xff] 0.0
          %385 = vst [vmem:[%s331 + $0x170] sm:$0xff] 0.0
          %386 = vst [vmem:[%s331 + $0x178] sm:$0xff] 0.0
          %387 = vst [vmem:[%s331 + $0x180] sm:$0xff] 0.0
          %388 = vst [vmem:[%s331 + $0x188] sm:$0xff] 0.0
          %389 = vst [vmem:[%s331 + $0x190] sm:$0xff] 0.0
          %390 = vst [vmem:[%s331 + $0x198] sm:$0xff] 0.0
          %391 = vst [vmem:[%s331 + $0x1a0] sm:$0xff] 0.0
          %392 = vst [vmem:[%s331 + $0x1a8] sm:$0xff] 0.0
          %393 = vst [vmem:[%s331 + $0x1b0] sm:$0xff] 0.0
          %394 = vst [vmem:[%s331 + $0x1b8] sm:$0xff] 0.0
          %395 = vst [vmem:[%s331 + $0x1c0] sm:$0xff] 0.0
          %396 = vst [vmem:[%s331 + $0x1c8] sm:$0xff] 0.0
          %397 = vst [vmem:[%s331 + $0x1d0] sm:$0xff] 0.0
          %398 = vst [vmem:[%s331 + $0x1d8] sm:$0xff] 0.0
          %399 = vst [vmem:[%s331 + $0x1e0] sm:$0xff] 0.0
          %400 = vst [vmem:[%s331 + $0x1e8] sm:$0xff] 0.0
          %401 = vst [vmem:[%s331 + $0x1f0] sm:$0xff] 0.0
          %402 = vst [vmem:[%s331 + $0x1f8] sm:$0xff] 0.0
        $region40: #{aggregation_feature_forward.3} parent=31 // pred_fallthru
          _
        %v403 = vld [vmem:[%s331] sm:$0xff]
        %v404 = vld [vmem:[%s331 + $0x8] sm:$0xff]
        %v405 = vld [vmem:[%s331 + $0x10] sm:$0xff]
        %v406 = vld [vmem:[%s331 + $0x18] sm:$0xff]
        %v407 = vld [vmem:[%s331 + $0x20] sm:$0xff]
        %v408 = vld [vmem:[%s331 + $0x28] sm:$0xff]
        %v409 = vld [vmem:[%s331 + $0x30] sm:$0xff]
        %v410 = vld [vmem:[%s331 + $0x38] sm:$0xff]
        %v411 = vld [vmem:[%s331 + $0x40] sm:$0xff]
        %v412 = vld [vmem:[%s331 + $0x48] sm:$0xff]
        %v413 = vld [vmem:[%s331 + $0x50] sm:$0xff]
        %v414 = vld [vmem:[%s331 + $0x58] sm:$0xff]
        %v415 = vld [vmem:[%s331 + $0x60] sm:$0xff]
        %v416 = vld [vmem:[%s331 + $0x68] sm:$0xff]
        %v417 = vld [vmem:[%s331 + $0x70] sm:$0xff]
        %v418 = vld [vmem:[%s331 + $0x78] sm:$0xff]
        %v419 = vld [vmem:[%s331 + $0x80] sm:$0xff]
        %v420 = vld [vmem:[%s331 + $0x88] sm:$0xff]
        %v421 = vld [vmem:[%s331 + $0x90] sm:$0xff]
        %v422 = vld [vmem:[%s331 + $0x98] sm:$0xff]
        %v423 = vld [vmem:[%s331 + $0xa0] sm:$0xff]
        %v424 = vld [vmem:[%s331 + $0xa8] sm:$0xff]
        %v425 = vld [vmem:[%s331 + $0xb0] sm:$0xff]
        %v426 = vld [vmem:[%s331 + $0xb8] sm:$0xff]
        %v427 = vld [vmem:[%s331 + $0xc0] sm:$0xff]
        %v428 = vld [vmem:[%s331 + $0xc8] sm:$0xff]
        %v429 = vld [vmem:[%s331 + $0xd0] sm:$0xff]
        %v430 = vld [vmem:[%s331 + $0xd8] sm:$0xff]
        %v431 = vld [vmem:[%s331 + $0xe0] sm:$0xff]
        %v432 = vld [vmem:[%s331 + $0xe8] sm:$0xff]
        %v433 = vld [vmem:[%s331 + $0xf0] sm:$0xff]
        %v434 = vld [vmem:[%s331 + $0xf8] sm:$0xff]
        %v435 = vld [vmem:[%s331 + $0x100] sm:$0xff]
        %v436 = vld [vmem:[%s331 + $0x108] sm:$0xff]
        %v437 = vld [vmem:[%s331 + $0x110] sm:$0xff]
        %v438 = vld [vmem:[%s331 + $0x118] sm:$0xff]
        %v439 = vld [vmem:[%s331 + $0x120] sm:$0xff]
        %v440 = vld [vmem:[%s331 + $0x128] sm:$0xff]
        %v441 = vld [vmem:[%s331 + $0x130] sm:$0xff]
        %v442 = vld [vmem:[%s331 + $0x138] sm:$0xff]
        %v443 = vld [vmem:[%s331 + $0x140] sm:$0xff]
        %v444 = vld [vmem:[%s331 + $0x148] sm:$0xff]
        %v445 = vld [vmem:[%s331 + $0x150] sm:$0xff]
        %v446 = vld [vmem:[%s331 + $0x158] sm:$0xff]
        %v447 = vld [vmem:[%s331 + $0x160] sm:$0xff]
        %v448 = vld [vmem:[%s331 + $0x168] sm:$0xff]
        %v449 = vld [vmem:[%s331 + $0x170] sm:$0xff]
        %v450 = vld [vmem:[%s331 + $0x178] sm:$0xff]
        %v451 = vld [vmem:[%s331 + $0x180] sm:$0xff]
        %v452 = vld [vmem:[%s331 + $0x188] sm:$0xff]
        %v453 = vld [vmem:[%s331 + $0x190] sm:$0xff]
        %v454 = vld [vmem:[%s331 + $0x198] sm:$0xff]
        %v455 = vld [vmem:[%s331 + $0x1a0] sm:$0xff]
        %v456 = vld [vmem:[%s331 + $0x1a8] sm:$0xff]
        %v457 = vld [vmem:[%s331 + $0x1b0] sm:$0xff]
        %v458 = vld [vmem:[%s331 + $0x1b8] sm:$0xff]
        %v459 = vld [vmem:[%s331 + $0x1c0] sm:$0xff]
        %v460 = vld [vmem:[%s331 + $0x1c8] sm:$0xff]
        %v461 = vld [vmem:[%s331 + $0x1d0] sm:$0xff]
        %v462 = vld [vmem:[%s331 + $0x1d8] sm:$0xff]
        %v463 = vld [vmem:[%s331 + $0x1e0] sm:$0xff]
        %v464 = vld [vmem:[%s331 + $0x1e8] sm:$0xff]
        %v465 = vld [vmem:[%s331 + $0x1f0] sm:$0xff]
        %v466 = vld [vmem:[%s331 + $0x1f8] sm:$0xff]
        %v467 = vld [vmem:[%s305] sm:$0xf]
        %v468 = vld [vmem:[%s305 + $0x4] sm:$0xf]
        %v469 = vld [vmem:[%s305 + $0x8] sm:$0xf]
        %v470 = vld [vmem:[%s305 + $0xc] sm:$0xf]
        %v471 = vld [vmem:[%s305 + $0x10] sm:$0xf]
        %v472 = vld [vmem:[%s305 + $0x14] sm:$0xf]
        %v473 = vld [vmem:[%s305 + $0x18] sm:$0xf]
        %v474 = vld [vmem:[%s305 + $0x1c] sm:$0xf]
        %v475 = vld [vmem:[%s305 + $0x20] sm:$0xf]
        %v476 = vld [vmem:[%s305 + $0x24] sm:$0xf]
        %v477 = vld [vmem:[%s305 + $0x28] sm:$0xf]
        %v478 = vld [vmem:[%s305 + $0x2c] sm:$0xf]
        %v479 = vld [vmem:[%s305 + $0x30] sm:$0xf]
        %v480 = vld [vmem:[%s305 + $0x34] sm:$0xf]
        %v481 = vld [vmem:[%s305 + $0x38] sm:$0xf]
        %v482 = vld [vmem:[%s305 + $0x3c] sm:$0xf]
        %v483 = vld [vmem:[%s241] sm:$0xff]
        %v484 = vld [vmem:[%s241 + $0x8] sm:$0xff]
        %v485 = vld [vmem:[%s241 + $0x10] sm:$0xff]
        %v486 = vld [vmem:[%s241 + $0x18] sm:$0xff]
        %v487 = vld [vmem:[%s241 + $0x20] sm:$0xff]
        %v488 = vld [vmem:[%s241 + $0x28] sm:$0xff]
        %v489 = vld [vmem:[%s241 + $0x30] sm:$0xff]
        %v490 = vld [vmem:[%s241 + $0x38] sm:$0xff]
        %v507 = vunpack.c.l.b16 %v467
        %v508 = vunpack.c.l.b16 %v468
        %v509 = vunpack.c.l.b16 %v469
        %v510 = vunpack.c.l.b16 %v470
        %v511 = vunpack.c.l.b16 %v471
        %v512 = vunpack.c.l.b16 %v472
        %v513 = vunpack.c.l.b16 %v473
        %v514 = vunpack.c.l.b16 %v474
        %v515 = vunpack.c.l.b16 %v475
        %v516 = vunpack.c.l.b16 %v476
        %v517 = vunpack.c.l.b16 %v477
        %v518 = vunpack.c.l.b16 %v478
        %v519 = vunpack.c.l.b16 %v479
        %v520 = vunpack.c.l.b16 %v480
        %v521 = vunpack.c.l.b16 %v481
        %v522 = vunpack.c.l.b16 %v482
        %v523 = vpack.c.b16 %v508, %v507
        %v524 = vpack.c.b16 %v510, %v509
        %v525 = vpack.c.b16 %v512, %v511
        %v526 = vpack.c.b16 %v514, %v513
        %v527 = vpack.c.b16 %v516, %v515
        %v528 = vpack.c.b16 %v518, %v517
        %v529 = vpack.c.b16 %v520, %v519
        %v530 = vpack.c.b16 %v522, %v521
        %v539 = vunpack.c.l.b16 %v483
        %v540 = vunpack.c.h.b16 %v483
        %v541 = vunpack.c.l.b16 %v484
        %v542 = vunpack.c.h.b16 %v484
        %v543 = vunpack.c.l.b16 %v485
        %v544 = vunpack.c.h.b16 %v485
        %v545 = vunpack.c.l.b16 %v486
        %v546 = vunpack.c.h.b16 %v486
        %v547 = vunpack.c.l.b16 %v487
        %v548 = vunpack.c.h.b16 %v487
        %v549 = vunpack.c.l.b16 %v488
        %v550 = vunpack.c.h.b16 %v488
        %v551 = vunpack.c.l.b16 %v489
        %v552 = vunpack.c.h.b16 %v489
        %v553 = vunpack.c.l.b16 %v490
        %v554 = vunpack.c.h.b16 %v490
        %v555 = vpack.c.b16 %v543, %v539
        %v556 = vpack.c.b16 %v544, %v540
        %v557 = vpack.c.b16 %v545, %v541
        %v558 = vpack.c.b16 %v546, %v542
        %v559 = vpack.c.b16 %v551, %v547
        %v560 = vpack.c.b16 %v552, %v548
        %v561 = vpack.c.b16 %v553, %v549
        %v562 = vpack.c.b16 %v554, %v550
        %vm571 = vcmask 261120
        %v573 = vsel %vm571, %v523, 0
        %v576 = vsel %vm571, %v524, 0
        %v579 = vsel %vm571, %v525, 0
        %v582 = vsel %vm571, %v526, 0
        %v585 = vsel %vm571, %v527, 0
        %v588 = vsel %vm571, %v528, 0
        %v591 = vsel %vm571, %v529, 0
        %v594 = vsel %vm571, %v530, 0
        %596 = vmatpush.bf16.msra.mxu0 0
        %597 = vmatpush.bf16.msra.mxu0 0
        %598 = vmatpush.bf16.msra.mxu0 0
        %599 = vmatpush.bf16.msra.mxu0 0
        %600 = vmatpush.bf16.msra.mxu0 0
        %601 = vmatpush.bf16.msra.mxu0 0
        %602 = vmatpush.bf16.msra.mxu0 %v559
        %603 = vmatpush.bf16.msra.mxu0 %v555
        %604 = vmatmul.bf16.gmra.mxu0 %v573
        %v605 = vpop.f32.mrf.mxu0
        %v606 = vadd.f32 0.0, %v605
        %v607 = vpop.f32.mrf.mxu0
        %v608 = vadd.f32 0.0, %v607
        %609 = vmatmul.bf16.gmra.mxu0 %v576
        %v610 = vpop.f32.mrf.mxu0
        %v611 = vadd.f32 0.0, %v610
        %v612 = vpop.f32.mrf.mxu0
        %v613 = vadd.f32 0.0, %v612
        %614 = vmatmul.bf16.gmra.mxu0 %v579
        %v615 = vpop.f32.mrf.mxu0
        %v616 = vadd.f32 0.0, %v615
        %v617 = vpop.f32.mrf.mxu0
        %v618 = vadd.f32 0.0, %v617
        %619 = vmatmul.bf16.gmra.mxu0 %v582
        %v620 = vpop.f32.mrf.mxu0
        %v621 = vadd.f32 0.0, %v620
        %v622 = vpop.f32.mrf.mxu0
        %v623 = vadd.f32 0.0, %v622
        %624 = vmatmul.bf16.gmra.mxu0 %v585
        %v625 = vpop.f32.mrf.mxu0
        %v626 = vadd.f32 0.0, %v625
        %v627 = vpop.f32.mrf.mxu0
        %v628 = vadd.f32 0.0, %v627
        %629 = vmatmul.bf16.gmra.mxu0 %v588
        %v630 = vpop.f32.mrf.mxu0
        %v631 = vadd.f32 0.0, %v630
        %v632 = vpop.f32.mrf.mxu0
        %v633 = vadd.f32 0.0, %v632
        %634 = vmatmul.bf16.gmra.mxu0 %v591
        %v635 = vpop.f32.mrf.mxu0
        %v636 = vadd.f32 0.0, %v635
        %v637 = vpop.f32.mrf.mxu0
        %v638 = vadd.f32 0.0, %v637
        %639 = vmatmul.bf16.gmra.mxu0 %v594
        %v640 = vpop.f32.mrf.mxu0
        %v641 = vadd.f32 0.0, %v640
        %v642 = vpop.f32.mrf.mxu0
        %v643 = vadd.f32 0.0, %v642
        %644 = vdwg.mxu0
        %645 = vmatpush.bf16.msra.mxu0 0
        %646 = vmatpush.bf16.msra.mxu0 0
        %647 = vmatpush.bf16.msra.mxu0 0
        %648 = vmatpush.bf16.msra.mxu0 0
        %649 = vmatpush.bf16.msra.mxu0 0
        %650 = vmatpush.bf16.msra.mxu0 0
        %651 = vmatpush.bf16.msra.mxu0 %v560
        %652 = vmatpush.bf16.msra.mxu0 %v556
        %653 = vmatmul.bf16.gmra.mxu0 %v573
        %v654 = vpop.f32.mrf.mxu0
        %v655 = vadd.f32 0.0, %v654
        %v656 = vpop.f32.mrf.mxu0
        %v657 = vadd.f32 0.0, %v656
        %658 = vmatmul.bf16.gmra.mxu0 %v576
        %v659 = vpop.f32.mrf.mxu0
        %v660 = vadd.f32 0.0, %v659
        %v661 = vpop.f32.mrf.mxu0
        %v662 = vadd.f32 0.0, %v661
        %663 = vmatmul.bf16.gmra.mxu0 %v579
        %v664 = vpop.f32.mrf.mxu0
        %v665 = vadd.f32 0.0, %v664
        %v666 = vpop.f32.mrf.mxu0
        %v667 = vadd.f32 0.0, %v666
        %668 = vmatmul.bf16.gmra.mxu0 %v582
        %v669 = vpop.f32.mrf.mxu0
        %v670 = vadd.f32 0.0, %v669
        %v671 = vpop.f32.mrf.mxu0
        %v672 = vadd.f32 0.0, %v671
        %673 = vmatmul.bf16.gmra.mxu0 %v585
        %v674 = vpop.f32.mrf.mxu0
        %v675 = vadd.f32 0.0, %v674
        %v676 = vpop.f32.mrf.mxu0
        %v677 = vadd.f32 0.0, %v676
        %678 = vmatmul.bf16.gmra.mxu0 %v588
        %v679 = vpop.f32.mrf.mxu0
        %v680 = vadd.f32 0.0, %v679
        %v681 = vpop.f32.mrf.mxu0
        %v682 = vadd.f32 0.0, %v681
        %683 = vmatmul.bf16.gmra.mxu0 %v591
        %v684 = vpop.f32.mrf.mxu0
        %v685 = vadd.f32 0.0, %v684
        %v686 = vpop.f32.mrf.mxu0
        %v687 = vadd.f32 0.0, %v686
        %688 = vmatmul.bf16.gmra.mxu0 %v594
        %v689 = vpop.f32.mrf.mxu0
        %v690 = vadd.f32 0.0, %v689
        %v691 = vpop.f32.mrf.mxu0
        %v692 = vadd.f32 0.0, %v691
        %693 = vdwg.mxu0
        %694 = vmatpush.bf16.msra.mxu0 0
        %695 = vmatpush.bf16.msra.mxu0 0
        %696 = vmatpush.bf16.msra.mxu0 0
        %697 = vmatpush.bf16.msra.mxu0 0
        %698 = vmatpush.bf16.msra.mxu0 0
        %699 = vmatpush.bf16.msra.mxu0 0
        %700 = vmatpush.bf16.msra.mxu0 %v561
        %701 = vmatpush.bf16.msra.mxu0 %v557
        %702 = vmatmul.bf16.gmra.mxu0 %v573
        %v703 = vpop.f32.mrf.mxu0
        %v704 = vadd.f32 0.0, %v703
        %v705 = vpop.f32.mrf.mxu0
        %v706 = vadd.f32 0.0, %v705
        %707 = vmatmul.bf16.gmra.mxu0 %v576
        %v708 = vpop.f32.mrf.mxu0
        %v709 = vadd.f32 0.0, %v708
        %v710 = vpop.f32.mrf.mxu0
        %v711 = vadd.f32 0.0, %v710
        %712 = vmatmul.bf16.gmra.mxu0 %v579
        %v713 = vpop.f32.mrf.mxu0
        %v714 = vadd.f32 0.0, %v713
        %v715 = vpop.f32.mrf.mxu0
        %v716 = vadd.f32 0.0, %v715
        %717 = vmatmul.bf16.gmra.mxu0 %v582
        %v718 = vpop.f32.mrf.mxu0
        %v719 = vadd.f32 0.0, %v718
        %v720 = vpop.f32.mrf.mxu0
        %v721 = vadd.f32 0.0, %v720
        %722 = vmatmul.bf16.gmra.mxu0 %v585
        %v723 = vpop.f32.mrf.mxu0
        %v724 = vadd.f32 0.0, %v723
        %v725 = vpop.f32.mrf.mxu0
        %v726 = vadd.f32 0.0, %v725
        %727 = vmatmul.bf16.gmra.mxu0 %v588
        %v728 = vpop.f32.mrf.mxu0
        %v729 = vadd.f32 0.0, %v728
        %v730 = vpop.f32.mrf.mxu0
        %v731 = vadd.f32 0.0, %v730
        %732 = vmatmul.bf16.gmra.mxu0 %v591
        %v733 = vpop.f32.mrf.mxu0
        %v734 = vadd.f32 0.0, %v733
        %v735 = vpop.f32.mrf.mxu0
        %v736 = vadd.f32 0.0, %v735
        %737 = vmatmul.bf16.gmra.mxu0 %v594
        %v738 = vpop.f32.mrf.mxu0
        %v739 = vadd.f32 0.0, %v738
        %v740 = vpop.f32.mrf.mxu0
        %v741 = vadd.f32 0.0, %v740
        %742 = vdwg.mxu0
        %743 = vmatpush.bf16.msra.mxu0 0
        %744 = vmatpush.bf16.msra.mxu0 0
        %745 = vmatpush.bf16.msra.mxu0 0
        %746 = vmatpush.bf16.msra.mxu0 0
        %747 = vmatpush.bf16.msra.mxu0 0
        %748 = vmatpush.bf16.msra.mxu0 0
        %749 = vmatpush.bf16.msra.mxu0 %v562
        %750 = vmatpush.bf16.msra.mxu0 %v558
        %751 = vmatmul.bf16.gmra.mxu0 %v573
        %v752 = vpop.f32.mrf.mxu0
        %v753 = vadd.f32 0.0, %v752
        %v754 = vpop.f32.mrf.mxu0
        %v755 = vadd.f32 0.0, %v754
        %756 = vmatmul.bf16.gmra.mxu0 %v576
        %v757 = vpop.f32.mrf.mxu0
        %v758 = vadd.f32 0.0, %v757
        %v759 = vpop.f32.mrf.mxu0
        %v760 = vadd.f32 0.0, %v759
        %761 = vmatmul.bf16.gmra.mxu0 %v579
        %v762 = vpop.f32.mrf.mxu0
        %v763 = vadd.f32 0.0, %v762
        %v764 = vpop.f32.mrf.mxu0
        %v765 = vadd.f32 0.0, %v764
        %766 = vmatmul.bf16.gmra.mxu0 %v582
        %v767 = vpop.f32.mrf.mxu0
        %v768 = vadd.f32 0.0, %v767
        %v769 = vpop.f32.mrf.mxu0
        %v770 = vadd.f32 0.0, %v769
        %771 = vmatmul.bf16.gmra.mxu0 %v585
        %v772 = vpop.f32.mrf.mxu0
        %v773 = vadd.f32 0.0, %v772
        %v774 = vpop.f32.mrf.mxu0
        %v775 = vadd.f32 0.0, %v774
        %776 = vmatmul.bf16.gmra.mxu0 %v588
        %v777 = vpop.f32.mrf.mxu0
        %v778 = vadd.f32 0.0, %v777
        %v779 = vpop.f32.mrf.mxu0
        %v780 = vadd.f32 0.0, %v779
        %781 = vmatmul.bf16.gmra.mxu0 %v591
        %v782 = vpop.f32.mrf.mxu0
        %v783 = vadd.f32 0.0, %v782
        %v784 = vpop.f32.mrf.mxu0
        %v785 = vadd.f32 0.0, %v784
        %786 = vmatmul.bf16.gmra.mxu0 %v594
        %v787 = vpop.f32.mrf.mxu0
        %v788 = vadd.f32 0.0, %v787
        %v789 = vpop.f32.mrf.mxu0
        %v790 = vadd.f32 0.0, %v789
        %791 = vdwg.mxu0
        %v792 = vadd.f32 %v403, %v606
        %v793 = vadd.f32 %v404, %v655
        %v794 = vadd.f32 %v405, %v704
        %v795 = vadd.f32 %v406, %v753
        %v796 = vadd.f32 %v407, %v608
        %v797 = vadd.f32 %v408, %v657
        %v798 = vadd.f32 %v409, %v706
        %v799 = vadd.f32 %v410, %v755
        %v800 = vadd.f32 %v411, %v611
        %v801 = vadd.f32 %v412, %v660
        %v802 = vadd.f32 %v413, %v709
        %v803 = vadd.f32 %v414, %v758
        %v804 = vadd.f32 %v415, %v613
        %v805 = vadd.f32 %v416, %v662
        %v806 = vadd.f32 %v417, %v711
        %v807 = vadd.f32 %v418, %v760
        %v808 = vadd.f32 %v419, %v616
        %v809 = vadd.f32 %v420, %v665
        %v810 = vadd.f32 %v421, %v714
        %v811 = vadd.f32 %v422, %v763
        %v812 = vadd.f32 %v423, %v618
        %v813 = vadd.f32 %v424, %v667
        %v814 = vadd.f32 %v425, %v716
        %v815 = vadd.f32 %v426, %v765
        %v816 = vadd.f32 %v427, %v621
        %v817 = vadd.f32 %v428, %v670
        %v818 = vadd.f32 %v429, %v719
        %v819 = vadd.f32 %v430, %v768
        %v820 = vadd.f32 %v431, %v623
        %v821 = vadd.f32 %v432, %v672
        %v822 = vadd.f32 %v433, %v721
        %v823 = vadd.f32 %v434, %v770
        %v824 = vadd.f32 %v435, %v626
        %v825 = vadd.f32 %v436, %v675
        %v826 = vadd.f32 %v437, %v724
        %v827 = vadd.f32 %v438, %v773
        %v828 = vadd.f32 %v439, %v628
        %v829 = vadd.f32 %v440, %v677
        %v830 = vadd.f32 %v441, %v726
        %v831 = vadd.f32 %v442, %v775
        %v832 = vadd.f32 %v443, %v631
        %v833 = vadd.f32 %v444, %v680
        %v834 = vadd.f32 %v445, %v729
        %v835 = vadd.f32 %v446, %v778
        %v836 = vadd.f32 %v447, %v633
        %v837 = vadd.f32 %v448, %v682
        %v838 = vadd.f32 %v449, %v731
        %v839 = vadd.f32 %v450, %v780
        %v840 = vadd.f32 %v451, %v636
        %v841 = vadd.f32 %v452, %v685
        %v842 = vadd.f32 %v453, %v734
        %v843 = vadd.f32 %v454, %v783
        %v844 = vadd.f32 %v455, %v638
        %v845 = vadd.f32 %v456, %v687
        %v846 = vadd.f32 %v457, %v736
        %v847 = vadd.f32 %v458, %v785
        %v848 = vadd.f32 %v459, %v641
        %v849 = vadd.f32 %v460, %v690
        %v850 = vadd.f32 %v461, %v739
        %v851 = vadd.f32 %v462, %v788
        %v852 = vadd.f32 %v463, %v643
        %v853 = vadd.f32 %v464, %v692
        %v854 = vadd.f32 %v465, %v741
        %v855 = vadd.f32 %v466, %v790
        %856 = vst [vmem:[%s331] sm:$0xff] %v792
        %857 = vst [vmem:[%s331 + $0x8] sm:$0xff] %v793
        %858 = vst [vmem:[%s331 + $0x10] sm:$0xff] %v794
        %859 = vst [vmem:[%s331 + $0x18] sm:$0xff] %v795
        %860 = vst [vmem:[%s331 + $0x20] sm:$0xff] %v796
        %861 = vst [vmem:[%s331 + $0x28] sm:$0xff] %v797
        %862 = vst [vmem:[%s331 + $0x30] sm:$0xff] %v798
        %863 = vst [vmem:[%s331 + $0x38] sm:$0xff] %v799
        %864 = vst [vmem:[%s331 + $0x40] sm:$0xff] %v800
        %865 = vst [vmem:[%s331 + $0x48] sm:$0xff] %v801
        %866 = vst [vmem:[%s331 + $0x50] sm:$0xff] %v802
        %867 = vst [vmem:[%s331 + $0x58] sm:$0xff] %v803
        %868 = vst [vmem:[%s331 + $0x60] sm:$0xff] %v804
        %869 = vst [vmem:[%s331 + $0x68] sm:$0xff] %v805
        %870 = vst [vmem:[%s331 + $0x70] sm:$0xff] %v806
        %871 = vst [vmem:[%s331 + $0x78] sm:$0xff] %v807
        %872 = vst [vmem:[%s331 + $0x80] sm:$0xff] %v808
        %873 = vst [vmem:[%s331 + $0x88] sm:$0xff] %v809
        %874 = vst [vmem:[%s331 + $0x90] sm:$0xff] %v810
        %875 = vst [vmem:[%s331 + $0x98] sm:$0xff] %v811
        %876 = vst [vmem:[%s331 + $0xa0] sm:$0xff] %v812
        %877 = vst [vmem:[%s331 + $0xa8] sm:$0xff] %v813
        %878 = vst [vmem:[%s331 + $0xb0] sm:$0xff] %v814
        %879 = vst [vmem:[%s331 + $0xb8] sm:$0xff] %v815
        %880 = vst [vmem:[%s331 + $0xc0] sm:$0xff] %v816
        %881 = vst [vmem:[%s331 + $0xc8] sm:$0xff] %v817
        %882 = vst [vmem:[%s331 + $0xd0] sm:$0xff] %v818
        %883 = vst [vmem:[%s331 + $0xd8] sm:$0xff] %v819
        %884 = vst [vmem:[%s331 + $0xe0] sm:$0xff] %v820
        %885 = vst [vmem:[%s331 + $0xe8] sm:$0xff] %v821
        %886 = vst [vmem:[%s331 + $0xf0] sm:$0xff] %v822
        %887 = vst [vmem:[%s331 + $0xf8] sm:$0xff] %v823
        %888 = vst [vmem:[%s331 + $0x100] sm:$0xff] %v824
        %889 = vst [vmem:[%s331 + $0x108] sm:$0xff] %v825
        %890 = vst [vmem:[%s331 + $0x110] sm:$0xff] %v826
        %891 = vst [vmem:[%s331 + $0x118] sm:$0xff] %v827
        %892 = vst [vmem:[%s331 + $0x120] sm:$0xff] %v828
        %893 = vst [vmem:[%s331 + $0x128] sm:$0xff] %v829
        %894 = vst [vmem:[%s331 + $0x130] sm:$0xff] %v830
        %895 = vst [vmem:[%s331 + $0x138] sm:$0xff] %v831
        %896 = vst [vmem:[%s331 + $0x140] sm:$0xff] %v832
        %897 = vst [vmem:[%s331 + $0x148] sm:$0xff] %v833
        %898 = vst [vmem:[%s331 + $0x150] sm:$0xff] %v834
        %899 = vst [vmem:[%s331 + $0x158] sm:$0xff] %v835
        %900 = vst [vmem:[%s331 + $0x160] sm:$0xff] %v836
        %901 = vst [vmem:[%s331 + $0x168] sm:$0xff] %v837
        %902 = vst [vmem:[%s331 + $0x170] sm:$0xff] %v838
        %903 = vst [vmem:[%s331 + $0x178] sm:$0xff] %v839
        %904 = vst [vmem:[%s331 + $0x180] sm:$0xff] %v840
        %905 = vst [vmem:[%s331 + $0x188] sm:$0xff] %v841
        %906 = vst [vmem:[%s331 + $0x190] sm:$0xff] %v842
        %907 = vst [vmem:[%s331 + $0x198] sm:$0xff] %v843
        %908 = vst [vmem:[%s331 + $0x1a0] sm:$0xff] %v844
        %909 = vst [vmem:[%s331 + $0x1a8] sm:$0xff] %v845
        %910 = vst [vmem:[%s331 + $0x1b0] sm:$0xff] %v846
        %911 = vst [vmem:[%s331 + $0x1b8] sm:$0xff] %v847
        %912 = vst [vmem:[%s331 + $0x1c0] sm:$0xff] %v848
        %913 = vst [vmem:[%s331 + $0x1c8] sm:$0xff] %v849
        %914 = vst [vmem:[%s331 + $0x1d0] sm:$0xff] %v850
        %915 = vst [vmem:[%s331 + $0x1d8] sm:$0xff] %v851
        %916 = vst [vmem:[%s331 + $0x1e0] sm:$0xff] %v852
        %917 = vst [vmem:[%s331 + $0x1e8] sm:$0xff] %v853
        %918 = vst [vmem:[%s331 + $0x1f0] sm:$0xff] %v854
        %919 = vst [vmem:[%s331 + $0x1f8] sm:$0xff] %v855
        // Predicated region
        $region41: #{aggregation_feature_forward.3} parent=31 // pred_check
          %p920 = pneg %p335
        $region42: #{aggregation_feature_forward.3} parent=31 // pred_check_branch
          %922 = sbr.rel (%p920) target = $region44
        $region43: #{aggregation_feature_forward.3} parent=31 // pred_region
          %v923 = vld [vmem:[%s331] sm:$0xff]
          %v924 = vld [vmem:[%s331 + $0x8] sm:$0xff]
          %v925 = vld [vmem:[%s331 + $0x10] sm:$0xff]
          %v926 = vld [vmem:[%s331 + $0x18] sm:$0xff]
          %v927 = vld [vmem:[%s331 + $0x20] sm:$0xff]
          %v928 = vld [vmem:[%s331 + $0x28] sm:$0xff]
          %v929 = vld [vmem:[%s331 + $0x30] sm:$0xff]
          %v930 = vld [vmem:[%s331 + $0x38] sm:$0xff]
          %v931 = vld [vmem:[%s331 + $0x40] sm:$0xff]
          %v932 = vld [vmem:[%s331 + $0x48] sm:$0xff]
          %v933 = vld [vmem:[%s331 + $0x50] sm:$0xff]
          %v934 = vld [vmem:[%s331 + $0x58] sm:$0xff]
          %v935 = vld [vmem:[%s331 + $0x60] sm:$0xff]
          %v936 = vld [vmem:[%s331 + $0x68] sm:$0xff]
          %v937 = vld [vmem:[%s331 + $0x70] sm:$0xff]
          %v938 = vld [vmem:[%s331 + $0x78] sm:$0xff]
          %v939 = vld [vmem:[%s331 + $0x80] sm:$0xff]
          %v940 = vld [vmem:[%s331 + $0x88] sm:$0xff]
          %v941 = vld [vmem:[%s331 + $0x90] sm:$0xff]
          %v942 = vld [vmem:[%s331 + $0x98] sm:$0xff]
          %v943 = vld [vmem:[%s331 + $0xa0] sm:$0xff]
          %v944 = vld [vmem:[%s331 + $0xa8] sm:$0xff]
          %v945 = vld [vmem:[%s331 + $0xb0] sm:$0xff]
          %v946 = vld [vmem:[%s331 + $0xb8] sm:$0xff]
          %v947 = vld [vmem:[%s331 + $0xc0] sm:$0xff]
          %v948 = vld [vmem:[%s331 + $0xc8] sm:$0xff]
          %v949 = vld [vmem:[%s331 + $0xd0] sm:$0xff]
          %v950 = vld [vmem:[%s331 + $0xd8] sm:$0xff]
          %v951 = vld [vmem:[%s331 + $0xe0] sm:$0xff]
          %v952 = vld [vmem:[%s331 + $0xe8] sm:$0xff]
          %v953 = vld [vmem:[%s331 + $0xf0] sm:$0xff]
          %v954 = vld [vmem:[%s331 + $0xf8] sm:$0xff]
          %v955 = vld [vmem:[%s331 + $0x100] sm:$0xff]
          %v956 = vld [vmem:[%s331 + $0x108] sm:$0xff]
          %v957 = vld [vmem:[%s331 + $0x110] sm:$0xff]
          %v958 = vld [vmem:[%s331 + $0x118] sm:$0xff]
          %v959 = vld [vmem:[%s331 + $0x120] sm:$0xff]
          %v960 = vld [vmem:[%s331 + $0x128] sm:$0xff]
          %v961 = vld [vmem:[%s331 + $0x130] sm:$0xff]
          %v962 = vld [vmem:[%s331 + $0x138] sm:$0xff]
          %v963 = vld [vmem:[%s331 + $0x140] sm:$0xff]
          %v964 = vld [vmem:[%s331 + $0x148] sm:$0xff]
          %v965 = vld [vmem:[%s331 + $0x150] sm:$0xff]
          %v966 = vld [vmem:[%s331 + $0x158] sm:$0xff]
          %v967 = vld [vmem:[%s331 + $0x160] sm:$0xff]
          %v968 = vld [vmem:[%s331 + $0x168] sm:$0xff]
          %v969 = vld [vmem:[%s331 + $0x170] sm:$0xff]
          %v970 = vld [vmem:[%s331 + $0x178] sm:$0xff]
          %v971 = vld [vmem:[%s331 + $0x180] sm:$0xff]
          %v972 = vld [vmem:[%s331 + $0x188] sm:$0xff]
          %v973 = vld [vmem:[%s331 + $0x190] sm:$0xff]
          %v974 = vld [vmem:[%s331 + $0x198] sm:$0xff]
          %v975 = vld [vmem:[%s331 + $0x1a0] sm:$0xff]
          %v976 = vld [vmem:[%s331 + $0x1a8] sm:$0xff]
          %v977 = vld [vmem:[%s331 + $0x1b0] sm:$0xff]
          %v978 = vld [vmem:[%s331 + $0x1b8] sm:$0xff]
          %v979 = vld [vmem:[%s331 + $0x1c0] sm:$0xff]
          %v980 = vld [vmem:[%s331 + $0x1c8] sm:$0xff]
          %v981 = vld [vmem:[%s331 + $0x1d0] sm:$0xff]
          %v982 = vld [vmem:[%s331 + $0x1d8] sm:$0xff]
          %v983 = vld [vmem:[%s331 + $0x1e0] sm:$0xff]
          %v984 = vld [vmem:[%s331 + $0x1e8] sm:$0xff]
          %v985 = vld [vmem:[%s331 + $0x1f0] sm:$0xff]
          %v986 = vld [vmem:[%s331 + $0x1f8] sm:$0xff]
          %v987 = vld [vmem:[%s316] sm:$0xf]
          %v989 = vperm.slane %v987, 0
          %v990 = vperm.slane %v987, 1
          %v991 = vperm.slane %v987, 2
          %v992 = vperm.slane %v987, 3
          %v997 = vadd.f32 %v923, %v989
          %v998 = vadd.f32 %v924, %v990
          %v999 = vadd.f32 %v925, %v991
          %v1000 = vadd.f32 %v926, %v992
          %v1001 = vadd.f32 %v927, %v989
          %v1002 = vadd.f32 %v928, %v990
          %v1003 = vadd.f32 %v929, %v991
          %v1004 = vadd.f32 %v930, %v992
          %v1005 = vadd.f32 %v931, %v989
          %v1006 = vadd.f32 %v932, %v990
          %v1007 = vadd.f32 %v933, %v991
          %v1008 = vadd.f32 %v934, %v992
          %v1009 = vadd.f32 %v935, %v989
          %v1010 = vadd.f32 %v936, %v990
          %v1011 = vadd.f32 %v937, %v991
          %v1012 = vadd.f32 %v938, %v992
          %v1013 = vadd.f32 %v939, %v989
          %v1014 = vadd.f32 %v940, %v990
          %v1015 = vadd.f32 %v941, %v991
          %v1016 = vadd.f32 %v942, %v992
          %v1017 = vadd.f32 %v943, %v989
          %v1018 = vadd.f32 %v944, %v990
          %v1019 = vadd.f32 %v945, %v991
          %v1020 = vadd.f32 %v946, %v992
          %v1021 = vadd.f32 %v947, %v989
          %v1022 = vadd.f32 %v948, %v990
          %v1023 = vadd.f32 %v949, %v991
          %v1024 = vadd.f32 %v950, %v992
          %v1025 = vadd.f32 %v951, %v989
          %v1026 = vadd.f32 %v952, %v990
          %v1027 = vadd.f32 %v953, %v991
          %v1028 = vadd.f32 %v954, %v992
          %v1029 = vadd.f32 %v955, %v989
          %v1030 = vadd.f32 %v956, %v990
          %v1031 = vadd.f32 %v957, %v991
          %v1032 = vadd.f32 %v958, %v992
          %v1033 = vadd.f32 %v959, %v989
          %v1034 = vadd.f32 %v960, %v990
          %v1035 = vadd.f32 %v961, %v991
          %v1036 = vadd.f32 %v962, %v992
          %v1037 = vadd.f32 %v963, %v989
          %v1038 = vadd.f32 %v964, %v990
          %v1039 = vadd.f32 %v965, %v991
          %v1040 = vadd.f32 %v966, %v992
          %v1041 = vadd.f32 %v967, %v989
          %v1042 = vadd.f32 %v968, %v990
          %v1043 = vadd.f32 %v969, %v991
          %v1044 = vadd.f32 %v970, %v992
          %v1045 = vadd.f32 %v971, %v989
          %v1046 = vadd.f32 %v972, %v990
          %v1047 = vadd.f32 %v973, %v991
          %v1048 = vadd.f32 %v974, %v992
          %v1049 = vadd.f32 %v975, %v989
          %v1050 = vadd.f32 %v976, %v990
          %v1051 = vadd.f32 %v977, %v991
          %v1052 = vadd.f32 %v978, %v992
          %v1053 = vadd.f32 %v979, %v989
          %v1054 = vadd.f32 %v980, %v990
          %v1055 = vadd.f32 %v981, %v991
          %v1056 = vadd.f32 %v982, %v992
          %v1057 = vadd.f32 %v983, %v989
          %v1058 = vadd.f32 %v984, %v990
          %v1059 = vadd.f32 %v985, %v991
          %v1060 = vadd.f32 %v986, %v992
          %v1061 = vmax.f32 %v997, 0.0
          %v1062 = vmax.f32 %v998, 0.0
          %v1063 = vmax.f32 %v999, 0.0
          %v1064 = vmax.f32 %v1000, 0.0
          %v1065 = vmax.f32 %v1001, 0.0
          %v1066 = vmax.f32 %v1002, 0.0
          %v1067 = vmax.f32 %v1003, 0.0
          %v1068 = vmax.f32 %v1004, 0.0
          %v1069 = vmax.f32 %v1005, 0.0
          %v1070 = vmax.f32 %v1006, 0.0
          %v1071 = vmax.f32 %v1007, 0.0
          %v1072 = vmax.f32 %v1008, 0.0
          %v1073 = vmax.f32 %v1009, 0.0
          %v1074 = vmax.f32 %v1010, 0.0
          %v1075 = vmax.f32 %v1011, 0.0
          %v1076 = vmax.f32 %v1012, 0.0
          %v1077 = vmax.f32 %v1013, 0.0
          %v1078 = vmax.f32 %v1014, 0.0
          %v1079 = vmax.f32 %v1015, 0.0
          %v1080 = vmax.f32 %v1016, 0.0
          %v1081 = vmax.f32 %v1017, 0.0
          %v1082 = vmax.f32 %v1018, 0.0
          %v1083 = vmax.f32 %v1019, 0.0
          %v1084 = vmax.f32 %v1020, 0.0
          %v1085 = vmax.f32 %v1021, 0.0
          %v1086 = vmax.f32 %v1022, 0.0
          %v1087 = vmax.f32 %v1023, 0.0
          %v1088 = vmax.f32 %v1024, 0.0
          %v1089 = vmax.f32 %v1025, 0.0
          %v1090 = vmax.f32 %v1026, 0.0
          %v1091 = vmax.f32 %v1027, 0.0
          %v1092 = vmax.f32 %v1028, 0.0
          %v1093 = vmax.f32 %v1029, 0.0
          %v1094 = vmax.f32 %v1030, 0.0
          %v1095 = vmax.f32 %v1031, 0.0
          %v1096 = vmax.f32 %v1032, 0.0
          %v1097 = vmax.f32 %v1033, 0.0
          %v1098 = vmax.f32 %v1034, 0.0
          %v1099 = vmax.f32 %v1035, 0.0
          %v1100 = vmax.f32 %v1036, 0.0
          %v1101 = vmax.f32 %v1037, 0.0
          %v1102 = vmax.f32 %v1038, 0.0
          %v1103 = vmax.f32 %v1039, 0.0
          %v1104 = vmax.f32 %v1040, 0.0
          %v1105 = vmax.f32 %v1041, 0.0
          %v1106 = vmax.f32 %v1042, 0.0
          %v1107 = vmax.f32 %v1043, 0.0
          %v1108 = vmax.f32 %v1044, 0.0
          %v1109 = vmax.f32 %v1045, 0.0
          %v1110 = vmax.f32 %v1046, 0.0
          %v1111 = vmax.f32 %v1047, 0.0
          %v1112 = vmax.f32 %v1048, 0.0
          %v1113 = vmax.f32 %v1049, 0.0
          %v1114 = vmax.f32 %v1050, 0.0
          %v1115 = vmax.f32 %v1051, 0.0
          %v1116 = vmax.f32 %v1052, 0.0
          %v1117 = vmax.f32 %v1053, 0.0
          %v1118 = vmax.f32 %v1054, 0.0
          %v1119 = vmax.f32 %v1055, 0.0
          %v1120 = vmax.f32 %v1056, 0.0
          %v1121 = vmax.f32 %v1057, 0.0
          %v1122 = vmax.f32 %v1058, 0.0
          %v1123 = vmax.f32 %v1059, 0.0
          %v1124 = vmax.f32 %v1060, 0.0
          %1125 = vst [vmem:[%s331] sm:$0xff] %v1061
          %1126 = vst [vmem:[%s331 + $0x8] sm:$0xff] %v1062
          %1127 = vst [vmem:[%s331 + $0x10] sm:$0xff] %v1063
          %1128 = vst [vmem:[%s331 + $0x18] sm:$0xff] %v1064
          %1129 = vst [vmem:[%s331 + $0x20] sm:$0xff] %v1065
          %1130 = vst [vmem:[%s331 + $0x28] sm:$0xff] %v1066
          %1131 = vst [vmem:[%s331 + $0x30] sm:$0xff] %v1067
          %1132 = vst [vmem:[%s331 + $0x38] sm:$0xff] %v1068
          %1133 = vst [vmem:[%s331 + $0x40] sm:$0xff] %v1069
          %1134 = vst [vmem:[%s331 + $0x48] sm:$0xff] %v1070
          %1135 = vst [vmem:[%s331 + $0x50] sm:$0xff] %v1071
          %1136 = vst [vmem:[%s331 + $0x58] sm:$0xff] %v1072
          %1137 = vst [vmem:[%s331 + $0x60] sm:$0xff] %v1073
          %1138 = vst [vmem:[%s331 + $0x68] sm:$0xff] %v1074
          %1139 = vst [vmem:[%s331 + $0x70] sm:$0xff] %v1075
          %1140 = vst [vmem:[%s331 + $0x78] sm:$0xff] %v1076
          %1141 = vst [vmem:[%s331 + $0x80] sm:$0xff] %v1077
          %1142 = vst [vmem:[%s331 + $0x88] sm:$0xff] %v1078
          %1143 = vst [vmem:[%s331 + $0x90] sm:$0xff] %v1079
          %1144 = vst [vmem:[%s331 + $0x98] sm:$0xff] %v1080
          %1145 = vst [vmem:[%s331 + $0xa0] sm:$0xff] %v1081
          %1146 = vst [vmem:[%s331 + $0xa8] sm:$0xff] %v1082
          %1147 = vst [vmem:[%s331 + $0xb0] sm:$0xff] %v1083
          %1148 = vst [vmem:[%s331 + $0xb8] sm:$0xff] %v1084
          %1149 = vst [vmem:[%s331 + $0xc0] sm:$0xff] %v1085
          %1150 = vst [vmem:[%s331 + $0xc8] sm:$0xff] %v1086
          %1151 = vst [vmem:[%s331 + $0xd0] sm:$0xff] %v1087
          %1152 = vst [vmem:[%s331 + $0xd8] sm:$0xff] %v1088
          %1153 = vst [vmem:[%s331 + $0xe0] sm:$0xff] %v1089
          %1154 = vst [vmem:[%s331 + $0xe8] sm:$0xff] %v1090
          %1155 = vst [vmem:[%s331 + $0xf0] sm:$0xff] %v1091
          %1156 = vst [vmem:[%s331 + $0xf8] sm:$0xff] %v1092
          %1157 = vst [vmem:[%s331 + $0x100] sm:$0xff] %v1093
          %1158 = vst [vmem:[%s331 + $0x108] sm:$0xff] %v1094
          %1159 = vst [vmem:[%s331 + $0x110] sm:$0xff] %v1095
          %1160 = vst [vmem:[%s331 + $0x118] sm:$0xff] %v1096
          %1161 = vst [vmem:[%s331 + $0x120] sm:$0xff] %v1097
          %1162 = vst [vmem:[%s331 + $0x128] sm:$0xff] %v1098
          %1163 = vst [vmem:[%s331 + $0x130] sm:$0xff] %v1099
          %1164 = vst [vmem:[%s331 + $0x138] sm:$0xff] %v1100
          %1165 = vst [vmem:[%s331 + $0x140] sm:$0xff] %v1101
          %1166 = vst [vmem:[%s331 + $0x148] sm:$0xff] %v1102
          %1167 = vst [vmem:[%s331 + $0x150] sm:$0xff] %v1103
          %1168 = vst [vmem:[%s331 + $0x158] sm:$0xff] %v1104
          %1169 = vst [vmem:[%s331 + $0x160] sm:$0xff] %v1105
          %1170 = vst [vmem:[%s331 + $0x168] sm:$0xff] %v1106
          %1171 = vst [vmem:[%s331 + $0x170] sm:$0xff] %v1107
          %1172 = vst [vmem:[%s331 + $0x178] sm:$0xff] %v1108
          %1173 = vst [vmem:[%s331 + $0x180] sm:$0xff] %v1109
          %1174 = vst [vmem:[%s331 + $0x188] sm:$0xff] %v1110
          %1175 = vst [vmem:[%s331 + $0x190] sm:$0xff] %v1111
          %1176 = vst [vmem:[%s331 + $0x198] sm:$0xff] %v1112
          %1177 = vst [vmem:[%s331 + $0x1a0] sm:$0xff] %v1113
          %1178 = vst [vmem:[%s331 + $0x1a8] sm:$0xff] %v1114
          %1179 = vst [vmem:[%s331 + $0x1b0] sm:$0xff] %v1115
          %1180 = vst [vmem:[%s331 + $0x1b8] sm:$0xff] %v1116
          %1181 = vst [vmem:[%s331 + $0x1c0] sm:$0xff] %v1117
          %1182 = vst [vmem:[%s331 + $0x1c8] sm:$0xff] %v1118
          %1183 = vst [vmem:[%s331 + $0x1d0] sm:$0xff] %v1119
          %1184 = vst [vmem:[%s331 + $0x1d8] sm:$0xff] %v1120
          %1185 = vst [vmem:[%s331 + $0x1e0] sm:$0xff] %v1121
          %1186 = vst [vmem:[%s331 + $0x1e8] sm:$0xff] %v1122
          %1187 = vst [vmem:[%s331 + $0x1f0] sm:$0xff] %v1123
          %1188 = vst [vmem:[%s331 + $0x1f8] sm:$0xff] %v1124
        $region44: #{aggregation_feature_forward.3} parent=31 // pred_fallthru
          _
        %s1189 = smul.u32 16, %s24
        %s1190 = smul.u32 4, %s25
        %p1191 = scmp.lt.s32.totalorder %s23, 3
        %s1192 = scalar_select %p1191, %s23, 3
        %p1193 = scmp.lt.s32.totalorder %s1189, 15
        %s1194 = scalar_select %p1193, %s1189, 15
        %p1195 = scmp.lt.s32.totalorder %s1190, 3
        %s1196 = scalar_select %p1195, %s1190, 3
        %s1197 = smul.addr %s1194, 4
        %s1198 = sadd.s32 %s1196, %s1197
        %s1199 = smul.addr %s1192, 64
        %s1200 = sadd.s32 %s1198, %s1199
        %s1201 = smul.addr %s1200, 8
        %s1202 = scalar_lea.vmem %s3, %s1201
        // Predicated region
        $region45: #{aggregation_feature_forward.3} parent=31 // pred_check
          %p1203 = pneg %p153
        $region46: #{aggregation_feature_forward.3} parent=31 // pred_check_branch
          %1205 = sbr.rel (%p1203) target = $region48
        $region47: #{aggregation_feature_forward.3} parent=31 // pred_region
          %s1206 = smul.u32 16, %s24
          %s1207 = smul.u32 4, %s25
        $region48: #{aggregation_feature_forward.3} parent=31 // pred_fallthru
          _
      $region32: #{aggregation_feature_forward.3} parent=5 // pred_fallthru
        _
      %p1208 = scmp.le.s32.totalorder 2, %s12
      // Predicated region
      $region49: #{aggregation_feature_forward.3} parent=5 // pred_check
        %p1209 = pneg %p1208
      $region50: #{aggregation_feature_forward.3} parent=5 // pred_check_branch
        %1211 = sbr.rel (%p1209) target = $region52
      $region51: #{aggregation_feature_forward.3} parent=5 // pred_region
        %s1212 = ssub.s32 %s12, 2
        // Predicated region
        $region53: #{aggregation_feature_forward.3} parent=51 // pred_check
          %p1213 = pneg %p159
        $region54: #{aggregation_feature_forward.3} parent=51 // pred_check_branch
          %1215 = sbr.rel (%p1213) target = $region56
        $region55: #{aggregation_feature_forward.3} parent=51 // pred_region
          %s1216 = smul.u32 16, %s28
          %s1217 = smul.u32 4, %s29
          %p1218 = scmp.lt.s32.totalorder %s27, 3
          %s1219 = scalar_select %p1218, %s27, 3
          %p1220 = scmp.lt.s32.totalorder %s1216, 15
          %s1221 = scalar_select %p1220, %s1216, 15
          %p1222 = scmp.lt.s32.totalorder %s1217, 3
          %s1223 = scalar_select %p1222, %s1217, 3
          %s1224 = smul.addr %s1221, 4
          %s1225 = sadd.s32 %s1223, %s1224
          %s1226 = smul.addr %s1219, 64
          %s1227 = sadd.s32 %s1225, %s1226
          %s1228 = smul.addr %s1227, 8
          %s1229 = scalar_lea.vmem %s3, %s1228
        $region56: #{aggregation_feature_forward.3} parent=51 // pred_fallthru
          _
      $region52: #{aggregation_feature_forward.3} parent=5 // pred_fallthru
        _
    $region6: #{aggregation_feature_forward.3} parent=1 // loop_footer
      %s16 = sadd.s32 1, %s12
    $region7: #{aggregation_feature_forward.3} parent=1 // loop_footer_branch
      %11 = sbr.rel target = $region3
    $region8: #{aggregation_feature_forward.3} parent=1 // loop_exit
      _
    %1230 = vsyncpa [#allocation3], 1
    %s1231 = scalar_lea.sflag [#allocation3], 1
    %1232 = vsyncpa %s1231, 1

// kernel: aggregation_feature_forward.5
$region0: #{aggregation_feature_forward.5}
  #allocation0 [shape = 'u32[]', space=smem, size = 0x4, offset = 0x4, fixed_abs, tag = 'smem constant byte address 0x4 - core index']
  #allocation1 [shape = 'u32[72,128]{1,0:T(1,128)}', space=vmem, size = 0x9000, scoped, tag = 'internal scratch']
  %s0 = inlined_call_operand.vmem [shape: bf16[4,16,512], index: 0, kind: input, shape index: {}]
  %s1 = inlined_call_operand.vmem [shape: bf16[4,512,1024], index: 1, kind: input, shape index: {}]
  %s2 = inlined_call_operand.vmem [shape: f32[4,1,1024], index: 2, kind: input, shape index: {}]
  %s3 = inlined_call_operand.vmem [shape: f32[4,2,1024], index: 3, kind: output, shape index: {}]
  %s4 = sld [smem:[#allocation0]]
  $region68: #{aggregation_feature_forward.5} parent=0
    _
  %s6 = ssub.s32 1, %s4
  %s7 = scalar_select 0, %s6, %s4
  $region1: #{aggregation_feature_forward.5} parent=0
    #allocation2 [shape = 'u8[1048576]{0}', space=vmem, size = 0x100000, scoped, tag = 'input window, operand 1']
    loop: start=0, step=1, limit=10
    $region2: #{aggregation_feature_forward.5} parent=1 // loop_pre_header
      _
    $region3: #{aggregation_feature_forward.5} parent=1 // loop_header
      %s9 = sphi 0, %s13
      %p10 = scmp.ge.s32.totalorder %s9, 10
      %s16 = sphi 0, %s28
      %s17 = sphi 0, %s24
      %s18 = sphi 0, %s16
      %s19 = sphi 0, %s17
      %s20 = sphi 0, %s18
      %s21 = sphi 0, %s19
      %s31 = sphi 0, %s33
      %s34 = sphi 0, %s31
      %s35 = sphi 0, %s34
      %s51 = sphi 0, %s35
      %s59 = sphi 0, %s61
      %s62 = sphi 0, %s59
      %s63 = sphi 0, %s62
      %s79 = sphi 0, %s63
      %s87 = sphi 0, %s89
      %s90 = sphi 0, %s87
      %s91 = sphi 0, %s90
      %s107 = sphi 0, %s91
      %s115 = sphi 0, %s117
      %s118 = sphi 0, %s115
      %s119 = sphi 0, %s118
      %s135 = sphi 0, %s119
    $region4: #{aggregation_feature_forward.5} parent=1 // loop_header_branch
      %12 = sbr.rel (%p10) target = $region8
    $region5: #{aggregation_feature_forward.5} parent=1 // loop_body
      %s14 = ssub.s32 %s9, 1
      %s15 = ssub.s32 %s9, 2
      %s22 = sadd.s32 1, %s17
      %p23 = scmp.ge.s32.totalorder %s22, 2
      %s24 = scalar_select %p23, 0, %s22
      %s25 = sadd.s32 1, %s16
      %s26 = scalar_select %p23, %s25, %s16
      %p27 = scmp.ge.s32.totalorder %s26, 4
      %s28 = scalar_select %p27, 0, %s26
      %s29 = ssub.s32 %s16, %s28
      %p30 = scmp.eq.s32.totalorder %s29, 0
      %s32 = sadd.s32 %s31, 1
      %s33 = scalar_select %p30, %s31, %s32
      %p36 = pneg %p30
      %p37 = scmp.eq.s32.totalorder %s9, 7
      %p38 = por %p36, %p37
      %p39 = scmp.ne.s32.totalorder %s31, %s34
      %p40 = scmp.eq.s32.totalorder %s9, 0
      %p41 = por %p39, %p40
      %p42 = scmp.ne.s32.totalorder %s31, %s34
      %p43 = scmp.eq.s32.totalorder %s14, 7
      %p44 = por %p42, %p43
      %p45 = scmp.ne.s32.totalorder %s34, %s35
      %p46 = scmp.eq.s32.totalorder %s14, 0
      %p47 = por %p45, %p46
      %p48 = scmp.ne.s32.totalorder %s34, %s35
      %p49 = scmp.eq.s32.totalorder %s15, 7
      %p50 = por %p48, %p49
      %p52 = scmp.ne.s32.totalorder %s35, %s51
      %p53 = scmp.eq.s32.totalorder %s15, 0
      %p54 = por %p52, %p53
      %s55 = ssub.s32 %s16, %s28
      %s56 = ssub.s32 %s17, %s24
      %s57 = sor.u32 %s55, %s56
      %p58 = scmp.eq.s32.totalorder %s57, 0
      %s60 = sadd.s32 %s59, 1
      %s61 = scalar_select %p58, %s59, %s60
      %p64 = pneg %p58
      %p65 = scmp.eq.s32.totalorder %s9, 7
      %p66 = por %p64, %p65
      %p67 = scmp.ne.s32.totalorder %s59, %s62
      %p68 = scmp.eq.s32.totalorder %s9, 0
      %p69 = por %p67, %p68
      %p70 = scmp.ne.s32.totalorder %s59, %s62
      %p71 = scmp.eq.s32.totalorder %s14, 7
      %p72 = por %p70, %p71
      %p73 = scmp.ne.s32.totalorder %s62, %s63
      %p74 = scmp.eq.s32.totalorder %s14, 0
      %p75 = por %p73, %p74
      %p76 = scmp.ne.s32.totalorder %s62, %s63
      %p77 = scmp.eq.s32.totalorder %s15, 7
      %p78 = por %p76, %p77
      %p80 = scmp.ne.s32.totalorder %s63, %s79
      %p81 = scmp.eq.s32.totalorder %s15, 0
      %p82 = por %p80, %p81
      %s83 = ssub.s32 %s16, %s28
      %s84 = ssub.s32 %s17, %s24
      %s85 = sor.u32 %s83, %s84
      %p86 = scmp.eq.s32.totalorder %s85, 0
      %s88 = sadd.s32 %s87, 1
      %s89 = scalar_select %p86, %s87, %s88
      %p92 = pneg %p86
      %p93 = scmp.eq.s32.totalorder %s9, 7
      %p94 = por %p92, %p93
      %p95 = scmp.ne.s32.totalorder %s87, %s90
      %p96 = scmp.eq.s32.totalorder %s9, 0
      %p97 = por %p95, %p96
      %p98 = scmp.ne.s32.totalorder %s87, %s90
      %p99 = scmp.eq.s32.totalorder %s14, 7
      %p100 = por %p98, %p99
      %p101 = scmp.ne.s32.totalorder %s90, %s91
      %p102 = scmp.eq.s32.totalorder %s14, 0
      %p103 = por %p101, %p102
      %p104 = scmp.ne.s32.totalorder %s90, %s91
      %p105 = scmp.eq.s32.totalorder %s15, 7
      %p106 = por %p104, %p105
      %p108 = scmp.ne.s32.totalorder %s91, %s107
      %p109 = scmp.eq.s32.totalorder %s15, 0
      %p110 = por %p108, %p109
      %s111 = ssub.s32 %s16, %s28
      %s112 = ssub.s32 %s17, %s24
      %s113 = sor.u32 %s111, %s112
      %p114 = scmp.eq.s32.totalorder %s113, 0
      %s116 = sadd.s32 %s115, 1
      %s117 = scalar_select %p114, %s115, %s116
      %p120 = pneg %p114
      %p121 = scmp.eq.s32.totalorder %s9, 7
      %p122 = por %p120, %p121
      %p123 = scmp.ne.s32.totalorder %s115, %s118
      %p124 = scmp.eq.s32.totalorder %s9, 0
      %p125 = por %p123, %p124
      %p126 = scmp.ne.s32.totalorder %s115, %s118
      %p127 = scmp.eq.s32.totalorder %s14, 7
      %p128 = por %p126, %p127
      %p129 = scmp.ne.s32.totalorder %s118, %s119
      %p130 = scmp.eq.s32.totalorder %s14, 0
      %p131 = por %p129, %p130
      %p132 = scmp.ne.s32.totalorder %s118, %s119
      %p133 = scmp.eq.s32.totalorder %s15, 7
      %p134 = por %p132, %p133
      %p136 = scmp.ne.s32.totalorder %s119, %s135
      %p137 = scmp.eq.s32.totalorder %s15, 0
      %p138 = por %p136, %p137
      %p139 = scmp.le.s32.totalorder 1, %s9
      %p140 = scmp.lt.s32.totalorder %s9, 9
      %p141 = pnand %p139, %p140
      %p142 = pneg %p141
      // Predicated region
      $region9: #{aggregation_feature_forward.5} parent=5 // pred_check
        _
      $region10: #{aggregation_feature_forward.5} parent=5 // pred_check_branch
        %144 = sbr.rel (%p141) target = $region12
      $region11: #{aggregation_feature_forward.5} parent=5 // pred_region
        %s145 = ssub.s32 %s9, 1
      $region12: #{aggregation_feature_forward.5} parent=5 // pred_fallthru
        _
      %p146 = scmp.lt.s32.totalorder %s9, 8
      // Predicated region
      $region13: #{aggregation_feature_forward.5} parent=5 // pred_check
        %p147 = pneg %p146
      $region14: #{aggregation_feature_forward.5} parent=5 // pred_check_branch
        %149 = sbr.rel (%p147) target = $region16
      $region15: #{aggregation_feature_forward.5} parent=5 // pred_region
        // Predicated region
        $region17: #{aggregation_feature_forward.5} parent=15 // pred_check
          %p150 = pneg %p41
        $region18: #{aggregation_feature_forward.5} parent=15 // pred_check_branch
          %152 = sbr.rel (%p150) target = $region20
        $region19: #{aggregation_feature_forward.5} parent=15 // pred_region
          %p153 = scmp.lt.s32.totalorder %s16, 3
          %s154 = scalar_select %p153, %s16, 3
          %s155 = smul.addr %s154, 8
          %s156 = smul.addr %s155, 4
          %s157 = scalar_lea.vmem %s0, %s156
        $region20: #{aggregation_feature_forward.5} parent=15 // pred_fallthru
          _
        // Predicated region
        $region21: #{aggregation_feature_forward.5} parent=15 // pred_check
          %p158 = pneg %p69
        $region22: #{aggregation_feature_forward.5} parent=15 // pred_check_branch
          %160 = sbr.rel (%p158) target = $region24
        $region23: #{aggregation_feature_forward.5} parent=15 // pred_region
          %s161 = sand.u32 %s59, 1
          %s162 = sand.u32 %s59, 1
          %s163 = smul.addr %s162, 1024
          %s164 = scalar_lea.vmem [#allocation2], %s163
          %s165 = smul.u32 4, %s17
          %s166 = smul.addr %s16, 512
          %s167 = sadd.s32 %s165, %s166
          %s168 = smul.addr %s167, 4
          %s169 = scalar_lea.vmem %s1, %s168
          // Predicated region
          $region25: #{aggregation_feature_forward.5} parent=23 // pred_check
            _
          $region26: #{aggregation_feature_forward.5} parent=23 // pred_check_branch
            %171 = sbr.rel (0) target = $region28
          $region27: #{aggregation_feature_forward.5} parent=23 // pred_region
            // Predicated region
            $region29: #{aggregation_feature_forward.5} parent=27 // pred_check
              _
            $region30: #{aggregation_feature_forward.5} parent=27 // pred_check_branch
              %173 = sbr.rel (0) target = $region32
            $region31: #{aggregation_feature_forward.5} parent=27 // pred_region
              loop: start=0, step=1, limit=1
              $region33: #{aggregation_feature_forward.5} parent=31 // loop_pre_header
                _
              $region34: #{aggregation_feature_forward.5} parent=31 // loop_header
                %s175 = sphi 0, %s179
                %p176 = scmp.ge.s32.totalorder %s175, 1
                %s180 = sphi %s169, %s169
                %s181 = sphi %s164, %s164
              $region35: #{aggregation_feature_forward.5} parent=31 // loop_header_branch
                %178 = sbr.rel (%p176) target = $region39
              $region36: #{aggregation_feature_forward.5} parent=31 // loop_body
                %v182 = vld [vmem:[%s180] sm:$0xff]
                %183 = vst [vmem:[%s181] sm:$0xff] %v182
                %v184 = vld [vmem:[%s180 + $0x8] sm:$0xff]
                %185 = vst [vmem:[%s181 + $0x8] sm:$0xff] %v184
                %v186 = vld [vmem:[%s180 + $0x20] sm:$0xff]
                %187 = vst [vmem:[%s181 + $0x10] sm:$0xff] %v186
                %v188 = vld [vmem:[%s180 + $0x28] sm:$0xff]
                %189 = vst [vmem:[%s181 + $0x18] sm:$0xff] %v188
                %v190 = vld [vmem:[%s180 + $0x40] sm:$0xff]
                %191 = vst [vmem:[%s181 + $0x20] sm:$0xff] %v190
                %v192 = vld [vmem:[%s180 + $0x48] sm:$0xff]
                %193 = vst [vmem:[%s181 + $0x28] sm:$0xff] %v192
                %v194 = vld [vmem:[%s180 + $0x60] sm:$0xff]
                %195 = vst [vmem:[%s181 + $0x30] sm:$0xff] %v194
                %v196 = vld [vmem:[%s180 + $0x68] sm:$0xff]
                %197 = vst [vmem:[%s181 + $0x38] sm:$0xff] %v196
                %v198 = vld [vmem:[%s180 + $0x80] sm:$0xff]
                %199 = vst [vmem:[%s181 + $0x40] sm:$0xff] %v198
                %v200 = vld [vmem:[%s180 + $0x88] sm:$0xff]
                %201 = vst [vmem:[%s181 + $0x48] sm:$0xff] %v200
                %v202 = vld [vmem:[%s180 + $0xa0] sm:$0xff]
                %203 = vst [vmem:[%s181 + $0x50] sm:$0xff] %v202
                %v204 = vld [vmem:[%s180 + $0xa8] sm:$0xff]
                %205 = vst [vmem:[%s181 + $0x58] sm:$0xff] %v204
                %v206 = vld [vmem:[%s180 + $0xc0] sm:$0xff]
                %207 = vst [vmem:[%s181 + $0x60] sm:$0xff] %v206
                %v208 = vld [vmem:[%s180 + $0xc8] sm:$0xff]
                %209 = vst [vmem:[%s181 + $0x68] sm:$0xff] %v208
                %v210 = vld [vmem:[%s180 + $0xe0] sm:$0xff]
                %211 = vst [vmem:[%s181 + $0x70] sm:$0xff] %v210
                %v212 = vld [vmem:[%s180 + $0xe8] sm:$0xff]
                %213 = vst [vmem:[%s181 + $0x78] sm:$0xff] %v212
                %v214 = vld [vmem:[%s180 + $0x100] sm:$0xff]
                %215 = vst [vmem:[%s181 + $0x80] sm:$0xff] %v214
                %v216 = vld [vmem:[%s180 + $0x108] sm:$0xff]
                %217 = vst [vmem:[%s181 + $0x88] sm:$0xff] %v216
                %v218 = vld [vmem:[%s180 + $0x120] sm:$0xff]
                %219 = vst [vmem:[%s181 + $0x90] sm:$0xff] %v218
                %v220 = vld [vmem:[%s180 + $0x128] sm:$0xff]
                %221 = vst [vmem:[%s181 + $0x98] sm:$0xff] %v220
                %v222 = vld [vmem:[%s180 + $0x140] sm:$0xff]
                %223 = vst [vmem:[%s181 + $0xa0] sm:$0xff] %v222
                %v224 = vld [vmem:[%s180 + $0x148] sm:$0xff]
                %225 = vst [vmem:[%s181 + $0xa8] sm:$0xff] %v224
                %v226 = vld [vmem:[%s180 + $0x160] sm:$0xff]
                %227 = vst [vmem:[%s181 + $0xb0] sm:$0xff] %v226
                %v228 = vld [vmem:[%s180 + $0x168] sm:$0xff]
                %229 = vst [vmem:[%s181 + $0xb8] sm:$0xff] %v228
                %v230 = vld [vmem:[%s180 + $0x180] sm:$0xff]
                %231 = vst [vmem:[%s181 + $0xc0] sm:$0xff] %v230
                %v232 = vld [vmem:[%s180 + $0x188] sm:$0xff]
                %233 = vst [vmem:[%s181 + $0xc8] sm:$0xff] %v232
                %v234 = vld [vmem:[%s180 + $0x1a0] sm:$0xff]
                %235 = vst [vmem:[%s181 + $0xd0] sm:$0xff] %v234
                %v236 = vld [vmem:[%s180 + $0x1a8] sm:$0xff]
                %237 = vst [vmem:[%s181 + $0xd8] sm:$0xff] %v236
                %v238 = vld [vmem:[%s180 + $0x1c0] sm:$0xff]
                %239 = vst [vmem:[%s181 + $0xe0] sm:$0xff] %v238
                %v240 = vld [vmem:[%s180 + $0x1c8] sm:$0xff]
                %241 = vst [vmem:[%s181 + $0xe8] sm:$0xff] %v240
                %v242 = vld [vmem:[%s180 + $0x1e0] sm:$0xff]
                %243 = vst [vmem:[%s181 + $0xf0] sm:$0xff] %v242
                %v244 = vld [vmem:[%s180 + $0x1e8] sm:$0xff]
                %245 = vst [vmem:[%s181 + $0xf8] sm:$0xff] %v244
                %v246 = vld [vmem:[%s180 + $0x200] sm:$0xff]
                %247 = vst [vmem:[%s181 + $0x100] sm:$0xff] %v246
                %v248 = vld [vmem:[%s180 + $0x208] sm:$0xff]
                %249 = vst [vmem:[%s181 + $0x108] sm:$0xff] %v248
                %v250 = vld [vmem:[%s180 + $0x220] sm:$0xff]
                %251 = vst [vmem:[%s181 + $0x110] sm:$0xff] %v250
                %v252 = vld [vmem:[%s180 + $0x228] sm:$0xff]
                %253 = vst [vmem:[%s181 + $0x118] sm:$0xff] %v252
                %v254 = vld [vmem:[%s180 + $0x240] sm:$0xff]
                %255 = vst [vmem:[%s181 + $0x120] sm:$0xff] %v254
                %v256 = vld [vmem:[%s180 + $0x248] sm:$0xff]
                %257 = vst [vmem:[%s181 + $0x128] sm:$0xff] %v256
                %v258 = vld [vmem:[%s180 + $0x260] sm:$0xff]
                %259 = vst [vmem:[%s181 + $0x130] sm:$0xff] %v258
                %v260 = vld [vmem:[%s180 + $0x268] sm:$0xff]
                %261 = vst [vmem:[%s181 + $0x138] sm:$0xff] %v260
                %v262 = vld [vmem:[%s180 + $0x280] sm:$0xff]
                %263 = vst [vmem:[%s181 + $0x140] sm:$0xff] %v262
                %v264 = vld [vmem:[%s180 + $0x288] sm:$0xff]
                %265 = vst [vmem:[%s181 + $0x148] sm:$0xff] %v264
                %v266 = vld [vmem:[%s180 + $0x2a0] sm:$0xff]
                %267 = vst [vmem:[%s181 + $0x150] sm:$0xff] %v266
                %v268 = vld [vmem:[%s180 + $0x2a8] sm:$0xff]
                %269 = vst [vmem:[%s181 + $0x158] sm:$0xff] %v268
                %v270 = vld [vmem:[%s180 + $0x2c0] sm:$0xff]
                %271 = vst [vmem:[%s181 + $0x160] sm:$0xff] %v270
                %v272 = vld [vmem:[%s180 + $0x2c8] sm:$0xff]
                %273 = vst [vmem:[%s181 + $0x168] sm:$0xff] %v272
                %v274 = vld [vmem:[%s180 + $0x2e0] sm:$0xff]
                %275 = vst [vmem:[%s181 + $0x170] sm:$0xff] %v274
                %v276 = vld [vmem:[%s180 + $0x2e8] sm:$0xff]
                %277 = vst [vmem:[%s181 + $0x178] sm:$0xff] %v276
                %v278 = vld [vmem:[%s180 + $0x300] sm:$0xff]
                %279 = vst [vmem:[%s181 + $0x180] sm:$0xff] %v278
                %v280 = vld [vmem:[%s180 + $0x308] sm:$0xff]
                %281 = vst [vmem:[%s181 + $0x188] sm:$0xff] %v280
                %v282 = vld [vmem:[%s180 + $0x320] sm:$0xff]
                %283 = vst [vmem:[%s181 + $0x190] sm:$0xff] %v282
                %v284 = vld [vmem:[%s180 + $0x328] sm:$0xff]
                %285 = vst [vmem:[%s181 + $0x198] sm:$0xff] %v284
                %v286 = vld [vmem:[%s180 + $0x340] sm:$0xff]
                %287 = vst [vmem:[%s181 + $0x1a0] sm:$0xff] %v286
                %v288 = vld [vmem:[%s180 + $0x348] sm:$0xff]
                %289 = vst [vmem:[%s181 + $0x1a8] sm:$0xff] %v288
                %v290 = vld [vmem:[%s180 + $0x360] sm:$0xff]
                %291 = vst [vmem:[%s181 + $0x1b0] sm:$0xff] %v290
                %v292 = vld [vmem:[%s180 + $0x368] sm:$0xff]
                %293 = vst [vmem:[%s181 + $0x1b8] sm:$0xff] %v292
                %v294 = vld [vmem:[%s180 + $0x380] sm:$0xff]
                %295 = vst [vmem:[%s181 + $0x1c0] sm:$0xff] %v294
                %v296 = vld [vmem:[%s180 + $0x388] sm:$0xff]
                %297 = vst [vmem:[%s181 + $0x1c8] sm:$0xff] %v296
                %v298 = vld [vmem:[%s180 + $0x3a0] sm:$0xff]
                %299 = vst [vmem:[%s181 + $0x1d0] sm:$0xff] %v298
                %v300 = vld [vmem:[%s180 + $0x3a8] sm:$0xff]
                %301 = vst [vmem:[%s181 + $0x1d8] sm:$0xff] %v300
                %v302 = vld [vmem:[%s180 + $0x3c0] sm:$0xff]
                %303 = vst [vmem:[%s181 + $0x1e0] sm:$0xff] %v302
                %v304 = vld [vmem:[%s180 + $0x3c8] sm:$0xff]
                %305 = vst [vmem:[%s181 + $0x1e8] sm:$0xff] %v304
                %v306 = vld [vmem:[%s180 + $0x3e0] sm:$0xff]
                %307 = vst [vmem:[%s181 + $0x1f0] sm:$0xff] %v306
                %v308 = vld [vmem:[%s180 + $0x3e8] sm:$0xff]
                %309 = vst [vmem:[%s181 + $0x1f8] sm:$0xff] %v308
                %v310 = vld [vmem:[%s180 + $0x400] sm:$0xff]
                %311 = vst [vmem:[%s181 + $0x200] sm:$0xff] %v310
                %v312 = vld [vmem:[%s180 + $0x408] sm:$0xff]
                %313 = vst [vmem:[%s181 + $0x208] sm:$0xff] %v312
                %v314 = vld [vmem:[%s180 + $0x420] sm:$0xff]
                %315 = vst [vmem:[%s181 + $0x210] sm:$0xff] %v314
                %v316 = vld [vmem:[%s180 + $0x428] sm:$0xff]
                %317 = vst [vmem:[%s181 + $0x218] sm:$0xff] %v316
                %v318 = vld [vmem:[%s180 + $0x440] sm:$0xff]
                %319 = vst [vmem:[%s181 + $0x220] sm:$0xff] %v318
                %v320 = vld [vmem:[%s180 + $0x448] sm:$0xff]
                %321 = vst [vmem:[%s181 + $0x228] sm:$0xff] %v320
                %v322 = vld [vmem:[%s180 + $0x460] sm:$0xff]
                %323 = vst [vmem:[%s181 + $0x230] sm:$0xff] %v322
                %v324 = vld [vmem:[%s180 + $0x468] sm:$0xff]
                %325 = vst [vmem:[%s181 + $0x238] sm:$0xff] %v324
                %v326 = vld [vmem:[%s180 + $0x480] sm:$0xff]
                %327 = vst [vmem:[%s181 + $0x240] sm:$0xff] %v326
                %v328 = vld [vmem:[%s180 + $0x488] sm:$0xff]
                %329 = vst [vmem:[%s181 + $0x248] sm:$0xff] %v328
                %v330 = vld [vmem:[%s180 + $0x4a0] sm:$0xff]
                %331 = vst [vmem:[%s181 + $0x250] sm:$0xff] %v330
                %v332 = vld [vmem:[%s180 + $0x4a8] sm:$0xff]
                %333 = vst [vmem:[%s181 + $0x258] sm:$0xff] %v332
                %v334 = vld [vmem:[%s180 + $0x4c0] sm:$0xff]
                %335 = vst [vmem:[%s181 + $0x260] sm:$0xff] %v334
                %v336 = vld [vmem:[%s180 + $0x4c8] sm:$0xff]
                %337 = vst [vmem:[%s181 + $0x268] sm:$0xff] %v336
                %v338 = vld [vmem:[%s180 + $0x4e0] sm:$0xff]
                %339 = vst [vmem:[%s181 + $0x270] sm:$0xff] %v338
                %v340 = vld [vmem:[%s180 + $0x4e8] sm:$0xff]
                %341 = vst [vmem:[%s181 + $0x278] sm:$0xff] %v340
                %v342 = vld [vmem:[%s180 + $0x500] sm:$0xff]
                %343 = vst [vmem:[%s181 + $0x280] sm:$0xff] %v342
                %v344 = vld [vmem:[%s180 + $0x508] sm:$0xff]
                %345 = vst [vmem:[%s181 + $0x288] sm:$0xff] %v344
                %v346 = vld [vmem:[%s180 + $0x520] sm:$0xff]
                %347 = vst [vmem:[%s181 + $0x290] sm:$0xff] %v346
                %v348 = vld [vmem:[%s180 + $0x528] sm:$0xff]
                %349 = vst [vmem:[%s181 + $0x298] sm:$0xff] %v348
                %v350 = vld [vmem:[%s180 + $0x540] sm:$0xff]
                %351 = vst [vmem:[%s181 + $0x2a0] sm:$0xff] %v350
                %v352 = vld [vmem:[%s180 + $0x548] sm:$0xff]
                %353 = vst [vmem:[%s181 + $0x2a8] sm:$0xff] %v352
                %v354 = vld [vmem:[%s180 + $0x560] sm:$0xff]
                %355 = vst [vmem:[%s181 + $0x2b0] sm:$0xff] %v354
                %v356 = vld [vmem:[%s180 + $0x568] sm:$0xff]
                %357 = vst [vmem:[%s181 + $0x2b8] sm:$0xff] %v356
                %v358 = vld [vmem:[%s180 + $0x580] sm:$0xff]
                %359 = vst [vmem:[%s181 + $0x2c0] sm:$0xff] %v358
                %v360 = vld [vmem:[%s180 + $0x588] sm:$0xff]
                %361 = vst [vmem:[%s181 + $0x2c8] sm:$0xff] %v360
                %v362 = vld [vmem:[%s180 + $0x5a0] sm:$0xff]
                %363 = vst [vmem:[%s181 + $0x2d0] sm:$0xff] %v362
                %v364 = vld [vmem:[%s180 + $0x5a8] sm:$0xff]
                %365 = vst [vmem:[%s181 + $0x2d8] sm:$0xff] %v364
                %v366 = vld [vmem:[%s180 + $0x5c0] sm:$0xff]
                %367 = vst [vmem:[%s181 + $0x2e0] sm:$0xff] %v366
                %v368 = vld [vmem:[%s180 + $0x5c8] sm:$0xff]
                %369 = vst [vmem:[%s181 + $0x2e8] sm:$0xff] %v368
                %v370 = vld [vmem:[%s180 + $0x5e0] sm:$0xff]
                %371 = vst [vmem:[%s181 + $0x2f0] sm:$0xff] %v370
                %v372 = vld [vmem:[%s180 + $0x5e8] sm:$0xff]
                %373 = vst [vmem:[%s181 + $0x2f8] sm:$0xff] %v372
                %v374 = vld [vmem:[%s180 + $0x600] sm:$0xff]
                %375 = vst [vmem:[%s181 + $0x300] sm:$0xff] %v374
                %v376 = vld [vmem:[%s180 + $0x608] sm:$0xff]
                %377 = vst [vmem:[%s181 + $0x308] sm:$0xff] %v376
                %v378 = vld [vmem:[%s180 + $0x620] sm:$0xff]
                %379 = vst [vmem:[%s181 + $0x310] sm:$0xff] %v378
                %v380 = vld [vmem:[%s180 + $0x628] sm:$0xff]
                %381 = vst [vmem:[%s181 + $0x318] sm:$0xff] %v380
                %v382 = vld [vmem:[%s180 + $0x640] sm:$0xff]
                %383 = vst [vmem:[%s181 + $0x320] sm:$0xff] %v382
                %v384 = vld [vmem:[%s180 + $0x648] sm:$0xff]
                %385 = vst [vmem:[%s181 + $0x328] sm:$0xff] %v384
                %v386 = vld [vmem:[%s180 + $0x660] sm:$0xff]
                %387 = vst [vmem:[%s181 + $0x330] sm:$0xff] %v386
                %v388 = vld [vmem:[%s180 + $0x668] sm:$0xff]
                %389 = vst [vmem:[%s181 + $0x338] sm:$0xff] %v388
                %v390 = vld [vmem:[%s180 + $0x680] sm:$0xff]
                %391 = vst [vmem:[%s181 + $0x340] sm:$0xff] %v390
                %v392 = vld [vmem:[%s180 + $0x688] sm:$0xff]
                %393 = vst [vmem:[%s181 + $0x348] sm:$0xff] %v392
                %v394 = vld [vmem:[%s180 + $0x6a0] sm:$0xff]
                %395 = vst [vmem:[%s181 + $0x350] sm:$0xff] %v394
                %v396 = vld [vmem:[%s180 + $0x6a8] sm:$0xff]
                %397 = vst [vmem:[%s181 + $0x358] sm:$0xff] %v396
                %v398 = vld [vmem:[%s180 + $0x6c0] sm:$0xff]
                %399 = vst [vmem:[%s181 + $0x360] sm:$0xff] %v398
                %v400 = vld [vmem:[%s180 + $0x6c8] sm:$0xff]
                %401 = vst [vmem:[%s181 + $0x368] sm:$0xff] %v400
                %v402 = vld [vmem:[%s180 + $0x6e0] sm:$0xff]
                %403 = vst [vmem:[%s181 + $0x370] sm:$0xff] %v402
                %v404 = vld [vmem:[%s180 + $0x6e8] sm:$0xff]
                %405 = vst [vmem:[%s181 + $0x378] sm:$0xff] %v404
                %v406 = vld [vmem:[%s180 + $0x700] sm:$0xff]
                %407 = vst [vmem:[%s181 + $0x380] sm:$0xff] %v406
                %v408 = vld [vmem:[%s180 + $0x708] sm:$0xff]
                %409 = vst [vmem:[%s181 + $0x388] sm:$0xff] %v408
                %v410 = vld [vmem:[%s180 + $0x720] sm:$0xff]
                %411 = vst [vmem:[%s181 + $0x390] sm:$0xff] %v410
                %v412 = vld [vmem:[%s180 + $0x728] sm:$0xff]
                %413 = vst [vmem:[%s181 + $0x398] sm:$0xff] %v412
                %v414 = vld [vmem:[%s180 + $0x740] sm:$0xff]
                %415 = vst [vmem:[%s181 + $0x3a0] sm:$0xff] %v414
                %v416 = vld [vmem:[%s180 + $0x748] sm:$0xff]
                %417 = vst [vmem:[%s181 + $0x3a8] sm:$0xff] %v416
                %v418 = vld [vmem:[%s180 + $0x760] sm:$0xff]
                %419 = vst [vmem:[%s181 + $0x3b0] sm:$0xff] %v418
                %v420 = vld [vmem:[%s180 + $0x768] sm:$0xff]
                %421 = vst [vmem:[%s181 + $0x3b8] sm:$0xff] %v420
                %v422 = vld [vmem:[%s180 + $0x780] sm:$0xff]
                %423 = vst [vmem:[%s181 + $0x3c0] sm:$0xff] %v422
                %v424 = vld [vmem:[%s180 + $0x788] sm:$0xff]
                %425 = vst [vmem:[%s181 + $0x3c8] sm:$0xff] %v424
                %v426 = vld [vmem:[%s180 + $0x7a0] sm:$0xff]
                %427 = vst [vmem:[%s181 + $0x3d0] sm:$0xff] %v426
                %v428 = vld [vmem:[%s180 + $0x7a8] sm:$0xff]
                %429 = vst [vmem:[%s181 + $0x3d8] sm:$0xff] %v428
                %v430 = vld [vmem:[%s180 + $0x7c0] sm:$0xff]
                %431 = vst [vmem:[%s181 + $0x3e0] sm:$0xff] %v430
                %v432 = vld [vmem:[%s180 + $0x7c8] sm:$0xff]
                %433 = vst [vmem:[%s181 + $0x3e8] sm:$0xff] %v432
                %v434 = vld [vmem:[%s180 + $0x7e0] sm:$0xff]
                %435 = vst [vmem:[%s181 + $0x3f0] sm:$0xff] %v434
                %v436 = vld [vmem:[%s180 + $0x7e8] sm:$0xff]
                %437 = vst [vmem:[%s181 + $0x3f8] sm:$0xff] %v436
              $region37: #{aggregation_feature_forward.5} parent=31 // loop_footer
                %s179 = sadd.s32 1, %s175
              $region38: #{aggregation_feature_forward.5} parent=31 // loop_footer_branch
                %174 = sbr.rel target = $region34
              $region39: #{aggregation_feature_forward.5} parent=31 // loop_exit
                _
            $region32: #{aggregation_feature_forward.5} parent=27 // pred_fallthru
              _
            // Predicated region
            $region40: #{aggregation_feature_forward.5} parent=27 // pred_check
              _
            $region41: #{aggregation_feature_forward.5} parent=27 // pred_check_branch
              %439 = sbr.rel target = $region43
            $region42: #{aggregation_feature_forward.5} parent=27 // pred_region
              _
            $region43: #{aggregation_feature_forward.5} parent=27 // pred_fallthru
              _
          $region28: #{aggregation_feature_forward.5} parent=23 // pred_fallthru
            _
          %440 = vnop
        $region24: #{aggregation_feature_forward.5} parent=15 // pred_fallthru
          _
        // Predicated region
        $region44: #{aggregation_feature_forward.5} parent=15 // pred_check
          %p441 = pneg %p97
        $region45: #{aggregation_feature_forward.5} parent=15 // pred_check_branch
          %443 = sbr.rel (%p441) target = $region47
        $region46: #{aggregation_feature_forward.5} parent=15 // pred_region
          %s444 = smul.u32 4, %s17
          %p445 = scmp.lt.s32.totalorder %s16, 3
          %s446 = scalar_select %p445, %s16, 3
          %p447 = scmp.lt.s32.totalorder %s444, 7
          %s448 = scalar_select %p447, %s444, 7
          %s449 = smul.addr %s446, 8
          %s450 = sadd.s32 %s448, %s449
          %s451 = scalar_lea.vmem %s2, %s450
          %s452 = smul.u32 4, %s17
        $region47: #{aggregation_feature_forward.5} parent=15 // pred_fallthru
          _
      $region16: #{aggregation_feature_forward.5} parent=5 // pred_fallthru
        _
      %p453 = scmp.le.s32.totalorder 1, %s9
      %p454 = scmp.lt.s32.totalorder %s9, 9
      %p455 = pnand %p453, %p454
      %p456 = pneg %p455
      // Predicated region
      $region48: #{aggregation_feature_forward.5} parent=5 // pred_check
        _
      $region49: #{aggregation_feature_forward.5} parent=5 // pred_check_branch
        %458 = sbr.rel (%p455) target = $region51
      $region50: #{aggregation_feature_forward.5} parent=5 // pred_region
        %s459 = ssub.s32 %s9, 1
        %s460 = sand.u32 %s62, 1
        %s461 = sand.u32 %s62, 1
        %s462 = smul.addr %s461, 1024
        %s463 = scalar_lea.vmem [#allocation2], %s462
        // Predicated region
        $region52: #{aggregation_feature_forward.5} parent=50 // pred_check
          %p464 = pneg %p75
        $region53: #{aggregation_feature_forward.5} parent=50 // pred_check_branch
          %466 = sbr.rel (%p464) target = $region55
        $region54: #{aggregation_feature_forward.5} parent=50 // pred_region
          _
        $region55: #{aggregation_feature_forward.5} parent=50 // pred_fallthru
          _
        %p467 = scmp.lt.s32.totalorder %s18, 3
        %s468 = scalar_select %p467, %s18, 3
        %s469 = smul.addr %s468, 8
        %s470 = smul.addr %s469, 4
        %s471 = scalar_lea.vmem %s0, %s470
        %p472 = pneg %p47
        %p473 = pneg %p44
        %s474 = sand.u32 %s62, 1
        %s475 = sand.u32 %s62, 1
        %s476 = smul.addr %s475, 1024
        %s477 = scalar_lea.vmem [#allocation2], %s476
        %p478 = pneg %p75
        %p479 = pneg %p72
        %s480 = smul.u32 4, %s19
        %p481 = scmp.lt.s32.totalorder %s18, 3
        %s482 = scalar_select %p481, %s18, 3
        %p483 = scmp.lt.s32.totalorder %s480, 7
        %s484 = scalar_select %p483, %s480, 7
        %s485 = smul.addr %s482, 8
        %s486 = sadd.s32 %s484, %s485
        %s487 = scalar_lea.vmem %s2, %s486
        %p488 = pneg %p103
        %p489 = pneg %p100
        %p490 = pneg %p131
        %p491 = pneg %p128
        %s492 = smul.u32 4, %s19
        %p493 = scmp.lt.s32.totalorder %s18, 3
        %s494 = scalar_select %p493, %s18, 3
        %p495 = scmp.lt.s32.totalorder %s492, 7
        %s496 = scalar_select %p495, %s492, 7
        %s497 = smul.addr %s494, 8
        %s498 = sadd.s32 %s496, %s497
        %s499 = smul.addr %s498, 2
        %s500 = scalar_lea.vmem %s3, %s499
        %p501 = scmp.lt.s32.totalorder %s18, 3
        %s502 = scalar_select %p501, %s18, 3
        %s503 = smul.addr %s502, 8
        %s504 = smul.addr %s503, 4
        %s505 = scalar_lea.vmem %s0, %s504
        %s506 = smul.u32 4, %s19
        %s507 = smul.u32 4, %s19
        %p508 = scmp.lt.s32.totalorder %s18, 3
        %s509 = scalar_select %p508, %s18, 3
        %p510 = scmp.lt.s32.totalorder %s507, 7
        %s511 = scalar_select %p510, %s507, 7
        %s512 = smul.addr %s509, 8
        %s513 = sadd.s32 %s511, %s512
        %s514 = scalar_lea.vmem %s2, %s513
        %s515 = smul.u32 4, %s19
        %s516 = smul.u32 4, %s19
        %p517 = scmp.lt.s32.totalorder %s18, 3
        %s518 = scalar_select %p517, %s18, 3
        %p519 = scmp.lt.s32.totalorder %s516, 7
        %s520 = scalar_select %p519, %s516, 7
        %s521 = smul.addr %s518, 8
        %s522 = sadd.s32 %s520, %s521
        %s523 = smul.addr %s522, 2
        %s524 = scalar_lea.vmem %s3, %s523
        %s525 = smul.u32 4, %s19
        %v526 = vld [vmem:[%s505] sm:$0xff]
        %v527 = vld [vmem:[%s505 + $0x8] sm:$0xff]
        %v528 = vld [vmem:[%s505 + $0x10] sm:$0xff]
        %v529 = vld [vmem:[%s505 + $0x18] sm:$0xff]
        %v530 = vld [vmem:[%s463] sm:$0xff]
        %v531 = vld [vmem:[%s463 + $0x8] sm:$0xff]
        %v532 = vld [vmem:[%s463 + $0x10] sm:$0xff]
        %v533 = vld [vmem:[%s463 + $0x18] sm:$0xff]
        %v534 = vld [vmem:[%s463 + $0x20] sm:$0xff]
        %v535 = vld [vmem:[%s463 + $0x28] sm:$0xff]
        %v536 = vld [vmem:[%s463 + $0x30] sm:$0xff]
        %v537 = vld [vmem:[%s463 + $0x38] sm:$0xff]
        %v538 = vld [vmem:[%s463 + $0x40] sm:$0xff]
        %v539 = vld [vmem:[%s463 + $0x48] sm:$0xff]
        %v540 = vld [vmem:[%s463 + $0x50] sm:$0xff]
        %v541 = vld [vmem:[%s463 + $0x58] sm:$0xff]
        %v542 = vld [vmem:[%s463 + $0x60] sm:$0xff]
        %v543 = vld [vmem:[%s463 + $0x68] sm:$0xff]
        %v544 = vld [vmem:[%s463 + $0x70] sm:$0xff]
        %v545 = vld [vmem:[%s463 + $0x78] sm:$0xff]
        %v546 = vld [vmem:[%s463 + $0x80] sm:$0xff]
        %v547 = vld [vmem:[%s463 + $0x88] sm:$0xff]
        %v548 = vld [vmem:[%s463 + $0x90] sm:$0xff]
        %v549 = vld [vmem:[%s463 + $0x98] sm:$0xff]
        %v550 = vld [vmem:[%s463 + $0xa0] sm:$0xff]
        %v551 = vld [vmem:[%s463 + $0xa8] sm:$0xff]
        %v552 = vld [vmem:[%s463 + $0xb0] sm:$0xff]
        %v553 = vld [vmem:[%s463 + $0xb8] sm:$0xff]
        %v554 = vld [vmem:[%s463 + $0xc0] sm:$0xff]
        %v555 = vld [vmem:[%s463 + $0xc8] sm:$0xff]
        %v556 = vld [vmem:[%s463 + $0xd0] sm:$0xff]
        %v557 = vld [vmem:[%s463 + $0xd8] sm:$0xff]
        %v558 = vld [vmem:[%s463 + $0xe0] sm:$0xff]
        %v559 = vld [vmem:[%s463 + $0xe8] sm:$0xff]
        %v560 = vld [vmem:[%s463 + $0xf0] sm:$0xff]
        %v561 = vld [vmem:[%s463 + $0xf8] sm:$0xff]
        %v562 = vld [vmem:[%s463 + $0x100] sm:$0xff]
        %v563 = vld [vmem:[%s463 + $0x108] sm:$0xff]
        %v564 = vld [vmem:[%s463 + $0x110] sm:$0xff]
        %v565 = vld [vmem:[%s463 + $0x118] sm:$0xff]
        %v566 = vld [vmem:[%s463 + $0x120] sm:$0xff]
        %v567 = vld [vmem:[%s463 + $0x128] sm:$0xff]
        %v568 = vld [vmem:[%s463 + $0x130] sm:$0xff]
        %v569 = vld [vmem:[%s463 + $0x138] sm:$0xff]
        %v570 = vld [vmem:[%s463 + $0x140] sm:$0xff]
        %v571 = vld [vmem:[%s463 + $0x148] sm:$0xff]
        %v572 = vld [vmem:[%s463 + $0x150] sm:$0xff]
        %v573 = vld [vmem:[%s463 + $0x158] sm:$0xff]
        %v574 = vld [vmem:[%s463 + $0x160] sm:$0xff]
        %v575 = vld [vmem:[%s463 + $0x168] sm:$0xff]
        %v576 = vld [vmem:[%s463 + $0x170] sm:$0xff]
        %v577 = vld [vmem:[%s463 + $0x178] sm:$0xff]
        %v578 = vld [vmem:[%s463 + $0x180] sm:$0xff]
        %v579 = vld [vmem:[%s463 + $0x188] sm:$0xff]
        %v580 = vld [vmem:[%s463 + $0x190] sm:$0xff]
        %v581 = vld [vmem:[%s463 + $0x198] sm:$0xff]
        %v582 = vld [vmem:[%s463 + $0x1a0] sm:$0xff]
        %v583 = vld [vmem:[%s463 + $0x1a8] sm:$0xff]
        %v584 = vld [vmem:[%s463 + $0x1b0] sm:$0xff]
        %v585 = vld [vmem:[%s463 + $0x1b8] sm:$0xff]
        %v586 = vld [vmem:[%s463 + $0x1c0] sm:$0xff]
        %v587 = vld [vmem:[%s463 + $0x1c8] sm:$0xff]
        %v588 = vld [vmem:[%s463 + $0x1d0] sm:$0xff]
        %v589 = vld [vmem:[%s463 + $0x1d8] sm:$0xff]
        %v590 = vld [vmem:[%s463 + $0x1e0] sm:$0xff]
        %v591 = vld [vmem:[%s463 + $0x1e8] sm:$0xff]
        %v592 = vld [vmem:[%s463 + $0x1f0] sm:$0xff]
        %v593 = vld [vmem:[%s463 + $0x1f8] sm:$0xff]
        %v594 = vld [vmem:[%s463 + $0x200] sm:$0xff]
        %v595 = vld [vmem:[%s463 + $0x208] sm:$0xff]
        %v596 = vld [vmem:[%s463 + $0x210] sm:$0xff]
        %v597 = vld [vmem:[%s463 + $0x218] sm:$0xff]
        %v598 = vld [vmem:[%s463 + $0x220] sm:$0xff]
        %v599 = vld [vmem:[%s463 + $0x228] sm:$0xff]
        %v600 = vld [vmem:[%s463 + $0x230] sm:$0xff]
        %v601 = vld [vmem:[%s463 + $0x238] sm:$0xff]
        %v602 = vld [vmem:[%s463 + $0x240] sm:$0xff]
        %v603 = vld [vmem:[%s463 + $0x248] sm:$0xff]
        %v604 = vld [vmem:[%s463 + $0x250] sm:$0xff]
        %v605 = vld [vmem:[%s463 + $0x258] sm:$0xff]
        %v606 = vld [vmem:[%s463 + $0x260] sm:$0xff]
        %v607 = vld [vmem:[%s463 + $0x268] sm:$0xff]
        %v608 = vld [vmem:[%s463 + $0x270] sm:$0xff]
        %v609 = vld [vmem:[%s463 + $0x278] sm:$0xff]
        %v610 = vld [vmem:[%s463 + $0x280] sm:$0xff]
        %v611 = vld [vmem:[%s463 + $0x288] sm:$0xff]
        %v612 = vld [vmem:[%s463 + $0x290] sm:$0xff]
        %v613 = vld [vmem:[%s463 + $0x298] sm:$0xff]
        %v614 = vld [vmem:[%s463 + $0x2a0] sm:$0xff]
        %v615 = vld [vmem:[%s463 + $0x2a8] sm:$0xff]
        %v616 = vld [vmem:[%s463 + $0x2b0] sm:$0xff]
        %v617 = vld [vmem:[%s463 + $0x2b8] sm:$0xff]
        %v618 = vld [vmem:[%s463 + $0x2c0] sm:$0xff]
        %v619 = vld [vmem:[%s463 + $0x2c8] sm:$0xff]
        %v620 = vld [vmem:[%s463 + $0x2d0] sm:$0xff]
        %v621 = vld [vmem:[%s463 + $0x2d8] sm:$0xff]
        %v622 = vld [vmem:[%s463 + $0x2e0] sm:$0xff]
        %v623 = vld [vmem:[%s463 + $0x2e8] sm:$0xff]
        %v624 = vld [vmem:[%s463 + $0x2f0] sm:$0xff]
        %v625 = vld [vmem:[%s463 + $0x2f8] sm:$0xff]
        %v626 = vld [vmem:[%s463 + $0x300] sm:$0xff]
        %v627 = vld [vmem:[%s463 + $0x308] sm:$0xff]
        %v628 = vld [vmem:[%s463 + $0x310] sm:$0xff]
        %v629 = vld [vmem:[%s463 + $0x318] sm:$0xff]
        %v630 = vld [vmem:[%s463 + $0x320] sm:$0xff]
        %v631 = vld [vmem:[%s463 + $0x328] sm:$0xff]
        %v632 = vld [vmem:[%s463 + $0x330] sm:$0xff]
        %v633 = vld [vmem:[%s463 + $0x338] sm:$0xff]
        %v634 = vld [vmem:[%s463 + $0x340] sm:$0xff]
        %v635 = vld [vmem:[%s463 + $0x348] sm:$0xff]
        %v636 = vld [vmem:[%s463 + $0x350] sm:$0xff]
        %v637 = vld [vmem:[%s463 + $0x358] sm:$0xff]
        %v638 = vld [vmem:[%s463 + $0x360] sm:$0xff]
        %v639 = vld [vmem:[%s463 + $0x368] sm:$0xff]
        %v640 = vld [vmem:[%s463 + $0x370] sm:$0xff]
        %v641 = vld [vmem:[%s463 + $0x378] sm:$0xff]
        %v642 = vld [vmem:[%s463 + $0x380] sm:$0xff]
        %v643 = vld [vmem:[%s463 + $0x388] sm:$0xff]
        %v644 = vld [vmem:[%s463 + $0x390] sm:$0xff]
        %v645 = vld [vmem:[%s463 + $0x398] sm:$0xff]
        %v646 = vld [vmem:[%s463 + $0x3a0] sm:$0xff]
        %v647 = vld [vmem:[%s463 + $0x3a8] sm:$0xff]
        %v648 = vld [vmem:[%s463 + $0x3b0] sm:$0xff]
        %v649 = vld [vmem:[%s463 + $0x3b8] sm:$0xff]
        %v650 = vld [vmem:[%s463 + $0x3c0] sm:$0xff]
        %v651 = vld [vmem:[%s463 + $0x3c8] sm:$0xff]
        %v652 = vld [vmem:[%s463 + $0x3d0] sm:$0xff]
        %v653 = vld [vmem:[%s463 + $0x3d8] sm:$0xff]
        %v654 = vld [vmem:[%s463 + $0x3e0] sm:$0xff]
        %v655 = vld [vmem:[%s463 + $0x3e8] sm:$0xff]
        %v656 = vld [vmem:[%s463 + $0x3f0] sm:$0xff]
        %v657 = vld [vmem:[%s463 + $0x3f8] sm:$0xff]
        %v658 = vld [vmem:[%s514] sm:$0xf]
        %v660 = vperm.slane %v658, 0
        %v661 = vperm.slane %v658, 1
        %v662 = vperm.slane %v658, 2
        %v663 = vperm.slane %v658, 3
        %v672 = vunpack.c.l.b16 %v526
        %v673 = vunpack.c.h.b16 %v526
        %v674 = vunpack.c.l.b16 %v527
        %v675 = vunpack.c.h.b16 %v527
        %v676 = vunpack.c.l.b16 %v528
        %v677 = vunpack.c.h.b16 %v528
        %v678 = vunpack.c.l.b16 %v529
        %v679 = vunpack.c.h.b16 %v529
        %v680 = vpack.c.b16 %v676, %v672
        %v681 = vpack.c.b16 %v677, %v673
        %v682 = vpack.c.b16 %v678, %v674
        %v683 = vpack.c.b16 %v679, %v675
        %v816 = vunpack.c.l.b16 %v530
        %v817 = vunpack.c.h.b16 %v530
        %v818 = vunpack.c.l.b16 %v531
        %v819 = vunpack.c.h.b16 %v531
        %v820 = vunpack.c.l.b16 %v532
        %v821 = vunpack.c.h.b16 %v532
        %v822 = vunpack.c.l.b16 %v533
        %v823 = vunpack.c.h.b16 %v533
        %v824 = vunpack.c.l.b16 %v534
        %v825 = vunpack.c.h.b16 %v534
        %v826 = vunpack.c.l.b16 %v535
        %v827 = vunpack.c.h.b16 %v535
        %v828 = vunpack.c.l.b16 %v536
        %v829 = vunpack.c.h.b16 %v536
        %v830 = vunpack.c.l.b16 %v537
        %v831 = vunpack.c.h.b16 %v537
        %v832 = vunpack.c.l.b16 %v538
        %v833 = vunpack.c.h.b16 %v538
        %v834 = vunpack.c.l.b16 %v539
        %v835 = vunpack.c.h.b16 %v539
        %v836 = vunpack.c.l.b16 %v540
        %v837 = vunpack.c.h.b16 %v540
        %v838 = vunpack.c.l.b16 %v541
        %v839 = vunpack.c.h.b16 %v541
        %v840 = vunpack.c.l.b16 %v542
        %v841 = vunpack.c.h.b16 %v542
        %v842 = vunpack.c.l.b16 %v543
        %v843 = vunpack.c.h.b16 %v543
        %v844 = vunpack.c.l.b16 %v544
        %v845 = vunpack.c.h.b16 %v544
        %v846 = vunpack.c.l.b16 %v545
        %v847 = vunpack.c.h.b16 %v545
        %v848 = vunpack.c.l.b16 %v546
        %v849 = vunpack.c.h.b16 %v546
        %v850 = vunpack.c.l.b16 %v547
        %v851 = vunpack.c.h.b16 %v547
        %v852 = vunpack.c.l.b16 %v548
        %v853 = vunpack.c.h.b16 %v548
        %v854 = vunpack.c.l.b16 %v549
        %v855 = vunpack.c.h.b16 %v549
        %v856 = vunpack.c.l.b16 %v550
        %v857 = vunpack.c.h.b16 %v550
        %v858 = vunpack.c.l.b16 %v551
        %v859 = vunpack.c.h.b16 %v551
        %v860 = vunpack.c.l.b16 %v552
        %v861 = vunpack.c.h.b16 %v552
        %v862 = vunpack.c.l.b16 %v553
        %v863 = vunpack.c.h.b16 %v553
        %v864 = vunpack.c.l.b16 %v554
        %v865 = vunpack.c.h.b16 %v554
        %v866 = vunpack.c.l.b16 %v555
        %v867 = vunpack.c.h.b16 %v555
        %v868 = vunpack.c.l.b16 %v556
        %v869 = vunpack.c.h.b16 %v556
        %v870 = vunpack.c.l.b16 %v557
        %v871 = vunpack.c.h.b16 %v557
        %v872 = vunpack.c.l.b16 %v558
        %v873 = vunpack.c.h.b16 %v558
        %v874 = vunpack.c.l.b16 %v559
        %v875 = vunpack.c.h.b16 %v559
        %v876 = vunpack.c.l.b16 %v560
        %v877 = vunpack.c.h.b16 %v560
        %v878 = vunpack.c.l.b16 %v561
        %v879 = vunpack.c.h.b16 %v561
        %v880 = vunpack.c.l.b16 %v562
        %v881 = vunpack.c.h.b16 %v562
        %v882 = vunpack.c.l.b16 %v563
        %v883 = vunpack.c.h.b16 %v563
        %v884 = vunpack.c.l.b16 %v564
        %v885 = vunpack.c.h.b16 %v564
        %v886 = vunpack.c.l.b16 %v565
        %v887 = vunpack.c.h.b16 %v565
        %v888 = vunpack.c.l.b16 %v566
        %v889 = vunpack.c.h.b16 %v566
        %v890 = vunpack.c.l.b16 %v567
        %v891 = vunpack.c.h.b16 %v567
        %v892 = vunpack.c.l.b16 %v568
        %v893 = vunpack.c.h.b16 %v568
        %v894 = vunpack.c.l.b16 %v569
        %v895 = vunpack.c.h.b16 %v569
        %v896 = vunpack.c.l.b16 %v570
        %v897 = vunpack.c.h.b16 %v570
        %v898 = vunpack.c.l.b16 %v571
        %v899 = vunpack.c.h.b16 %v571
        %v900 = vunpack.c.l.b16 %v572
        %v901 = vunpack.c.h.b16 %v572
        %v902 = vunpack.c.l.b16 %v573
        %v903 = vunpack.c.h.b16 %v573
        %v904 = vunpack.c.l.b16 %v574
        %v905 = vunpack.c.h.b16 %v574
        %v906 = vunpack.c.l.b16 %v575
        %v907 = vunpack.c.h.b16 %v575
        %v908 = vunpack.c.l.b16 %v576
        %v909 = vunpack.c.h.b16 %v576
        %v910 = vunpack.c.l.b16 %v577
        %v911 = vunpack.c.h.b16 %v577
        %v912 = vunpack.c.l.b16 %v578
        %v913 = vunpack.c.h.b16 %v578
        %v914 = vunpack.c.l.b16 %v579
        %v915 = vunpack.c.h.b16 %v579
        %v916 = vunpack.c.l.b16 %v580
        %v917 = vunpack.c.h.b16 %v580
        %v918 = vunpack.c.l.b16 %v581
        %v919 = vunpack.c.h.b16 %v581
        %v920 = vunpack.c.l.b16 %v582
        %v921 = vunpack.c.h.b16 %v582
        %v922 = vunpack.c.l.b16 %v583
        %v923 = vunpack.c.h.b16 %v583
        %v924 = vunpack.c.l.b16 %v584
        %v925 = vunpack.c.h.b16 %v584
        %v926 = vunpack.c.l.b16 %v585
        %v927 = vunpack.c.h.b16 %v585
        %v928 = vunpack.c.l.b16 %v586
        %v929 = vunpack.c.h.b16 %v586
        %v930 = vunpack.c.l.b16 %v587
        %v931 = vunpack.c.h.b16 %v587
        %v932 = vunpack.c.l.b16 %v588
        %v933 = vunpack.c.h.b16 %v588
        %v934 = vunpack.c.l.b16 %v589
        %v935 = vunpack.c.h.b16 %v589
        %v936 = vunpack.c.l.b16 %v590
        %v937 = vunpack.c.h.b16 %v590
        %v938 = vunpack.c.l.b16 %v591
        %v939 = vunpack.c.h.b16 %v591
        %v940 = vunpack.c.l.b16 %v592
        %v941 = vunpack.c.h.b16 %v592
        %v942 = vunpack.c.l.b16 %v593
        %v943 = vunpack.c.h.b16 %v593
        %v944 = vunpack.c.l.b16 %v594
        %v945 = vunpack.c.h.b16 %v594
        %v946 = vunpack.c.l.b16 %v595
        %v947 = vunpack.c.h.b16 %v595
        %v948 = vunpack.c.l.b16 %v596
        %v949 = vunpack.c.h.b16 %v596
        %v950 = vunpack.c.l.b16 %v597
        %v951 = vunpack.c.h.b16 %v597
        %v952 = vunpack.c.l.b16 %v598
        %v953 = vunpack.c.h.b16 %v598
        %v954 = vunpack.c.l.b16 %v599
        %v955 = vunpack.c.h.b16 %v599
        %v956 = vunpack.c.l.b16 %v600
        %v957 = vunpack.c.h.b16 %v600
        %v958 = vunpack.c.l.b16 %v601
        %v959 = vunpack.c.h.b16 %v601
        %v960 = vunpack.c.l.b16 %v602
        %v961 = vunpack.c.h.b16 %v602
        %v962 = vunpack.c.l.b16 %v603
        %v963 = vunpack.c.h.b16 %v603
        %v964 = vunpack.c.l.b16 %v604
        %v965 = vunpack.c.h.b16 %v604
        %v966 = vunpack.c.l.b16 %v605
        %v967 = vunpack.c.h.b16 %v605
        %v968 = vunpack.c.l.b16 %v606
        %v969 = vunpack.c.h.b16 %v606
        %v970 = vunpack.c.l.b16 %v607
        %v971 = vunpack.c.h.b16 %v607
        %v972 = vunpack.c.l.b16 %v608
        %v973 = vunpack.c.h.b16 %v608
        %v974 = vunpack.c.l.b16 %v609
        %v975 = vunpack.c.h.b16 %v609
        %v976 = vunpack.c.l.b16 %v610
        %v977 = vunpack.c.h.b16 %v610
        %v978 = vunpack.c.l.b16 %v611
        %v979 = vunpack.c.h.b16 %v611
        %v980 = vunpack.c.l.b16 %v612
        %v981 = vunpack.c.h.b16 %v612
        %v982 = vunpack.c.l.b16 %v613
        %v983 = vunpack.c.h.b16 %v613
        %v984 = vunpack.c.l.b16 %v614
        %v985 = vunpack.c.h.b16 %v614
        %v986 = vunpack.c.l.b16 %v615
        %v987 = vunpack.c.h.b16 %v615
        %v988 = vunpack.c.l.b16 %v616
        %v989 = vunpack.c.h.b16 %v616
        %v990 = vunpack.c.l.b16 %v617
        %v991 = vunpack.c.h.b16 %v617
        %v992 = vunpack.c.l.b16 %v618
        %v993 = vunpack.c.h.b16 %v618
        %v994 = vunpack.c.l.b16 %v619
        %v995 = vunpack.c.h.b16 %v619
        %v996 = vunpack.c.l.b16 %v620
        %v997 = vunpack.c.h.b16 %v620
        %v998 = vunpack.c.l.b16 %v621
        %v999 = vunpack.c.h.b16 %v621
        %v1000 = vunpack.c.l.b16 %v622
        %v1001 = vunpack.c.h.b16 %v622
        %v1002 = vunpack.c.l.b16 %v623
        %v1003 = vunpack.c.h.b16 %v623
        %v1004 = vunpack.c.l.b16 %v624
        %v1005 = vunpack.c.h.b16 %v624
        %v1006 = vunpack.c.l.b16 %v625
        %v1007 = vunpack.c.h.b16 %v625
        %v1008 = vunpack.c.l.b16 %v626
        %v1009 = vunpack.c.h.b16 %v626
        %v1010 = vunpack.c.l.b16 %v627
        %v1011 = vunpack.c.h.b16 %v627
        %v1012 = vunpack.c.l.b16 %v628
        %v1013 = vunpack.c.h.b16 %v628
        %v1014 = vunpack.c.l.b16 %v629
        %v1015 = vunpack.c.h.b16 %v629
        %v1016 = vunpack.c.l.b16 %v630
        %v1017 = vunpack.c.h.b16 %v630
        %v1018 = vunpack.c.l.b16 %v631
        %v1019 = vunpack.c.h.b16 %v631
        %v1020 = vunpack.c.l.b16 %v632
        %v1021 = vunpack.c.h.b16 %v632
        %v1022 = vunpack.c.l.b16 %v633
        %v1023 = vunpack.c.h.b16 %v633
        %v1024 = vunpack.c.l.b16 %v634
        %v1025 = vunpack.c.h.b16 %v634
        %v1026 = vunpack.c.l.b16 %v635
        %v1027 = vunpack.c.h.b16 %v635
        %v1028 = vunpack.c.l.b16 %v636
        %v1029 = vunpack.c.h.b16 %v636
        %v1030 = vunpack.c.l.b16 %v637
        %v1031 = vunpack.c.h.b16 %v637
        %v1032 = vunpack.c.l.b16 %v638
        %v1033 = vunpack.c.h.b16 %v638
        %v1034 = vunpack.c.l.b16 %v639
        %v1035 = vunpack.c.h.b16 %v639
        %v1036 = vunpack.c.l.b16 %v640
        %v1037 = vunpack.c.h.b16 %v640
        %v1038 = vunpack.c.l.b16 %v641
        %v1039 = vunpack.c.h.b16 %v641
        %v1040 = vunpack.c.l.b16 %v642
        %v1041 = vunpack.c.h.b16 %v642
        %v1042 = vunpack.c.l.b16 %v643
        %v1043 = vunpack.c.h.b16 %v643
        %v1044 = vunpack.c.l.b16 %v644
        %v1045 = vunpack.c.h.b16 %v644
        %v1046 = vunpack.c.l.b16 %v645
        %v1047 = vunpack.c.h.b16 %v645
        %v1048 = vunpack.c.l.b16 %v646
        %v1049 = vunpack.c.h.b16 %v646
        %v1050 = vunpack.c.l.b16 %v647
        %v1051 = vunpack.c.h.b16 %v647
        %v1052 = vunpack.c.l.b16 %v648
        %v1053 = vunpack.c.h.b16 %v648
        %v1054 = vunpack.c.l.b16 %v649
        %v1055 = vunpack.c.h.b16 %v649
        %v1056 = vunpack.c.l.b16 %v650
        %v1057 = vunpack.c.h.b16 %v650
        %v1058 = vunpack.c.l.b16 %v651
        %v1059 = vunpack.c.h.b16 %v651
        %v1060 = vunpack.c.l.b16 %v652
        %v1061 = vunpack.c.h.b16 %v652
        %v1062 = vunpack.c.l.b16 %v653
        %v1063 = vunpack.c.h.b16 %v653
        %v1064 = vunpack.c.l.b16 %v654
        %v1065 = vunpack.c.h.b16 %v654
        %v1066 = vunpack.c.l.b16 %v655
        %v1067 = vunpack.c.h.b16 %v655
        %v1068 = vunpack.c.l.b16 %v656
        %v1069 = vunpack.c.h.b16 %v656
        %v1070 = vunpack.c.l.b16 %v657
        %v1071 = vunpack.c.h.b16 %v657
        %v1072 = vpack.c.b16 %v820, %v816
        %v1073 = vpack.c.b16 %v821, %v817
        %v1074 = vpack.c.b16 %v822, %v818
        %v1075 = vpack.c.b16 %v823, %v819
        %v1076 = vpack.c.b16 %v828, %v824
        %v1077 = vpack.c.b16 %v829, %v825
        %v1078 = vpack.c.b16 %v830, %v826
        %v1079 = vpack.c.b16 %v831, %v827
        %v1080 = vpack.c.b16 %v836, %v832
        %v1081 = vpack.c.b16 %v837, %v833
        %v1082 = vpack.c.b16 %v838, %v834
        %v1083 = vpack.c.b16 %v839, %v835
        %v1084 = vpack.c.b16 %v844, %v840
        %v1085 = vpack.c.b16 %v845, %v841
        %v1086 = vpack.c.b16 %v846, %v842
        %v1087 = vpack.c.b16 %v847, %v843
        %v1088 = vpack.c.b16 %v852, %v848
        %v1089 = vpack.c.b16 %v853, %v849
        %v1090 = vpack.c.b16 %v854, %v850
        %v1091 = vpack.c.b16 %v855, %v851
        %v1092 = vpack.c.b16 %v860, %v856
        %v1093 = vpack.c.b16 %v861, %v857
        %v1094 = vpack.c.b16 %v862, %v858
        %v1095 = vpack.c.b16 %v863, %v859
        %v1096 = vpack.c.b16 %v868, %v864
        %v1097 = vpack.c.b16 %v869, %v865
        %v1098 = vpack.c.b16 %v870, %v866
        %v1099 = vpack.c.b16 %v871, %v867
        %v1100 = vpack.c.b16 %v876, %v872
        %v1101 = vpack.c.b16 %v877, %v873
        %v1102 = vpack.c.b16 %v878, %v874
        %v1103 = vpack.c.b16 %v879, %v875
        %v1104 = vpack.c.b16 %v884, %v880
        %v1105 = vpack.c.b16 %v885, %v881
        %v1106 = vpack.c.b16 %v886, %v882
        %v1107 = vpack.c.b16 %v887, %v883
        %v1108 = vpack.c.b16 %v892, %v888
        %v1109 = vpack.c.b16 %v893, %v889
        %v1110 = vpack.c.b16 %v894, %v890
        %v1111 = vpack.c.b16 %v895, %v891
        %v1112 = vpack.c.b16 %v900, %v896
        %v1113 = vpack.c.b16 %v901, %v897
        %v1114 = vpack.c.b16 %v902, %v898
        %v1115 = vpack.c.b16 %v903, %v899
        %v1116 = vpack.c.b16 %v908, %v904
        %v1117 = vpack.c.b16 %v909, %v905
        %v1118 = vpack.c.b16 %v910, %v906
        %v1119 = vpack.c.b16 %v911, %v907
        %v1120 = vpack.c.b16 %v916, %v912
        %v1121 = vpack.c.b16 %v917, %v913
        %v1122 = vpack.c.b16 %v918, %v914
        %v1123 = vpack.c.b16 %v919, %v915
        %v1124 = vpack.c.b16 %v924, %v920
        %v1125 = vpack.c.b16 %v925, %v921
        %v1126 = vpack.c.b16 %v926, %v922
        %v1127 = vpack.c.b16 %v927, %v923
        %v1128 = vpack.c.b16 %v932, %v928
        %v1129 = vpack.c.b16 %v933, %v929
        %v1130 = vpack.c.b16 %v934, %v930
        %v1131 = vpack.c.b16 %v935, %v931
        %v1132 = vpack.c.b16 %v940, %v936
        %v1133 = vpack.c.b16 %v941, %v937
        %v1134 = vpack.c.b16 %v942, %v938
        %v1135 = vpack.c.b16 %v943, %v939
        %v1136 = vpack.c.b16 %v948, %v944
        %v1137 = vpack.c.b16 %v949, %v945
        %v1138 = vpack.c.b16 %v950, %v946
        %v1139 = vpack.c.b16 %v951, %v947
        %v1140 = vpack.c.b16 %v956, %v952
        %v1141 = vpack.c.b16 %v957, %v953
        %v1142 = vpack.c.b16 %v958, %v954
        %v1143 = vpack.c.b16 %v959, %v955
        %v1144 = vpack.c.b16 %v964, %v960
        %v1145 = vpack.c.b16 %v965, %v961
        %v1146 = vpack.c.b16 %v966, %v962
        %v1147 = vpack.c.b16 %v967, %v963
        %v1148 = vpack.c.b16 %v972, %v968
        %v1149 = vpack.c.b16 %v973, %v969
        %v1150 = vpack.c.b16 %v974, %v970
        %v1151 = vpack.c.b16 %v975, %v971
        %v1152 = vpack.c.b16 %v980, %v976
        %v1153 = vpack.c.b16 %v981, %v977
        %v1154 = vpack.c.b16 %v982, %v978
        %v1155 = vpack.c.b16 %v983, %v979
        %v1156 = vpack.c.b16 %v988, %v984
        %v1157 = vpack.c.b16 %v989, %v985
        %v1158 = vpack.c.b16 %v990, %v986
        %v1159 = vpack.c.b16 %v991, %v987
        %v1160 = vpack.c.b16 %v996, %v992
        %v1161 = vpack.c.b16 %v997, %v993
        %v1162 = vpack.c.b16 %v998, %v994
        %v1163 = vpack.c.b16 %v999, %v995
        %v1164 = vpack.c.b16 %v1004, %v1000
        %v1165 = vpack.c.b16 %v1005, %v1001
        %v1166 = vpack.c.b16 %v1006, %v1002
        %v1167 = vpack.c.b16 %v1007, %v1003
        %v1168 = vpack.c.b16 %v1012, %v1008
        %v1169 = vpack.c.b16 %v1013, %v1009
        %v1170 = vpack.c.b16 %v1014, %v1010
        %v1171 = vpack.c.b16 %v1015, %v1011
        %v1172 = vpack.c.b16 %v1020, %v1016
        %v1173 = vpack.c.b16 %v1021, %v1017
        %v1174 = vpack.c.b16 %v1022, %v1018
        %v1175 = vpack.c.b16 %v1023, %v1019
        %v1176 = vpack.c.b16 %v1028, %v1024
        %v1177 = vpack.c.b16 %v1029, %v1025
        %v1178 = vpack.c.b16 %v1030, %v1026
        %v1179 = vpack.c.b16 %v1031, %v1027
        %v1180 = vpack.c.b16 %v1036, %v1032
        %v1181 = vpack.c.b16 %v1037, %v1033
        %v1182 = vpack.c.b16 %v1038, %v1034
        %v1183 = vpack.c.b16 %v1039, %v1035
        %v1184 = vpack.c.b16 %v1044, %v1040
        %v1185 = vpack.c.b16 %v1045, %v1041
        %v1186 = vpack.c.b16 %v1046, %v1042
        %v1187 = vpack.c.b16 %v1047, %v1043
        %v1188 = vpack.c.b16 %v1052, %v1048
        %v1189 = vpack.c.b16 %v1053, %v1049
        %v1190 = vpack.c.b16 %v1054, %v1050
        %v1191 = vpack.c.b16 %v1055, %v1051
        %v1192 = vpack.c.b16 %v1060, %v1056
        %v1193 = vpack.c.b16 %v1061, %v1057
        %v1194 = vpack.c.b16 %v1062, %v1058
        %v1195 = vpack.c.b16 %v1063, %v1059
        %v1196 = vpack.c.b16 %v1068, %v1064
        %v1197 = vpack.c.b16 %v1069, %v1065
        %v1198 = vpack.c.b16 %v1070, %v1066
        %v1199 = vpack.c.b16 %v1071, %v1067
        %1328 = vmatpush.bf16.msra.mxu0 %v1100
        %1329 = vmatpush.bf16.msra.mxu0 %v1096
        %1330 = vmatpush.bf16.msra.mxu0 %v1092
        %1331 = vmatpush.bf16.msra.mxu0 %v1088
        %1332 = vmatpush.bf16.msra.mxu0 %v1084
        %1333 = vmatpush.bf16.msra.mxu0 %v1080
        %1334 = vmatpush.bf16.msra.mxu0 %v1076
        %1335 = vmatpush.bf16.msra.mxu0 %v1072
        %1336 = vmatmul.bf16.gmra.mxu0 %v680
        %v1337 = vpop.f32.mrf.mxu0
        %v1338 = vadd.f32 %v660, %v1337
        %v1339 = vpop.f32.mrf.mxu0
        %v1340 = vadd.f32 %v660, %v1339
        %1341 = vdwg.mxu0
        %1342 = vmatpush.bf16.msra.mxu0 %v1132
        %1343 = vmatpush.bf16.msra.mxu0 %v1128
        %1344 = vmatpush.bf16.msra.mxu0 %v1124
        %1345 = vmatpush.bf16.msra.mxu0 %v1120
        %1346 = vmatpush.bf16.msra.mxu0 %v1116
        %1347 = vmatpush.bf16.msra.mxu0 %v1112
        %1348 = vmatpush.bf16.msra.mxu0 %v1108
        %1349 = vmatpush.bf16.msra.mxu0 %v1104
        %1350 = vmatmul.bf16.gmra.mxu0 %v681
        %v1351 = vpop.f32.mrf.mxu0
        %v1352 = vadd.f32 %v1338, %v1351
        %v1353 = vpop.f32.mrf.mxu0
        %v1354 = vadd.f32 %v1340, %v1353
        %1355 = vdwg.mxu0
        %1356 = vmatpush.bf16.msra.mxu0 %v1164
        %1357 = vmatpush.bf16.msra.mxu0 %v1160
        %1358 = vmatpush.bf16.msra.mxu0 %v1156
        %1359 = vmatpush.bf16.msra.mxu0 %v1152
        %1360 = vmatpush.bf16.msra.mxu0 %v1148
        %1361 = vmatpush.bf16.msra.mxu0 %v1144
        %1362 = vmatpush.bf16.msra.mxu0 %v1140
        %1363 = vmatpush.bf16.msra.mxu0 %v1136
        %1364 = vmatmul.bf16.gmra.mxu0 %v682
        %v1365 = vpop.f32.mrf.mxu0
        %v1366 = vadd.f32 %v1352, %v1365
        %v1367 = vpop.f32.mrf.mxu0
        %v1368 = vadd.f32 %v1354, %v1367
        %1369 = vdwg.mxu0
        %1370 = vmatpush.bf16.msra.mxu0 %v1196
        %1371 = vmatpush.bf16.msra.mxu0 %v1192
        %1372 = vmatpush.bf16.msra.mxu0 %v1188
        %1373 = vmatpush.bf16.msra.mxu0 %v1184
        %1374 = vmatpush.bf16.msra.mxu0 %v1180
        %1375 = vmatpush.bf16.msra.mxu0 %v1176
        %1376 = vmatpush.bf16.msra.mxu0 %v1172
        %1377 = vmatpush.bf16.msra.mxu0 %v1168
        %1378 = vmatmul.bf16.gmra.mxu0 %v683
        %v1379 = vpop.f32.mrf.mxu0
        %v1380 = vadd.f32 %v1366, %v1379
        %v1381 = vpop.f32.mrf.mxu0
        %v1382 = vadd.f32 %v1368, %v1381
        %1383 = vdwg.mxu0
        %1384 = vmatpush.bf16.msra.mxu0 %v1101
        %1385 = vmatpush.bf16.msra.mxu0 %v1097
        %1386 = vmatpush.bf16.msra.mxu0 %v1093
        %1387 = vmatpush.bf16.msra.mxu0 %v1089
        %1388 = vmatpush.bf16.msra.mxu0 %v1085
        %1389 = vmatpush.bf16.msra.mxu0 %v1081
        %1390 = vmatpush.bf16.msra.mxu0 %v1077
        %1391 = vmatpush.bf16.msra.mxu0 %v1073
        %1392 = vmatmul.bf16.gmra.mxu0 %v680
        %v1393 = vpop.f32.mrf.mxu0
        %v1394 = vadd.f32 %v661, %v1393
        %v1395 = vpop.f32.mrf.mxu0
        %v1396 = vadd.f32 %v661, %v1395
        %1397 = vdwg.mxu0
        %1398 = vmatpush.bf16.msra.mxu0 %v1133
        %1399 = vmatpush.bf16.msra.mxu0 %v1129
        %1400 = vmatpush.bf16.msra.mxu0 %v1125
        %1401 = vmatpush.bf16.msra.mxu0 %v1121
        %1402 = vmatpush.bf16.msra.mxu0 %v1117
        %1403 = vmatpush.bf16.msra.mxu0 %v1113
        %1404 = vmatpush.bf16.msra.mxu0 %v1109
        %1405 = vmatpush.bf16.msra.mxu0 %v1105
        %1406 = vmatmul.bf16.gmra.mxu0 %v681
        %v1407 = vpop.f32.mrf.mxu0
        %v1408 = vadd.f32 %v1394, %v1407
        %v1409 = vpop.f32.mrf.mxu0
        %v1410 = vadd.f32 %v1396, %v1409
        %1411 = vdwg.mxu0
        %1412 = vmatpush.bf16.msra.mxu0 %v1165
        %1413 = vmatpush.bf16.msra.mxu0 %v1161
        %1414 = vmatpush.bf16.msra.mxu0 %v1157
        %1415 = vmatpush.bf16.msra.mxu0 %v1153
        %1416 = vmatpush.bf16.msra.mxu0 %v1149
        %1417 = vmatpush.bf16.msra.mxu0 %v1145
        %1418 = vmatpush.bf16.msra.mxu0 %v1141
        %1419 = vmatpush.bf16.msra.mxu0 %v1137
        %1420 = vmatmul.bf16.gmra.mxu0 %v682
        %v1421 = vpop.f32.mrf.mxu0
        %v1422 = vadd.f32 %v1408, %v1421
        %v1423 = vpop.f32.mrf.mxu0
        %v1424 = vadd.f32 %v1410, %v1423
        %1425 = vdwg.mxu0
        %1426 = vmatpush.bf16.msra.mxu0 %v1197
        %1427 = vmatpush.bf16.msra.mxu0 %v1193
        %1428 = vmatpush.bf16.msra.mxu0 %v1189
        %1429 = vmatpush.bf16.msra.mxu0 %v1185
        %1430 = vmatpush.bf16.msra.mxu0 %v1181
        %1431 = vmatpush.bf16.msra.mxu0 %v1177
        %1432 = vmatpush.bf16.msra.mxu0 %v1173
        %1433 = vmatpush.bf16.msra.mxu0 %v1169
        %1434 = vmatmul.bf16.gmra.mxu0 %v683
        %v1435 = vpop.f32.mrf.mxu0
        %v1436 = vadd.f32 %v1422, %v1435
        %v1437 = vpop.f32.mrf.mxu0
        %v1438 = vadd.f32 %v1424, %v1437
        %1439 = vdwg.mxu0
        %1440 = vmatpush.bf16.msra.mxu0 %v1102
        %1441 = vmatpush.bf16.msra.mxu0 %v1098
        %1442 = vmatpush.bf16.msra.mxu0 %v1094
        %1443 = vmatpush.bf16.msra.mxu0 %v1090
        %1444 = vmatpush.bf16.msra.mxu0 %v1086
        %1445 = vmatpush.bf16.msra.mxu0 %v1082
        %1446 = vmatpush.bf16.msra.mxu0 %v1078
        %1447 = vmatpush.bf16.msra.mxu0 %v1074
        %1448 = vmatmul.bf16.gmra.mxu0 %v680
        %v1449 = vpop.f32.mrf.mxu0
        %v1450 = vadd.f32 %v662, %v1449
        %v1451 = vpop.f32.mrf.mxu0
        %v1452 = vadd.f32 %v662, %v1451
        %1453 = vdwg.mxu0
        %1454 = vmatpush.bf16.msra.mxu0 %v1134
        %1455 = vmatpush.bf16.msra.mxu0 %v1130
        %1456 = vmatpush.bf16.msra.mxu0 %v1126
        %1457 = vmatpush.bf16.msra.mxu0 %v1122
        %1458 = vmatpush.bf16.msra.mxu0 %v1118
        %1459 = vmatpush.bf16.msra.mxu0 %v1114
        %1460 = vmatpush.bf16.msra.mxu0 %v1110
        %1461 = vmatpush.bf16.msra.mxu0 %v1106
        %1462 = vmatmul.bf16.gmra.mxu0 %v681
        %v1463 = vpop.f32.mrf.mxu0
        %v1464 = vadd.f32 %v1450, %v1463
        %v1465 = vpop.f32.mrf.mxu0
        %v1466 = vadd.f32 %v1452, %v1465
        %1467 = vdwg.mxu0
        %1468 = vmatpush.bf16.msra.mxu0 %v1166
        %1469 = vmatpush.bf16.msra.mxu0 %v1162
        %1470 = vmatpush.bf16.msra.mxu0 %v1158
        %1471 = vmatpush.bf16.msra.mxu0 %v1154
        %1472 = vmatpush.bf16.msra.mxu0 %v1150
        %1473 = vmatpush.bf16.msra.mxu0 %v1146
        %1474 = vmatpush.bf16.msra.mxu0 %v1142
        %1475 = vmatpush.bf16.msra.mxu0 %v1138
        %1476 = vmatmul.bf16.gmra.mxu0 %v682
        %v1477 = vpop.f32.mrf.mxu0
        %v1478 = vadd.f32 %v1464, %v1477
        %v1479 = vpop.f32.mrf.mxu0
        %v1480 = vadd.f32 %v1466, %v1479
        %1481 = vdwg.mxu0
        %1482 = vmatpush.bf16.msra.mxu0 %v1198
        %1483 = vmatpush.bf16.msra.mxu0 %v1194
        %1484 = vmatpush.bf16.msra.mxu0 %v1190
        %1485 = vmatpush.bf16.msra.mxu0 %v1186
        %1486 = vmatpush.bf16.msra.mxu0 %v1182
        %1487 = vmatpush.bf16.msra.mxu0 %v1178
        %1488 = vmatpush.bf16.msra.mxu0 %v1174
        %1489 = vmatpush.bf16.msra.mxu0 %v1170
        %1490 = vmatmul.bf16.gmra.mxu0 %v683
        %v1491 = vpop.f32.mrf.mxu0
        %v1492 = vadd.f32 %v1478, %v1491
        %v1493 = vpop.f32.mrf.mxu0
        %v1494 = vadd.f32 %v1480, %v1493
        %1495 = vdwg.mxu0
        %1496 = vmatpush.bf16.msra.mxu0 %v1103
        %1497 = vmatpush.bf16.msra.mxu0 %v1099
        %1498 = vmatpush.bf16.msra.mxu0 %v1095
        %1499 = vmatpush.bf16.msra.mxu0 %v1091
        %1500 = vmatpush.bf16.msra.mxu0 %v1087
        %1501 = vmatpush.bf16.msra.mxu0 %v1083
        %1502 = vmatpush.bf16.msra.mxu0 %v1079
        %1503 = vmatpush.bf16.msra.mxu0 %v1075
        %1504 = vmatmul.bf16.gmra.mxu0 %v680
        %v1505 = vpop.f32.mrf.mxu0
        %v1506 = vadd.f32 %v663, %v1505
        %v1507 = vpop.f32.mrf.mxu0
        %v1508 = vadd.f32 %v663, %v1507
        %1509 = vdwg.mxu0
        %1510 = vmatpush.bf16.msra.mxu0 %v1135
        %1511 = vmatpush.bf16.msra.mxu0 %v1131
        %1512 = vmatpush.bf16.msra.mxu0 %v1127
        %1513 = vmatpush.bf16.msra.mxu0 %v1123
        %1514 = vmatpush.bf16.msra.mxu0 %v1119
        %1515 = vmatpush.bf16.msra.mxu0 %v1115
        %1516 = vmatpush.bf16.msra.mxu0 %v1111
        %1517 = vmatpush.bf16.msra.mxu0 %v1107
        %1518 = vmatmul.bf16.gmra.mxu0 %v681
        %v1519 = vpop.f32.mrf.mxu0
        %v1520 = vadd.f32 %v1506, %v1519
        %v1521 = vpop.f32.mrf.mxu0
        %v1522 = vadd.f32 %v1508, %v1521
        %1523 = vdwg.mxu0
        %1524 = vmatpush.bf16.msra.mxu0 %v1167
        %1525 = vmatpush.bf16.msra.mxu0 %v1163
        %1526 = vmatpush.bf16.msra.mxu0 %v1159
        %1527 = vmatpush.bf16.msra.mxu0 %v1155
        %1528 = vmatpush.bf16.msra.mxu0 %v1151
        %1529 = vmatpush.bf16.msra.mxu0 %v1147
        %1530 = vmatpush.bf16.msra.mxu0 %v1143
        %1531 = vmatpush.bf16.msra.mxu0 %v1139
        %1532 = vmatmul.bf16.gmra.mxu0 %v682
        %v1533 = vpop.f32.mrf.mxu0
        %v1534 = vadd.f32 %v1520, %v1533
        %v1535 = vpop.f32.mrf.mxu0
        %v1536 = vadd.f32 %v1522, %v1535
        %1537 = vdwg.mxu0
        %1538 = vmatpush.bf16.msra.mxu0 %v1199
        %1539 = vmatpush.bf16.msra.mxu0 %v1195
        %1540 = vmatpush.bf16.msra.mxu0 %v1191
        %1541 = vmatpush.bf16.msra.mxu0 %v1187
        %1542 = vmatpush.bf16.msra.mxu0 %v1183
        %1543 = vmatpush.bf16.msra.mxu0 %v1179
        %1544 = vmatpush.bf16.msra.mxu0 %v1175
        %1545 = vmatpush.bf16.msra.mxu0 %v1171
        %1546 = vmatmul.bf16.gmra.mxu0 %v683
        %v1547 = vpop.f32.mrf.mxu0
        %v1548 = vadd.f32 %v1534, %v1547
        %v1549 = vpop.f32.mrf.mxu0
        %v1550 = vadd.f32 %v1536, %v1549
        %1551 = vdwg.mxu0
        %v1552 = vmax.f32 %v1380, 0.0
        %v1553 = vmax.f32 %v1436, 0.0
        %v1554 = vmax.f32 %v1492, 0.0
        %v1555 = vmax.f32 %v1548, 0.0
        %v1556 = vmax.f32 %v1382, 0.0
        %v1557 = vmax.f32 %v1438, 0.0
        %v1558 = vmax.f32 %v1494, 0.0
        %v1559 = vmax.f32 %v1550, 0.0
        %v1560 = vrot.slane %v1552, 4
        %v1561 = vadd.f32 %v1552, %v1560
        %v1562 = vrot.slane %v1561, 2
        %v1563 = vadd.f32 %v1561, %v1562
        %v1564 = vrot.slane %v1563, 1
        %v1565 = vadd.f32 %v1563, %v1564
        %v1566 = vrot.slane %v1553, 4
        %v1567 = vadd.f32 %v1553, %v1566
        %v1568 = vrot.slane %v1567, 2
        %v1569 = vadd.f32 %v1567, %v1568
        %v1570 = vrot.slane %v1569, 1
        %v1571 = vadd.f32 %v1569, %v1570
        %v1572 = vrot.slane %v1554, 4
        %v1573 = vadd.f32 %v1554, %v1572
        %v1574 = vrot.slane %v1573, 2
        %v1575 = vadd.f32 %v1573, %v1574
        %v1576 = vrot.slane %v1575, 1
        %v1577 = vadd.f32 %v1575, %v1576
        %v1578 = vrot.slane %v1555, 4
        %v1579 = vadd.f32 %v1555, %v1578
        %v1580 = vrot.slane %v1579, 2
        %v1581 = vadd.f32 %v1579, %v1580
        %v1582 = vrot.slane %v1581, 1
        %v1583 = vadd.f32 %v1581, %v1582
        %v1584 = vrot.slane %v1556, 4
        %v1585 = vadd.f32 %v1556, %v1584
        %v1586 = vrot.slane %v1585, 2
        %v1587 = vadd.f32 %v1585, %v1586
        %v1588 = vrot.slane %v1587, 1
        %v1589 = vadd.f32 %v1587, %v1588
        %v1590 = vrot.slane %v1557, 4
        %v1591 = vadd.f32 %v1557, %v1590
        %v1592 = vrot.slane %v1591, 2
        %v1593 = vadd.f32 %v1591, %v1592
        %v1594 = vrot.slane %v1593, 1
        %v1595 = vadd.f32 %v1593, %v1594
        %v1596 = vrot.slane %v1558, 4
        %v1597 = vadd.f32 %v1558, %v1596
        %v1598 = vrot.slane %v1597, 2
        %v1599 = vadd.f32 %v1597, %v1598
        %v1600 = vrot.slane %v1599, 1
        %v1601 = vadd.f32 %v1599, %v1600
        %v1602 = vrot.slane %v1559, 4
        %v1603 = vadd.f32 %v1559, %v1602
        %v1604 = vrot.slane %v1603, 2
        %v1605 = vadd.f32 %v1603, %v1604
        %v1606 = vrot.slane %v1605, 1
        %v1607 = vadd.f32 %v1605, %v1606
        %v1608 = vrcp.pop 8.0
        %v1609 = vmul.f32 8.0, %v1608
        %v1610 = vsub.f32 1.0, %v1609
        %v1611 = vmul.f32 %v1608, %v1610
        %v1612 = vadd.f32 %v1608, %v1611
        %vm1613 = vweird.f32 %v1608
        %v1614 = vsel %vm1613, %v1608, %v1612
        %v1615 = vmul.f32 %v1565, %v1614
        %v1616 = vmul.f32 %v1571, %v1614
        %v1617 = vmul.f32 %v1577, %v1614
        %v1618 = vmul.f32 %v1583, %v1614
        %v1619 = vmul.f32 %v1589, %v1614
        %v1620 = vmul.f32 %v1595, %v1614
        %v1621 = vmul.f32 %v1601, %v1614
        %v1622 = vmul.f32 %v1607, %v1614
        %v1631 = vrot.slane %v1616, 6
        %v1632 = vrot.slane %v1617, 4
        %v1633 = vrot.slane %v1618, 2
        %v1634 = vrot.slane %v1620, 6
        %v1635 = vrot.slane %v1621, 4
        %v1636 = vrot.slane %v1622, 2
        %vm1637 = vcmask 1041408
        %v1638 = vsel %vm1637, %v1615, %v1631
        %vm1639 = vcmask 1045508
        %v1640 = vsel %vm1639, %v1632, %v1633
        %vm1641 = vcmask 1043456
        %v1642 = vsel %vm1641, %v1638, %v1640
        %v1643 = vsel %vm1637, %v1619, %v1634
        %v1644 = vsel %vm1639, %v1635, %v1636
        %v1645 = vsel %vm1641, %v1643, %v1644
        %vm1646 = vcmask 1044484
        %v1647 = vsel %vm1646, %v1642, %v1642
        %vm1648 = vcmask 1046534
        %v1649 = vsel %vm1648, %v1642, %v1647
        %v1650 = vrot.slane %v1645, 7
        %vm1651 = vcmask 1041409
        %v1652 = vsel %vm1651, %v1650, %v1649
        %vm1653 = vcmask 1043459
        %v1654 = vsel %vm1653, %v1650, %v1652
        %vm1655 = vcmask 1045509
        %v1656 = vsel %vm1655, %v1650, %v1654
        %vm1657 = vcmask 1047559
        %v1658 = vsel %vm1657, %v1650, %v1656
        %1660 = vst [vmem:[%s524] sm:$0xff] %v1658
        %s1661 = smul.u32 4, %s19
        %p1662 = scmp.lt.s32.totalorder %s18, 3
        %s1663 = scalar_select %p1662, %s18, 3
        %p1664 = scmp.lt.s32.totalorder %s1661, 7
        %s1665 = scalar_select %p1664, %s1661, 7
        %s1666 = smul.addr %s1663, 8
        %s1667 = sadd.s32 %s1665, %s1666
        %s1668 = smul.addr %s1667, 2
        %s1669 = scalar_lea.vmem %s3, %s1668
        // Predicated region
        $region56: #{aggregation_feature_forward.5} parent=50 // pred_check
          %p1670 = pneg %p128
        $region57: #{aggregation_feature_forward.5} parent=50 // pred_check_branch
          %1672 = sbr.rel (%p1670) target = $region59
        $region58: #{aggregation_feature_forward.5} parent=50 // pred_region
          %s1673 = smul.u32 4, %s19
        $region59: #{aggregation_feature_forward.5} parent=50 // pred_fallthru
          _
      $region51: #{aggregation_feature_forward.5} parent=5 // pred_fallthru
        _
      %p1674 = scmp.le.s32.totalorder 2, %s9
      // Predicated region
      $region60: #{aggregation_feature_forward.5} parent=5 // pred_check
        %p1675 = pneg %p1674
      $region61: #{aggregation_feature_forward.5} parent=5 // pred_check_branch
        %1677 = sbr.rel (%p1675) target = $region63
      $region62: #{aggregation_feature_forward.5} parent=5 // pred_region
        %s1678 = ssub.s32 %s9, 2
        // Predicated region
        $region64: #{aggregation_feature_forward.5} parent=62 // pred_check
          %p1679 = pneg %p134
        $region65: #{aggregation_feature_forward.5} parent=62 // pred_check_branch
          %1681 = sbr.rel (%p1679) target = $region67
        $region66: #{aggregation_feature_forward.5} parent=62 // pred_region
          %s1682 = smul.u32 4, %s21
          %p1683 = scmp.lt.s32.totalorder %s20, 3
          %s1684 = scalar_select %p1683, %s20, 3
          %p1685 = scmp.lt.s32.totalorder %s1682, 7
          %s1686 = scalar_select %p1685, %s1682, 7
          %s1687 = smul.addr %s1684, 8
          %s1688 = sadd.s32 %s1686, %s1687
          %s1689 = smul.addr %s1688, 2
          %s1690 = scalar_lea.vmem %s3, %s1689
        $region67: #{aggregation_feature_forward.5} parent=62 // pred_fallthru
          _
      $region63: #{aggregation_feature_forward.5} parent=5 // pred_fallthru
        _
    $region6: #{aggregation_feature_forward.5} parent=1 // loop_footer
      %s13 = sadd.s32 1, %s9
    $region7: #{aggregation_feature_forward.5} parent=1 // loop_footer_branch
      %8 = sbr.rel target = $region3
    $region8: #{aggregation_feature_forward.5} parent=1 // loop_exit
      _

// kernel: aggregation_feature_forward.4
$region0: #{aggregation_feature_forward.4}
  #allocation0 [shape = 'u32[]', space=smem, size = 0x4, offset = 0x4, fixed_abs, tag = 'smem constant byte address 0x4 - core index']
  #allocation1 [shape = 'u32[72,128]{1,0:T(1,128)}', space=vmem, size = 0x9000, scoped, tag = 'internal scratch']
  %s0 = inlined_call_operand.vmem [shape: bf16[4,16,13824], index: 0, kind: input, shape index: {}]
  %s1 = inlined_call_operand.hbm [shape: bf16[4,13824,512], index: 1, kind: input, shape index: {}]
  %s2 = inlined_call_operand.vmem [shape: f32[4,1,512], index: 2, kind: input, shape index: {}]
  %s3 = inlined_call_operand.vmem [shape: f32[4,16,512], index: 3, kind: output, shape index: {}]
  %s4 = sld [smem:[#allocation0]]
  $region80: #{aggregation_feature_forward.4} parent=0
    _
  %s6 = ssub.s32 1, %s4
  %s7 = scalar_select 0, %s6, %s4
  $region1: #{aggregation_feature_forward.4} parent=0
    #allocation2 [shape = 'u8[294912]{0}', space=vmem, size = 0x48000, scoped, tag = 'input window, operand 0']
    #allocation3 [shape = 'u8[9437184]{0}', space=vmem, size = 0x900000, scoped, tag = 'input window, operand 1']
    #allocation4 [shape = 's32[2]{0}', space=sflag, size = 0x8, scoped, tag = 'scoped memory for aggregation_feature_forward.4']
    %8 = vsyncpa [#allocation4], 0
    %s9 = scalar_lea.sflag [#allocation4], 1
    %10 = vsyncpa %s9, 0
    loop: start=0, step=1, limit=14
    $region2: #{aggregation_feature_forward.4} parent=1 // loop_pre_header
      _
    $region3: #{aggregation_feature_forward.4} parent=1 // loop_header
      %s12 = sphi 0, %s16
      %p13 = scmp.ge.s32.totalorder %s12, 14
      %s19 = sphi 0, %s45
      %s20 = sphi 0, %s41
      %s21 = sphi 0, %s37
      %s22 = sphi 0, %s33
      %s23 = sphi 0, %s19
      %s24 = sphi 0, %s20
      %s25 = sphi 0, %s21
      %s26 = sphi 0, %s22
      %s27 = sphi 0, %s23
      %s28 = sphi 0, %s24
      %s29 = sphi 0, %s25
      %s30 = sphi 0, %s26
      %s52 = sphi 0, %s54
      %s55 = sphi 0, %s52
      %s56 = sphi 0, %s55
      %s72 = sphi 0, %s56
      %s82 = sphi 0, %s84
      %s85 = sphi 0, %s82
      %s86 = sphi 0, %s85
      %s102 = sphi 0, %s86
      %s110 = sphi 0, %s112
      %s113 = sphi 0, %s110
      %s114 = sphi 0, %s113
      %s130 = sphi 0, %s114
      %s140 = sphi 0, %s142
      %s143 = sphi 0, %s140
      %s144 = sphi 0, %s143
      %s160 = sphi 0, %s144
    $region4: #{aggregation_feature_forward.4} parent=1 // loop_header_branch
      %15 = sbr.rel (%p13) target = $region8
    $region5: #{aggregation_feature_forward.4} parent=1 // loop_body
      %s17 = ssub.s32 %s12, 1
      %s18 = ssub.s32 %s12, 2
      %s31 = sadd.s32 1, %s22
      %p32 = scmp.ge.s32.totalorder %s31, 3
      %s33 = scalar_select %p32, 0, %s31
      %s34 = sadd.s32 1, %s21
      %s35 = scalar_select %p32, %s34, %s21
      %p36 = scmp.ge.s32.totalorder %s35, 1
      %s37 = scalar_select %p36, 0, %s35
      %s38 = sadd.s32 1, %s20
      %s39 = scalar_select %p36, %s38, %s20
      %p40 = scmp.ge.s32.totalorder %s39, 1
      %s41 = scalar_select %p40, 0, %s39
      %s42 = sadd.s32 1, %s19
      %s43 = scalar_select %p40, %s42, %s19
      %p44 = scmp.ge.s32.totalorder %s43, 4
      %s45 = scalar_select %p44, 0, %s43
      %s46 = ssub.s32 %s19, %s45
      %s47 = ssub.s32 %s20, %s41
      %s48 = sor.u32 %s46, %s47
      %s49 = ssub.s32 %s22, %s33
      %s50 = sor.u32 %s48, %s49
      %p51 = scmp.eq.s32.totalorder %s50, 0
      %s53 = sadd.s32 %s52, 1
      %s54 = scalar_select %p51, %s52, %s53
      %p57 = pneg %p51
      %p58 = scmp.eq.s32.totalorder %s12, 11
      %p59 = por %p57, %p58
      %p60 = scmp.ne.s32.totalorder %s52, %s55
      %p61 = scmp.eq.s32.totalorder %s12, 0
      %p62 = por %p60, %p61
      %p63 = scmp.ne.s32.totalorder %s52, %s55
      %p64 = scmp.eq.s32.totalorder %s17, 11
      %p65 = por %p63, %p64
      %p66 = scmp.ne.s32.totalorder %s55, %s56
      %p67 = scmp.eq.s32.totalorder %s17, 0
      %p68 = por %p66, %p67
      %p69 = scmp.ne.s32.totalorder %s55, %s56
      %p70 = scmp.eq.s32.totalorder %s18, 11
      %p71 = por %p69, %p70
      %p73 = scmp.ne.s32.totalorder %s56, %s72
      %p74 = scmp.eq.s32.totalorder %s18, 0
      %p75 = por %p73, %p74
      %s76 = ssub.s32 %s19, %s45
      %s77 = ssub.s32 %s22, %s33
      %s78 = sor.u32 %s76, %s77
      %s79 = ssub.s32 %s21, %s37
      %s80 = sor.u32 %s78, %s79
      %p81 = scmp.eq.s32.totalorder %s80, 0
      %s83 = sadd.s32 %s82, 1
      %s84 = scalar_select %p81, %s82, %s83
      %p87 = pneg %p81
      %p88 = scmp.eq.s32.totalorder %s12, 11
      %p89 = por %p87, %p88
      %p90 = scmp.ne.s32.totalorder %s82, %s85
      %p91 = scmp.eq.s32.totalorder %s12, 0
      %p92 = por %p90, %p91
      %p93 = scmp.ne.s32.totalorder %s82, %s85
      %p94 = scmp.eq.s32.totalorder %s17, 11
      %p95 = por %p93, %p94
      %p96 = scmp.ne.s32.totalorder %s85, %s86
      %p97 = scmp.eq.s32.totalorder %s17, 0
      %p98 = por %p96, %p97
      %p99 = scmp.ne.s32.totalorder %s85, %s86
      %p100 = scmp.eq.s32.totalorder %s18, 11
      %p101 = por %p99, %p100
      %p103 = scmp.ne.s32.totalorder %s86, %s102
      %p104 = scmp.eq.s32.totalorder %s18, 0
      %p105 = por %p103, %p104
      %s106 = ssub.s32 %s19, %s45
      %s107 = ssub.s32 %s21, %s37
      %s108 = sor.u32 %s106, %s107
      %p109 = scmp.eq.s32.totalorder %s108, 0
      %s111 = sadd.s32 %s110, 1
      %s112 = scalar_select %p109, %s110, %s111
      %p115 = pneg %p109
      %p116 = scmp.eq.s32.totalorder %s12, 11
      %p117 = por %p115, %p116
      %p118 = scmp.ne.s32.totalorder %s110, %s113
      %p119 = scmp.eq.s32.totalorder %s12, 0
      %p120 = por %p118, %p119
      %p121 = scmp.ne.s32.totalorder %s110, %s113
      %p122 = scmp.eq.s32.totalorder %s17, 11
      %p123 = por %p121, %p122
      %p124 = scmp.ne.s32.totalorder %s113, %s114
      %p125 = scmp.eq.s32.totalorder %s17, 0
      %p126 = por %p124, %p125
      %p127 = scmp.ne.s32.totalorder %s113, %s114
      %p128 = scmp.eq.s32.totalorder %s18, 11
      %p129 = por %p127, %p128
      %p131 = scmp.ne.s32.totalorder %s114, %s130
      %p132 = scmp.eq.s32.totalorder %s18, 0
      %p133 = por %p131, %p132
      %s134 = ssub.s32 %s19, %s45
      %s135 = ssub.s32 %s20, %s41
      %s136 = sor.u32 %s134, %s135
      %s137 = ssub.s32 %s21, %s37
      %s138 = sor.u32 %s136, %s137
      %p139 = scmp.eq.s32.totalorder %s138, 0
      %s141 = sadd.s32 %s140, 1
      %s142 = scalar_select %p139, %s140, %s141
      %p145 = pneg %p139
      %p146 = scmp.eq.s32.totalorder %s12, 11
      %p147 = por %p145, %p146
      %p148 = scmp.ne.s32.totalorder %s140, %s143
      %p149 = scmp.eq.s32.totalorder %s12, 0
      %p150 = por %p148, %p149
      %p151 = scmp.ne.s32.totalorder %s140, %s143
      %p152 = scmp.eq.s32.totalorder %s17, 11
      %p153 = por %p151, %p152
      %p154 = scmp.ne.s32.totalorder %s143, %s144
      %p155 = scmp.eq.s32.totalorder %s17, 0
      %p156 = por %p154, %p155
      %p157 = scmp.ne.s32.totalorder %s143, %s144
      %p158 = scmp.eq.s32.totalorder %s18, 11
      %p159 = por %p157, %p158
      %p161 = scmp.ne.s32.totalorder %s144, %s160
      %p162 = scmp.eq.s32.totalorder %s18, 0
      %p163 = por %p161, %p162
      %p164 = scmp.le.s32.totalorder 1, %s12
      %p165 = scmp.lt.s32.totalorder %s12, 13
      %p166 = pnand %p164, %p165
      %p167 = pneg %p166
      // Predicated region
      $region9: #{aggregation_feature_forward.4} parent=5 // pred_check
        _
      $region10: #{aggregation_feature_forward.4} parent=5 // pred_check_branch
        %169 = sbr.rel (%p166) target = $region12
      $region11: #{aggregation_feature_forward.4} parent=5 // pred_region
        %s170 = ssub.s32 %s12, 1
      $region12: #{aggregation_feature_forward.4} parent=5 // pred_fallthru
        _
      %p171 = scmp.lt.s32.totalorder %s12, 12
      // Predicated region
      $region13: #{aggregation_feature_forward.4} parent=5 // pred_check
        %p172 = pneg %p171
      $region14: #{aggregation_feature_forward.4} parent=5 // pred_check_branch
        %174 = sbr.rel (%p172) target = $region16
      $region15: #{aggregation_feature_forward.4} parent=5 // pred_region
        // Predicated region
        $region17: #{aggregation_feature_forward.4} parent=15 // pred_check
          %p175 = pneg %p62
        $region18: #{aggregation_feature_forward.4} parent=15 // pred_check_branch
          %177 = sbr.rel (%p175) target = $region20
        $region19: #{aggregation_feature_forward.4} parent=15 // pred_region
          %s178 = sand.u32 %s52, 1
          %s179 = sand.u32 %s52, 1
          %s180 = smul.addr %s179, 288
          %s181 = scalar_lea.vmem [#allocation2], %s180
          %s182 = smul.u32 2, %s20
          %s183 = smul.u32 36, %s22
          %s184 = smul.addr %s182, 108
          %s185 = sadd.s32 %s183, %s184
          %s186 = smul.addr %s19, 216
          %s187 = sadd.s32 %s185, %s186
          %s188 = smul.addr %s187, 4
          %s189 = scalar_lea.vmem %s0, %s188
          // Predicated region
          $region21: #{aggregation_feature_forward.4} parent=19 // pred_check
            _
          $region22: #{aggregation_feature_forward.4} parent=19 // pred_check_branch
            %191 = sbr.rel (0) target = $region24
          $region23: #{aggregation_feature_forward.4} parent=19 // pred_region
            // Predicated region
            $region25: #{aggregation_feature_forward.4} parent=23 // pred_check
              _
            $region26: #{aggregation_feature_forward.4} parent=23 // pred_check_branch
              %193 = sbr.rel (0) target = $region28
            $region27: #{aggregation_feature_forward.4} parent=23 // pred_region
              loop: start=0, step=1, limit=1
              $region29: #{aggregation_feature_forward.4} parent=27 // loop_pre_header
                _
              $region30: #{aggregation_feature_forward.4} parent=27 // loop_header
                %s195 = sphi 0, %s199
                %p196 = scmp.ge.s32.totalorder %s195, 1
                %s200 = sphi %s189, %s189
                %s201 = sphi %s181, %s181
              $region31: #{aggregation_feature_forward.4} parent=27 // loop_header_branch
                %198 = sbr.rel (%p196) target = $region35
              $region32: #{aggregation_feature_forward.4} parent=27 // loop_body
                %v202 = vld [vmem:[%s200] sm:$0xff]
                %203 = vst [vmem:[%s201] sm:$0xff] %v202
                %v204 = vld [vmem:[%s200 + $0x8] sm:$0xff]
                %205 = vst [vmem:[%s201 + $0x8] sm:$0xff] %v204
                %v206 = vld [vmem:[%s200 + $0x10] sm:$0xff]
                %207 = vst [vmem:[%s201 + $0x10] sm:$0xff] %v206
                %v208 = vld [vmem:[%s200 + $0x18] sm:$0xff]
                %209 = vst [vmem:[%s201 + $0x18] sm:$0xff] %v208
                %v210 = vld [vmem:[%s200 + $0x20] sm:$0xff]
                %211 = vst [vmem:[%s201 + $0x20] sm:$0xff] %v210
                %v212 = vld [vmem:[%s200 + $0x28] sm:$0xff]
                %213 = vst [vmem:[%s201 + $0x28] sm:$0xff] %v212
                %v214 = vld [vmem:[%s200 + $0x30] sm:$0xff]
                %215 = vst [vmem:[%s201 + $0x30] sm:$0xff] %v214
                %v216 = vld [vmem:[%s200 + $0x38] sm:$0xff]
                %217 = vst [vmem:[%s201 + $0x38] sm:$0xff] %v216
                %v218 = vld [vmem:[%s200 + $0x40] sm:$0xff]
                %219 = vst [vmem:[%s201 + $0x40] sm:$0xff] %v218
                %v220 = vld [vmem:[%s200 + $0x48] sm:$0xff]
                %221 = vst [vmem:[%s201 + $0x48] sm:$0xff] %v220
                %v222 = vld [vmem:[%s200 + $0x50] sm:$0xff]
                %223 = vst [vmem:[%s201 + $0x50] sm:$0xff] %v222
                %v224 = vld [vmem:[%s200 + $0x58] sm:$0xff]
                %225 = vst [vmem:[%s201 + $0x58] sm:$0xff] %v224
                %v226 = vld [vmem:[%s200 + $0x60] sm:$0xff]
                %227 = vst [vmem:[%s201 + $0x60] sm:$0xff] %v226
                %v228 = vld [vmem:[%s200 + $0x68] sm:$0xff]
                %229 = vst [vmem:[%s201 + $0x68] sm:$0xff] %v228
                %v230 = vld [vmem:[%s200 + $0x70] sm:$0xff]
                %231 = vst [vmem:[%s201 + $0x70] sm:$0xff] %v230
                %v232 = vld [vmem:[%s200 + $0x78] sm:$0xff]
                %233 = vst [vmem:[%s201 + $0x78] sm:$0xff] %v232
                %v234 = vld [vmem:[%s200 + $0x80] sm:$0xff]
                %235 = vst [vmem:[%s201 + $0x80] sm:$0xff] %v234
                %v236 = vld [vmem:[%s200 + $0x88] sm:$0xff]
                %237 = vst [vmem:[%s201 + $0x88] sm:$0xff] %v236
                %v238 = vld [vmem:[%s200 + $0x1b0] sm:$0xff]
                %239 = vst [vmem:[%s201 + $0x90] sm:$0xff] %v238
                %v240 = vld [vmem:[%s200 + $0x1b8] sm:$0xff]
                %241 = vst [vmem:[%s201 + $0x98] sm:$0xff] %v240
                %v242 = vld [vmem:[%s200 + $0x1c0] sm:$0xff]
                %243 = vst [vmem:[%s201 + $0xa0] sm:$0xff] %v242
                %v244 = vld [vmem:[%s200 + $0x1c8] sm:$0xff]
                %245 = vst [vmem:[%s201 + $0xa8] sm:$0xff] %v244
                %v246 = vld [vmem:[%s200 + $0x1d0] sm:$0xff]
                %247 = vst [vmem:[%s201 + $0xb0] sm:$0xff] %v246
                %v248 = vld [vmem:[%s200 + $0x1d8] sm:$0xff]
                %249 = vst [vmem:[%s201 + $0xb8] sm:$0xff] %v248
                %v250 = vld [vmem:[%s200 + $0x1e0] sm:$0xff]
                %251 = vst [vmem:[%s201 + $0xc0] sm:$0xff] %v250
                %v252 = vld [vmem:[%s200 + $0x1e8] sm:$0xff]
                %253 = vst [vmem:[%s201 + $0xc8] sm:$0xff] %v252
                %v254 = vld [vmem:[%s200 + $0x1f0] sm:$0xff]
                %255 = vst [vmem:[%s201 + $0xd0] sm:$0xff] %v254
                %v256 = vld [vmem:[%s200 + $0x1f8] sm:$0xff]
                %257 = vst [vmem:[%s201 + $0xd8] sm:$0xff] %v256
                %v258 = vld [vmem:[%s200 + $0x200] sm:$0xff]
                %259 = vst [vmem:[%s201 + $0xe0] sm:$0xff] %v258
                %v260 = vld [vmem:[%s200 + $0x208] sm:$0xff]
                %261 = vst [vmem:[%s201 + $0xe8] sm:$0xff] %v260
                %v262 = vld [vmem:[%s200 + $0x210] sm:$0xff]
                %263 = vst [vmem:[%s201 + $0xf0] sm:$0xff] %v262
                %v264 = vld [vmem:[%s200 + $0x218] sm:$0xff]
                %265 = vst [vmem:[%s201 + $0xf8] sm:$0xff] %v264
                %v266 = vld [vmem:[%s200 + $0x220] sm:$0xff]
                %267 = vst [vmem:[%s201 + $0x100] sm:$0xff] %v266
                %v268 = vld [vmem:[%s200 + $0x228] sm:$0xff]
                %269 = vst [vmem:[%s201 + $0x108] sm:$0xff] %v268
                %v270 = vld [vmem:[%s200 + $0x230] sm:$0xff]
                %271 = vst [vmem:[%s201 + $0x110] sm:$0xff] %v270
                %v272 = vld [vmem:[%s200 + $0x238] sm:$0xff]
                %273 = vst [vmem:[%s201 + $0x118] sm:$0xff] %v272
              $region33: #{aggregation_feature_forward.4} parent=27 // loop_footer
                %s199 = sadd.s32 1, %s195
              $region34: #{aggregation_feature_forward.4} parent=27 // loop_footer_branch
                %194 = sbr.rel target = $region30
              $region35: #{aggregation_feature_forward.4} parent=27 // loop_exit
                _
            $region28: #{aggregation_feature_forward.4} parent=23 // pred_fallthru
              _
            // Predicated region
            $region36: #{aggregation_feature_forward.4} parent=23 // pred_check
              _
            $region37: #{aggregation_feature_forward.4} parent=23 // pred_check_branch
              %275 = sbr.rel target = $region39
            $region38: #{aggregation_feature_forward.4} parent=23 // pred_region
              _
            $region39: #{aggregation_feature_forward.4} parent=23 // pred_fallthru
              _
          $region24: #{aggregation_feature_forward.4} parent=19 // pred_fallthru
            _
          %276 = vnop
        $region20: #{aggregation_feature_forward.4} parent=15 // pred_fallthru
          _
        // Predicated region
        $region40: #{aggregation_feature_forward.4} parent=15 // pred_check
          %p277 = pneg %p92
        $region41: #{aggregation_feature_forward.4} parent=15 // pred_check_branch
          %279 = sbr.rel (%p277) target = $region43
        $region42: #{aggregation_feature_forward.4} parent=15 // pred_region
          %s280 = sand.u32 %s82, 1
          %s281 = scalar_lea.sflag [#allocation4], %s280
          %s282 = sand.u32 %s82, 1
          %s283 = smul.addr %s282, 9216
          %s284 = scalar_lea.vmem [#allocation3], %s283
          %s285 = smul.u32 576, %s22
          %s286 = smul.u32 4, %s21
          %288 = vsyncadd %s281, 0
          %s289 = smul.addr %s285, 4
          %s290 = sadd.s32 %s286, %s289
          %s291 = smul.addr %s19, 6912
          %s292 = sadd.s32 %s290, %s291
          %s293 = smul.addr %s292, 4
          %s294 = scalar_lea.hbm %s1, %s293
          %s295 = sshll.u32 %s294, 4
          %s296 = int_to_ptr.hbm [resolvable:$true] %s295
          %s297 = sshll.u32 %s284, 4
          %s298 = int_to_ptr.vmem [resolvable:$true] %s297
          %303 = dma.hbm_to_vmem [thread:$0]  %s296, 147456, %s298, %s281, 256, 256, 16
        $region43: #{aggregation_feature_forward.4} parent=15 // pred_fallthru
          _
        // Predicated region
        $region44: #{aggregation_feature_forward.4} parent=15 // pred_check
          %p304 = pneg %p120
        $region45: #{aggregation_feature_forward.4} parent=15 // pred_check_branch
          %306 = sbr.rel (%p304) target = $region47
        $region46: #{aggregation_feature_forward.4} parent=15 // pred_region
          %s307 = smul.u32 4, %s21
          %p308 = scmp.lt.s32.totalorder %s19, 3
          %s309 = scalar_select %p308, %s19, 3
          %p310 = scmp.lt.s32.totalorder %s307, 3
          %s311 = scalar_select %p310, %s307, 3
          %s312 = smul.addr %s309, 4
          %s313 = sadd.s32 %s311, %s312
          %s314 = scalar_lea.vmem %s2, %s313
          %s315 = smul.u32 4, %s21
        $region47: #{aggregation_feature_forward.4} parent=15 // pred_fallthru
          _
      $region16: #{aggregation_feature_forward.4} parent=5 // pred_fallthru
        _
      %p316 = scmp.le.s32.totalorder 1, %s12
      %p317 = scmp.lt.s32.totalorder %s12, 13
      %p318 = pnand %p316, %p317
      %p319 = pneg %p318
      // Predicated region
      $region48: #{aggregation_feature_forward.4} parent=5 // pred_check
        _
      $region49: #{aggregation_feature_forward.4} parent=5 // pred_check_branch
        %321 = sbr.rel (%p318) target = $region51
      $region50: #{aggregation_feature_forward.4} parent=5 // pred_region
        %s322 = ssub.s32 %s12, 1
        %s323 = sand.u32 %s55, 1
        %s324 = sand.u32 %s55, 1
        %s325 = smul.addr %s324, 288
        %s326 = scalar_lea.vmem [#allocation2], %s325
        // Predicated region
        $region52: #{aggregation_feature_forward.4} parent=50 // pred_check
          %p327 = pneg %p68
        $region53: #{aggregation_feature_forward.4} parent=50 // pred_check_branch
          %329 = sbr.rel (%p327) target = $region55
        $region54: #{aggregation_feature_forward.4} parent=50 // pred_region
          _
        $region55: #{aggregation_feature_forward.4} parent=50 // pred_fallthru
          _
        %s330 = sand.u32 %s85, 1
        %s331 = scalar_lea.sflag [#allocation4], %s330
        %s332 = sand.u32 %s85, 1
        %s333 = smul.addr %s332, 9216
        %s334 = scalar_lea.vmem [#allocation3], %s333
        // Predicated region
        $region56: #{aggregation_feature_forward.4} parent=50 // pred_check
          %p335 = pneg %p98
        $region57: #{aggregation_feature_forward.4} parent=50 // pred_check_branch
          %337 = sbr.rel (%p335) target = $region59
        $region58: #{aggregation_feature_forward.4} parent=50 // pred_region
          %339 = dma.done %s331, 147456
        $region59: #{aggregation_feature_forward.4} parent=50 // pred_fallthru
          _
        %s340 = sand.u32 %s55, 1
        %s341 = sand.u32 %s55, 1
        %s342 = smul.addr %s341, 288
        %s343 = scalar_lea.vmem [#allocation2], %s342
        %p344 = pneg %p68
        %p345 = pneg %p65
        %s346 = sand.u32 %s85, 1
        %s347 = scalar_lea.sflag [#allocation4], %s346
        %s348 = sand.u32 %s85, 1
        %s349 = smul.addr %s348, 9216
        %s350 = scalar_lea.vmem [#allocation3], %s349
        %p351 = pneg %p98
        %p352 = pneg %p95
        %s353 = smul.u32 4, %s25
        %p354 = scmp.lt.s32.totalorder %s23, 3
        %s355 = scalar_select %p354, %s23, 3
        %p356 = scmp.lt.s32.totalorder %s353, 3
        %s357 = scalar_select %p356, %s353, 3
        %s358 = smul.addr %s355, 4
        %s359 = sadd.s32 %s357, %s358
        %s360 = scalar_lea.vmem %s2, %s359
        %p361 = pneg %p126
        %p362 = pneg %p123
        %p363 = pneg %p156
        %p364 = pneg %p153
        %s365 = smul.u32 2, %s24
        %s366 = smul.u32 4, %s25
        %p367 = scmp.lt.s32.totalorder %s23, 3
        %s368 = scalar_select %p367, %s23, 3
        %p369 = scmp.lt.s32.totalorder %s365, 1
        %s370 = scalar_select %p369, %s365, 1
        %p371 = scmp.lt.s32.totalorder %s366, 3
        %s372 = scalar_select %p371, %s366, 3
        %s373 = smul.addr %s370, 4
        %s374 = sadd.s32 %s372, %s373
        %s375 = smul.addr %s368, 8
        %s376 = sadd.s32 %s374, %s375
        %s377 = smul.addr %s376, 8
        %s378 = scalar_lea.vmem %s3, %s377
        %s379 = smul.u32 2, %s24
        %s380 = smul.u32 36, %s26
        %s381 = smul.u32 576, %s26
        %s382 = smul.u32 4, %s25
        %s383 = smul.u32 4, %s25
        %p384 = scmp.lt.s32.totalorder %s23, 3
        %s385 = scalar_select %p384, %s23, 3
        %p386 = scmp.lt.s32.totalorder %s383, 3
        %s387 = scalar_select %p386, %s383, 3
        %s388 = smul.addr %s385, 4
        %s389 = sadd.s32 %s387, %s388
        %s390 = scalar_lea.vmem %s2, %s389
        %s391 = smul.u32 4, %s25
        %s392 = smul.u32 2, %s24
        %s393 = smul.u32 4, %s25
        %p394 = scmp.lt.s32.totalorder %s23, 3
        %s395 = scalar_select %p394, %s23, 3
        %p396 = scmp.lt.s32.totalorder %s392, 1
        %s397 = scalar_select %p396, %s392, 1
        %p398 = scmp.lt.s32.totalorder %s393, 3
        %s399 = scalar_select %p398, %s393, 3
        %s400 = smul.addr %s397, 4
        %s401 = sadd.s32 %s399, %s400
        %s402 = smul.addr %s395, 8
        %s403 = sadd.s32 %s401, %s402
        %s404 = smul.addr %s403, 8
        %s405 = scalar_lea.vmem %s3, %s404
        %s406 = smul.u32 2, %s24
        %s407 = smul.u32 4, %s25
        %p408 = scmp.eq.s32.totalorder %s26, 0
        // Predicated region
        $region60: #{aggregation_feature_forward.4} parent=50 // pred_check
          %p409 = pneg %p408
        $region61: #{aggregation_feature_forward.4} parent=50 // pred_check_branch
          %411 = sbr.rel (%p409) target = $region63
        $region62: #{aggregation_feature_forward.4} parent=50 // pred_region
          %412 = vst [vmem:[%s405] sm:$0xff] 0.0
          %413 = vst [vmem:[%s405 + $0x8] sm:$0xff] 0.0
          %414 = vst [vmem:[%s405 + $0x10] sm:$0xff] 0.0
          %415 = vst [vmem:[%s405 + $0x18] sm:$0xff] 0.0
          %416 = vst [vmem:[%s405 + $0x20] sm:$0xff] 0.0
          %417 = vst [vmem:[%s405 + $0x28] sm:$0xff] 0.0
          %418 = vst [vmem:[%s405 + $0x30] sm:$0xff] 0.0
          %419 = vst [vmem:[%s405 + $0x38] sm:$0xff] 0.0
        $region63: #{aggregation_feature_forward.4} parent=50 // pred_fallthru
          _
        %v420 = vld [vmem:[%s405] sm:$0xff]
        %v421 = vld [vmem:[%s405 + $0x8] sm:$0xff]
        %v422 = vld [vmem:[%s405 + $0x10] sm:$0xff]
        %v423 = vld [vmem:[%s405 + $0x18] sm:$0xff]
        %v424 = vld [vmem:[%s405 + $0x20] sm:$0xff]
        %v425 = vld [vmem:[%s405 + $0x28] sm:$0xff]
        %v426 = vld [vmem:[%s405 + $0x30] sm:$0xff]
        %v427 = vld [vmem:[%s405 + $0x38] sm:$0xff]
        %v428 = vld [vmem:[%s326] sm:$0xff]
        %v429 = vld [vmem:[%s326 + $0x8] sm:$0xff]
        %v430 = vld [vmem:[%s326 + $0x10] sm:$0xff]
        %v431 = vld [vmem:[%s326 + $0x18] sm:$0xff]
        %v432 = vld [vmem:[%s326 + $0x20] sm:$0xff]
        %v433 = vld [vmem:[%s326 + $0x28] sm:$0xff]
        %v434 = vld [vmem:[%s326 + $0x30] sm:$0xff]
        %v435 = vld [vmem:[%s326 + $0x38] sm:$0xff]
        %v436 = vld [vmem:[%s326 + $0x40] sm:$0xff]
        %v437 = vld [vmem:[%s326 + $0x48] sm:$0xff]
        %v438 = vld [vmem:[%s326 + $0x50] sm:$0xff]
        %v439 = vld [vmem:[%s326 + $0x58] sm:$0xff]
        %v440 = vld [vmem:[%s326 + $0x60] sm:$0xff]
        %v441 = vld [vmem:[%s326 + $0x68] sm:$0xff]
        %v442 = vld [vmem:[%s326 + $0x70] sm:$0xff]
        %v443 = vld [vmem:[%s326 + $0x78] sm:$0xff]
        %v444 = vld [vmem:[%s326 + $0x80] sm:$0xff]
        %v445 = vld [vmem:[%s326 + $0x88] sm:$0xff]
        %v446 = vld [vmem:[%s326 + $0x90] sm:$0xff]
        %v447 = vld [vmem:[%s326 + $0x98] sm:$0xff]
        %v448 = vld [vmem:[%s326 + $0xa0] sm:$0xff]
        %v449 = vld [vmem:[%s326 + $0xa8] sm:$0xff]
        %v450 = vld [vmem:[%s326 + $0xb0] sm:$0xff]
        %v451 = vld [vmem:[%s326 + $0xb8] sm:$0xff]
        %v452 = vld [vmem:[%s326 + $0xc0] sm:$0xff]
        %v453 = vld [vmem:[%s326 + $0xc8] sm:$0xff]
        %v454 = vld [vmem:[%s326 + $0xd0] sm:$0xff]
        %v455 = vld [vmem:[%s326 + $0xd8] sm:$0xff]
        %v456 = vld [vmem:[%s326 + $0xe0] sm:$0xff]
        %v457 = vld [vmem:[%s326 + $0xe8] sm:$0xff]
        %v458 = vld [vmem:[%s326 + $0xf0] sm:$0xff]
        %v459 = vld [vmem:[%s326 + $0xf8] sm:$0xff]
        %v460 = vld [vmem:[%s326 + $0x100] sm:$0xff]
        %v461 = vld [vmem:[%s326 + $0x108] sm:$0xff]
        %v462 = vld [vmem:[%s326 + $0x110] sm:$0xff]
        %v463 = vld [vmem:[%s326 + $0x118] sm:$0xff]
        %v464 = vld [vmem:[%s334] sm:$0xff]
        %v465 = vld [vmem:[%s334 + $0x8] sm:$0xff]
        %v466 = vld [vmem:[%s334 + $0x10] sm:$0xff]
        %v467 = vld [vmem:[%s334 + $0x18] sm:$0xff]
        %v468 = vld [vmem:[%s334 + $0x20] sm:$0xff]
        %v469 = vld [vmem:[%s334 + $0x28] sm:$0xff]
        %v470 = vld [vmem:[%s334 + $0x30] sm:$0xff]
        %v471 = vld [vmem:[%s334 + $0x38] sm:$0xff]
        %v472 = vld [vmem:[%s334 + $0x40] sm:$0xff]
        %v473 = vld [vmem:[%s334 + $0x48] sm:$0xff]
        %v474 = vld [vmem:[%s334 + $0x50] sm:$0xff]
        %v475 = vld [vmem:[%s334 + $0x58] sm:$0xff]
        %v476 = vld [vmem:[%s334 + $0x60] sm:$0xff]
        %v477 = vld [vmem:[%s334 + $0x68] sm:$0xff]
        %v478 = vld [vmem:[%s334 + $0x70] sm:$0xff]
        %v479 = vld [vmem:[%s334 + $0x78] sm:$0xff]
        %v480 = vld [vmem:[%s334 + $0x80] sm:$0xff]
        %v481 = vld [vmem:[%s334 + $0x88] sm:$0xff]
        %v482 = vld [vmem:[%s334 + $0x90] sm:$0xff]
        %v483 = vld [vmem:[%s334 + $0x98] sm:$0xff]
        %v484 = vld [vmem:[%s334 + $0xa0] sm:$0xff]
        %v485 = vld [vmem:[%s334 + $0xa8] sm:$0xff]
        %v486 = vld [vmem:[%s334 + $0xb0] sm:$0xff]
        %v487 = vld [vmem:[%s334 + $0xb8] sm:$0xff]
        %v488 = vld [vmem:[%s334 + $0xc0] sm:$0xff]
        %v489 = vld [vmem:[%s334 + $0xc8] sm:$0xff]
        %v490 = vld [vmem:[%s334 + $0xd0] sm:$0xff]
        %v491 = vld [vmem:[%s334 + $0xd8] sm:$0xff]
        %v492 = vld [vmem:[%s334 + $0xe0] sm:$0xff]
        %v493 = vld [vmem:[%s334 + $0xe8] sm:$0xff]
        %v494 = vld [vmem:[%s334 + $0xf0] sm:$0xff]
        %v495 = vld [vmem:[%s334 + $0xf8] sm:$0xff]
        %v496 = vld [vmem:[%s334 + $0x100] sm:$0xff]
        %v497 = vld [vmem:[%s334 + $0x108] sm:$0xff]
        %v498 = vld [vmem:[%s334 + $0x110] sm:$0xff]
        %v499 = vld [vmem:[%s334 + $0x118] sm:$0xff]
        %v500 = vld [vmem:[%s334 + $0x120] sm:$0xff]
        %v501 = vld [vmem:[%s334 + $0x128] sm:$0xff]
        %v502 = vld [vmem:[%s334 + $0x130] sm:$0xff]
        %v503 = vld [vmem:[%s334 + $0x138] sm:$0xff]
        %v504 = vld [vmem:[%s334 + $0x140] sm:$0xff]
        %v505 = vld [vmem:[%s334 + $0x148] sm:$0xff]
        %v506 = vld [vmem:[%s334 + $0x150] sm:$0xff]
        %v507 = vld [vmem:[%s334 + $0x158] sm:$0xff]
        %v508 = vld [vmem:[%s334 + $0x160] sm:$0xff]
        %v509 = vld [vmem:[%s334 + $0x168] sm:$0xff]
        %v510 = vld [vmem:[%s334 + $0x170] sm:$0xff]
        %v511 = vld [vmem:[%s334 + $0x178] sm:$0xff]
        %v512 = vld [vmem:[%s334 + $0x180] sm:$0xff]
        %v513 = vld [vmem:[%s334 + $0x188] sm:$0xff]
        %v514 = vld [vmem:[%s334 + $0x190] sm:$0xff]
        %v515 = vld [vmem:[%s334 + $0x198] sm:$0xff]
        %v516 = vld [vmem:[%s334 + $0x1a0] sm:$0xff]
        %v517 = vld [vmem:[%s334 + $0x1a8] sm:$0xff]
        %v518 = vld [vmem:[%s334 + $0x1b0] sm:$0xff]
        %v519 = vld [vmem:[%s334 + $0x1b8] sm:$0xff]
        %v520 = vld [vmem:[%s334 + $0x1c0] sm:$0xff]
        %v521 = vld [vmem:[%s334 + $0x1c8] sm:$0xff]
        %v522 = vld [vmem:[%s334 + $0x1d0] sm:$0xff]
        %v523 = vld [vmem:[%s334 + $0x1d8] sm:$0xff]
        %v524 = vld [vmem:[%s334 + $0x1e0] sm:$0xff]
        %v525 = vld [vmem:[%s334 + $0x1e8] sm:$0xff]
        %v526 = vld [vmem:[%s334 + $0x1f0] sm:$0xff]
        %v527 = vld [vmem:[%s334 + $0x1f8] sm:$0xff]
        %v528 = vld [vmem:[%s334 + $0x200] sm:$0xff]
        %v529 = vld [vmem:[%s334 + $0x208] sm:$0xff]
        %v530 = vld [vmem:[%s334 + $0x210] sm:$0xff]
        %v531 = vld [vmem:[%s334 + $0x218] sm:$0xff]
        %v532 = vld [vmem:[%s334 + $0x220] sm:$0xff]
        %v533 = vld [vmem:[%s334 + $0x228] sm:$0xff]
        %v534 = vld [vmem:[%s334 + $0x230] sm:$0xff]
        %v535 = vld [vmem:[%s334 + $0x238] sm:$0xff]
        %v536 = vld [vmem:[%s334 + $0x240] sm:$0xff]
        %v537 = vld [vmem:[%s334 + $0x248] sm:$0xff]
        %v538 = vld [vmem:[%s334 + $0x250] sm:$0xff]
        %v539 = vld [vmem:[%s334 + $0x258] sm:$0xff]
        %v540 = vld [vmem:[%s334 + $0x260] sm:$0xff]
        %v541 = vld [vmem:[%s334 + $0x268] sm:$0xff]
        %v542 = vld [vmem:[%s334 + $0x270] sm:$0xff]
        %v543 = vld [vmem:[%s334 + $0x278] sm:$0xff]
        %v544 = vld [vmem:[%s334 + $0x280] sm:$0xff]
        %v545 = vld [vmem:[%s334 + $0x288] sm:$0xff]
        %v546 = vld [vmem:[%s334 + $0x290] sm:$0xff]
        %v547 = vld [vmem:[%s334 + $0x298] sm:$0xff]
        %v548 = vld [vmem:[%s334 + $0x2a0] sm:$0xff]
        %v549 = vld [vmem:[%s334 + $0x2a8] sm:$0xff]
        %v550 = vld [vmem:[%s334 + $0x2b0] sm:$0xff]
        %v551 = vld [vmem:[%s334 + $0x2b8] sm:$0xff]
        %v552 = vld [vmem:[%s334 + $0x2c0] sm:$0xff]
        %v553 = vld [vmem:[%s334 + $0x2c8] sm:$0xff]
        %v554 = vld [vmem:[%s334 + $0x2d0] sm:$0xff]
        %v555 = vld [vmem:[%s334 + $0x2d8] sm:$0xff]
        %v556 = vld [vmem:[%s334 + $0x2e0] sm:$0xff]
        %v557 = vld [vmem:[%s334 + $0x2e8] sm:$0xff]
        %v558 = vld [vmem:[%s334 + $0x2f0] sm:$0xff]
        %v559 = vld [vmem:[%s334 + $0x2f8] sm:$0xff]
        %v560 = vld [vmem:[%s334 + $0x300] sm:$0xff]
        %v561 = vld [vmem:[%s334 + $0x308] sm:$0xff]
        %v562 = vld [vmem:[%s334 + $0x310] sm:$0xff]
        %v563 = vld [vmem:[%s334 + $0x318] sm:$0xff]
        %v564 = vld [vmem:[%s334 + $0x320] sm:$0xff]
        %v565 = vld [vmem:[%s334 + $0x328] sm:$0xff]
        %v566 = vld [vmem:[%s334 + $0x330] sm:$0xff]
        %v567 = vld [vmem:[%s334 + $0x338] sm:$0xff]
        %v568 = vld [vmem:[%s334 + $0x340] sm:$0xff]
        %v569 = vld [vmem:[%s334 + $0x348] sm:$0xff]
        %v570 = vld [vmem:[%s334 + $0x350] sm:$0xff]
        %v571 = vld [vmem:[%s334 + $0x358] sm:$0xff]
        %v572 = vld [vmem:[%s334 + $0x360] sm:$0xff]
        %v573 = vld [vmem:[%s334 + $0x368] sm:$0xff]
        %v574 = vld [vmem:[%s334 + $0x370] sm:$0xff]
        %v575 = vld [vmem:[%s334 + $0x378] sm:$0xff]
        %v576 = vld [vmem:[%s334 + $0x380] sm:$0xff]
        %v577 = vld [vmem:[%s334 + $0x388] sm:$0xff]
        %v578 = vld [vmem:[%s334 + $0x390] sm:$0xff]
        %v579 = vld [vmem:[%s334 + $0x398] sm:$0xff]
        %v580 = vld [vmem:[%s334 + $0x3a0] sm:$0xff]
        %v581 = vld [vmem:[%s334 + $0x3a8] sm:$0xff]
        %v582 = vld [vmem:[%s334 + $0x3b0] sm:$0xff]
        %v583 = vld [vmem:[%s334 + $0x3b8] sm:$0xff]
        %v584 = vld [vmem:[%s334 + $0x3c0] sm:$0xff]
        %v585 = vld [vmem:[%s334 + $0x3c8] sm:$0xff]
        %v586 = vld [vmem:[%s334 + $0x3d0] sm:$0xff]
        %v587 = vld [vmem:[%s334 + $0x3d8] sm:$0xff]
        %v588 = vld [vmem:[%s334 + $0x3e0] sm:$0xff]
        %v589 = vld [vmem:[%s334 + $0x3e8] sm:$0xff]
        %v590 = vld [vmem:[%s334 + $0x3f0] sm:$0xff]
        %v591 = vld [vmem:[%s334 + $0x3f8] sm:$0xff]
        %v592 = vld [vmem:[%s334 + $0x400] sm:$0xff]
        %v593 = vld [vmem:[%s334 + $0x408] sm:$0xff]
        %v594 = vld [vmem:[%s334 + $0x410] sm:$0xff]
        %v595 = vld [vmem:[%s334 + $0x418] sm:$0xff]
        %v596 = vld [vmem:[%s334 + $0x420] sm:$0xff]
        %v597 = vld [vmem:[%s334 + $0x428] sm:$0xff]
        %v598 = vld [vmem:[%s334 + $0x430] sm:$0xff]
        %v599 = vld [vmem:[%s334 + $0x438] sm:$0xff]
        %v600 = vld [vmem:[%s334 + $0x440] sm:$0xff]
        %v601 = vld [vmem:[%s334 + $0x448] sm:$0xff]
        %v602 = vld [vmem:[%s334 + $0x450] sm:$0xff]
        %v603 = vld [vmem:[%s334 + $0x458] sm:$0xff]
        %v604 = vld [vmem:[%s334 + $0x460] sm:$0xff]
        %v605 = vld [vmem:[%s334 + $0x468] sm:$0xff]
        %v606 = vld [vmem:[%s334 + $0x470] sm:$0xff]
        %v607 = vld [vmem:[%s334 + $0x478] sm:$0xff]
        %v608 = vld [vmem:[%s334 + $0x480] sm:$0xff]
        %v609 = vld [vmem:[%s334 + $0x488] sm:$0xff]
        %v610 = vld [vmem:[%s334 + $0x490] sm:$0xff]
        %v611 = vld [vmem:[%s334 + $0x498] sm:$0xff]
        %v612 = vld [vmem:[%s334 + $0x4a0] sm:$0xff]
        %v613 = vld [vmem:[%s334 + $0x4a8] sm:$0xff]
        %v614 = vld [vmem:[%s334 + $0x4b0] sm:$0xff]
        %v615 = vld [vmem:[%s334 + $0x4b8] sm:$0xff]
        %v616 = vld [vmem:[%s334 + $0x4c0] sm:$0xff]
        %v617 = vld [vmem:[%s334 + $0x4c8] sm:$0xff]
        %v618 = vld [vmem:[%s334 + $0x4d0] sm:$0xff]
        %v619 = vld [vmem:[%s334 + $0x4d8] sm:$0xff]
        %v620 = vld [vmem:[%s334 + $0x4e0] sm:$0xff]
        %v621 = vld [vmem:[%s334 + $0x4e8] sm:$0xff]
        %v622 = vld [vmem:[%s334 + $0x4f0] sm:$0xff]
        %v623 = vld [vmem:[%s334 + $0x4f8] sm:$0xff]
        %v624 = vld [vmem:[%s334 + $0x500] sm:$0xff]
        %v625 = vld [vmem:[%s334 + $0x508] sm:$0xff]
        %v626 = vld [vmem:[%s334 + $0x510] sm:$0xff]
        %v627 = vld [vmem:[%s334 + $0x518] sm:$0xff]
        %v628 = vld [vmem:[%s334 + $0x520] sm:$0xff]
        %v629 = vld [vmem:[%s334 + $0x528] sm:$0xff]
        %v630 = vld [vmem:[%s334 + $0x530] sm:$0xff]
        %v631 = vld [vmem:[%s334 + $0x538] sm:$0xff]
        %v632 = vld [vmem:[%s334 + $0x540] sm:$0xff]
        %v633 = vld [vmem:[%s334 + $0x548] sm:$0xff]
        %v634 = vld [vmem:[%s334 + $0x550] sm:$0xff]
        %v635 = vld [vmem:[%s334 + $0x558] sm:$0xff]
        %v636 = vld [vmem:[%s334 + $0x560] sm:$0xff]
        %v637 = vld [vmem:[%s334 + $0x568] sm:$0xff]
        %v638 = vld [vmem:[%s334 + $0x570] sm:$0xff]
        %v639 = vld [vmem:[%s334 + $0x578] sm:$0xff]
        %v640 = vld [vmem:[%s334 + $0x580] sm:$0xff]
        %v641 = vld [vmem:[%s334 + $0x588] sm:$0xff]
        %v642 = vld [vmem:[%s334 + $0x590] sm:$0xff]
        %v643 = vld [vmem:[%s334 + $0x598] sm:$0xff]
        %v644 = vld [vmem:[%s334 + $0x5a0] sm:$0xff]
        %v645 = vld [vmem:[%s334 + $0x5a8] sm:$0xff]
        %v646 = vld [vmem:[%s334 + $0x5b0] sm:$0xff]
        %v647 = vld [vmem:[%s334 + $0x5b8] sm:$0xff]
        %v648 = vld [vmem:[%s334 + $0x5c0] sm:$0xff]
        %v649 = vld [vmem:[%s334 + $0x5c8] sm:$0xff]
        %v650 = vld [vmem:[%s334 + $0x5d0] sm:$0xff]
        %v651 = vld [vmem:[%s334 + $0x5d8] sm:$0xff]
        %v652 = vld [vmem:[%s334 + $0x5e0] sm:$0xff]
        %v653 = vld [vmem:[%s334 + $0x5e8] sm:$0xff]
        %v654 = vld [vmem:[%s334 + $0x5f0] sm:$0xff]
        %v655 = vld [vmem:[%s334 + $0x5f8] sm:$0xff]
        %v656 = vld [vmem:[%s334 + $0x600] sm:$0xff]
        %v657 = vld [vmem:[%s334 + $0x608] sm:$0xff]
        %v658 = vld [vmem:[%s334 + $0x610] sm:$0xff]
        %v659 = vld [vmem:[%s334 + $0x618] sm:$0xff]
        %v660 = vld [vmem:[%s334 + $0x620] sm:$0xff]
        %v661 = vld [vmem:[%s334 + $0x628] sm:$0xff]
        %v662 = vld [vmem:[%s334 + $0x630] sm:$0xff]
        %v663 = vld [vmem:[%s334 + $0x638] sm:$0xff]
        %v664 = vld [vmem:[%s334 + $0x640] sm:$0xff]
        %v665 = vld [vmem:[%s334 + $0x648] sm:$0xff]
        %v666 = vld [vmem:[%s334 + $0x650] sm:$0xff]
        %v667 = vld [vmem:[%s334 + $0x658] sm:$0xff]
        %v668 = vld [vmem:[%s334 + $0x660] sm:$0xff]
        %v669 = vld [vmem:[%s334 + $0x668] sm:$0xff]
        %v670 = vld [vmem:[%s334 + $0x670] sm:$0xff]
        %v671 = vld [vmem:[%s334 + $0x678] sm:$0xff]
        %v672 = vld [vmem:[%s334 + $0x680] sm:$0xff]
        %v673 = vld [vmem:[%s334 + $0x688] sm:$0xff]
        %v674 = vld [vmem:[%s334 + $0x690] sm:$0xff]
        %v675 = vld [vmem:[%s334 + $0x698] sm:$0xff]
        %v676 = vld [vmem:[%s334 + $0x6a0] sm:$0xff]
        %v677 = vld [vmem:[%s334 + $0x6a8] sm:$0xff]
        %v678 = vld [vmem:[%s334 + $0x6b0] sm:$0xff]
        %v679 = vld [vmem:[%s334 + $0x6b8] sm:$0xff]
        %v680 = vld [vmem:[%s334 + $0x6c0] sm:$0xff]
        %v681 = vld [vmem:[%s334 + $0x6c8] sm:$0xff]
        %v682 = vld [vmem:[%s334 + $0x6d0] sm:$0xff]
        %v683 = vld [vmem:[%s334 + $0x6d8] sm:$0xff]
        %v684 = vld [vmem:[%s334 + $0x6e0] sm:$0xff]
        %v685 = vld [vmem:[%s334 + $0x6e8] sm:$0xff]
        %v686 = vld [vmem:[%s334 + $0x6f0] sm:$0xff]
        %v687 = vld [vmem:[%s334 + $0x6f8] sm:$0xff]
        %v688 = vld [vmem:[%s334 + $0x700] sm:$0xff]
        %v689 = vld [vmem:[%s334 + $0x708] sm:$0xff]
        %v690 = vld [vmem:[%s334 + $0x710] sm:$0xff]
        %v691 = vld [vmem:[%s334 + $0x718] sm:$0xff]
        %v692 = vld [vmem:[%s334 + $0x720] sm:$0xff]
        %v693 = vld [vmem:[%s334 + $0x728] sm:$0xff]
        %v694 = vld [vmem:[%s334 + $0x730] sm:$0xff]
        %v695 = vld [vmem:[%s334 + $0x738] sm:$0xff]
        %v696 = vld [vmem:[%s334 + $0x740] sm:$0xff]
        %v697 = vld [vmem:[%s334 + $0x748] sm:$0xff]
        %v698 = vld [vmem:[%s334 + $0x750] sm:$0xff]
        %v699 = vld [vmem:[%s334 + $0x758] sm:$0xff]
        %v700 = vld [vmem:[%s334 + $0x760] sm:$0xff]
        %v701 = vld [vmem:[%s334 + $0x768] sm:$0xff]
        %v702 = vld [vmem:[%s334 + $0x770] sm:$0xff]
        %v703 = vld [vmem:[%s334 + $0x778] sm:$0xff]
        %v704 = vld [vmem:[%s334 + $0x780] sm:$0xff]
        %v705 = vld [vmem:[%s334 + $0x788] sm:$0xff]
        %v706 = vld [vmem:[%s334 + $0x790] sm:$0xff]
        %v707 = vld [vmem:[%s334 + $0x798] sm:$0xff]
        %v708 = vld [vmem:[%s334 + $0x7a0] sm:$0xff]
        %v709 = vld [vmem:[%s334 + $0x7a8] sm:$0xff]
        %v710 = vld [vmem:[%s334 + $0x7b0] sm:$0xff]
        %v711 = vld [vmem:[%s334 + $0x7b8] sm:$0xff]
        %v712 = vld [vmem:[%s334 + $0x7c0] sm:$0xff]
        %v713 = vld [vmem:[%s334 + $0x7c8] sm:$0xff]
        %v714 = vld [vmem:[%s334 + $0x7d0] sm:$0xff]
        %v715 = vld [vmem:[%s334 + $0x7d8] sm:$0xff]
        %v716 = vld [vmem:[%s334 + $0x7e0] sm:$0xff]
        %v717 = vld [vmem:[%s334 + $0x7e8] sm:$0xff]
        %v718 = vld [vmem:[%s334 + $0x7f0] sm:$0xff]
        %v719 = vld [vmem:[%s334 + $0x7f8] sm:$0xff]
        %v720 = vld [vmem:[%s334 + $0x800] sm:$0xff]
        %v721 = vld [vmem:[%s334 + $0x808] sm:$0xff]
        %v722 = vld [vmem:[%s334 + $0x810] sm:$0xff]
        %v723 = vld [vmem:[%s334 + $0x818] sm:$0xff]
        %v724 = vld [vmem:[%s334 + $0x820] sm:$0xff]
        %v725 = vld [vmem:[%s334 + $0x828] sm:$0xff]
        %v726 = vld [vmem:[%s334 + $0x830] sm:$0xff]
        %v727 = vld [vmem:[%s334 + $0x838] sm:$0xff]
        %v728 = vld [vmem:[%s334 + $0x840] sm:$0xff]
        %v729 = vld [vmem:[%s334 + $0x848] sm:$0xff]
        %v730 = vld [vmem:[%s334 + $0x850] sm:$0xff]
        %v731 = vld [vmem:[%s334 + $0x858] sm:$0xff]
        %v732 = vld [vmem:[%s334 + $0x860] sm:$0xff]
        %v733 = vld [vmem:[%s334 + $0x868] sm:$0xff]
        %v734 = vld [vmem:[%s334 + $0x870] sm:$0xff]
        %v735 = vld [vmem:[%s334 + $0x878] sm:$0xff]
        %v736 = vld [vmem:[%s334 + $0x880] sm:$0xff]
        %v737 = vld [vmem:[%s334 + $0x888] sm:$0xff]
        %v738 = vld [vmem:[%s334 + $0x890] sm:$0xff]
        %v739 = vld [vmem:[%s334 + $0x898] sm:$0xff]
        %v740 = vld [vmem:[%s334 + $0x8a0] sm:$0xff]
        %v741 = vld [vmem:[%s334 + $0x8a8] sm:$0xff]
        %v742 = vld [vmem:[%s334 + $0x8b0] sm:$0xff]
        %v743 = vld [vmem:[%s334 + $0x8b8] sm:$0xff]
        %v744 = vld [vmem:[%s334 + $0x8c0] sm:$0xff]
        %v745 = vld [vmem:[%s334 + $0x8c8] sm:$0xff]
        %v746 = vld [vmem:[%s334 + $0x8d0] sm:$0xff]
        %v747 = vld [vmem:[%s334 + $0x8d8] sm:$0xff]
        %v748 = vld [vmem:[%s334 + $0x8e0] sm:$0xff]
        %v749 = vld [vmem:[%s334 + $0x8e8] sm:$0xff]
        %v750 = vld [vmem:[%s334 + $0x8f0] sm:$0xff]
        %v751 = vld [vmem:[%s334 + $0x8f8] sm:$0xff]
        %v752 = vld [vmem:[%s334 + $0x900] sm:$0xff]
        %v753 = vld [vmem:[%s334 + $0x908] sm:$0xff]
        %v754 = vld [vmem:[%s334 + $0x910] sm:$0xff]
        %v755 = vld [vmem:[%s334 + $0x918] sm:$0xff]
        %v756 = vld [vmem:[%s334 + $0x920] sm:$0xff]
        %v757 = vld [vmem:[%s334 + $0x928] sm:$0xff]
        %v758 = vld [vmem:[%s334 + $0x930] sm:$0xff]
        %v759 = vld [vmem:[%s334 + $0x938] sm:$0xff]
        %v760 = vld [vmem:[%s334 + $0x940] sm:$0xff]
        %v761 = vld [vmem:[%s334 + $0x948] sm:$0xff]
        %v762 = vld [vmem:[%s334 + $0x950] sm:$0xff]
        %v763 = vld [vmem:[%s334 + $0x958] sm:$0xff]
        %v764 = vld [vmem:[%s334 + $0x960] sm:$0xff]
        %v765 = vld [vmem:[%s334 + $0x968] sm:$0xff]
        %v766 = vld [vmem:[%s334 + $0x970] sm:$0xff]
        %v767 = vld [vmem:[%s334 + $0x978] sm:$0xff]
        %v768 = vld [vmem:[%s334 + $0x980] sm:$0xff]
        %v769 = vld [vmem:[%s334 + $0x988] sm:$0xff]
        %v770 = vld [vmem:[%s334 + $0x990] sm:$0xff]
        %v771 = vld [vmem:[%s334 + $0x998] sm:$0xff]
        %v772 = vld [vmem:[%s334 + $0x9a0] sm:$0xff]
        %v773 = vld [vmem:[%s334 + $0x9a8] sm:$0xff]
        %v774 = vld [vmem:[%s334 + $0x9b0] sm:$0xff]
        %v775 = vld [vmem:[%s334 + $0x9b8] sm:$0xff]
        %v776 = vld [vmem:[%s334 + $0x9c0] sm:$0xff]
        %v777 = vld [vmem:[%s334 + $0x9c8] sm:$0xff]
        %v778 = vld [vmem:[%s334 + $0x9d0] sm:$0xff]
        %v779 = vld [vmem:[%s334 + $0x9d8] sm:$0xff]
        %v780 = vld [vmem:[%s334 + $0x9e0] sm:$0xff]
        %v781 = vld [vmem:[%s334 + $0x9e8] sm:$0xff]
        %v782 = vld [vmem:[%s334 + $0x9f0] sm:$0xff]
        %v783 = vld [vmem:[%s334 + $0x9f8] sm:$0xff]
        %v784 = vld [vmem:[%s334 + $0xa00] sm:$0xff]
        %v785 = vld [vmem:[%s334 + $0xa08] sm:$0xff]
        %v786 = vld [vmem:[%s334 + $0xa10] sm:$0xff]
        %v787 = vld [vmem:[%s334 + $0xa18] sm:$0xff]
        %v788 = vld [vmem:[%s334 + $0xa20] sm:$0xff]
        %v789 = vld [vmem:[%s334 + $0xa28] sm:$0xff]
        %v790 = vld [vmem:[%s334 + $0xa30] sm:$0xff]
        %v791 = vld [vmem:[%s334 + $0xa38] sm:$0xff]
        %v792 = vld [vmem:[%s334 + $0xa40] sm:$0xff]
        %v793 = vld [vmem:[%s334 + $0xa48] sm:$0xff]
        %v794 = vld [vmem:[%s334 + $0xa50] sm:$0xff]
        %v795 = vld [vmem:[%s334 + $0xa58] sm:$0xff]
        %v796 = vld [vmem:[%s334 + $0xa60] sm:$0xff]
        %v797 = vld [vmem:[%s334 + $0xa68] sm:$0xff]
        %v798 = vld [vmem:[%s334 + $0xa70] sm:$0xff]
        %v799 = vld [vmem:[%s334 + $0xa78] sm:$0xff]
        %v800 = vld [vmem:[%s334 + $0xa80] sm:$0xff]
        %v801 = vld [vmem:[%s334 + $0xa88] sm:$0xff]
        %v802 = vld [vmem:[%s334 + $0xa90] sm:$0xff]
        %v803 = vld [vmem:[%s334 + $0xa98] sm:$0xff]
        %v804 = vld [vmem:[%s334 + $0xaa0] sm:$0xff]
        %v805 = vld [vmem:[%s334 + $0xaa8] sm:$0xff]
        %v806 = vld [vmem:[%s334 + $0xab0] sm:$0xff]
        %v807 = vld [vmem:[%s334 + $0xab8] sm:$0xff]
        %v808 = vld [vmem:[%s334 + $0xac0] sm:$0xff]
        %v809 = vld [vmem:[%s334 + $0xac8] sm:$0xff]
        %v810 = vld [vmem:[%s334 + $0xad0] sm:$0xff]
        %v811 = vld [vmem:[%s334 + $0xad8] sm:$0xff]
        %v812 = vld [vmem:[%s334 + $0xae0] sm:$0xff]
        %v813 = vld [vmem:[%s334 + $0xae8] sm:$0xff]
        %v814 = vld [vmem:[%s334 + $0xaf0] sm:$0xff]
        %v815 = vld [vmem:[%s334 + $0xaf8] sm:$0xff]
        %v816 = vld [vmem:[%s334 + $0xb00] sm:$0xff]
        %v817 = vld [vmem:[%s334 + $0xb08] sm:$0xff]
        %v818 = vld [vmem:[%s334 + $0xb10] sm:$0xff]
        %v819 = vld [vmem:[%s334 + $0xb18] sm:$0xff]
        %v820 = vld [vmem:[%s334 + $0xb20] sm:$0xff]
        %v821 = vld [vmem:[%s334 + $0xb28] sm:$0xff]
        %v822 = vld [vmem:[%s334 + $0xb30] sm:$0xff]
        %v823 = vld [vmem:[%s334 + $0xb38] sm:$0xff]
        %v824 = vld [vmem:[%s334 + $0xb40] sm:$0xff]
        %v825 = vld [vmem:[%s334 + $0xb48] sm:$0xff]
        %v826 = vld [vmem:[%s334 + $0xb50] sm:$0xff]
        %v827 = vld [vmem:[%s334 + $0xb58] sm:$0xff]
        %v828 = vld [vmem:[%s334 + $0xb60] sm:$0xff]
        %v829 = vld [vmem:[%s334 + $0xb68] sm:$0xff]
        %v830 = vld [vmem:[%s334 + $0xb70] sm:$0xff]
        %v831 = vld [vmem:[%s334 + $0xb78] sm:$0xff]
        %v832 = vld [vmem:[%s334 + $0xb80] sm:$0xff]
        %v833 = vld [vmem:[%s334 + $0xb88] sm:$0xff]
        %v834 = vld [vmem:[%s334 + $0xb90] sm:$0xff]
        %v835 = vld [vmem:[%s334 + $0xb98] sm:$0xff]
        %v836 = vld [vmem:[%s334 + $0xba0] sm:$0xff]
        %v837 = vld [vmem:[%s334 + $0xba8] sm:$0xff]
        %v838 = vld [vmem:[%s334 + $0xbb0] sm:$0xff]
        %v839 = vld [vmem:[%s334 + $0xbb8] sm:$0xff]
        %v840 = vld [vmem:[%s334 + $0xbc0] sm:$0xff]
        %v841 = vld [vmem:[%s334 + $0xbc8] sm:$0xff]
        %v842 = vld [vmem:[%s334 + $0xbd0] sm:$0xff]
        %v843 = vld [vmem:[%s334 + $0xbd8] sm:$0xff]
        %v844 = vld [vmem:[%s334 + $0xbe0] sm:$0xff]
        %v845 = vld [vmem:[%s334 + $0xbe8] sm:$0xff]
        %v846 = vld [vmem:[%s334 + $0xbf0] sm:$0xff]
        %v847 = vld [vmem:[%s334 + $0xbf8] sm:$0xff]
        %v848 = vld [vmem:[%s334 + $0xc00] sm:$0xff]
        %v849 = vld [vmem:[%s334 + $0xc08] sm:$0xff]
        %v850 = vld [vmem:[%s334 + $0xc10] sm:$0xff]
        %v851 = vld [vmem:[%s334 + $0xc18] sm:$0xff]
        %v852 = vld [vmem:[%s334 + $0xc20] sm:$0xff]
        %v853 = vld [vmem:[%s334 + $0xc28] sm:$0xff]
        %v854 = vld [vmem:[%s334 + $0xc30] sm:$0xff]
        %v855 = vld [vmem:[%s334 + $0xc38] sm:$0xff]
        %v856 = vld [vmem:[%s334 + $0xc40] sm:$0xff]
        %v857 = vld [vmem:[%s334 + $0xc48] sm:$0xff]
        %v858 = vld [vmem:[%s334 + $0xc50] sm:$0xff]
        %v859 = vld [vmem:[%s334 + $0xc58] sm:$0xff]
        %v860 = vld [vmem:[%s334 + $0xc60] sm:$0xff]
        %v861 = vld [vmem:[%s334 + $0xc68] sm:$0xff]
        %v862 = vld [vmem:[%s334 + $0xc70] sm:$0xff]
        %v863 = vld [vmem:[%s334 + $0xc78] sm:$0xff]
        %v864 = vld [vmem:[%s334 + $0xc80] sm:$0xff]
        %v865 = vld [vmem:[%s334 + $0xc88] sm:$0xff]
        %v866 = vld [vmem:[%s334 + $0xc90] sm:$0xff]
        %v867 = vld [vmem:[%s334 + $0xc98] sm:$0xff]
        %v868 = vld [vmem:[%s334 + $0xca0] sm:$0xff]
        %v869 = vld [vmem:[%s334 + $0xca8] sm:$0xff]
        %v870 = vld [vmem:[%s334 + $0xcb0] sm:$0xff]
        %v871 = vld [vmem:[%s334 + $0xcb8] sm:$0xff]
        %v872 = vld [vmem:[%s334 + $0xcc0] sm:$0xff]
        %v873 = vld [vmem:[%s334 + $0xcc8] sm:$0xff]
        %v874 = vld [vmem:[%s334 + $0xcd0] sm:$0xff]
        %v875 = vld [vmem:[%s334 + $0xcd8] sm:$0xff]
        %v876 = vld [vmem:[%s334 + $0xce0] sm:$0xff]
        %v877 = vld [vmem:[%s334 + $0xce8] sm:$0xff]
        %v878 = vld [vmem:[%s334 + $0xcf0] sm:$0xff]
        %v879 = vld [vmem:[%s334 + $0xcf8] sm:$0xff]
        %v880 = vld [vmem:[%s334 + $0xd00] sm:$0xff]
        %v881 = vld [vmem:[%s334 + $0xd08] sm:$0xff]
        %v882 = vld [vmem:[%s334 + $0xd10] sm:$0xff]
        %v883 = vld [vmem:[%s334 + $0xd18] sm:$0xff]
        %v884 = vld [vmem:[%s334 + $0xd20] sm:$0xff]
        %v885 = vld [vmem:[%s334 + $0xd28] sm:$0xff]
        %v886 = vld [vmem:[%s334 + $0xd30] sm:$0xff]
        %v887 = vld [vmem:[%s334 + $0xd38] sm:$0xff]
        %v888 = vld [vmem:[%s334 + $0xd40] sm:$0xff]
        %v889 = vld [vmem:[%s334 + $0xd48] sm:$0xff]
        %v890 = vld [vmem:[%s334 + $0xd50] sm:$0xff]
        %v891 = vld [vmem:[%s334 + $0xd58] sm:$0xff]
        %v892 = vld [vmem:[%s334 + $0xd60] sm:$0xff]
        %v893 = vld [vmem:[%s334 + $0xd68] sm:$0xff]
        %v894 = vld [vmem:[%s334 + $0xd70] sm:$0xff]
        %v895 = vld [vmem:[%s334 + $0xd78] sm:$0xff]
        %v896 = vld [vmem:[%s334 + $0xd80] sm:$0xff]
        %v897 = vld [vmem:[%s334 + $0xd88] sm:$0xff]
        %v898 = vld [vmem:[%s334 + $0xd90] sm:$0xff]
        %v899 = vld [vmem:[%s334 + $0xd98] sm:$0xff]
        %v900 = vld [vmem:[%s334 + $0xda0] sm:$0xff]
        %v901 = vld [vmem:[%s334 + $0xda8] sm:$0xff]
        %v902 = vld [vmem:[%s334 + $0xdb0] sm:$0xff]
        %v903 = vld [vmem:[%s334 + $0xdb8] sm:$0xff]
        %v904 = vld [vmem:[%s334 + $0xdc0] sm:$0xff]
        %v905 = vld [vmem:[%s334 + $0xdc8] sm:$0xff]
        %v906 = vld [vmem:[%s334 + $0xdd0] sm:$0xff]
        %v907 = vld [vmem:[%s334 + $0xdd8] sm:$0xff]
        %v908 = vld [vmem:[%s334 + $0xde0] sm:$0xff]
        %v909 = vld [vmem:[%s334 + $0xde8] sm:$0xff]
        %v910 = vld [vmem:[%s334 + $0xdf0] sm:$0xff]
        %v911 = vld [vmem:[%s334 + $0xdf8] sm:$0xff]
        %v912 = vld [vmem:[%s334 + $0xe00] sm:$0xff]
        %v913 = vld [vmem:[%s334 + $0xe08] sm:$0xff]
        %v914 = vld [vmem:[%s334 + $0xe10] sm:$0xff]
        %v915 = vld [vmem:[%s334 + $0xe18] sm:$0xff]
        %v916 = vld [vmem:[%s334 + $0xe20] sm:$0xff]
        %v917 = vld [vmem:[%s334 + $0xe28] sm:$0xff]
        %v918 = vld [vmem:[%s334 + $0xe30] sm:$0xff]
        %v919 = vld [vmem:[%s334 + $0xe38] sm:$0xff]
        %v920 = vld [vmem:[%s334 + $0xe40] sm:$0xff]
        %v921 = vld [vmem:[%s334 + $0xe48] sm:$0xff]
        %v922 = vld [vmem:[%s334 + $0xe50] sm:$0xff]
        %v923 = vld [vmem:[%s334 + $0xe58] sm:$0xff]
        %v924 = vld [vmem:[%s334 + $0xe60] sm:$0xff]
        %v925 = vld [vmem:[%s334 + $0xe68] sm:$0xff]
        %v926 = vld [vmem:[%s334 + $0xe70] sm:$0xff]
        %v927 = vld [vmem:[%s334 + $0xe78] sm:$0xff]
        %v928 = vld [vmem:[%s334 + $0xe80] sm:$0xff]
        %v929 = vld [vmem:[%s334 + $0xe88] sm:$0xff]
        %v930 = vld [vmem:[%s334 + $0xe90] sm:$0xff]
        %v931 = vld [vmem:[%s334 + $0xe98] sm:$0xff]
        %v932 = vld [vmem:[%s334 + $0xea0] sm:$0xff]
        %v933 = vld [vmem:[%s334 + $0xea8] sm:$0xff]
        %v934 = vld [vmem:[%s334 + $0xeb0] sm:$0xff]
        %v935 = vld [vmem:[%s334 + $0xeb8] sm:$0xff]
        %v936 = vld [vmem:[%s334 + $0xec0] sm:$0xff]
        %v937 = vld [vmem:[%s334 + $0xec8] sm:$0xff]
        %v938 = vld [vmem:[%s334 + $0xed0] sm:$0xff]
        %v939 = vld [vmem:[%s334 + $0xed8] sm:$0xff]
        %v940 = vld [vmem:[%s334 + $0xee0] sm:$0xff]
        %v941 = vld [vmem:[%s334 + $0xee8] sm:$0xff]
        %v942 = vld [vmem:[%s334 + $0xef0] sm:$0xff]
        %v943 = vld [vmem:[%s334 + $0xef8] sm:$0xff]
        %v944 = vld [vmem:[%s334 + $0xf00] sm:$0xff]
        %v945 = vld [vmem:[%s334 + $0xf08] sm:$0xff]
        %v946 = vld [vmem:[%s334 + $0xf10] sm:$0xff]
        %v947 = vld [vmem:[%s334 + $0xf18] sm:$0xff]
        %v948 = vld [vmem:[%s334 + $0xf20] sm:$0xff]
        %v949 = vld [vmem:[%s334 + $0xf28] sm:$0xff]
        %v950 = vld [vmem:[%s334 + $0xf30] sm:$0xff]
        %v951 = vld [vmem:[%s334 + $0xf38] sm:$0xff]
        %v952 = vld [vmem:[%s334 + $0xf40] sm:$0xff]
        %v953 = vld [vmem:[%s334 + $0xf48] sm:$0xff]
        %v954 = vld [vmem:[%s334 + $0xf50] sm:$0xff]
        %v955 = vld [vmem:[%s334 + $0xf58] sm:$0xff]
        %v956 = vld [vmem:[%s334 + $0xf60] sm:$0xff]
        %v957 = vld [vmem:[%s334 + $0xf68] sm:$0xff]
        %v958 = vld [vmem:[%s334 + $0xf70] sm:$0xff]
        %v959 = vld [vmem:[%s334 + $0xf78] sm:$0xff]
        %v960 = vld [vmem:[%s334 + $0xf80] sm:$0xff]
        %v961 = vld [vmem:[%s334 + $0xf88] sm:$0xff]
        %v962 = vld [vmem:[%s334 + $0xf90] sm:$0xff]
        %v963 = vld [vmem:[%s334 + $0xf98] sm:$0xff]
        %v964 = vld [vmem:[%s334 + $0xfa0] sm:$0xff]
        %v965 = vld [vmem:[%s334 + $0xfa8] sm:$0xff]
        %v966 = vld [vmem:[%s334 + $0xfb0] sm:$0xff]
        %v967 = vld [vmem:[%s334 + $0xfb8] sm:$0xff]
        %v968 = vld [vmem:[%s334 + $0xfc0] sm:$0xff]
        %v969 = vld [vmem:[%s334 + $0xfc8] sm:$0xff]
        %v970 = vld [vmem:[%s334 + $0xfd0] sm:$0xff]
        %v971 = vld [vmem:[%s334 + $0xfd8] sm:$0xff]
        %v972 = vld [vmem:[%s334 + $0xfe0] sm:$0xff]
        %v973 = vld [vmem:[%s334 + $0xfe8] sm:$0xff]
        %v974 = vld [vmem:[%s334 + $0xff0] sm:$0xff]
        %v975 = vld [vmem:[%s334 + $0xff8] sm:$0xff]
        %v976 = vld [vmem:[%s334 + $0x1000] sm:$0xff]
        %v977 = vld [vmem:[%s334 + $0x1008] sm:$0xff]
        %v978 = vld [vmem:[%s334 + $0x1010] sm:$0xff]
        %v979 = vld [vmem:[%s334 + $0x1018] sm:$0xff]
        %v980 = vld [vmem:[%s334 + $0x1020] sm:$0xff]
        %v981 = vld [vmem:[%s334 + $0x1028] sm:$0xff]
        %v982 = vld [vmem:[%s334 + $0x1030] sm:$0xff]
        %v983 = vld [vmem:[%s334 + $0x1038] sm:$0xff]
        %v984 = vld [vmem:[%s334 + $0x1040] sm:$0xff]
        %v985 = vld [vmem:[%s334 + $0x1048] sm:$0xff]
        %v986 = vld [vmem:[%s334 + $0x1050] sm:$0xff]
        %v987 = vld [vmem:[%s334 + $0x1058] sm:$0xff]
        %v988 = vld [vmem:[%s334 + $0x1060] sm:$0xff]
        %v989 = vld [vmem:[%s334 + $0x1068] sm:$0xff]
        %v990 = vld [vmem:[%s334 + $0x1070] sm:$0xff]
        %v991 = vld [vmem:[%s334 + $0x1078] sm:$0xff]
        %v992 = vld [vmem:[%s334 + $0x1080] sm:$0xff]
        %v993 = vld [vmem:[%s334 + $0x1088] sm:$0xff]
        %v994 = vld [vmem:[%s334 + $0x1090] sm:$0xff]
        %v995 = vld [vmem:[%s334 + $0x1098] sm:$0xff]
        %v996 = vld [vmem:[%s334 + $0x10a0] sm:$0xff]
        %v997 = vld [vmem:[%s334 + $0x10a8] sm:$0xff]
        %v998 = vld [vmem:[%s334 + $0x10b0] sm:$0xff]
        %v999 = vld [vmem:[%s334 + $0x10b8] sm:$0xff]
        %v1000 = vld [vmem:[%s334 + $0x10c0] sm:$0xff]
        %v1001 = vld [vmem:[%s334 + $0x10c8] sm:$0xff]
        %v1002 = vld [vmem:[%s334 + $0x10d0] sm:$0xff]
        %v1003 = vld [vmem:[%s334 + $0x10d8] sm:$0xff]
        %v1004 = vld [vmem:[%s334 + $0x10e0] sm:$0xff]
        %v1005 = vld [vmem:[%s334 + $0x10e8] sm:$0xff]
        %v1006 = vld [vmem:[%s334 + $0x10f0] sm:$0xff]
        %v1007 = vld [vmem:[%s334 + $0x10f8] sm:$0xff]
        %v1008 = vld [vmem:[%s334 + $0x1100] sm:$0xff]
        %v1009 = vld [vmem:[%s334 + $0x1108] sm:$0xff]
        %v1010 = vld [vmem:[%s334 + $0x1110] sm:$0xff]
        %v1011 = vld [vmem:[%s334 + $0x1118] sm:$0xff]
        %v1012 = vld [vmem:[%s334 + $0x1120] sm:$0xff]
        %v1013 = vld [vmem:[%s334 + $0x1128] sm:$0xff]
        %v1014 = vld [vmem:[%s334 + $0x1130] sm:$0xff]
        %v1015 = vld [vmem:[%s334 + $0x1138] sm:$0xff]
        %v1016 = vld [vmem:[%s334 + $0x1140] sm:$0xff]
        %v1017 = vld [vmem:[%s334 + $0x1148] sm:$0xff]
        %v1018 = vld [vmem:[%s334 + $0x1150] sm:$0xff]
        %v1019 = vld [vmem:[%s334 + $0x1158] sm:$0xff]
        %v1020 = vld [vmem:[%s334 + $0x1160] sm:$0xff]
        %v1021 = vld [vmem:[%s334 + $0x1168] sm:$0xff]
        %v1022 = vld [vmem:[%s334 + $0x1170] sm:$0xff]
        %v1023 = vld [vmem:[%s334 + $0x1178] sm:$0xff]
        %v1024 = vld [vmem:[%s334 + $0x1180] sm:$0xff]
        %v1025 = vld [vmem:[%s334 + $0x1188] sm:$0xff]
        %v1026 = vld [vmem:[%s334 + $0x1190] sm:$0xff]
        %v1027 = vld [vmem:[%s334 + $0x1198] sm:$0xff]
        %v1028 = vld [vmem:[%s334 + $0x11a0] sm:$0xff]
        %v1029 = vld [vmem:[%s334 + $0x11a8] sm:$0xff]
        %v1030 = vld [vmem:[%s334 + $0x11b0] sm:$0xff]
        %v1031 = vld [vmem:[%s334 + $0x11b8] sm:$0xff]
        %v1032 = vld [vmem:[%s334 + $0x11c0] sm:$0xff]
        %v1033 = vld [vmem:[%s334 + $0x11c8] sm:$0xff]
        %v1034 = vld [vmem:[%s334 + $0x11d0] sm:$0xff]
        %v1035 = vld [vmem:[%s334 + $0x11d8] sm:$0xff]
        %v1036 = vld [vmem:[%s334 + $0x11e0] sm:$0xff]
        %v1037 = vld [vmem:[%s334 + $0x11e8] sm:$0xff]
        %v1038 = vld [vmem:[%s334 + $0x11f0] sm:$0xff]
        %v1039 = vld [vmem:[%s334 + $0x11f8] sm:$0xff]
        %v1040 = vld [vmem:[%s334 + $0x1200] sm:$0xff]
        %v1041 = vld [vmem:[%s334 + $0x1208] sm:$0xff]
        %v1042 = vld [vmem:[%s334 + $0x1210] sm:$0xff]
        %v1043 = vld [vmem:[%s334 + $0x1218] sm:$0xff]
        %v1044 = vld [vmem:[%s334 + $0x1220] sm:$0xff]
        %v1045 = vld [vmem:[%s334 + $0x1228] sm:$0xff]
        %v1046 = vld [vmem:[%s334 + $0x1230] sm:$0xff]
        %v1047 = vld [vmem:[%s334 + $0x1238] sm:$0xff]
        %v1048 = vld [vmem:[%s334 + $0x1240] sm:$0xff]
        %v1049 = vld [vmem:[%s334 + $0x1248] sm:$0xff]
        %v1050 = vld [vmem:[%s334 + $0x1250] sm:$0xff]
        %v1051 = vld [vmem:[%s334 + $0x1258] sm:$0xff]
        %v1052 = vld [vmem:[%s334 + $0x1260] sm:$0xff]
        %v1053 = vld [vmem:[%s334 + $0x1268] sm:$0xff]
        %v1054 = vld [vmem:[%s334 + $0x1270] sm:$0xff]
        %v1055 = vld [vmem:[%s334 + $0x1278] sm:$0xff]
        %v1056 = vld [vmem:[%s334 + $0x1280] sm:$0xff]
        %v1057 = vld [vmem:[%s334 + $0x1288] sm:$0xff]
        %v1058 = vld [vmem:[%s334 + $0x1290] sm:$0xff]
        %v1059 = vld [vmem:[%s334 + $0x1298] sm:$0xff]
        %v1060 = vld [vmem:[%s334 + $0x12a0] sm:$0xff]
        %v1061 = vld [vmem:[%s334 + $0x12a8] sm:$0xff]
        %v1062 = vld [vmem:[%s334 + $0x12b0] sm:$0xff]
        %v1063 = vld [vmem:[%s334 + $0x12b8] sm:$0xff]
        %v1064 = vld [vmem:[%s334 + $0x12c0] sm:$0xff]
        %v1065 = vld [vmem:[%s334 + $0x12c8] sm:$0xff]
        %v1066 = vld [vmem:[%s334 + $0x12d0] sm:$0xff]
        %v1067 = vld [vmem:[%s334 + $0x12d8] sm:$0xff]
        %v1068 = vld [vmem:[%s334 + $0x12e0] sm:$0xff]
        %v1069 = vld [vmem:[%s334 + $0x12e8] sm:$0xff]
        %v1070 = vld [vmem:[%s334 + $0x12f0] sm:$0xff]
        %v1071 = vld [vmem:[%s334 + $0x12f8] sm:$0xff]
        %v1072 = vld [vmem:[%s334 + $0x1300] sm:$0xff]
        %v1073 = vld [vmem:[%s334 + $0x1308] sm:$0xff]
        %v1074 = vld [vmem:[%s334 + $0x1310] sm:$0xff]
        %v1075 = vld [vmem:[%s334 + $0x1318] sm:$0xff]
        %v1076 = vld [vmem:[%s334 + $0x1320] sm:$0xff]
        %v1077 = vld [vmem:[%s334 + $0x1328] sm:$0xff]
        %v1078 = vld [vmem:[%s334 + $0x1330] sm:$0xff]
        %v1079 = vld [vmem:[%s334 + $0x1338] sm:$0xff]
        %v1080 = vld [vmem:[%s334 + $0x1340] sm:$0xff]
        %v1081 = vld [vmem:[%s334 + $0x1348] sm:$0xff]
        %v1082 = vld [vmem:[%s334 + $0x1350] sm:$0xff]
        %v1083 = vld [vmem:[%s334 + $0x1358] sm:$0xff]
        %v1084 = vld [vmem:[%s334 + $0x1360] sm:$0xff]
        %v1085 = vld [vmem:[%s334 + $0x1368] sm:$0xff]
        %v1086 = vld [vmem:[%s334 + $0x1370] sm:$0xff]
        %v1087 = vld [vmem:[%s334 + $0x1378] sm:$0xff]
        %v1088 = vld [vmem:[%s334 + $0x1380] sm:$0xff]
        %v1089 = vld [vmem:[%s334 + $0x1388] sm:$0xff]
        %v1090 = vld [vmem:[%s334 + $0x1390] sm:$0xff]
        %v1091 = vld [vmem:[%s334 + $0x1398] sm:$0xff]
        %v1092 = vld [vmem:[%s334 + $0x13a0] sm:$0xff]
        %v1093 = vld [vmem:[%s334 + $0x13a8] sm:$0xff]
        %v1094 = vld [vmem:[%s334 + $0x13b0] sm:$0xff]
        %v1095 = vld [vmem:[%s334 + $0x13b8] sm:$0xff]
        %v1096 = vld [vmem:[%s334 + $0x13c0] sm:$0xff]
        %v1097 = vld [vmem:[%s334 + $0x13c8] sm:$0xff]
        %v1098 = vld [vmem:[%s334 + $0x13d0] sm:$0xff]
        %v1099 = vld [vmem:[%s334 + $0x13d8] sm:$0xff]
        %v1100 = vld [vmem:[%s334 + $0x13e0] sm:$0xff]
        %v1101 = vld [vmem:[%s334 + $0x13e8] sm:$0xff]
        %v1102 = vld [vmem:[%s334 + $0x13f0] sm:$0xff]
        %v1103 = vld [vmem:[%s334 + $0x13f8] sm:$0xff]
        %v1104 = vld [vmem:[%s334 + $0x1400] sm:$0xff]
        %v1105 = vld [vmem:[%s334 + $0x1408] sm:$0xff]
        %v1106 = vld [vmem:[%s334 + $0x1410] sm:$0xff]
        %v1107 = vld [vmem:[%s334 + $0x1418] sm:$0xff]
        %v1108 = vld [vmem:[%s334 + $0x1420] sm:$0xff]
        %v1109 = vld [vmem:[%s334 + $0x1428] sm:$0xff]
        %v1110 = vld [vmem:[%s334 + $0x1430] sm:$0xff]
        %v1111 = vld [vmem:[%s334 + $0x1438] sm:$0xff]
        %v1112 = vld [vmem:[%s334 + $0x1440] sm:$0xff]
        %v1113 = vld [vmem:[%s334 + $0x1448] sm:$0xff]
        %v1114 = vld [vmem:[%s334 + $0x1450] sm:$0xff]
        %v1115 = vld [vmem:[%s334 + $0x1458] sm:$0xff]
        %v1116 = vld [vmem:[%s334 + $0x1460] sm:$0xff]
        %v1117 = vld [vmem:[%s334 + $0x1468] sm:$0xff]
        %v1118 = vld [vmem:[%s334 + $0x1470] sm:$0xff]
        %v1119 = vld [vmem:[%s334 + $0x1478] sm:$0xff]
        %v1120 = vld [vmem:[%s334 + $0x1480] sm:$0xff]
        %v1121 = vld [vmem:[%s334 + $0x1488] sm:$0xff]
        %v1122 = vld [vmem:[%s334 + $0x1490] sm:$0xff]
        %v1123 = vld [vmem:[%s334 + $0x1498] sm:$0xff]
        %v1124 = vld [vmem:[%s334 + $0x14a0] sm:$0xff]
        %v1125 = vld [vmem:[%s334 + $0x14a8] sm:$0xff]
        %v1126 = vld [vmem:[%s334 + $0x14b0] sm:$0xff]
        %v1127 = vld [vmem:[%s334 + $0x14b8] sm:$0xff]
        %v1128 = vld [vmem:[%s334 + $0x14c0] sm:$0xff]
        %v1129 = vld [vmem:[%s334 + $0x14c8] sm:$0xff]
        %v1130 = vld [vmem:[%s334 + $0x14d0] sm:$0xff]
        %v1131 = vld [vmem:[%s334 + $0x14d8] sm:$0xff]
        %v1132 = vld [vmem:[%s334 + $0x14e0] sm:$0xff]
        %v1133 = vld [vmem:[%s334 + $0x14e8] sm:$0xff]
        %v1134 = vld [vmem:[%s334 + $0x14f0] sm:$0xff]
        %v1135 = vld [vmem:[%s334 + $0x14f8] sm:$0xff]
        %v1136 = vld [vmem:[%s334 + $0x1500] sm:$0xff]
        %v1137 = vld [vmem:[%s334 + $0x1508] sm:$0xff]
        %v1138 = vld [vmem:[%s334 + $0x1510] sm:$0xff]
        %v1139 = vld [vmem:[%s334 + $0x1518] sm:$0xff]
        %v1140 = vld [vmem:[%s334 + $0x1520] sm:$0xff]
        %v1141 = vld [vmem:[%s334 + $0x1528] sm:$0xff]
        %v1142 = vld [vmem:[%s334 + $0x1530] sm:$0xff]
        %v1143 = vld [vmem:[%s334 + $0x1538] sm:$0xff]
        %v1144 = vld [vmem:[%s334 + $0x1540] sm:$0xff]
        %v1145 = vld [vmem:[%s334 + $0x1548] sm:$0xff]
        %v1146 = vld [vmem:[%s334 + $0x1550] sm:$0xff]
        %v1147 = vld [vmem:[%s334 + $0x1558] sm:$0xff]
        %v1148 = vld [vmem:[%s334 + $0x1560] sm:$0xff]
        %v1149 = vld [vmem:[%s334 + $0x1568] sm:$0xff]
        %v1150 = vld [vmem:[%s334 + $0x1570] sm:$0xff]
        %v1151 = vld [vmem:[%s334 + $0x1578] sm:$0xff]
        %v1152 = vld [vmem:[%s334 + $0x1580] sm:$0xff]
        %v1153 = vld [vmem:[%s334 + $0x1588] sm:$0xff]
        %v1154 = vld [vmem:[%s334 + $0x1590] sm:$0xff]
        %v1155 = vld [vmem:[%s334 + $0x1598] sm:$0xff]
        %v1156 = vld [vmem:[%s334 + $0x15a0] sm:$0xff]
        %v1157 = vld [vmem:[%s334 + $0x15a8] sm:$0xff]
        %v1158 = vld [vmem:[%s334 + $0x15b0] sm:$0xff]
        %v1159 = vld [vmem:[%s334 + $0x15b8] sm:$0xff]
        %v1160 = vld [vmem:[%s334 + $0x15c0] sm:$0xff]
        %v1161 = vld [vmem:[%s334 + $0x15c8] sm:$0xff]
        %v1162 = vld [vmem:[%s334 + $0x15d0] sm:$0xff]
        %v1163 = vld [vmem:[%s334 + $0x15d8] sm:$0xff]
        %v1164 = vld [vmem:[%s334 + $0x15e0] sm:$0xff]
        %v1165 = vld [vmem:[%s334 + $0x15e8] sm:$0xff]
        %v1166 = vld [vmem:[%s334 + $0x15f0] sm:$0xff]
        %v1167 = vld [vmem:[%s334 + $0x15f8] sm:$0xff]
        %v1168 = vld [vmem:[%s334 + $0x1600] sm:$0xff]
        %v1169 = vld [vmem:[%s334 + $0x1608] sm:$0xff]
        %v1170 = vld [vmem:[%s334 + $0x1610] sm:$0xff]
        %v1171 = vld [vmem:[%s334 + $0x1618] sm:$0xff]
        %v1172 = vld [vmem:[%s334 + $0x1620] sm:$0xff]
        %v1173 = vld [vmem:[%s334 + $0x1628] sm:$0xff]
        %v1174 = vld [vmem:[%s334 + $0x1630] sm:$0xff]
        %v1175 = vld [vmem:[%s334 + $0x1638] sm:$0xff]
        %v1176 = vld [vmem:[%s334 + $0x1640] sm:$0xff]
        %v1177 = vld [vmem:[%s334 + $0x1648] sm:$0xff]
        %v1178 = vld [vmem:[%s334 + $0x1650] sm:$0xff]
        %v1179 = vld [vmem:[%s334 + $0x1658] sm:$0xff]
        %v1180 = vld [vmem:[%s334 + $0x1660] sm:$0xff]
        %v1181 = vld [vmem:[%s334 + $0x1668] sm:$0xff]
        %v1182 = vld [vmem:[%s334 + $0x1670] sm:$0xff]
        %v1183 = vld [vmem:[%s334 + $0x1678] sm:$0xff]
        %v1184 = vld [vmem:[%s334 + $0x1680] sm:$0xff]
        %v1185 = vld [vmem:[%s334 + $0x1688] sm:$0xff]
        %v1186 = vld [vmem:[%s334 + $0x1690] sm:$0xff]
        %v1187 = vld [vmem:[%s334 + $0x1698] sm:$0xff]
        %v1188 = vld [vmem:[%s334 + $0x16a0] sm:$0xff]
        %v1189 = vld [vmem:[%s334 + $0x16a8] sm:$0xff]
        %v1190 = vld [vmem:[%s334 + $0x16b0] sm:$0xff]
        %v1191 = vld [vmem:[%s334 + $0x16b8] sm:$0xff]
        %v1192 = vld [vmem:[%s334 + $0x16c0] sm:$0xff]
        %v1193 = vld [vmem:[%s334 + $0x16c8] sm:$0xff]
        %v1194 = vld [vmem:[%s334 + $0x16d0] sm:$0xff]
        %v1195 = vld [vmem:[%s334 + $0x16d8] sm:$0xff]
        %v1196 = vld [vmem:[%s334 + $0x16e0] sm:$0xff]
        %v1197 = vld [vmem:[%s334 + $0x16e8] sm:$0xff]
        %v1198 = vld [vmem:[%s334 + $0x16f0] sm:$0xff]
        %v1199 = vld [vmem:[%s334 + $0x16f8] sm:$0xff]
        %v1200 = vld [vmem:[%s334 + $0x1700] sm:$0xff]
        %v1201 = vld [vmem:[%s334 + $0x1708] sm:$0xff]
        %v1202 = vld [vmem:[%s334 + $0x1710] sm:$0xff]
        %v1203 = vld [vmem:[%s334 + $0x1718] sm:$0xff]
        %v1204 = vld [vmem:[%s334 + $0x1720] sm:$0xff]
        %v1205 = vld [vmem:[%s334 + $0x1728] sm:$0xff]
        %v1206 = vld [vmem:[%s334 + $0x1730] sm:$0xff]
        %v1207 = vld [vmem:[%s334 + $0x1738] sm:$0xff]
        %v1208 = vld [vmem:[%s334 + $0x1740] sm:$0xff]
        %v1209 = vld [vmem:[%s334 + $0x1748] sm:$0xff]
        %v1210 = vld [vmem:[%s334 + $0x1750] sm:$0xff]
        %v1211 = vld [vmem:[%s334 + $0x1758] sm:$0xff]
        %v1212 = vld [vmem:[%s334 + $0x1760] sm:$0xff]
        %v1213 = vld [vmem:[%s334 + $0x1768] sm:$0xff]
        %v1214 = vld [vmem:[%s334 + $0x1770] sm:$0xff]
        %v1215 = vld [vmem:[%s334 + $0x1778] sm:$0xff]
        %v1216 = vld [vmem:[%s334 + $0x1780] sm:$0xff]
        %v1217 = vld [vmem:[%s334 + $0x1788] sm:$0xff]
        %v1218 = vld [vmem:[%s334 + $0x1790] sm:$0xff]
        %v1219 = vld [vmem:[%s334 + $0x1798] sm:$0xff]
        %v1220 = vld [vmem:[%s334 + $0x17a0] sm:$0xff]
        %v1221 = vld [vmem:[%s334 + $0x17a8] sm:$0xff]
        %v1222 = vld [vmem:[%s334 + $0x17b0] sm:$0xff]
        %v1223 = vld [vmem:[%s334 + $0x17b8] sm:$0xff]
        %v1224 = vld [vmem:[%s334 + $0x17c0] sm:$0xff]
        %v1225 = vld [vmem:[%s334 + $0x17c8] sm:$0xff]
        %v1226 = vld [vmem:[%s334 + $0x17d0] sm:$0xff]
        %v1227 = vld [vmem:[%s334 + $0x17d8] sm:$0xff]
        %v1228 = vld [vmem:[%s334 + $0x17e0] sm:$0xff]
        %v1229 = vld [vmem:[%s334 + $0x17e8] sm:$0xff]
        %v1230 = vld [vmem:[%s334 + $0x17f0] sm:$0xff]
        %v1231 = vld [vmem:[%s334 + $0x17f8] sm:$0xff]
        %v1232 = vld [vmem:[%s334 + $0x1800] sm:$0xff]
        %v1233 = vld [vmem:[%s334 + $0x1808] sm:$0xff]
        %v1234 = vld [vmem:[%s334 + $0x1810] sm:$0xff]
        %v1235 = vld [vmem:[%s334 + $0x1818] sm:$0xff]
        %v1236 = vld [vmem:[%s334 + $0x1820] sm:$0xff]
        %v1237 = vld [vmem:[%s334 + $0x1828] sm:$0xff]
        %v1238 = vld [vmem:[%s334 + $0x1830] sm:$0xff]
        %v1239 = vld [vmem:[%s334 + $0x1838] sm:$0xff]
        %v1240 = vld [vmem:[%s334 + $0x1840] sm:$0xff]
        %v1241 = vld [vmem:[%s334 + $0x1848] sm:$0xff]
        %v1242 = vld [vmem:[%s334 + $0x1850] sm:$0xff]
        %v1243 = vld [vmem:[%s334 + $0x1858] sm:$0xff]
        %v1244 = vld [vmem:[%s334 + $0x1860] sm:$0xff]
        %v1245 = vld [vmem:[%s334 + $0x1868] sm:$0xff]
        %v1246 = vld [vmem:[%s334 + $0x1870] sm:$0xff]
        %v1247 = vld [vmem:[%s334 + $0x1878] sm:$0xff]
        %v1248 = vld [vmem:[%s334 + $0x1880] sm:$0xff]
        %v1249 = vld [vmem:[%s334 + $0x1888] sm:$0xff]
        %v1250 = vld [vmem:[%s334 + $0x1890] sm:$0xff]
        %v1251 = vld [vmem:[%s334 + $0x1898] sm:$0xff]
        %v1252 = vld [vmem:[%s334 + $0x18a0] sm:$0xff]
        %v1253 = vld [vmem:[%s334 + $0x18a8] sm:$0xff]
        %v1254 = vld [vmem:[%s334 + $0x18b0] sm:$0xff]
        %v1255 = vld [vmem:[%s334 + $0x18b8] sm:$0xff]
        %v1256 = vld [vmem:[%s334 + $0x18c0] sm:$0xff]
        %v1257 = vld [vmem:[%s334 + $0x18c8] sm:$0xff]
        %v1258 = vld [vmem:[%s334 + $0x18d0] sm:$0xff]
        %v1259 = vld [vmem:[%s334 + $0x18d8] sm:$0xff]
        %v1260 = vld [vmem:[%s334 + $0x18e0] sm:$0xff]
        %v1261 = vld [vmem:[%s334 + $0x18e8] sm:$0xff]
        %v1262 = vld [vmem:[%s334 + $0x18f0] sm:$0xff]
        %v1263 = vld [vmem:[%s334 + $0x18f8] sm:$0xff]
        %v1264 = vld [vmem:[%s334 + $0x1900] sm:$0xff]
        %v1265 = vld [vmem:[%s334 + $0x1908] sm:$0xff]
        %v1266 = vld [vmem:[%s334 + $0x1910] sm:$0xff]
        %v1267 = vld [vmem:[%s334 + $0x1918] sm:$0xff]
        %v1268 = vld [vmem:[%s334 + $0x1920] sm:$0xff]
        %v1269 = vld [vmem:[%s334 + $0x1928] sm:$0xff]
        %v1270 = vld [vmem:[%s334 + $0x1930] sm:$0xff]
        %v1271 = vld [vmem:[%s334 + $0x1938] sm:$0xff]
        %v1272 = vld [vmem:[%s334 + $0x1940] sm:$0xff]
        %v1273 = vld [vmem:[%s334 + $0x1948] sm:$0xff]
        %v1274 = vld [vmem:[%s334 + $0x1950] sm:$0xff]
        %v1275 = vld [vmem:[%s334 + $0x1958] sm:$0xff]
        %v1276 = vld [vmem:[%s334 + $0x1960] sm:$0xff]
        %v1277 = vld [vmem:[%s334 + $0x1968] sm:$0xff]
        %v1278 = vld [vmem:[%s334 + $0x1970] sm:$0xff]
        %v1279 = vld [vmem:[%s334 + $0x1978] sm:$0xff]
        %v1280 = vld [vmem:[%s334 + $0x1980] sm:$0xff]
        %v1281 = vld [vmem:[%s334 + $0x1988] sm:$0xff]
        %v1282 = vld [vmem:[%s334 + $0x1990] sm:$0xff]
        %v1283 = vld [vmem:[%s334 + $0x1998] sm:$0xff]
        %v1284 = vld [vmem:[%s334 + $0x19a0] sm:$0xff]
        %v1285 = vld [vmem:[%s334 + $0x19a8] sm:$0xff]
        %v1286 = vld [vmem:[%s334 + $0x19b0] sm:$0xff]
        %v1287 = vld [vmem:[%s334 + $0x19b8] sm:$0xff]
        %v1288 = vld [vmem:[%s334 + $0x19c0] sm:$0xff]
        %v1289 = vld [vmem:[%s334 + $0x19c8] sm:$0xff]
        %v1290 = vld [vmem:[%s334 + $0x19d0] sm:$0xff]
        %v1291 = vld [vmem:[%s334 + $0x19d8] sm:$0xff]
        %v1292 = vld [vmem:[%s334 + $0x19e0] sm:$0xff]
        %v1293 = vld [vmem:[%s334 + $0x19e8] sm:$0xff]
        %v1294 = vld [vmem:[%s334 + $0x19f0] sm:$0xff]
        %v1295 = vld [vmem:[%s334 + $0x19f8] sm:$0xff]
        %v1296 = vld [vmem:[%s334 + $0x1a00] sm:$0xff]
        %v1297 = vld [vmem:[%s334 + $0x1a08] sm:$0xff]
        %v1298 = vld [vmem:[%s334 + $0x1a10] sm:$0xff]
        %v1299 = vld [vmem:[%s334 + $0x1a18] sm:$0xff]
        %v1300 = vld [vmem:[%s334 + $0x1a20] sm:$0xff]
        %v1301 = vld [vmem:[%s334 + $0x1a28] sm:$0xff]
        %v1302 = vld [vmem:[%s334 + $0x1a30] sm:$0xff]
        %v1303 = vld [vmem:[%s334 + $0x1a38] sm:$0xff]
        %v1304 = vld [vmem:[%s334 + $0x1a40] sm:$0xff]
        %v1305 = vld [vmem:[%s334 + $0x1a48] sm:$0xff]
        %v1306 = vld [vmem:[%s334 + $0x1a50] sm:$0xff]
        %v1307 = vld [vmem:[%s334 + $0x1a58] sm:$0xff]
        %v1308 = vld [vmem:[%s334 + $0x1a60] sm:$0xff]
        %v1309 = vld [vmem:[%s334 + $0x1a68] sm:$0xff]
        %v1310 = vld [vmem:[%s334 + $0x1a70] sm:$0xff]
        %v1311 = vld [vmem:[%s334 + $0x1a78] sm:$0xff]
        %v1312 = vld [vmem:[%s334 + $0x1a80] sm:$0xff]
        %v1313 = vld [vmem:[%s334 + $0x1a88] sm:$0xff]
        %v1314 = vld [vmem:[%s334 + $0x1a90] sm:$0xff]
        %v1315 = vld [vmem:[%s334 + $0x1a98] sm:$0xff]
        %v1316 = vld [vmem:[%s334 + $0x1aa0] sm:$0xff]
        %v1317 = vld [vmem:[%s334 + $0x1aa8] sm:$0xff]
        %v1318 = vld [vmem:[%s334 + $0x1ab0] sm:$0xff]
        %v1319 = vld [vmem:[%s334 + $0x1ab8] sm:$0xff]
        %v1320 = vld [vmem:[%s334 + $0x1ac0] sm:$0xff]
        %v1321 = vld [vmem:[%s334 + $0x1ac8] sm:$0xff]
        %v1322 = vld [vmem:[%s334 + $0x1ad0] sm:$0xff]
        %v1323 = vld [vmem:[%s334 + $0x1ad8] sm:$0xff]
        %v1324 = vld [vmem:[%s334 + $0x1ae0] sm:$0xff]
        %v1325 = vld [vmem:[%s334 + $0x1ae8] sm:$0xff]
        %v1326 = vld [vmem:[%s334 + $0x1af0] sm:$0xff]
        %v1327 = vld [vmem:[%s334 + $0x1af8] sm:$0xff]
        %v1328 = vld [vmem:[%s334 + $0x1b00] sm:$0xff]
        %v1329 = vld [vmem:[%s334 + $0x1b08] sm:$0xff]
        %v1330 = vld [vmem:[%s334 + $0x1b10] sm:$0xff]
        %v1331 = vld [vmem:[%s334 + $0x1b18] sm:$0xff]
        %v1332 = vld [vmem:[%s334 + $0x1b20] sm:$0xff]
        %v1333 = vld [vmem:[%s334 + $0x1b28] sm:$0xff]
        %v1334 = vld [vmem:[%s334 + $0x1b30] sm:$0xff]
        %v1335 = vld [vmem:[%s334 + $0x1b38] sm:$0xff]
        %v1336 = vld [vmem:[%s334 + $0x1b40] sm:$0xff]
        %v1337 = vld [vmem:[%s334 + $0x1b48] sm:$0xff]
        %v1338 = vld [vmem:[%s334 + $0x1b50] sm:$0xff]
        %v1339 = vld [vmem:[%s334 + $0x1b58] sm:$0xff]
        %v1340 = vld [vmem:[%s334 + $0x1b60] sm:$0xff]
        %v1341 = vld [vmem:[%s334 + $0x1b68] sm:$0xff]
        %v1342 = vld [vmem:[%s334 + $0x1b70] sm:$0xff]
        %v1343 = vld [vmem:[%s334 + $0x1b78] sm:$0xff]
        %v1344 = vld [vmem:[%s334 + $0x1b80] sm:$0xff]
        %v1345 = vld [vmem:[%s334 + $0x1b88] sm:$0xff]
        %v1346 = vld [vmem:[%s334 + $0x1b90] sm:$0xff]
        %v1347 = vld [vmem:[%s334 + $0x1b98] sm:$0xff]
        %v1348 = vld [vmem:[%s334 + $0x1ba0] sm:$0xff]
        %v1349 = vld [vmem:[%s334 + $0x1ba8] sm:$0xff]
        %v1350 = vld [vmem:[%s334 + $0x1bb0] sm:$0xff]
        %v1351 = vld [vmem:[%s334 + $0x1bb8] sm:$0xff]
        %v1352 = vld [vmem:[%s334 + $0x1bc0] sm:$0xff]
        %v1353 = vld [vmem:[%s334 + $0x1bc8] sm:$0xff]
        %v1354 = vld [vmem:[%s334 + $0x1bd0] sm:$0xff]
        %v1355 = vld [vmem:[%s334 + $0x1bd8] sm:$0xff]
        %v1356 = vld [vmem:[%s334 + $0x1be0] sm:$0xff]
        %v1357 = vld [vmem:[%s334 + $0x1be8] sm:$0xff]
        %v1358 = vld [vmem:[%s334 + $0x1bf0] sm:$0xff]
        %v1359 = vld [vmem:[%s334 + $0x1bf8] sm:$0xff]
        %v1360 = vld [vmem:[%s334 + $0x1c00] sm:$0xff]
        %v1361 = vld [vmem:[%s334 + $0x1c08] sm:$0xff]
        %v1362 = vld [vmem:[%s334 + $0x1c10] sm:$0xff]
        %v1363 = vld [vmem:[%s334 + $0x1c18] sm:$0xff]
        %v1364 = vld [vmem:[%s334 + $0x1c20] sm:$0xff]
        %v1365 = vld [vmem:[%s334 + $0x1c28] sm:$0xff]
        %v1366 = vld [vmem:[%s334 + $0x1c30] sm:$0xff]
        %v1367 = vld [vmem:[%s334 + $0x1c38] sm:$0xff]
        %v1368 = vld [vmem:[%s334 + $0x1c40] sm:$0xff]
        %v1369 = vld [vmem:[%s334 + $0x1c48] sm:$0xff]
        %v1370 = vld [vmem:[%s334 + $0x1c50] sm:$0xff]
        %v1371 = vld [vmem:[%s334 + $0x1c58] sm:$0xff]
        %v1372 = vld [vmem:[%s334 + $0x1c60] sm:$0xff]
        %v1373 = vld [vmem:[%s334 + $0x1c68] sm:$0xff]
        %v1374 = vld [vmem:[%s334 + $0x1c70] sm:$0xff]
        %v1375 = vld [vmem:[%s334 + $0x1c78] sm:$0xff]
        %v1376 = vld [vmem:[%s334 + $0x1c80] sm:$0xff]
        %v1377 = vld [vmem:[%s334 + $0x1c88] sm:$0xff]
        %v1378 = vld [vmem:[%s334 + $0x1c90] sm:$0xff]
        %v1379 = vld [vmem:[%s334 + $0x1c98] sm:$0xff]
        %v1380 = vld [vmem:[%s334 + $0x1ca0] sm:$0xff]
        %v1381 = vld [vmem:[%s334 + $0x1ca8] sm:$0xff]
        %v1382 = vld [vmem:[%s334 + $0x1cb0] sm:$0xff]
        %v1383 = vld [vmem:[%s334 + $0x1cb8] sm:$0xff]
        %v1384 = vld [vmem:[%s334 + $0x1cc0] sm:$0xff]
        %v1385 = vld [vmem:[%s334 + $0x1cc8] sm:$0xff]
        %v1386 = vld [vmem:[%s334 + $0x1cd0] sm:$0xff]
        %v1387 = vld [vmem:[%s334 + $0x1cd8] sm:$0xff]
        %v1388 = vld [vmem:[%s334 + $0x1ce0] sm:$0xff]
        %v1389 = vld [vmem:[%s334 + $0x1ce8] sm:$0xff]
        %v1390 = vld [vmem:[%s334 + $0x1cf0] sm:$0xff]
        %v1391 = vld [vmem:[%s334 + $0x1cf8] sm:$0xff]
        %v1392 = vld [vmem:[%s334 + $0x1d00] sm:$0xff]
        %v1393 = vld [vmem:[%s334 + $0x1d08] sm:$0xff]
        %v1394 = vld [vmem:[%s334 + $0x1d10] sm:$0xff]
        %v1395 = vld [vmem:[%s334 + $0x1d18] sm:$0xff]
        %v1396 = vld [vmem:[%s334 + $0x1d20] sm:$0xff]
        %v1397 = vld [vmem:[%s334 + $0x1d28] sm:$0xff]
        %v1398 = vld [vmem:[%s334 + $0x1d30] sm:$0xff]
        %v1399 = vld [vmem:[%s334 + $0x1d38] sm:$0xff]
        %v1400 = vld [vmem:[%s334 + $0x1d40] sm:$0xff]
        %v1401 = vld [vmem:[%s334 + $0x1d48] sm:$0xff]
        %v1402 = vld [vmem:[%s334 + $0x1d50] sm:$0xff]
        %v1403 = vld [vmem:[%s334 + $0x1d58] sm:$0xff]
        %v1404 = vld [vmem:[%s334 + $0x1d60] sm:$0xff]
        %v1405 = vld [vmem:[%s334 + $0x1d68] sm:$0xff]
        %v1406 = vld [vmem:[%s334 + $0x1d70] sm:$0xff]
        %v1407 = vld [vmem:[%s334 + $0x1d78] sm:$0xff]
        %v1408 = vld [vmem:[%s334 + $0x1d80] sm:$0xff]
        %v1409 = vld [vmem:[%s334 + $0x1d88] sm:$0xff]
        %v1410 = vld [vmem:[%s334 + $0x1d90] sm:$0xff]
        %v1411 = vld [vmem:[%s334 + $0x1d98] sm:$0xff]
        %v1412 = vld [vmem:[%s334 + $0x1da0] sm:$0xff]
        %v1413 = vld [vmem:[%s334 + $0x1da8] sm:$0xff]
        %v1414 = vld [vmem:[%s334 + $0x1db0] sm:$0xff]
        %v1415 = vld [vmem:[%s334 + $0x1db8] sm:$0xff]
        %v1416 = vld [vmem:[%s334 + $0x1dc0] sm:$0xff]
        %v1417 = vld [vmem:[%s334 + $0x1dc8] sm:$0xff]
        %v1418 = vld [vmem:[%s334 + $0x1dd0] sm:$0xff]
        %v1419 = vld [vmem:[%s334 + $0x1dd8] sm:$0xff]
        %v1420 = vld [vmem:[%s334 + $0x1de0] sm:$0xff]
        %v1421 = vld [vmem:[%s334 + $0x1de8] sm:$0xff]
        %v1422 = vld [vmem:[%s334 + $0x1df0] sm:$0xff]
        %v1423 = vld [vmem:[%s334 + $0x1df8] sm:$0xff]
        %v1424 = vld [vmem:[%s334 + $0x1e00] sm:$0xff]
        %v1425 = vld [vmem:[%s334 + $0x1e08] sm:$0xff]
        %v1426 = vld [vmem:[%s334 + $0x1e10] sm:$0xff]
        %v1427 = vld [vmem:[%s334 + $0x1e18] sm:$0xff]
        %v1428 = vld [vmem:[%s334 + $0x1e20] sm:$0xff]
        %v1429 = vld [vmem:[%s334 + $0x1e28] sm:$0xff]
        %v1430 = vld [vmem:[%s334 + $0x1e30] sm:$0xff]
        %v1431 = vld [vmem:[%s334 + $0x1e38] sm:$0xff]
        %v1432 = vld [vmem:[%s334 + $0x1e40] sm:$0xff]
        %v1433 = vld [vmem:[%s334 + $0x1e48] sm:$0xff]
        %v1434 = vld [vmem:[%s334 + $0x1e50] sm:$0xff]
        %v1435 = vld [vmem:[%s334 + $0x1e58] sm:$0xff]
        %v1436 = vld [vmem:[%s334 + $0x1e60] sm:$0xff]
        %v1437 = vld [vmem:[%s334 + $0x1e68] sm:$0xff]
        %v1438 = vld [vmem:[%s334 + $0x1e70] sm:$0xff]
        %v1439 = vld [vmem:[%s334 + $0x1e78] sm:$0xff]
        %v1440 = vld [vmem:[%s334 + $0x1e80] sm:$0xff]
        %v1441 = vld [vmem:[%s334 + $0x1e88] sm:$0xff]
        %v1442 = vld [vmem:[%s334 + $0x1e90] sm:$0xff]
        %v1443 = vld [vmem:[%s334 + $0x1e98] sm:$0xff]
        %v1444 = vld [vmem:[%s334 + $0x1ea0] sm:$0xff]
        %v1445 = vld [vmem:[%s334 + $0x1ea8] sm:$0xff]
        %v1446 = vld [vmem:[%s334 + $0x1eb0] sm:$0xff]
        %v1447 = vld [vmem:[%s334 + $0x1eb8] sm:$0xff]
        %v1448 = vld [vmem:[%s334 + $0x1ec0] sm:$0xff]
        %v1449 = vld [vmem:[%s334 + $0x1ec8] sm:$0xff]
        %v1450 = vld [vmem:[%s334 + $0x1ed0] sm:$0xff]
        %v1451 = vld [vmem:[%s334 + $0x1ed8] sm:$0xff]
        %v1452 = vld [vmem:[%s334 + $0x1ee0] sm:$0xff]
        %v1453 = vld [vmem:[%s334 + $0x1ee8] sm:$0xff]
        %v1454 = vld [vmem:[%s334 + $0x1ef0] sm:$0xff]
        %v1455 = vld [vmem:[%s334 + $0x1ef8] sm:$0xff]
        %v1456 = vld [vmem:[%s334 + $0x1f00] sm:$0xff]
        %v1457 = vld [vmem:[%s334 + $0x1f08] sm:$0xff]
        %v1458 = vld [vmem:[%s334 + $0x1f10] sm:$0xff]
        %v1459 = vld [vmem:[%s334 + $0x1f18] sm:$0xff]
        %v1460 = vld [vmem:[%s334 + $0x1f20] sm:$0xff]
        %v1461 = vld [vmem:[%s334 + $0x1f28] sm:$0xff]
        %v1462 = vld [vmem:[%s334 + $0x1f30] sm:$0xff]
        %v1463 = vld [vmem:[%s334 + $0x1f38] sm:$0xff]
        %v1464 = vld [vmem:[%s334 + $0x1f40] sm:$0xff]
        %v1465 = vld [vmem:[%s334 + $0x1f48] sm:$0xff]
        %v1466 = vld [vmem:[%s334 + $0x1f50] sm:$0xff]
        %v1467 = vld [vmem:[%s334 + $0x1f58] sm:$0xff]
        %v1468 = vld [vmem:[%s334 + $0x1f60] sm:$0xff]
        %v1469 = vld [vmem:[%s334 + $0x1f68] sm:$0xff]
        %v1470 = vld [vmem:[%s334 + $0x1f70] sm:$0xff]
        %v1471 = vld [vmem:[%s334 + $0x1f78] sm:$0xff]
        %v1472 = vld [vmem:[%s334 + $0x1f80] sm:$0xff]
        %v1473 = vld [vmem:[%s334 + $0x1f88] sm:$0xff]
        %v1474 = vld [vmem:[%s334 + $0x1f90] sm:$0xff]
        %v1475 = vld [vmem:[%s334 + $0x1f98] sm:$0xff]
        %v1476 = vld [vmem:[%s334 + $0x1fa0] sm:$0xff]
        %v1477 = vld [vmem:[%s334 + $0x1fa8] sm:$0xff]
        %v1478 = vld [vmem:[%s334 + $0x1fb0] sm:$0xff]
        %v1479 = vld [vmem:[%s334 + $0x1fb8] sm:$0xff]
        %v1480 = vld [vmem:[%s334 + $0x1fc0] sm:$0xff]
        %v1481 = vld [vmem:[%s334 + $0x1fc8] sm:$0xff]
        %v1482 = vld [vmem:[%s334 + $0x1fd0] sm:$0xff]
        %v1483 = vld [vmem:[%s334 + $0x1fd8] sm:$0xff]
        %v1484 = vld [vmem:[%s334 + $0x1fe0] sm:$0xff]
        %v1485 = vld [vmem:[%s334 + $0x1fe8] sm:$0xff]
        %v1486 = vld [vmem:[%s334 + $0x1ff0] sm:$0xff]
        %v1487 = vld [vmem:[%s334 + $0x1ff8] sm:$0xff]
        %v1488 = vld [vmem:[%s334 + $0x2000] sm:$0xff]
        %v1489 = vld [vmem:[%s334 + $0x2008] sm:$0xff]
        %v1490 = vld [vmem:[%s334 + $0x2010] sm:$0xff]
        %v1491 = vld [vmem:[%s334 + $0x2018] sm:$0xff]
        %v1492 = vld [vmem:[%s334 + $0x2020] sm:$0xff]
        %v1493 = vld [vmem:[%s334 + $0x2028] sm:$0xff]
        %v1494 = vld [vmem:[%s334 + $0x2030] sm:$0xff]
        %v1495 = vld [vmem:[%s334 + $0x2038] sm:$0xff]
        %v1496 = vld [vmem:[%s334 + $0x2040] sm:$0xff]
        %v1497 = vld [vmem:[%s334 + $0x2048] sm:$0xff]
        %v1498 = vld [vmem:[%s334 + $0x2050] sm:$0xff]
        %v1499 = vld [vmem:[%s334 + $0x2058] sm:$0xff]
        %v1500 = vld [vmem:[%s334 + $0x2060] sm:$0xff]
        %v1501 = vld [vmem:[%s334 + $0x2068] sm:$0xff]
        %v1502 = vld [vmem:[%s334 + $0x2070] sm:$0xff]
        %v1503 = vld [vmem:[%s334 + $0x2078] sm:$0xff]
        %v1504 = vld [vmem:[%s334 + $0x2080] sm:$0xff]
        %v1505 = vld [vmem:[%s334 + $0x2088] sm:$0xff]
        %v1506 = vld [vmem:[%s334 + $0x2090] sm:$0xff]
        %v1507 = vld [vmem:[%s334 + $0x2098] sm:$0xff]
        %v1508 = vld [vmem:[%s334 + $0x20a0] sm:$0xff]
        %v1509 = vld [vmem:[%s334 + $0x20a8] sm:$0xff]
        %v1510 = vld [vmem:[%s334 + $0x20b0] sm:$0xff]
        %v1511 = vld [vmem:[%s334 + $0x20b8] sm:$0xff]
        %v1512 = vld [vmem:[%s334 + $0x20c0] sm:$0xff]
        %v1513 = vld [vmem:[%s334 + $0x20c8] sm:$0xff]
        %v1514 = vld [vmem:[%s334 + $0x20d0] sm:$0xff]
        %v1515 = vld [vmem:[%s334 + $0x20d8] sm:$0xff]
        %v1516 = vld [vmem:[%s334 + $0x20e0] sm:$0xff]
        %v1517 = vld [vmem:[%s334 + $0x20e8] sm:$0xff]
        %v1518 = vld [vmem:[%s334 + $0x20f0] sm:$0xff]
        %v1519 = vld [vmem:[%s334 + $0x20f8] sm:$0xff]
        %v1520 = vld [vmem:[%s334 + $0x2100] sm:$0xff]
        %v1521 = vld [vmem:[%s334 + $0x2108] sm:$0xff]
        %v1522 = vld [vmem:[%s334 + $0x2110] sm:$0xff]
        %v1523 = vld [vmem:[%s334 + $0x2118] sm:$0xff]
        %v1524 = vld [vmem:[%s334 + $0x2120] sm:$0xff]
        %v1525 = vld [vmem:[%s334 + $0x2128] sm:$0xff]
        %v1526 = vld [vmem:[%s334 + $0x2130] sm:$0xff]
        %v1527 = vld [vmem:[%s334 + $0x2138] sm:$0xff]
        %v1528 = vld [vmem:[%s334 + $0x2140] sm:$0xff]
        %v1529 = vld [vmem:[%s334 + $0x2148] sm:$0xff]
        %v1530 = vld [vmem:[%s334 + $0x2150] sm:$0xff]
        %v1531 = vld [vmem:[%s334 + $0x2158] sm:$0xff]
        %v1532 = vld [vmem:[%s334 + $0x2160] sm:$0xff]
        %v1533 = vld [vmem:[%s334 + $0x2168] sm:$0xff]
        %v1534 = vld [vmem:[%s334 + $0x2170] sm:$0xff]
        %v1535 = vld [vmem:[%s334 + $0x2178] sm:$0xff]
        %v1536 = vld [vmem:[%s334 + $0x2180] sm:$0xff]
        %v1537 = vld [vmem:[%s334 + $0x2188] sm:$0xff]
        %v1538 = vld [vmem:[%s334 + $0x2190] sm:$0xff]
        %v1539 = vld [vmem:[%s334 + $0x2198] sm:$0xff]
        %v1540 = vld [vmem:[%s334 + $0x21a0] sm:$0xff]
        %v1541 = vld [vmem:[%s334 + $0x21a8] sm:$0xff]
        %v1542 = vld [vmem:[%s334 + $0x21b0] sm:$0xff]
        %v1543 = vld [vmem:[%s334 + $0x21b8] sm:$0xff]
        %v1544 = vld [vmem:[%s334 + $0x21c0] sm:$0xff]
        %v1545 = vld [vmem:[%s334 + $0x21c8] sm:$0xff]
        %v1546 = vld [vmem:[%s334 + $0x21d0] sm:$0xff]
        %v1547 = vld [vmem:[%s334 + $0x21d8] sm:$0xff]
        %v1548 = vld [vmem:[%s334 + $0x21e0] sm:$0xff]
        %v1549 = vld [vmem:[%s334 + $0x21e8] sm:$0xff]
        %v1550 = vld [vmem:[%s334 + $0x21f0] sm:$0xff]
        %v1551 = vld [vmem:[%s334 + $0x21f8] sm:$0xff]
        %v1552 = vld [vmem:[%s334 + $0x2200] sm:$0xff]
        %v1553 = vld [vmem:[%s334 + $0x2208] sm:$0xff]
        %v1554 = vld [vmem:[%s334 + $0x2210] sm:$0xff]
        %v1555 = vld [vmem:[%s334 + $0x2218] sm:$0xff]
        %v1556 = vld [vmem:[%s334 + $0x2220] sm:$0xff]
        %v1557 = vld [vmem:[%s334 + $0x2228] sm:$0xff]
        %v1558 = vld [vmem:[%s334 + $0x2230] sm:$0xff]
        %v1559 = vld [vmem:[%s334 + $0x2238] sm:$0xff]
        %v1560 = vld [vmem:[%s334 + $0x2240] sm:$0xff]
        %v1561 = vld [vmem:[%s334 + $0x2248] sm:$0xff]
        %v1562 = vld [vmem:[%s334 + $0x2250] sm:$0xff]
        %v1563 = vld [vmem:[%s334 + $0x2258] sm:$0xff]
        %v1564 = vld [vmem:[%s334 + $0x2260] sm:$0xff]
        %v1565 = vld [vmem:[%s334 + $0x2268] sm:$0xff]
        %v1566 = vld [vmem:[%s334 + $0x2270] sm:$0xff]
        %v1567 = vld [vmem:[%s334 + $0x2278] sm:$0xff]
        %v1568 = vld [vmem:[%s334 + $0x2280] sm:$0xff]
        %v1569 = vld [vmem:[%s334 + $0x2288] sm:$0xff]
        %v1570 = vld [vmem:[%s334 + $0x2290] sm:$0xff]
        %v1571 = vld [vmem:[%s334 + $0x2298] sm:$0xff]
        %v1572 = vld [vmem:[%s334 + $0x22a0] sm:$0xff]
        %v1573 = vld [vmem:[%s334 + $0x22a8] sm:$0xff]
        %v1574 = vld [vmem:[%s334 + $0x22b0] sm:$0xff]
        %v1575 = vld [vmem:[%s334 + $0x22b8] sm:$0xff]
        %v1576 = vld [vmem:[%s334 + $0x22c0] sm:$0xff]
        %v1577 = vld [vmem:[%s334 + $0x22c8] sm:$0xff]
        %v1578 = vld [vmem:[%s334 + $0x22d0] sm:$0xff]
        %v1579 = vld [vmem:[%s334 + $0x22d8] sm:$0xff]
        %v1580 = vld [vmem:[%s334 + $0x22e0] sm:$0xff]
        %v1581 = vld [vmem:[%s334 + $0x22e8] sm:$0xff]
        %v1582 = vld [vmem:[%s334 + $0x22f0] sm:$0xff]
        %v1583 = vld [vmem:[%s334 + $0x22f8] sm:$0xff]
        %v1584 = vld [vmem:[%s334 + $0x2300] sm:$0xff]
        %v1585 = vld [vmem:[%s334 + $0x2308] sm:$0xff]
        %v1586 = vld [vmem:[%s334 + $0x2310] sm:$0xff]
        %v1587 = vld [vmem:[%s334 + $0x2318] sm:$0xff]
        %v1588 = vld [vmem:[%s334 + $0x2320] sm:$0xff]
        %v1589 = vld [vmem:[%s334 + $0x2328] sm:$0xff]
        %v1590 = vld [vmem:[%s334 + $0x2330] sm:$0xff]
        %v1591 = vld [vmem:[%s334 + $0x2338] sm:$0xff]
        %v1592 = vld [vmem:[%s334 + $0x2340] sm:$0xff]
        %v1593 = vld [vmem:[%s334 + $0x2348] sm:$0xff]
        %v1594 = vld [vmem:[%s334 + $0x2350] sm:$0xff]
        %v1595 = vld [vmem:[%s334 + $0x2358] sm:$0xff]
        %v1596 = vld [vmem:[%s334 + $0x2360] sm:$0xff]
        %v1597 = vld [vmem:[%s334 + $0x2368] sm:$0xff]
        %v1598 = vld [vmem:[%s334 + $0x2370] sm:$0xff]
        %v1599 = vld [vmem:[%s334 + $0x2378] sm:$0xff]
        %v1600 = vld [vmem:[%s334 + $0x2380] sm:$0xff]
        %v1601 = vld [vmem:[%s334 + $0x2388] sm:$0xff]
        %v1602 = vld [vmem:[%s334 + $0x2390] sm:$0xff]
        %v1603 = vld [vmem:[%s334 + $0x2398] sm:$0xff]
        %v1604 = vld [vmem:[%s334 + $0x23a0] sm:$0xff]
        %v1605 = vld [vmem:[%s334 + $0x23a8] sm:$0xff]
        %v1606 = vld [vmem:[%s334 + $0x23b0] sm:$0xff]
        %v1607 = vld [vmem:[%s334 + $0x23b8] sm:$0xff]
        %v1608 = vld [vmem:[%s334 + $0x23c0] sm:$0xff]
        %v1609 = vld [vmem:[%s334 + $0x23c8] sm:$0xff]
        %v1610 = vld [vmem:[%s334 + $0x23d0] sm:$0xff]
        %v1611 = vld [vmem:[%s334 + $0x23d8] sm:$0xff]
        %v1612 = vld [vmem:[%s334 + $0x23e0] sm:$0xff]
        %v1613 = vld [vmem:[%s334 + $0x23e8] sm:$0xff]
        %v1614 = vld [vmem:[%s334 + $0x23f0] sm:$0xff]
        %v1615 = vld [vmem:[%s334 + $0x23f8] sm:$0xff]
        %v1652 = vunpack.c.l.b16 %v428
        %v1653 = vunpack.c.h.b16 %v428
        %v1654 = vunpack.c.l.b16 %v429
        %v1655 = vunpack.c.h.b16 %v429
        %v1656 = vunpack.c.l.b16 %v430
        %v1657 = vunpack.c.h.b16 %v430
        %v1658 = vunpack.c.l.b16 %v431
        %v1659 = vunpack.c.h.b16 %v431
        %v1660 = vunpack.c.l.b16 %v432
        %v1661 = vunpack.c.h.b16 %v432
        %v1662 = vunpack.c.l.b16 %v433
        %v1663 = vunpack.c.h.b16 %v433
        %v1664 = vunpack.c.l.b16 %v434
        %v1665 = vunpack.c.h.b16 %v434
        %v1666 = vunpack.c.l.b16 %v435
        %v1667 = vunpack.c.h.b16 %v435
        %v1668 = vunpack.c.l.b16 %v436
        %v1669 = vunpack.c.h.b16 %v436
        %v1670 = vunpack.c.l.b16 %v437
        %v1671 = vunpack.c.h.b16 %v437
        %v1672 = vunpack.c.l.b16 %v438
        %v1673 = vunpack.c.h.b16 %v438
        %v1674 = vunpack.c.l.b16 %v439
        %v1675 = vunpack.c.h.b16 %v439
        %v1676 = vunpack.c.l.b16 %v440
        %v1677 = vunpack.c.h.b16 %v440
        %v1678 = vunpack.c.l.b16 %v441
        %v1679 = vunpack.c.h.b16 %v441
        %v1680 = vunpack.c.l.b16 %v442
        %v1681 = vunpack.c.h.b16 %v442
        %v1682 = vunpack.c.l.b16 %v443
        %v1683 = vunpack.c.h.b16 %v443
        %v1684 = vunpack.c.l.b16 %v444
        %v1685 = vunpack.c.h.b16 %v444
        %v1686 = vunpack.c.l.b16 %v445
        %v1687 = vunpack.c.h.b16 %v445
        %v1688 = vunpack.c.l.b16 %v446
        %v1689 = vunpack.c.h.b16 %v446
        %v1690 = vunpack.c.l.b16 %v447
        %v1691 = vunpack.c.h.b16 %v447
        %v1692 = vunpack.c.l.b16 %v448
        %v1693 = vunpack.c.h.b16 %v448
        %v1694 = vunpack.c.l.b16 %v449
        %v1695 = vunpack.c.h.b16 %v449
        %v1696 = vunpack.c.l.b16 %v450
        %v1697 = vunpack.c.h.b16 %v450
        %v1698 = vunpack.c.l.b16 %v451
        %v1699 = vunpack.c.h.b16 %v451
        %v1700 = vunpack.c.l.b16 %v452
        %v1701 = vunpack.c.h.b16 %v452
        %v1702 = vunpack.c.l.b16 %v453
        %v1703 = vunpack.c.h.b16 %v453
        %v1704 = vunpack.c.l.b16 %v454
        %v1705 = vunpack.c.h.b16 %v454
        %v1706 = vunpack.c.l.b16 %v455
        %v1707 = vunpack.c.h.b16 %v455
        %v1708 = vunpack.c.l.b16 %v456
        %v1709 = vunpack.c.h.b16 %v456
        %v1710 = vunpack.c.l.b16 %v457
        %v1711 = vunpack.c.h.b16 %v457
        %v1712 = vunpack.c.l.b16 %v458
        %v1713 = vunpack.c.h.b16 %v458
        %v1714 = vunpack.c.l.b16 %v459
        %v1715 = vunpack.c.h.b16 %v459
        %v1716 = vunpack.c.l.b16 %v460
        %v1717 = vunpack.c.h.b16 %v460
        %v1718 = vunpack.c.l.b16 %v461
        %v1719 = vunpack.c.h.b16 %v461
        %v1720 = vunpack.c.l.b16 %v462
        %v1721 = vunpack.c.h.b16 %v462
        %v1722 = vunpack.c.l.b16 %v463
        %v1723 = vunpack.c.h.b16 %v463
        %v1724 = vpack.c.b16 %v1688, %v1652
        %v1725 = vpack.c.b16 %v1689, %v1653
        %v1726 = vpack.c.b16 %v1690, %v1654
        %v1727 = vpack.c.b16 %v1691, %v1655
        %v1728 = vpack.c.b16 %v1692, %v1656
        %v1729 = vpack.c.b16 %v1693, %v1657
        %v1730 = vpack.c.b16 %v1694, %v1658
        %v1731 = vpack.c.b16 %v1695, %v1659
        %v1732 = vpack.c.b16 %v1696, %v1660
        %v1733 = vpack.c.b16 %v1697, %v1661
        %v1734 = vpack.c.b16 %v1698, %v1662
        %v1735 = vpack.c.b16 %v1699, %v1663
        %v1736 = vpack.c.b16 %v1700, %v1664
        %v1737 = vpack.c.b16 %v1701, %v1665
        %v1738 = vpack.c.b16 %v1702, %v1666
        %v1739 = vpack.c.b16 %v1703, %v1667
        %v1740 = vpack.c.b16 %v1704, %v1668
        %v1741 = vpack.c.b16 %v1705, %v1669
        %v1742 = vpack.c.b16 %v1706, %v1670
        %v1743 = vpack.c.b16 %v1707, %v1671
        %v1744 = vpack.c.b16 %v1708, %v1672
        %v1745 = vpack.c.b16 %v1709, %v1673
        %v1746 = vpack.c.b16 %v1710, %v1674
        %v1747 = vpack.c.b16 %v1711, %v1675
        %v1748 = vpack.c.b16 %v1712, %v1676
        %v1749 = vpack.c.b16 %v1713, %v1677
        %v1750 = vpack.c.b16 %v1714, %v1678
        %v1751 = vpack.c.b16 %v1715, %v1679
        %v1752 = vpack.c.b16 %v1716, %v1680
        %v1753 = vpack.c.b16 %v1717, %v1681
        %v1754 = vpack.c.b16 %v1718, %v1682
        %v1755 = vpack.c.b16 %v1719, %v1683
        %v1756 = vpack.c.b16 %v1720, %v1684
        %v1757 = vpack.c.b16 %v1721, %v1685
        %v1758 = vpack.c.b16 %v1722, %v1686
        %v1759 = vpack.c.b16 %v1723, %v1687
        %v2948 = vunpack.c.l.b16 %v464
        %v2949 = vunpack.c.h.b16 %v464
        %v2950 = vunpack.c.l.b16 %v465
        %v2951 = vunpack.c.h.b16 %v465
        %v2952 = vunpack.c.l.b16 %v466
        %v2953 = vunpack.c.h.b16 %v466
        %v2954 = vunpack.c.l.b16 %v467
        %v2955 = vunpack.c.h.b16 %v467
        %v2956 = vunpack.c.l.b16 %v468
        %v2957 = vunpack.c.h.b16 %v468
        %v2958 = vunpack.c.l.b16 %v469
        %v2959 = vunpack.c.h.b16 %v469
        %v2960 = vunpack.c.l.b16 %v470
        %v2961 = vunpack.c.h.b16 %v470
        %v2962 = vunpack.c.l.b16 %v471
        %v2963 = vunpack.c.h.b16 %v471
        %v2964 = vunpack.c.l.b16 %v472
        %v2965 = vunpack.c.h.b16 %v472
        %v2966 = vunpack.c.l.b16 %v473
        %v2967 = vunpack.c.h.b16 %v473
        %v2968 = vunpack.c.l.b16 %v474
        %v2969 = vunpack.c.h.b16 %v474
        %v2970 = vunpack.c.l.b16 %v475
        %v2971 = vunpack.c.h.b16 %v475
        %v2972 = vunpack.c.l.b16 %v476
        %v2973 = vunpack.c.h.b16 %v476
        %v2974 = vunpack.c.l.b16 %v477
        %v2975 = vunpack.c.h.b16 %v477
        %v2976 = vunpack.c.l.b16 %v478
        %v2977 = vunpack.c.h.b16 %v478
        %v2978 = vunpack.c.l.b16 %v479
        %v2979 = vunpack.c.h.b16 %v479
        %v2980 = vunpack.c.l.b16 %v480
        %v2981 = vunpack.c.h.b16 %v480
        %v2982 = vunpack.c.l.b16 %v481
        %v2983 = vunpack.c.h.b16 %v481
        %v2984 = vunpack.c.l.b16 %v482
        %v2985 = vunpack.c.h.b16 %v482
        %v2986 = vunpack.c.l.b16 %v483
        %v2987 = vunpack.c.h.b16 %v483
        %v2988 = vunpack.c.l.b16 %v484
        %v2989 = vunpack.c.h.b16 %v484
        %v2990 = vunpack.c.l.b16 %v485
        %v2991 = vunpack.c.h.b16 %v485
        %v2992 = vunpack.c.l.b16 %v486
        %v2993 = vunpack.c.h.b16 %v486
        %v2994 = vunpack.c.l.b16 %v487
        %v2995 = vunpack.c.h.b16 %v487
        %v2996 = vunpack.c.l.b16 %v488
        %v2997 = vunpack.c.h.b16 %v488
        %v2998 = vunpack.c.l.b16 %v489
        %v2999 = vunpack.c.h.b16 %v489
        %v3000 = vunpack.c.l.b16 %v490
        %v3001 = vunpack.c.h.b16 %v490
        %v3002 = vunpack.c.l.b16 %v491
        %v3003 = vunpack.c.h.b16 %v491
        %v3004 = vunpack.c.l.b16 %v492
        %v3005 = vunpack.c.h.b16 %v492
        %v3006 = vunpack.c.l.b16 %v493
        %v3007 = vunpack.c.h.b16 %v493
        %v3008 = vunpack.c.l.b16 %v494
        %v3009 = vunpack.c.h.b16 %v494
        %v3010 = vunpack.c.l.b16 %v495
        %v3011 = vunpack.c.h.b16 %v495
        %v3012 = vunpack.c.l.b16 %v496
        %v3013 = vunpack.c.h.b16 %v496
        %v3014 = vunpack.c.l.b16 %v497
        %v3015 = vunpack.c.h.b16 %v497
        %v3016 = vunpack.c.l.b16 %v498
        %v3017 = vunpack.c.h.b16 %v498
        %v3018 = vunpack.c.l.b16 %v499
        %v3019 = vunpack.c.h.b16 %v499
        %v3020 = vunpack.c.l.b16 %v500
        %v3021 = vunpack.c.h.b16 %v500
        %v3022 = vunpack.c.l.b16 %v501
        %v3023 = vunpack.c.h.b16 %v501
        %v3024 = vunpack.c.l.b16 %v502
        %v3025 = vunpack.c.h.b16 %v502
        %v3026 = vunpack.c.l.b16 %v503
        %v3027 = vunpack.c.h.b16 %v503
        %v3028 = vunpack.c.l.b16 %v504
        %v3029 = vunpack.c.h.b16 %v504
        %v3030 = vunpack.c.l.b16 %v505
        %v3031 = vunpack.c.h.b16 %v505
        %v3032 = vunpack.c.l.b16 %v506
        %v3033 = vunpack.c.h.b16 %v506
        %v3034 = vunpack.c.l.b16 %v507
        %v3035 = vunpack.c.h.b16 %v507
        %v3036 = vunpack.c.l.b16 %v508
        %v3037 = vunpack.c.h.b16 %v508
        %v3038 = vunpack.c.l.b16 %v509
        %v3039 = vunpack.c.h.b16 %v509
        %v3040 = vunpack.c.l.b16 %v510
        %v3041 = vunpack.c.h.b16 %v510
        %v3042 = vunpack.c.l.b16 %v511
        %v3043 = vunpack.c.h.b16 %v511
        %v3044 = vunpack.c.l.b16 %v512
        %v3045 = vunpack.c.h.b16 %v512
        %v3046 = vunpack.c.l.b16 %v513
        %v3047 = vunpack.c.h.b16 %v513
        %v3048 = vunpack.c.l.b16 %v514
        %v3049 = vunpack.c.h.b16 %v514
        %v3050 = vunpack.c.l.b16 %v515
        %v3051 = vunpack.c.h.b16 %v515
        %v3052 = vunpack.c.l.b16 %v516
        %v3053 = vunpack.c.h.b16 %v516
        %v3054 = vunpack.c.l.b16 %v517
        %v3055 = vunpack.c.h.b16 %v517
        %v3056 = vunpack.c.l.b16 %v518
        %v3057 = vunpack.c.h.b16 %v518
        %v3058 = vunpack.c.l.b16 %v519
        %v3059 = vunpack.c.h.b16 %v519
        %v3060 = vunpack.c.l.b16 %v520
        %v3061 = vunpack.c.h.b16 %v520
        %v3062 = vunpack.c.l.b16 %v521
        %v3063 = vunpack.c.h.b16 %v521
        %v3064 = vunpack.c.l.b16 %v522
        %v3065 = vunpack.c.h.b16 %v522
        %v3066 = vunpack.c.l.b16 %v523
        %v3067 = vunpack.c.h.b16 %v523
        %v3068 = vunpack.c.l.b16 %v524
        %v3069 = vunpack.c.h.b16 %v524
        %v3070 = vunpack.c.l.b16 %v525
        %v3071 = vunpack.c.h.b16 %v525
        %v3072 = vunpack.c.l.b16 %v526
        %v3073 = vunpack.c.h.b16 %v526
        %v3074 = vunpack.c.l.b16 %v527
        %v3075 = vunpack.c.h.b16 %v527
        %v3076 = vunpack.c.l.b16 %v528
        %v3077 = vunpack.c.h.b16 %v528
        %v3078 = vunpack.c.l.b16 %v529
        %v3079 = vunpack.c.h.b16 %v529
        %v3080 = vunpack.c.l.b16 %v530
        %v3081 = vunpack.c.h.b16 %v530
        %v3082 = vunpack.c.l.b16 %v531
        %v3083 = vunpack.c.h.b16 %v531
        %v3084 = vunpack.c.l.b16 %v532
        %v3085 = vunpack.c.h.b16 %v532
        %v3086 = vunpack.c.l.b16 %v533
        %v3087 = vunpack.c.h.b16 %v533
        %v3088 = vunpack.c.l.b16 %v534
        %v3089 = vunpack.c.h.b16 %v534
        %v3090 = vunpack.c.l.b16 %v535
        %v3091 = vunpack.c.h.b16 %v535
        %v3092 = vunpack.c.l.b16 %v536
        %v3093 = vunpack.c.h.b16 %v536
        %v3094 = vunpack.c.l.b16 %v537
        %v3095 = vunpack.c.h.b16 %v537
        %v3096 = vunpack.c.l.b16 %v538
        %v3097 = vunpack.c.h.b16 %v538
        %v3098 = vunpack.c.l.b16 %v539
        %v3099 = vunpack.c.h.b16 %v539
        %v3100 = vunpack.c.l.b16 %v540
        %v3101 = vunpack.c.h.b16 %v540
        %v3102 = vunpack.c.l.b16 %v541
        %v3103 = vunpack.c.h.b16 %v541
        %v3104 = vunpack.c.l.b16 %v542
        %v3105 = vunpack.c.h.b16 %v542
        %v3106 = vunpack.c.l.b16 %v543
        %v3107 = vunpack.c.h.b16 %v543
        %v3108 = vunpack.c.l.b16 %v544
        %v3109 = vunpack.c.h.b16 %v544
        %v3110 = vunpack.c.l.b16 %v545
        %v3111 = vunpack.c.h.b16 %v545
        %v3112 = vunpack.c.l.b16 %v546
        %v3113 = vunpack.c.h.b16 %v546
        %v3114 = vunpack.c.l.b16 %v547
        %v3115 = vunpack.c.h.b16 %v547
        %v3116 = vunpack.c.l.b16 %v548
        %v3117 = vunpack.c.h.b16 %v548
        %v3118 = vunpack.c.l.b16 %v549
        %v3119 = vunpack.c.h.b16 %v549
        %v3120 = vunpack.c.l.b16 %v550
        %v3121 = vunpack.c.h.b16 %v550
        %v3122 = vunpack.c.l.b16 %v551
        %v3123 = vunpack.c.h.b16 %v551
        %v3124 = vunpack.c.l.b16 %v552
        %v3125 = vunpack.c.h.b16 %v552
        %v3126 = vunpack.c.l.b16 %v553
        %v3127 = vunpack.c.h.b16 %v553
        %v3128 = vunpack.c.l.b16 %v554
        %v3129 = vunpack.c.h.b16 %v554
        %v3130 = vunpack.c.l.b16 %v555
        %v3131 = vunpack.c.h.b16 %v555
        %v3132 = vunpack.c.l.b16 %v556
        %v3133 = vunpack.c.h.b16 %v556
        %v3134 = vunpack.c.l.b16 %v557
        %v3135 = vunpack.c.h.b16 %v557
        %v3136 = vunpack.c.l.b16 %v558
        %v3137 = vunpack.c.h.b16 %v558
        %v3138 = vunpack.c.l.b16 %v559
        %v3139 = vunpack.c.h.b16 %v559
        %v3140 = vunpack.c.l.b16 %v560
        %v3141 = vunpack.c.h.b16 %v560
        %v3142 = vunpack.c.l.b16 %v561
        %v3143 = vunpack.c.h.b16 %v561
        %v3144 = vunpack.c.l.b16 %v562
        %v3145 = vunpack.c.h.b16 %v562
        %v3146 = vunpack.c.l.b16 %v563
        %v3147 = vunpack.c.h.b16 %v563
        %v3148 = vunpack.c.l.b16 %v564
        %v3149 = vunpack.c.h.b16 %v564
        %v3150 = vunpack.c.l.b16 %v565
        %v3151 = vunpack.c.h.b16 %v565
        %v3152 = vunpack.c.l.b16 %v566
        %v3153 = vunpack.c.h.b16 %v566
        %v3154 = vunpack.c.l.b16 %v567
        %v3155 = vunpack.c.h.b16 %v567
        %v3156 = vunpack.c.l.b16 %v568
        %v3157 = vunpack.c.h.b16 %v568
        %v3158 = vunpack.c.l.b16 %v569
        %v3159 = vunpack.c.h.b16 %v569
        %v3160 = vunpack.c.l.b16 %v570
        %v3161 = vunpack.c.h.b16 %v570
        %v3162 = vunpack.c.l.b16 %v571
        %v3163 = vunpack.c.h.b16 %v571
        %v3164 = vunpack.c.l.b16 %v572
        %v3165 = vunpack.c.h.b16 %v572
        %v3166 = vunpack.c.l.b16 %v573
        %v3167 = vunpack.c.h.b16 %v573
        %v3168 = vunpack.c.l.b16 %v574
        %v3169 = vunpack.c.h.b16 %v574
        %v3170 = vunpack.c.l.b16 %v575
        %v3171 = vunpack.c.h.b16 %v575
        %v3172 = vunpack.c.l.b16 %v576
        %v3173 = vunpack.c.h.b16 %v576
        %v3174 = vunpack.c.l.b16 %v577
        %v3175 = vunpack.c.h.b16 %v577
        %v3176 = vunpack.c.l.b16 %v578
        %v3177 = vunpack.c.h.b16 %v578
        %v3178 = vunpack.c.l.b16 %v579
        %v3179 = vunpack.c.h.b16 %v579
        %v3180 = vunpack.c.l.b16 %v580
        %v3181 = vunpack.c.h.b16 %v580
        %v3182 = vunpack.c.l.b16 %v581
        %v3183 = vunpack.c.h.b16 %v581
        %v3184 = vunpack.c.l.b16 %v582
        %v3185 = vunpack.c.h.b16 %v582
        %v3186 = vunpack.c.l.b16 %v583
        %v3187 = vunpack.c.h.b16 %v583
        %v3188 = vunpack.c.l.b16 %v584
        %v3189 = vunpack.c.h.b16 %v584
        %v3190 = vunpack.c.l.b16 %v585
        %v3191 = vunpack.c.h.b16 %v585
        %v3192 = vunpack.c.l.b16 %v586
        %v3193 = vunpack.c.h.b16 %v586
        %v3194 = vunpack.c.l.b16 %v587
        %v3195 = vunpack.c.h.b16 %v587
        %v3196 = vunpack.c.l.b16 %v588
        %v3197 = vunpack.c.h.b16 %v588
        %v3198 = vunpack.c.l.b16 %v589
        %v3199 = vunpack.c.h.b16 %v589
        %v3200 = vunpack.c.l.b16 %v590
        %v3201 = vunpack.c.h.b16 %v590
        %v3202 = vunpack.c.l.b16 %v591
        %v3203 = vunpack.c.h.b16 %v591
        %v3204 = vunpack.c.l.b16 %v592
        %v3205 = vunpack.c.h.b16 %v592
        %v3206 = vunpack.c.l.b16 %v593
        %v3207 = vunpack.c.h.b16 %v593
        %v3208 = vunpack.c.l.b16 %v594
        %v3209 = vunpack.c.h.b16 %v594
        %v3210 = vunpack.c.l.b16 %v595
        %v3211 = vunpack.c.h.b16 %v595
        %v3212 = vunpack.c.l.b16 %v596
        %v3213 = vunpack.c.h.b16 %v596
        %v3214 = vunpack.c.l.b16 %v597
        %v3215 = vunpack.c.h.b16 %v597
        %v3216 = vunpack.c.l.b16 %v598
        %v3217 = vunpack.c.h.b16 %v598
        %v3218 = vunpack.c.l.b16 %v599
        %v3219 = vunpack.c.h.b16 %v599
        %v3220 = vunpack.c.l.b16 %v600
        %v3221 = vunpack.c.h.b16 %v600
        %v3222 = vunpack.c.l.b16 %v601
        %v3223 = vunpack.c.h.b16 %v601
        %v3224 = vunpack.c.l.b16 %v602
        %v3225 = vunpack.c.h.b16 %v602
        %v3226 = vunpack.c.l.b16 %v603
        %v3227 = vunpack.c.h.b16 %v603
        %v3228 = vunpack.c.l.b16 %v604
        %v3229 = vunpack.c.h.b16 %v604
        %v3230 = vunpack.c.l.b16 %v605
        %v3231 = vunpack.c.h.b16 %v605
        %v3232 = vunpack.c.l.b16 %v606
        %v3233 = vunpack.c.h.b16 %v606
        %v3234 = vunpack.c.l.b16 %v607
        %v3235 = vunpack.c.h.b16 %v607
        %v3236 = vunpack.c.l.b16 %v608
        %v3237 = vunpack.c.h.b16 %v608
        %v3238 = vunpack.c.l.b16 %v609
        %v3239 = vunpack.c.h.b16 %v609
        %v3240 = vunpack.c.l.b16 %v610
        %v3241 = vunpack.c.h.b16 %v610
        %v3242 = vunpack.c.l.b16 %v611
        %v3243 = vunpack.c.h.b16 %v611
        %v3244 = vunpack.c.l.b16 %v612
        %v3245 = vunpack.c.h.b16 %v612
        %v3246 = vunpack.c.l.b16 %v613
        %v3247 = vunpack.c.h.b16 %v613
        %v3248 = vunpack.c.l.b16 %v614
        %v3249 = vunpack.c.h.b16 %v614
        %v3250 = vunpack.c.l.b16 %v615
        %v3251 = vunpack.c.h.b16 %v615
        %v3252 = vunpack.c.l.b16 %v616
        %v3253 = vunpack.c.h.b16 %v616
        %v3254 = vunpack.c.l.b16 %v617
        %v3255 = vunpack.c.h.b16 %v617
        %v3256 = vunpack.c.l.b16 %v618
        %v3257 = vunpack.c.h.b16 %v618
        %v3258 = vunpack.c.l.b16 %v619
        %v3259 = vunpack.c.h.b16 %v619
        %v3260 = vunpack.c.l.b16 %v620
        %v3261 = vunpack.c.h.b16 %v620
        %v3262 = vunpack.c.l.b16 %v621
        %v3263 = vunpack.c.h.b16 %v621
        %v3264 = vunpack.c.l.b16 %v622
        %v3265 = vunpack.c.h.b16 %v622
        %v3266 = vunpack.c.l.b16 %v623
        %v3267 = vunpack.c.h.b16 %v623
        %v3268 = vunpack.c.l.b16 %v624
        %v3269 = vunpack.c.h.b16 %v624
        %v3270 = vunpack.c.l.b16 %v625
        %v3271 = vunpack.c.h.b16 %v625
        %v3272 = vunpack.c.l.b16 %v626
        %v3273 = vunpack.c.h.b16 %v626
        %v3274 = vunpack.c.l.b16 %v627
        %v3275 = vunpack.c.h.b16 %v627
        %v3276 = vunpack.c.l.b16 %v628
        %v3277 = vunpack.c.h.b16 %v628
        %v3278 = vunpack.c.l.b16 %v629
        %v3279 = vunpack.c.h.b16 %v629
        %v3280 = vunpack.c.l.b16 %v630
        %v3281 = vunpack.c.h.b16 %v630
        %v3282 = vunpack.c.l.b16 %v631
        %v3283 = vunpack.c.h.b16 %v631
        %v3284 = vunpack.c.l.b16 %v632
        %v3285 = vunpack.c.h.b16 %v632
        %v3286 = vunpack.c.l.b16 %v633
        %v3287 = vunpack.c.h.b16 %v633
        %v3288 = vunpack.c.l.b16 %v634
        %v3289 = vunpack.c.h.b16 %v634
        %v3290 = vunpack.c.l.b16 %v635
        %v3291 = vunpack.c.h.b16 %v635
        %v3292 = vunpack.c.l.b16 %v636
        %v3293 = vunpack.c.h.b16 %v636
        %v3294 = vunpack.c.l.b16 %v637
        %v3295 = vunpack.c.h.b16 %v637
        %v3296 = vunpack.c.l.b16 %v638
        %v3297 = vunpack.c.h.b16 %v638
        %v3298 = vunpack.c.l.b16 %v639
        %v3299 = vunpack.c.h.b16 %v639
        %v3300 = vunpack.c.l.b16 %v640
        %v3301 = vunpack.c.h.b16 %v640
        %v3302 = vunpack.c.l.b16 %v641
        %v3303 = vunpack.c.h.b16 %v641
        %v3304 = vunpack.c.l.b16 %v642
        %v3305 = vunpack.c.h.b16 %v642
        %v3306 = vunpack.c.l.b16 %v643
        %v3307 = vunpack.c.h.b16 %v643
        %v3308 = vunpack.c.l.b16 %v644
        %v3309 = vunpack.c.h.b16 %v644
        %v3310 = vunpack.c.l.b16 %v645
        %v3311 = vunpack.c.h.b16 %v645
        %v3312 = vunpack.c.l.b16 %v646
        %v3313 = vunpack.c.h.b16 %v646
        %v3314 = vunpack.c.l.b16 %v647
        %v3315 = vunpack.c.h.b16 %v647
        %v3316 = vunpack.c.l.b16 %v648
        %v3317 = vunpack.c.h.b16 %v648
        %v3318 = vunpack.c.l.b16 %v649
        %v3319 = vunpack.c.h.b16 %v649
        %v3320 = vunpack.c.l.b16 %v650
        %v3321 = vunpack.c.h.b16 %v650
        %v3322 = vunpack.c.l.b16 %v651
        %v3323 = vunpack.c.h.b16 %v651
        %v3324 = vunpack.c.l.b16 %v652
        %v3325 = vunpack.c.h.b16 %v652
        %v3326 = vunpack.c.l.b16 %v653
        %v3327 = vunpack.c.h.b16 %v653
        %v3328 = vunpack.c.l.b16 %v654
        %v3329 = vunpack.c.h.b16 %v654
        %v3330 = vunpack.c.l.b16 %v655
        %v3331 = vunpack.c.h.b16 %v655
        %v3332 = vunpack.c.l.b16 %v656
        %v3333 = vunpack.c.h.b16 %v656
        %v3334 = vunpack.c.l.b16 %v657
        %v3335 = vunpack.c.h.b16 %v657
        %v3336 = vunpack.c.l.b16 %v658
        %v3337 = vunpack.c.h.b16 %v658
        %v3338 = vunpack.c.l.b16 %v659
        %v3339 = vunpack.c.h.b16 %v659
        %v3340 = vunpack.c.l.b16 %v660
        %v3341 = vunpack.c.h.b16 %v660
        %v3342 = vunpack.c.l.b16 %v661
        %v3343 = vunpack.c.h.b16 %v661
        %v3344 = vunpack.c.l.b16 %v662
        %v3345 = vunpack.c.h.b16 %v662
        %v3346 = vunpack.c.l.b16 %v663
        %v3347 = vunpack.c.h.b16 %v663
        %v3348 = vunpack.c.l.b16 %v664
        %v3349 = vunpack.c.h.b16 %v664
        %v3350 = vunpack.c.l.b16 %v665
        %v3351 = vunpack.c.h.b16 %v665
        %v3352 = vunpack.c.l.b16 %v666
        %v3353 = vunpack.c.h.b16 %v666
        %v3354 = vunpack.c.l.b16 %v667
        %v3355 = vunpack.c.h.b16 %v667
        %v3356 = vunpack.c.l.b16 %v668
        %v3357 = vunpack.c.h.b16 %v668
        %v3358 = vunpack.c.l.b16 %v669
        %v3359 = vunpack.c.h.b16 %v669
        %v3360 = vunpack.c.l.b16 %v670
        %v3361 = vunpack.c.h.b16 %v670
        %v3362 = vunpack.c.l.b16 %v671
        %v3363 = vunpack.c.h.b16 %v671
        %v3364 = vunpack.c.l.b16 %v672
        %v3365 = vunpack.c.h.b16 %v672
        %v3366 = vunpack.c.l.b16 %v673
        %v3367 = vunpack.c.h.b16 %v673
        %v3368 = vunpack.c.l.b16 %v674
        %v3369 = vunpack.c.h.b16 %v674
        %v3370 = vunpack.c.l.b16 %v675
        %v3371 = vunpack.c.h.b16 %v675
        %v3372 = vunpack.c.l.b16 %v676
        %v3373 = vunpack.c.h.b16 %v676
        %v3374 = vunpack.c.l.b16 %v677
        %v3375 = vunpack.c.h.b16 %v677
        %v3376 = vunpack.c.l.b16 %v678
        %v3377 = vunpack.c.h.b16 %v678
        %v3378 = vunpack.c.l.b16 %v679
        %v3379 = vunpack.c.h.b16 %v679
        %v3380 = vunpack.c.l.b16 %v680
        %v3381 = vunpack.c.h.b16 %v680
        %v3382 = vunpack.c.l.b16 %v681
        %v3383 = vunpack.c.h.b16 %v681
        %v3384 = vunpack.c.l.b16 %v682
        %v3385 = vunpack.c.h.b16 %v682
        %v3386 = vunpack.c.l.b16 %v683
        %v3387 = vunpack.c.h.b16 %v683
        %v3388 = vunpack.c.l.b16 %v684
        %v3389 = vunpack.c.h.b16 %v684
        %v3390 = vunpack.c.l.b16 %v685
        %v3391 = vunpack.c.h.b16 %v685
        %v3392 = vunpack.c.l.b16 %v686
        %v3393 = vunpack.c.h.b16 %v686
        %v3394 = vunpack.c.l.b16 %v687
        %v3395 = vunpack.c.h.b16 %v687
        %v3396 = vunpack.c.l.b16 %v688
        %v3397 = vunpack.c.h.b16 %v688
        %v3398 = vunpack.c.l.b16 %v689
        %v3399 = vunpack.c.h.b16 %v689
        %v3400 = vunpack.c.l.b16 %v690
        %v3401 = vunpack.c.h.b16 %v690
        %v3402 = vunpack.c.l.b16 %v691
        %v3403 = vunpack.c.h.b16 %v691
        %v3404 = vunpack.c.l.b16 %v692
        %v3405 = vunpack.c.h.b16 %v692
        %v3406 = vunpack.c.l.b16 %v693
        %v3407 = vunpack.c.h.b16 %v693
        %v3408 = vunpack.c.l.b16 %v694
        %v3409 = vunpack.c.h.b16 %v694
        %v3410 = vunpack.c.l.b16 %v695
        %v3411 = vunpack.c.h.b16 %v695
        %v3412 = vunpack.c.l.b16 %v696
        %v3413 = vunpack.c.h.b16 %v696
        %v3414 = vunpack.c.l.b16 %v697
        %v3415 = vunpack.c.h.b16 %v697
        %v3416 = vunpack.c.l.b16 %v698
        %v3417 = vunpack.c.h.b16 %v698
        %v3418 = vunpack.c.l.b16 %v699
        %v3419 = vunpack.c.h.b16 %v699
        %v3420 = vunpack.c.l.b16 %v700
        %v3421 = vunpack.c.h.b16 %v700
        %v3422 = vunpack.c.l.b16 %v701
        %v3423 = vunpack.c.h.b16 %v701
        %v3424 = vunpack.c.l.b16 %v702
        %v3425 = vunpack.c.h.b16 %v702
        %v3426 = vunpack.c.l.b16 %v703
        %v3427 = vunpack.c.h.b16 %v703
        %v3428 = vunpack.c.l.b16 %v704
        %v3429 = vunpack.c.h.b16 %v704
        %v3430 = vunpack.c.l.b16 %v705
        %v3431 = vunpack.c.h.b16 %v705
        %v3432 = vunpack.c.l.b16 %v706
        %v3433 = vunpack.c.h.b16 %v706
        %v3434 = vunpack.c.l.b16 %v707
        %v3435 = vunpack.c.h.b16 %v707
        %v3436 = vunpack.c.l.b16 %v708
        %v3437 = vunpack.c.h.b16 %v708
        %v3438 = vunpack.c.l.b16 %v709
        %v3439 = vunpack.c.h.b16 %v709
        %v3440 = vunpack.c.l.b16 %v710
        %v3441 = vunpack.c.h.b16 %v710
        %v3442 = vunpack.c.l.b16 %v711
        %v3443 = vunpack.c.h.b16 %v711
        %v3444 = vunpack.c.l.b16 %v712
        %v3445 = vunpack.c.h.b16 %v712
        %v3446 = vunpack.c.l.b16 %v713
        %v3447 = vunpack.c.h.b16 %v713
        %v3448 = vunpack.c.l.b16 %v714
        %v3449 = vunpack.c.h.b16 %v714
        %v3450 = vunpack.c.l.b16 %v715
        %v3451 = vunpack.c.h.b16 %v715
        %v3452 = vunpack.c.l.b16 %v716
        %v3453 = vunpack.c.h.b16 %v716
        %v3454 = vunpack.c.l.b16 %v717
        %v3455 = vunpack.c.h.b16 %v717
        %v3456 = vunpack.c.l.b16 %v718
        %v3457 = vunpack.c.h.b16 %v718
        %v3458 = vunpack.c.l.b16 %v719
        %v3459 = vunpack.c.h.b16 %v719
        %v3460 = vunpack.c.l.b16 %v720
        %v3461 = vunpack.c.h.b16 %v720
        %v3462 = vunpack.c.l.b16 %v721
        %v3463 = vunpack.c.h.b16 %v721
        %v3464 = vunpack.c.l.b16 %v722
        %v3465 = vunpack.c.h.b16 %v722
        %v3466 = vunpack.c.l.b16 %v723
        %v3467 = vunpack.c.h.b16 %v723
        %v3468 = vunpack.c.l.b16 %v724
        %v3469 = vunpack.c.h.b16 %v724
        %v3470 = vunpack.c.l.b16 %v725
        %v3471 = vunpack.c.h.b16 %v725
        %v3472 = vunpack.c.l.b16 %v726
        %v3473 = vunpack.c.h.b16 %v726
        %v3474 = vunpack.c.l.b16 %v727
        %v3475 = vunpack.c.h.b16 %v727
        %v3476 = vunpack.c.l.b16 %v728
        %v3477 = vunpack.c.h.b16 %v728
        %v3478 = vunpack.c.l.b16 %v729
        %v3479 = vunpack.c.h.b16 %v729
        %v3480 = vunpack.c.l.b16 %v730
        %v3481 = vunpack.c.h.b16 %v730
        %v3482 = vunpack.c.l.b16 %v731
        %v3483 = vunpack.c.h.b16 %v731
        %v3484 = vunpack.c.l.b16 %v732
        %v3485 = vunpack.c.h.b16 %v732
        %v3486 = vunpack.c.l.b16 %v733
        %v3487 = vunpack.c.h.b16 %v733
        %v3488 = vunpack.c.l.b16 %v734
        %v3489 = vunpack.c.h.b16 %v734
        %v3490 = vunpack.c.l.b16 %v735
        %v3491 = vunpack.c.h.b16 %v735
        %v3492 = vunpack.c.l.b16 %v736
        %v3493 = vunpack.c.h.b16 %v736
        %v3494 = vunpack.c.l.b16 %v737
        %v3495 = vunpack.c.h.b16 %v737
        %v3496 = vunpack.c.l.b16 %v738
        %v3497 = vunpack.c.h.b16 %v738
        %v3498 = vunpack.c.l.b16 %v739
        %v3499 = vunpack.c.h.b16 %v739
        %v3500 = vunpack.c.l.b16 %v740
        %v3501 = vunpack.c.h.b16 %v740
        %v3502 = vunpack.c.l.b16 %v741
        %v3503 = vunpack.c.h.b16 %v741
        %v3504 = vunpack.c.l.b16 %v742
        %v3505 = vunpack.c.h.b16 %v742
        %v3506 = vunpack.c.l.b16 %v743
        %v3507 = vunpack.c.h.b16 %v743
        %v3508 = vunpack.c.l.b16 %v744
        %v3509 = vunpack.c.h.b16 %v744
        %v3510 = vunpack.c.l.b16 %v745
        %v3511 = vunpack.c.h.b16 %v745
        %v3512 = vunpack.c.l.b16 %v746
        %v3513 = vunpack.c.h.b16 %v746
        %v3514 = vunpack.c.l.b16 %v747
        %v3515 = vunpack.c.h.b16 %v747
        %v3516 = vunpack.c.l.b16 %v748
        %v3517 = vunpack.c.h.b16 %v748
        %v3518 = vunpack.c.l.b16 %v749
        %v3519 = vunpack.c.h.b16 %v749
        %v3520 = vunpack.c.l.b16 %v750
        %v3521 = vunpack.c.h.b16 %v750
        %v3522 = vunpack.c.l.b16 %v751
        %v3523 = vunpack.c.h.b16 %v751
        %v3524 = vunpack.c.l.b16 %v752
        %v3525 = vunpack.c.h.b16 %v752
        %v3526 = vunpack.c.l.b16 %v753
        %v3527 = vunpack.c.h.b16 %v753
        %v3528 = vunpack.c.l.b16 %v754
        %v3529 = vunpack.c.h.b16 %v754
        %v3530 = vunpack.c.l.b16 %v755
        %v3531 = vunpack.c.h.b16 %v755
        %v3532 = vunpack.c.l.b16 %v756
        %v3533 = vunpack.c.h.b16 %v756
        %v3534 = vunpack.c.l.b16 %v757
        %v3535 = vunpack.c.h.b16 %v757
        %v3536 = vunpack.c.l.b16 %v758
        %v3537 = vunpack.c.h.b16 %v758
        %v3538 = vunpack.c.l.b16 %v759
        %v3539 = vunpack.c.h.b16 %v759
        %v3540 = vunpack.c.l.b16 %v760
        %v3541 = vunpack.c.h.b16 %v760
        %v3542 = vunpack.c.l.b16 %v761
        %v3543 = vunpack.c.h.b16 %v761
        %v3544 = vunpack.c.l.b16 %v762
        %v3545 = vunpack.c.h.b16 %v762
        %v3546 = vunpack.c.l.b16 %v763
        %v3547 = vunpack.c.h.b16 %v763
        %v3548 = vunpack.c.l.b16 %v764
        %v3549 = vunpack.c.h.b16 %v764
        %v3550 = vunpack.c.l.b16 %v765
        %v3551 = vunpack.c.h.b16 %v765
        %v3552 = vunpack.c.l.b16 %v766
        %v3553 = vunpack.c.h.b16 %v766
        %v3554 = vunpack.c.l.b16 %v767
        %v3555 = vunpack.c.h.b16 %v767
        %v3556 = vunpack.c.l.b16 %v768
        %v3557 = vunpack.c.h.b16 %v768
        %v3558 = vunpack.c.l.b16 %v769
        %v3559 = vunpack.c.h.b16 %v769
        %v3560 = vunpack.c.l.b16 %v770
        %v3561 = vunpack.c.h.b16 %v770
        %v3562 = vunpack.c.l.b16 %v771
        %v3563 = vunpack.c.h.b16 %v771
        %v3564 = vunpack.c.l.b16 %v772
        %v3565 = vunpack.c.h.b16 %v772
        %v3566 = vunpack.c.l.b16 %v773
        %v3567 = vunpack.c.h.b16 %v773
        %v3568 = vunpack.c.l.b16 %v774
        %v3569 = vunpack.c.h.b16 %v774
        %v3570 = vunpack.c.l.b16 %v775
        %v3571 = vunpack.c.h.b16 %v775
        %v3572 = vunpack.c.l.b16 %v776
        %v3573 = vunpack.c.h.b16 %v776
        %v3574 = vunpack.c.l.b16 %v777
        %v3575 = vunpack.c.h.b16 %v777
        %v3576 = vunpack.c.l.b16 %v778
        %v3577 = vunpack.c.h.b16 %v778
        %v3578 = vunpack.c.l.b16 %v779
        %v3579 = vunpack.c.h.b16 %v779
        %v3580 = vunpack.c.l.b16 %v780
        %v3581 = vunpack.c.h.b16 %v780
        %v3582 = vunpack.c.l.b16 %v781
        %v3583 = vunpack.c.h.b16 %v781
        %v3584 = vunpack.c.l.b16 %v782
        %v3585 = vunpack.c.h.b16 %v782
        %v3586 = vunpack.c.l.b16 %v783
        %v3587 = vunpack.c.h.b16 %v783
        %v3588 = vunpack.c.l.b16 %v784
        %v3589 = vunpack.c.h.b16 %v784
        %v3590 = vunpack.c.l.b16 %v785
        %v3591 = vunpack.c.h.b16 %v785
        %v3592 = vunpack.c.l.b16 %v786
        %v3593 = vunpack.c.h.b16 %v786
        %v3594 = vunpack.c.l.b16 %v787
        %v3595 = vunpack.c.h.b16 %v787
        %v3596 = vunpack.c.l.b16 %v788
        %v3597 = vunpack.c.h.b16 %v788
        %v3598 = vunpack.c.l.b16 %v789
        %v3599 = vunpack.c.h.b16 %v789
        %v3600 = vunpack.c.l.b16 %v790
        %v3601 = vunpack.c.h.b16 %v790
        %v3602 = vunpack.c.l.b16 %v791
        %v3603 = vunpack.c.h.b16 %v791
        %v3604 = vunpack.c.l.b16 %v792
        %v3605 = vunpack.c.h.b16 %v792
        %v3606 = vunpack.c.l.b16 %v793
        %v3607 = vunpack.c.h.b16 %v793
        %v3608 = vunpack.c.l.b16 %v794
        %v3609 = vunpack.c.h.b16 %v794
        %v3610 = vunpack.c.l.b16 %v795
        %v3611 = vunpack.c.h.b16 %v795
        %v3612 = vunpack.c.l.b16 %v796
        %v3613 = vunpack.c.h.b16 %v796
        %v3614 = vunpack.c.l.b16 %v797
        %v3615 = vunpack.c.h.b16 %v797
        %v3616 = vunpack.c.l.b16 %v798
        %v3617 = vunpack.c.h.b16 %v798
        %v3618 = vunpack.c.l.b16 %v799
        %v3619 = vunpack.c.h.b16 %v799
        %v3620 = vunpack.c.l.b16 %v800
        %v3621 = vunpack.c.h.b16 %v800
        %v3622 = vunpack.c.l.b16 %v801
        %v3623 = vunpack.c.h.b16 %v801
        %v3624 = vunpack.c.l.b16 %v802
        %v3625 = vunpack.c.h.b16 %v802
        %v3626 = vunpack.c.l.b16 %v803
        %v3627 = vunpack.c.h.b16 %v803
        %v3628 = vunpack.c.l.b16 %v804
        %v3629 = vunpack.c.h.b16 %v804
        %v3630 = vunpack.c.l.b16 %v805
        %v3631 = vunpack.c.h.b16 %v805
        %v3632 = vunpack.c.l.b16 %v806
        %v3633 = vunpack.c.h.b16 %v806
        %v3634 = vunpack.c.l.b16 %v807
        %v3635 = vunpack.c.h.b16 %v807
        %v3636 = vunpack.c.l.b16 %v808
        %v3637 = vunpack.c.h.b16 %v808
        %v3638 = vunpack.c.l.b16 %v809
        %v3639 = vunpack.c.h.b16 %v809
        %v3640 = vunpack.c.l.b16 %v810
        %v3641 = vunpack.c.h.b16 %v810
        %v3642 = vunpack.c.l.b16 %v811
        %v3643 = vunpack.c.h.b16 %v811
        %v3644 = vunpack.c.l.b16 %v812
        %v3645 = vunpack.c.h.b16 %v812
        %v3646 = vunpack.c.l.b16 %v813
        %v3647 = vunpack.c.h.b16 %v813
        %v3648 = vunpack.c.l.b16 %v814
        %v3649 = vunpack.c.h.b16 %v814
        %v3650 = vunpack.c.l.b16 %v815
        %v3651 = vunpack.c.h.b16 %v815
        %v3652 = vunpack.c.l.b16 %v816
        %v3653 = vunpack.c.h.b16 %v816
        %v3654 = vunpack.c.l.b16 %v817
        %v3655 = vunpack.c.h.b16 %v817
        %v3656 = vunpack.c.l.b16 %v818
        %v3657 = vunpack.c.h.b16 %v818
        %v3658 = vunpack.c.l.b16 %v819
        %v3659 = vunpack.c.h.b16 %v819
        %v3660 = vunpack.c.l.b16 %v820
        %v3661 = vunpack.c.h.b16 %v820
        %v3662 = vunpack.c.l.b16 %v821
        %v3663 = vunpack.c.h.b16 %v821
        %v3664 = vunpack.c.l.b16 %v822
        %v3665 = vunpack.c.h.b16 %v822
        %v3666 = vunpack.c.l.b16 %v823
        %v3667 = vunpack.c.h.b16 %v823
        %v3668 = vunpack.c.l.b16 %v824
        %v3669 = vunpack.c.h.b16 %v824
        %v3670 = vunpack.c.l.b16 %v825
        %v3671 = vunpack.c.h.b16 %v825
        %v3672 = vunpack.c.l.b16 %v826
        %v3673 = vunpack.c.h.b16 %v826
        %v3674 = vunpack.c.l.b16 %v827
        %v3675 = vunpack.c.h.b16 %v827
        %v3676 = vunpack.c.l.b16 %v828
        %v3677 = vunpack.c.h.b16 %v828
        %v3678 = vunpack.c.l.b16 %v829
        %v3679 = vunpack.c.h.b16 %v829
        %v3680 = vunpack.c.l.b16 %v830
        %v3681 = vunpack.c.h.b16 %v830
        %v3682 = vunpack.c.l.b16 %v831
        %v3683 = vunpack.c.h.b16 %v831
        %v3684 = vunpack.c.l.b16 %v832
        %v3685 = vunpack.c.h.b16 %v832
        %v3686 = vunpack.c.l.b16 %v833
        %v3687 = vunpack.c.h.b16 %v833
        %v3688 = vunpack.c.l.b16 %v834
        %v3689 = vunpack.c.h.b16 %v834
        %v3690 = vunpack.c.l.b16 %v835
        %v3691 = vunpack.c.h.b16 %v835
        %v3692 = vunpack.c.l.b16 %v836
        %v3693 = vunpack.c.h.b16 %v836
        %v3694 = vunpack.c.l.b16 %v837
        %v3695 = vunpack.c.h.b16 %v837
        %v3696 = vunpack.c.l.b16 %v838
        %v3697 = vunpack.c.h.b16 %v838
        %v3698 = vunpack.c.l.b16 %v839
        %v3699 = vunpack.c.h.b16 %v839
        %v3700 = vunpack.c.l.b16 %v840
        %v3701 = vunpack.c.h.b16 %v840
        %v3702 = vunpack.c.l.b16 %v841
        %v3703 = vunpack.c.h.b16 %v841
        %v3704 = vunpack.c.l.b16 %v842
        %v3705 = vunpack.c.h.b16 %v842
        %v3706 = vunpack.c.l.b16 %v843
        %v3707 = vunpack.c.h.b16 %v843
        %v3708 = vunpack.c.l.b16 %v844
        %v3709 = vunpack.c.h.b16 %v844
        %v3710 = vunpack.c.l.b16 %v845
        %v3711 = vunpack.c.h.b16 %v845
        %v3712 = vunpack.c.l.b16 %v846
        %v3713 = vunpack.c.h.b16 %v846
        %v3714 = vunpack.c.l.b16 %v847
        %v3715 = vunpack.c.h.b16 %v847
        %v3716 = vunpack.c.l.b16 %v848
        %v3717 = vunpack.c.h.b16 %v848
        %v3718 = vunpack.c.l.b16 %v849
        %v3719 = vunpack.c.h.b16 %v849
        %v3720 = vunpack.c.l.b16 %v850
        %v3721 = vunpack.c.h.b16 %v850
        %v3722 = vunpack.c.l.b16 %v851
        %v3723 = vunpack.c.h.b16 %v851
        %v3724 = vunpack.c.l.b16 %v852
        %v3725 = vunpack.c.h.b16 %v852
        %v3726 = vunpack.c.l.b16 %v853
        %v3727 = vunpack.c.h.b16 %v853
        %v3728 = vunpack.c.l.b16 %v854
        %v3729 = vunpack.c.h.b16 %v854
        %v3730 = vunpack.c.l.b16 %v855
        %v3731 = vunpack.c.h.b16 %v855
        %v3732 = vunpack.c.l.b16 %v856
        %v3733 = vunpack.c.h.b16 %v856
        %v3734 = vunpack.c.l.b16 %v857
        %v3735 = vunpack.c.h.b16 %v857
        %v3736 = vunpack.c.l.b16 %v858
        %v3737 = vunpack.c.h.b16 %v858
        %v3738 = vunpack.c.l.b16 %v859
        %v3739 = vunpack.c.h.b16 %v859
        %v3740 = vunpack.c.l.b16 %v860
        %v3741 = vunpack.c.h.b16 %v860
        %v3742 = vunpack.c.l.b16 %v861
        %v3743 = vunpack.c.h.b16 %v861
        %v3744 = vunpack.c.l.b16 %v862
        %v3745 = vunpack.c.h.b16 %v862
        %v3746 = vunpack.c.l.b16 %v863
        %v3747 = vunpack.c.h.b16 %v863
        %v3748 = vunpack.c.l.b16 %v864
        %v3749 = vunpack.c.h.b16 %v864
        %v3750 = vunpack.c.l.b16 %v865
        %v3751 = vunpack.c.h.b16 %v865
        %v3752 = vunpack.c.l.b16 %v866
        %v3753 = vunpack.c.h.b16 %v866
        %v3754 = vunpack.c.l.b16 %v867
        %v3755 = vunpack.c.h.b16 %v867
        %v3756 = vunpack.c.l.b16 %v868
        %v3757 = vunpack.c.h.b16 %v868
        %v3758 = vunpack.c.l.b16 %v869
        %v3759 = vunpack.c.h.b16 %v869
        %v3760 = vunpack.c.l.b16 %v870
        %v3761 = vunpack.c.h.b16 %v870
        %v3762 = vunpack.c.l.b16 %v871
        %v3763 = vunpack.c.h.b16 %v871
        %v3764 = vunpack.c.l.b16 %v872
        %v3765 = vunpack.c.h.b16 %v872
        %v3766 = vunpack.c.l.b16 %v873
        %v3767 = vunpack.c.h.b16 %v873
        %v3768 = vunpack.c.l.b16 %v874
        %v3769 = vunpack.c.h.b16 %v874
        %v3770 = vunpack.c.l.b16 %v875
        %v3771 = vunpack.c.h.b16 %v875
        %v3772 = vunpack.c.l.b16 %v876
        %v3773 = vunpack.c.h.b16 %v876
        %v3774 = vunpack.c.l.b16 %v877
        %v3775 = vunpack.c.h.b16 %v877
        %v3776 = vunpack.c.l.b16 %v878
        %v3777 = vunpack.c.h.b16 %v878
        %v3778 = vunpack.c.l.b16 %v879
        %v3779 = vunpack.c.h.b16 %v879
        %v3780 = vunpack.c.l.b16 %v880
        %v3781 = vunpack.c.h.b16 %v880
        %v3782 = vunpack.c.l.b16 %v881
        %v3783 = vunpack.c.h.b16 %v881
        %v3784 = vunpack.c.l.b16 %v882
        %v3785 = vunpack.c.h.b16 %v882
        %v3786 = vunpack.c.l.b16 %v883
        %v3787 = vunpack.c.h.b16 %v883
        %v3788 = vunpack.c.l.b16 %v884
        %v3789 = vunpack.c.h.b16 %v884
        %v3790 = vunpack.c.l.b16 %v885
        %v3791 = vunpack.c.h.b16 %v885
        %v3792 = vunpack.c.l.b16 %v886
        %v3793 = vunpack.c.h.b16 %v886
        %v3794 = vunpack.c.l.b16 %v887
        %v3795 = vunpack.c.h.b16 %v887
        %v3796 = vunpack.c.l.b16 %v888
        %v3797 = vunpack.c.h.b16 %v888
        %v3798 = vunpack.c.l.b16 %v889
        %v3799 = vunpack.c.h.b16 %v889
        %v3800 = vunpack.c.l.b16 %v890
        %v3801 = vunpack.c.h.b16 %v890
        %v3802 = vunpack.c.l.b16 %v891
        %v3803 = vunpack.c.h.b16 %v891
        %v3804 = vunpack.c.l.b16 %v892
        %v3805 = vunpack.c.h.b16 %v892
        %v3806 = vunpack.c.l.b16 %v893
        %v3807 = vunpack.c.h.b16 %v893
        %v3808 = vunpack.c.l.b16 %v894
        %v3809 = vunpack.c.h.b16 %v894
        %v3810 = vunpack.c.l.b16 %v895
        %v3811 = vunpack.c.h.b16 %v895
        %v3812 = vunpack.c.l.b16 %v896
        %v3813 = vunpack.c.h.b16 %v896
        %v3814 = vunpack.c.l.b16 %v897
        %v3815 = vunpack.c.h.b16 %v897
        %v3816 = vunpack.c.l.b16 %v898
        %v3817 = vunpack.c.h.b16 %v898
        %v3818 = vunpack.c.l.b16 %v899
        %v3819 = vunpack.c.h.b16 %v899
        %v3820 = vunpack.c.l.b16 %v900
        %v3821 = vunpack.c.h.b16 %v900
        %v3822 = vunpack.c.l.b16 %v901
        %v3823 = vunpack.c.h.b16 %v901
        %v3824 = vunpack.c.l.b16 %v902
        %v3825 = vunpack.c.h.b16 %v902
        %v3826 = vunpack.c.l.b16 %v903
        %v3827 = vunpack.c.h.b16 %v903
        %v3828 = vunpack.c.l.b16 %v904
        %v3829 = vunpack.c.h.b16 %v904
        %v3830 = vunpack.c.l.b16 %v905
        %v3831 = vunpack.c.h.b16 %v905
        %v3832 = vunpack.c.l.b16 %v906
        %v3833 = vunpack.c.h.b16 %v906
        %v3834 = vunpack.c.l.b16 %v907
        %v3835 = vunpack.c.h.b16 %v907
        %v3836 = vunpack.c.l.b16 %v908
        %v3837 = vunpack.c.h.b16 %v908
        %v3838 = vunpack.c.l.b16 %v909
        %v3839 = vunpack.c.h.b16 %v909
        %v3840 = vunpack.c.l.b16 %v910
        %v3841 = vunpack.c.h.b16 %v910
        %v3842 = vunpack.c.l.b16 %v911
        %v3843 = vunpack.c.h.b16 %v911
        %v3844 = vunpack.c.l.b16 %v912
        %v3845 = vunpack.c.h.b16 %v912
        %v3846 = vunpack.c.l.b16 %v913
        %v3847 = vunpack.c.h.b16 %v913
        %v3848 = vunpack.c.l.b16 %v914
        %v3849 = vunpack.c.h.b16 %v914
        %v3850 = vunpack.c.l.b16 %v915
        %v3851 = vunpack.c.h.b16 %v915
        %v3852 = vunpack.c.l.b16 %v916
        %v3853 = vunpack.c.h.b16 %v916
        %v3854 = vunpack.c.l.b16 %v917
        %v3855 = vunpack.c.h.b16 %v917
        %v3856 = vunpack.c.l.b16 %v918
        %v3857 = vunpack.c.h.b16 %v918
        %v3858 = vunpack.c.l.b16 %v919
        %v3859 = vunpack.c.h.b16 %v919
        %v3860 = vunpack.c.l.b16 %v920
        %v3861 = vunpack.c.h.b16 %v920
        %v3862 = vunpack.c.l.b16 %v921
        %v3863 = vunpack.c.h.b16 %v921
        %v3864 = vunpack.c.l.b16 %v922
        %v3865 = vunpack.c.h.b16 %v922
        %v3866 = vunpack.c.l.b16 %v923
        %v3867 = vunpack.c.h.b16 %v923
        %v3868 = vunpack.c.l.b16 %v924
        %v3869 = vunpack.c.h.b16 %v924
        %v3870 = vunpack.c.l.b16 %v925
        %v3871 = vunpack.c.h.b16 %v925
        %v3872 = vunpack.c.l.b16 %v926
        %v3873 = vunpack.c.h.b16 %v926
        %v3874 = vunpack.c.l.b16 %v927
        %v3875 = vunpack.c.h.b16 %v927
        %v3876 = vunpack.c.l.b16 %v928
        %v3877 = vunpack.c.h.b16 %v928
        %v3878 = vunpack.c.l.b16 %v929
        %v3879 = vunpack.c.h.b16 %v929
        %v3880 = vunpack.c.l.b16 %v930
        %v3881 = vunpack.c.h.b16 %v930
        %v3882 = vunpack.c.l.b16 %v931
        %v3883 = vunpack.c.h.b16 %v931
        %v3884 = vunpack.c.l.b16 %v932
        %v3885 = vunpack.c.h.b16 %v932
        %v3886 = vunpack.c.l.b16 %v933
        %v3887 = vunpack.c.h.b16 %v933
        %v3888 = vunpack.c.l.b16 %v934
        %v3889 = vunpack.c.h.b16 %v934
        %v3890 = vunpack.c.l.b16 %v935
        %v3891 = vunpack.c.h.b16 %v935
        %v3892 = vunpack.c.l.b16 %v936
        %v3893 = vunpack.c.h.b16 %v936
        %v3894 = vunpack.c.l.b16 %v937
        %v3895 = vunpack.c.h.b16 %v937
        %v3896 = vunpack.c.l.b16 %v938
        %v3897 = vunpack.c.h.b16 %v938
        %v3898 = vunpack.c.l.b16 %v939
        %v3899 = vunpack.c.h.b16 %v939
        %v3900 = vunpack.c.l.b16 %v940
        %v3901 = vunpack.c.h.b16 %v940
        %v3902 = vunpack.c.l.b16 %v941
        %v3903 = vunpack.c.h.b16 %v941
        %v3904 = vunpack.c.l.b16 %v942
        %v3905 = vunpack.c.h.b16 %v942
        %v3906 = vunpack.c.l.b16 %v943
        %v3907 = vunpack.c.h.b16 %v943
        %v3908 = vunpack.c.l.b16 %v944
        %v3909 = vunpack.c.h.b16 %v944
        %v3910 = vunpack.c.l.b16 %v945
        %v3911 = vunpack.c.h.b16 %v945
        %v3912 = vunpack.c.l.b16 %v946
        %v3913 = vunpack.c.h.b16 %v946
        %v3914 = vunpack.c.l.b16 %v947
        %v3915 = vunpack.c.h.b16 %v947
        %v3916 = vunpack.c.l.b16 %v948
        %v3917 = vunpack.c.h.b16 %v948
        %v3918 = vunpack.c.l.b16 %v949
        %v3919 = vunpack.c.h.b16 %v949
        %v3920 = vunpack.c.l.b16 %v950
        %v3921 = vunpack.c.h.b16 %v950
        %v3922 = vunpack.c.l.b16 %v951
        %v3923 = vunpack.c.h.b16 %v951
        %v3924 = vunpack.c.l.b16 %v952
        %v3925 = vunpack.c.h.b16 %v952
        %v3926 = vunpack.c.l.b16 %v953
        %v3927 = vunpack.c.h.b16 %v953
        %v3928 = vunpack.c.l.b16 %v954
        %v3929 = vunpack.c.h.b16 %v954
        %v3930 = vunpack.c.l.b16 %v955
        %v3931 = vunpack.c.h.b16 %v955
        %v3932 = vunpack.c.l.b16 %v956
        %v3933 = vunpack.c.h.b16 %v956
        %v3934 = vunpack.c.l.b16 %v957
        %v3935 = vunpack.c.h.b16 %v957
        %v3936 = vunpack.c.l.b16 %v958
        %v3937 = vunpack.c.h.b16 %v958
        %v3938 = vunpack.c.l.b16 %v959
        %v3939 = vunpack.c.h.b16 %v959
        %v3940 = vunpack.c.l.b16 %v960
        %v3941 = vunpack.c.h.b16 %v960
        %v3942 = vunpack.c.l.b16 %v961
        %v3943 = vunpack.c.h.b16 %v961
        %v3944 = vunpack.c.l.b16 %v962
        %v3945 = vunpack.c.h.b16 %v962
        %v3946 = vunpack.c.l.b16 %v963
        %v3947 = vunpack.c.h.b16 %v963
        %v3948 = vunpack.c.l.b16 %v964
        %v3949 = vunpack.c.h.b16 %v964
        %v3950 = vunpack.c.l.b16 %v965
        %v3951 = vunpack.c.h.b16 %v965
        %v3952 = vunpack.c.l.b16 %v966
        %v3953 = vunpack.c.h.b16 %v966
        %v3954 = vunpack.c.l.b16 %v967
        %v3955 = vunpack.c.h.b16 %v967
        %v3956 = vunpack.c.l.b16 %v968
        %v3957 = vunpack.c.h.b16 %v968
        %v3958 = vunpack.c.l.b16 %v969
        %v3959 = vunpack.c.h.b16 %v969
        %v3960 = vunpack.c.l.b16 %v970
        %v3961 = vunpack.c.h.b16 %v970
        %v3962 = vunpack.c.l.b16 %v971
        %v3963 = vunpack.c.h.b16 %v971
        %v3964 = vunpack.c.l.b16 %v972
        %v3965 = vunpack.c.h.b16 %v972
        %v3966 = vunpack.c.l.b16 %v973
        %v3967 = vunpack.c.h.b16 %v973
        %v3968 = vunpack.c.l.b16 %v974
        %v3969 = vunpack.c.h.b16 %v974
        %v3970 = vunpack.c.l.b16 %v975
        %v3971 = vunpack.c.h.b16 %v975
        %v3972 = vunpack.c.l.b16 %v976
        %v3973 = vunpack.c.h.b16 %v976
        %v3974 = vunpack.c.l.b16 %v977
        %v3975 = vunpack.c.h.b16 %v977
        %v3976 = vunpack.c.l.b16 %v978
        %v3977 = vunpack.c.h.b16 %v978
        %v3978 = vunpack.c.l.b16 %v979
        %v3979 = vunpack.c.h.b16 %v979
        %v3980 = vunpack.c.l.b16 %v980
        %v3981 = vunpack.c.h.b16 %v980
        %v3982 = vunpack.c.l.b16 %v981
        %v3983 = vunpack.c.h.b16 %v981
        %v3984 = vunpack.c.l.b16 %v982
        %v3985 = vunpack.c.h.b16 %v982
        %v3986 = vunpack.c.l.b16 %v983
        %v3987 = vunpack.c.h.b16 %v983
        %v3988 = vunpack.c.l.b16 %v984
        %v3989 = vunpack.c.h.b16 %v984
        %v3990 = vunpack.c.l.b16 %v985
        %v3991 = vunpack.c.h.b16 %v985
        %v3992 = vunpack.c.l.b16 %v986
        %v3993 = vunpack.c.h.b16 %v986
        %v3994 = vunpack.c.l.b16 %v987
        %v3995 = vunpack.c.h.b16 %v987
        %v3996 = vunpack.c.l.b16 %v988
        %v3997 = vunpack.c.h.b16 %v988
        %v3998 = vunpack.c.l.b16 %v989
        %v3999 = vunpack.c.h.b16 %v989
        %v4000 = vunpack.c.l.b16 %v990
        %v4001 = vunpack.c.h.b16 %v990
        %v4002 = vunpack.c.l.b16 %v991
        %v4003 = vunpack.c.h.b16 %v991
        %v4004 = vunpack.c.l.b16 %v992
        %v4005 = vunpack.c.h.b16 %v992
        %v4006 = vunpack.c.l.b16 %v993
        %v4007 = vunpack.c.h.b16 %v993
        %v4008 = vunpack.c.l.b16 %v994
        %v4009 = vunpack.c.h.b16 %v994
        %v4010 = vunpack.c.l.b16 %v995
        %v4011 = vunpack.c.h.b16 %v995
        %v4012 = vunpack.c.l.b16 %v996
        %v4013 = vunpack.c.h.b16 %v996
        %v4014 = vunpack.c.l.b16 %v997
        %v4015 = vunpack.c.h.b16 %v997
        %v4016 = vunpack.c.l.b16 %v998
        %v4017 = vunpack.c.h.b16 %v998
        %v4018 = vunpack.c.l.b16 %v999
        %v4019 = vunpack.c.h.b16 %v999
        %v4020 = vunpack.c.l.b16 %v1000
        %v4021 = vunpack.c.h.b16 %v1000
        %v4022 = vunpack.c.l.b16 %v1001
        %v4023 = vunpack.c.h.b16 %v1001
        %v4024 = vunpack.c.l.b16 %v1002
        %v4025 = vunpack.c.h.b16 %v1002
        %v4026 = vunpack.c.l.b16 %v1003
        %v4027 = vunpack.c.h.b16 %v1003
        %v4028 = vunpack.c.l.b16 %v1004
        %v4029 = vunpack.c.h.b16 %v1004
        %v4030 = vunpack.c.l.b16 %v1005
        %v4031 = vunpack.c.h.b16 %v1005
        %v4032 = vunpack.c.l.b16 %v1006
        %v4033 = vunpack.c.h.b16 %v1006
        %v4034 = vunpack.c.l.b16 %v1007
        %v4035 = vunpack.c.h.b16 %v1007
        %v4036 = vunpack.c.l.b16 %v1008
        %v4037 = vunpack.c.h.b16 %v1008
        %v4038 = vunpack.c.l.b16 %v1009
        %v4039 = vunpack.c.h.b16 %v1009
        %v4040 = vunpack.c.l.b16 %v1010
        %v4041 = vunpack.c.h.b16 %v1010
        %v4042 = vunpack.c.l.b16 %v1011
        %v4043 = vunpack.c.h.b16 %v1011
        %v4044 = vunpack.c.l.b16 %v1012
        %v4045 = vunpack.c.h.b16 %v1012
        %v4046 = vunpack.c.l.b16 %v1013
        %v4047 = vunpack.c.h.b16 %v1013
        %v4048 = vunpack.c.l.b16 %v1014
        %v4049 = vunpack.c.h.b16 %v1014
        %v4050 = vunpack.c.l.b16 %v1015
        %v4051 = vunpack.c.h.b16 %v1015
        %v4052 = vunpack.c.l.b16 %v1016
        %v4053 = vunpack.c.h.b16 %v1016
        %v4054 = vunpack.c.l.b16 %v1017
        %v4055 = vunpack.c.h.b16 %v1017
        %v4056 = vunpack.c.l.b16 %v1018
        %v4057 = vunpack.c.h.b16 %v1018
        %v4058 = vunpack.c.l.b16 %v1019
        %v4059 = vunpack.c.h.b16 %v1019
        %v4060 = vunpack.c.l.b16 %v1020
        %v4061 = vunpack.c.h.b16 %v1020
        %v4062 = vunpack.c.l.b16 %v1021
        %v4063 = vunpack.c.h.b16 %v1021
        %v4064 = vunpack.c.l.b16 %v1022
        %v4065 = vunpack.c.h.b16 %v1022
        %v4066 = vunpack.c.l.b16 %v1023
        %v4067 = vunpack.c.h.b16 %v1023
        %v4068 = vunpack.c.l.b16 %v1024
        %v4069 = vunpack.c.h.b16 %v1024
        %v4070 = vunpack.c.l.b16 %v1025
        %v4071 = vunpack.c.h.b16 %v1025
        %v4072 = vunpack.c.l.b16 %v1026
        %v4073 = vunpack.c.h.b16 %v1026
        %v4074 = vunpack.c.l.b16 %v1027
        %v4075 = vunpack.c.h.b16 %v1027
        %v4076 = vunpack.c.l.b16 %v1028
        %v4077 = vunpack.c.h.b16 %v1028
        %v4078 = vunpack.c.l.b16 %v1029
        %v4079 = vunpack.c.h.b16 %v1029
        %v4080 = vunpack.c.l.b16 %v1030
        %v4081 = vunpack.c.h.b16 %v1030
        %v4082 = vunpack.c.l.b16 %v1031
        %v4083 = vunpack.c.h.b16 %v1031
        %v4084 = vunpack.c.l.b16 %v1032
        %v4085 = vunpack.c.h.b16 %v1032
        %v4086 = vunpack.c.l.b16 %v1033
        %v4087 = vunpack.c.h.b16 %v1033
        %v4088 = vunpack.c.l.b16 %v1034
        %v4089 = vunpack.c.h.b16 %v1034
        %v4090 = vunpack.c.l.b16 %v1035
        %v4091 = vunpack.c.h.b16 %v1035
        %v4092 = vunpack.c.l.b16 %v1036
        %v4093 = vunpack.c.h.b16 %v1036
        %v4094 = vunpack.c.l.b16 %v1037
        %v4095 = vunpack.c.h.b16 %v1037
        %v4096 = vunpack.c.l.b16 %v1038
        %v4097 = vunpack.c.h.b16 %v1038
        %v4098 = vunpack.c.l.b16 %v1039
        %v4099 = vunpack.c.h.b16 %v1039
        %v4100 = vunpack.c.l.b16 %v1040
        %v4101 = vunpack.c.h.b16 %v1040
        %v4102 = vunpack.c.l.b16 %v1041
        %v4103 = vunpack.c.h.b16 %v1041
        %v4104 = vunpack.c.l.b16 %v1042
        %v4105 = vunpack.c.h.b16 %v1042
        %v4106 = vunpack.c.l.b16 %v1043
        %v4107 = vunpack.c.h.b16 %v1043
        %v4108 = vunpack.c.l.b16 %v1044
        %v4109 = vunpack.c.h.b16 %v1044
        %v4110 = vunpack.c.l.b16 %v1045
        %v4111 = vunpack.c.h.b16 %v1045
        %v4112 = vunpack.c.l.b16 %v1046
        %v4113 = vunpack.c.h.b16 %v1046
        %v4114 = vunpack.c.l.b16 %v1047
        %v4115 = vunpack.c.h.b16 %v1047
        %v4116 = vunpack.c.l.b16 %v1048
        %v4117 = vunpack.c.h.b16 %v1048
        %v4118 = vunpack.c.l.b16 %v1049
        %v4119 = vunpack.c.h.b16 %v1049
        %v4120 = vunpack.c.l.b16 %v1050
        %v4121 = vunpack.c.h.b16 %v1050
        %v4122 = vunpack.c.l.b16 %v1051
        %v4123 = vunpack.c.h.b16 %v1051
        %v4124 = vunpack.c.l.b16 %v1052
        %v4125 = vunpack.c.h.b16 %v1052
        %v4126 = vunpack.c.l.b16 %v1053
        %v4127 = vunpack.c.h.b16 %v1053
        %v4128 = vunpack.c.l.b16 %v1054
        %v4129 = vunpack.c.h.b16 %v1054
        %v4130 = vunpack.c.l.b16 %v1055
        %v4131 = vunpack.c.h.b16 %v1055
        %v4132 = vunpack.c.l.b16 %v1056
        %v4133 = vunpack.c.h.b16 %v1056
        %v4134 = vunpack.c.l.b16 %v1057
        %v4135 = vunpack.c.h.b16 %v1057
        %v4136 = vunpack.c.l.b16 %v1058
        %v4137 = vunpack.c.h.b16 %v1058
        %v4138 = vunpack.c.l.b16 %v1059
        %v4139 = vunpack.c.h.b16 %v1059
        %v4140 = vunpack.c.l.b16 %v1060
        %v4141 = vunpack.c.h.b16 %v1060
        %v4142 = vunpack.c.l.b16 %v1061
        %v4143 = vunpack.c.h.b16 %v1061
        %v4144 = vunpack.c.l.b16 %v1062
        %v4145 = vunpack.c.h.b16 %v1062
        %v4146 = vunpack.c.l.b16 %v1063
        %v4147 = vunpack.c.h.b16 %v1063
        %v4148 = vunpack.c.l.b16 %v1064
        %v4149 = vunpack.c.h.b16 %v1064
        %v4150 = vunpack.c.l.b16 %v1065
        %v4151 = vunpack.c.h.b16 %v1065
        %v4152 = vunpack.c.l.b16 %v1066
        %v4153 = vunpack.c.h.b16 %v1066
        %v4154 = vunpack.c.l.b16 %v1067
        %v4155 = vunpack.c.h.b16 %v1067
        %v4156 = vunpack.c.l.b16 %v1068
        %v4157 = vunpack.c.h.b16 %v1068
        %v4158 = vunpack.c.l.b16 %v1069
        %v4159 = vunpack.c.h.b16 %v1069
        %v4160 = vunpack.c.l.b16 %v1070
        %v4161 = vunpack.c.h.b16 %v1070
        %v4162 = vunpack.c.l.b16 %v1071
        %v4163 = vunpack.c.h.b16 %v1071
        %v4164 = vunpack.c.l.b16 %v1072
        %v4165 = vunpack.c.h.b16 %v1072
        %v4166 = vunpack.c.l.b16 %v1073
        %v4167 = vunpack.c.h.b16 %v1073
        %v4168 = vunpack.c.l.b16 %v1074
        %v4169 = vunpack.c.h.b16 %v1074
        %v4170 = vunpack.c.l.b16 %v1075
        %v4171 = vunpack.c.h.b16 %v1075
        %v4172 = vunpack.c.l.b16 %v1076
        %v4173 = vunpack.c.h.b16 %v1076
        %v4174 = vunpack.c.l.b16 %v1077
        %v4175 = vunpack.c.h.b16 %v1077
        %v4176 = vunpack.c.l.b16 %v1078
        %v4177 = vunpack.c.h.b16 %v1078
        %v4178 = vunpack.c.l.b16 %v1079
        %v4179 = vunpack.c.h.b16 %v1079
        %v4180 = vunpack.c.l.b16 %v1080
        %v4181 = vunpack.c.h.b16 %v1080
        %v4182 = vunpack.c.l.b16 %v1081
        %v4183 = vunpack.c.h.b16 %v1081
        %v4184 = vunpack.c.l.b16 %v1082
        %v4185 = vunpack.c.h.b16 %v1082
        %v4186 = vunpack.c.l.b16 %v1083
        %v4187 = vunpack.c.h.b16 %v1083
        %v4188 = vunpack.c.l.b16 %v1084
        %v4189 = vunpack.c.h.b16 %v1084
        %v4190 = vunpack.c.l.b16 %v1085
        %v4191 = vunpack.c.h.b16 %v1085
        %v4192 = vunpack.c.l.b16 %v1086
        %v4193 = vunpack.c.h.b16 %v1086
        %v4194 = vunpack.c.l.b16 %v1087
        %v4195 = vunpack.c.h.b16 %v1087
        %v4196 = vunpack.c.l.b16 %v1088
        %v4197 = vunpack.c.h.b16 %v1088
        %v4198 = vunpack.c.l.b16 %v1089
        %v4199 = vunpack.c.h.b16 %v1089
        %v4200 = vunpack.c.l.b16 %v1090
        %v4201 = vunpack.c.h.b16 %v1090
        %v4202 = vunpack.c.l.b16 %v1091
        %v4203 = vunpack.c.h.b16 %v1091
        %v4204 = vunpack.c.l.b16 %v1092
        %v4205 = vunpack.c.h.b16 %v1092
        %v4206 = vunpack.c.l.b16 %v1093
        %v4207 = vunpack.c.h.b16 %v1093
        %v4208 = vunpack.c.l.b16 %v1094
        %v4209 = vunpack.c.h.b16 %v1094
        %v4210 = vunpack.c.l.b16 %v1095
        %v4211 = vunpack.c.h.b16 %v1095
        %v4212 = vunpack.c.l.b16 %v1096
        %v4213 = vunpack.c.h.b16 %v1096
        %v4214 = vunpack.c.l.b16 %v1097
        %v4215 = vunpack.c.h.b16 %v1097
        %v4216 = vunpack.c.l.b16 %v1098
        %v4217 = vunpack.c.h.b16 %v1098
        %v4218 = vunpack.c.l.b16 %v1099
        %v4219 = vunpack.c.h.b16 %v1099
        %v4220 = vunpack.c.l.b16 %v1100
        %v4221 = vunpack.c.h.b16 %v1100
        %v4222 = vunpack.c.l.b16 %v1101
        %v4223 = vunpack.c.h.b16 %v1101
        %v4224 = vunpack.c.l.b16 %v1102
        %v4225 = vunpack.c.h.b16 %v1102
        %v4226 = vunpack.c.l.b16 %v1103
        %v4227 = vunpack.c.h.b16 %v1103
        %v4228 = vunpack.c.l.b16 %v1104
        %v4229 = vunpack.c.h.b16 %v1104
        %v4230 = vunpack.c.l.b16 %v1105
        %v4231 = vunpack.c.h.b16 %v1105
        %v4232 = vunpack.c.l.b16 %v1106
        %v4233 = vunpack.c.h.b16 %v1106
        %v4234 = vunpack.c.l.b16 %v1107
        %v4235 = vunpack.c.h.b16 %v1107
        %v4236 = vunpack.c.l.b16 %v1108
        %v4237 = vunpack.c.h.b16 %v1108
        %v4238 = vunpack.c.l.b16 %v1109
        %v4239 = vunpack.c.h.b16 %v1109
        %v4240 = vunpack.c.l.b16 %v1110
        %v4241 = vunpack.c.h.b16 %v1110
        %v4242 = vunpack.c.l.b16 %v1111
        %v4243 = vunpack.c.h.b16 %v1111
        %v4244 = vunpack.c.l.b16 %v1112
        %v4245 = vunpack.c.h.b16 %v1112
        %v4246 = vunpack.c.l.b16 %v1113
        %v4247 = vunpack.c.h.b16 %v1113
        %v4248 = vunpack.c.l.b16 %v1114
        %v4249 = vunpack.c.h.b16 %v1114
        %v4250 = vunpack.c.l.b16 %v1115
        %v4251 = vunpack.c.h.b16 %v1115
        %v4252 = vunpack.c.l.b16 %v1116
        %v4253 = vunpack.c.h.b16 %v1116
        %v4254 = vunpack.c.l.b16 %v1117
        %v4255 = vunpack.c.h.b16 %v1117
        %v4256 = vunpack.c.l.b16 %v1118
        %v4257 = vunpack.c.h.b16 %v1118
        %v4258 = vunpack.c.l.b16 %v1119
        %v4259 = vunpack.c.h.b16 %v1119
        %v4260 = vunpack.c.l.b16 %v1120
        %v4261 = vunpack.c.h.b16 %v1120
        %v4262 = vunpack.c.l.b16 %v1121
        %v4263 = vunpack.c.h.b16 %v1121
        %v4264 = vunpack.c.l.b16 %v1122
        %v4265 = vunpack.c.h.b16 %v1122
        %v4266 = vunpack.c.l.b16 %v1123
        %v4267 = vunpack.c.h.b16 %v1123
        %v4268 = vunpack.c.l.b16 %v1124
        %v4269 = vunpack.c.h.b16 %v1124
        %v4270 = vunpack.c.l.b16 %v1125
        %v4271 = vunpack.c.h.b16 %v1125
        %v4272 = vunpack.c.l.b16 %v1126
        %v4273 = vunpack.c.h.b16 %v1126
        %v4274 = vunpack.c.l.b16 %v1127
        %v4275 = vunpack.c.h.b16 %v1127
        %v4276 = vunpack.c.l.b16 %v1128
        %v4277 = vunpack.c.h.b16 %v1128
        %v4278 = vunpack.c.l.b16 %v1129
        %v4279 = vunpack.c.h.b16 %v1129
        %v4280 = vunpack.c.l.b16 %v1130
        %v4281 = vunpack.c.h.b16 %v1130
        %v4282 = vunpack.c.l.b16 %v1131
        %v4283 = vunpack.c.h.b16 %v1131
        %v4284 = vunpack.c.l.b16 %v1132
        %v4285 = vunpack.c.h.b16 %v1132
        %v4286 = vunpack.c.l.b16 %v1133
        %v4287 = vunpack.c.h.b16 %v1133
        %v4288 = vunpack.c.l.b16 %v1134
        %v4289 = vunpack.c.h.b16 %v1134
        %v4290 = vunpack.c.l.b16 %v1135
        %v4291 = vunpack.c.h.b16 %v1135
        %v4292 = vunpack.c.l.b16 %v1136
        %v4293 = vunpack.c.h.b16 %v1136
        %v4294 = vunpack.c.l.b16 %v1137
        %v4295 = vunpack.c.h.b16 %v1137
        %v4296 = vunpack.c.l.b16 %v1138
        %v4297 = vunpack.c.h.b16 %v1138
        %v4298 = vunpack.c.l.b16 %v1139
        %v4299 = vunpack.c.h.b16 %v1139
        %v4300 = vunpack.c.l.b16 %v1140
        %v4301 = vunpack.c.h.b16 %v1140
        %v4302 = vunpack.c.l.b16 %v1141
        %v4303 = vunpack.c.h.b16 %v1141
        %v4304 = vunpack.c.l.b16 %v1142
        %v4305 = vunpack.c.h.b16 %v1142
        %v4306 = vunpack.c.l.b16 %v1143
        %v4307 = vunpack.c.h.b16 %v1143
        %v4308 = vunpack.c.l.b16 %v1144
        %v4309 = vunpack.c.h.b16 %v1144
        %v4310 = vunpack.c.l.b16 %v1145
        %v4311 = vunpack.c.h.b16 %v1145
        %v4312 = vunpack.c.l.b16 %v1146
        %v4313 = vunpack.c.h.b16 %v1146
        %v4314 = vunpack.c.l.b16 %v1147
        %v4315 = vunpack.c.h.b16 %v1147
        %v4316 = vunpack.c.l.b16 %v1148
        %v4317 = vunpack.c.h.b16 %v1148
        %v4318 = vunpack.c.l.b16 %v1149
        %v4319 = vunpack.c.h.b16 %v1149
        %v4320 = vunpack.c.l.b16 %v1150
        %v4321 = vunpack.c.h.b16 %v1150
        %v4322 = vunpack.c.l.b16 %v1151
        %v4323 = vunpack.c.h.b16 %v1151
        %v4324 = vunpack.c.l.b16 %v1152
        %v4325 = vunpack.c.h.b16 %v1152
        %v4326 = vunpack.c.l.b16 %v1153
        %v4327 = vunpack.c.h.b16 %v1153
        %v4328 = vunpack.c.l.b16 %v1154
        %v4329 = vunpack.c.h.b16 %v1154
        %v4330 = vunpack.c.l.b16 %v1155
        %v4331 = vunpack.c.h.b16 %v1155
        %v4332 = vunpack.c.l.b16 %v1156
        %v4333 = vunpack.c.h.b16 %v1156
        %v4334 = vunpack.c.l.b16 %v1157
        %v4335 = vunpack.c.h.b16 %v1157
        %v4336 = vunpack.c.l.b16 %v1158
        %v4337 = vunpack.c.h.b16 %v1158
        %v4338 = vunpack.c.l.b16 %v1159
        %v4339 = vunpack.c.h.b16 %v1159
        %v4340 = vunpack.c.l.b16 %v1160
        %v4341 = vunpack.c.h.b16 %v1160
        %v4342 = vunpack.c.l.b16 %v1161
        %v4343 = vunpack.c.h.b16 %v1161
        %v4344 = vunpack.c.l.b16 %v1162
        %v4345 = vunpack.c.h.b16 %v1162
        %v4346 = vunpack.c.l.b16 %v1163
        %v4347 = vunpack.c.h.b16 %v1163
        %v4348 = vunpack.c.l.b16 %v1164
        %v4349 = vunpack.c.h.b16 %v1164
        %v4350 = vunpack.c.l.b16 %v1165
        %v4351 = vunpack.c.h.b16 %v1165
        %v4352 = vunpack.c.l.b16 %v1166
        %v4353 = vunpack.c.h.b16 %v1166
        %v4354 = vunpack.c.l.b16 %v1167
        %v4355 = vunpack.c.h.b16 %v1167
        %v4356 = vunpack.c.l.b16 %v1168
        %v4357 = vunpack.c.h.b16 %v1168
        %v4358 = vunpack.c.l.b16 %v1169
        %v4359 = vunpack.c.h.b16 %v1169
        %v4360 = vunpack.c.l.b16 %v1170
        %v4361 = vunpack.c.h.b16 %v1170
        %v4362 = vunpack.c.l.b16 %v1171
        %v4363 = vunpack.c.h.b16 %v1171
        %v4364 = vunpack.c.l.b16 %v1172
        %v4365 = vunpack.c.h.b16 %v1172
        %v4366 = vunpack.c.l.b16 %v1173
        %v4367 = vunpack.c.h.b16 %v1173
        %v4368 = vunpack.c.l.b16 %v1174
        %v4369 = vunpack.c.h.b16 %v1174
        %v4370 = vunpack.c.l.b16 %v1175
        %v4371 = vunpack.c.h.b16 %v1175
        %v4372 = vunpack.c.l.b16 %v1176
        %v4373 = vunpack.c.h.b16 %v1176
        %v4374 = vunpack.c.l.b16 %v1177
        %v4375 = vunpack.c.h.b16 %v1177
        %v4376 = vunpack.c.l.b16 %v1178
        %v4377 = vunpack.c.h.b16 %v1178
        %v4378 = vunpack.c.l.b16 %v1179
        %v4379 = vunpack.c.h.b16 %v1179
        %v4380 = vunpack.c.l.b16 %v1180
        %v4381 = vunpack.c.h.b16 %v1180
        %v4382 = vunpack.c.l.b16 %v1181
        %v4383 = vunpack.c.h.b16 %v1181
        %v4384 = vunpack.c.l.b16 %v1182
        %v4385 = vunpack.c.h.b16 %v1182
        %v4386 = vunpack.c.l.b16 %v1183
        %v4387 = vunpack.c.h.b16 %v1183
        %v4388 = vunpack.c.l.b16 %v1184
        %v4389 = vunpack.c.h.b16 %v1184
        %v4390 = vunpack.c.l.b16 %v1185
        %v4391 = vunpack.c.h.b16 %v1185
        %v4392 = vunpack.c.l.b16 %v1186
        %v4393 = vunpack.c.h.b16 %v1186
        %v4394 = vunpack.c.l.b16 %v1187
        %v4395 = vunpack.c.h.b16 %v1187
        %v4396 = vunpack.c.l.b16 %v1188
        %v4397 = vunpack.c.h.b16 %v1188
        %v4398 = vunpack.c.l.b16 %v1189
        %v4399 = vunpack.c.h.b16 %v1189
        %v4400 = vunpack.c.l.b16 %v1190
        %v4401 = vunpack.c.h.b16 %v1190
        %v4402 = vunpack.c.l.b16 %v1191
        %v4403 = vunpack.c.h.b16 %v1191
        %v4404 = vunpack.c.l.b16 %v1192
        %v4405 = vunpack.c.h.b16 %v1192
        %v4406 = vunpack.c.l.b16 %v1193
        %v4407 = vunpack.c.h.b16 %v1193
        %v4408 = vunpack.c.l.b16 %v1194
        %v4409 = vunpack.c.h.b16 %v1194
        %v4410 = vunpack.c.l.b16 %v1195
        %v4411 = vunpack.c.h.b16 %v1195
        %v4412 = vunpack.c.l.b16 %v1196
        %v4413 = vunpack.c.h.b16 %v1196
        %v4414 = vunpack.c.l.b16 %v1197
        %v4415 = vunpack.c.h.b16 %v1197
        %v4416 = vunpack.c.l.b16 %v1198
        %v4417 = vunpack.c.h.b16 %v1198
        %v4418 = vunpack.c.l.b16 %v1199
        %v4419 = vunpack.c.h.b16 %v1199
        %v4420 = vunpack.c.l.b16 %v1200
        %v4421 = vunpack.c.h.b16 %v1200
        %v4422 = vunpack.c.l.b16 %v1201
        %v4423 = vunpack.c.h.b16 %v1201
        %v4424 = vunpack.c.l.b16 %v1202
        %v4425 = vunpack.c.h.b16 %v1202
        %v4426 = vunpack.c.l.b16 %v1203
        %v4427 = vunpack.c.h.b16 %v1203
        %v4428 = vunpack.c.l.b16 %v1204
        %v4429 = vunpack.c.h.b16 %v1204
        %v4430 = vunpack.c.l.b16 %v1205
        %v4431 = vunpack.c.h.b16 %v1205
        %v4432 = vunpack.c.l.b16 %v1206
        %v4433 = vunpack.c.h.b16 %v1206
        %v4434 = vunpack.c.l.b16 %v1207
        %v4435 = vunpack.c.h.b16 %v1207
        %v4436 = vunpack.c.l.b16 %v1208
        %v4437 = vunpack.c.h.b16 %v1208
        %v4438 = vunpack.c.l.b16 %v1209
        %v4439 = vunpack.c.h.b16 %v1209
        %v4440 = vunpack.c.l.b16 %v1210
        %v4441 = vunpack.c.h.b16 %v1210
        %v4442 = vunpack.c.l.b16 %v1211
        %v4443 = vunpack.c.h.b16 %v1211
        %v4444 = vunpack.c.l.b16 %v1212
        %v4445 = vunpack.c.h.b16 %v1212
        %v4446 = vunpack.c.l.b16 %v1213
        %v4447 = vunpack.c.h.b16 %v1213
        %v4448 = vunpack.c.l.b16 %v1214
        %v4449 = vunpack.c.h.b16 %v1214
        %v4450 = vunpack.c.l.b16 %v1215
        %v4451 = vunpack.c.h.b16 %v1215
        %v4452 = vunpack.c.l.b16 %v1216
        %v4453 = vunpack.c.h.b16 %v1216
        %v4454 = vunpack.c.l.b16 %v1217
        %v4455 = vunpack.c.h.b16 %v1217
        %v4456 = vunpack.c.l.b16 %v1218
        %v4457 = vunpack.c.h.b16 %v1218
        %v4458 = vunpack.c.l.b16 %v1219
        %v4459 = vunpack.c.h.b16 %v1219
        %v4460 = vunpack.c.l.b16 %v1220
        %v4461 = vunpack.c.h.b16 %v1220
        %v4462 = vunpack.c.l.b16 %v1221
        %v4463 = vunpack.c.h.b16 %v1221
        %v4464 = vunpack.c.l.b16 %v1222
        %v4465 = vunpack.c.h.b16 %v1222
        %v4466 = vunpack.c.l.b16 %v1223
        %v4467 = vunpack.c.h.b16 %v1223
        %v4468 = vunpack.c.l.b16 %v1224
        %v4469 = vunpack.c.h.b16 %v1224
        %v4470 = vunpack.c.l.b16 %v1225
        %v4471 = vunpack.c.h.b16 %v1225
        %v4472 = vunpack.c.l.b16 %v1226
        %v4473 = vunpack.c.h.b16 %v1226
        %v4474 = vunpack.c.l.b16 %v1227
        %v4475 = vunpack.c.h.b16 %v1227
        %v4476 = vunpack.c.l.b16 %v1228
        %v4477 = vunpack.c.h.b16 %v1228
        %v4478 = vunpack.c.l.b16 %v1229
        %v4479 = vunpack.c.h.b16 %v1229
        %v4480 = vunpack.c.l.b16 %v1230
        %v4481 = vunpack.c.h.b16 %v1230
        %v4482 = vunpack.c.l.b16 %v1231
        %v4483 = vunpack.c.h.b16 %v1231
        %v4484 = vunpack.c.l.b16 %v1232
        %v4485 = vunpack.c.h.b16 %v1232
        %v4486 = vunpack.c.l.b16 %v1233
        %v4487 = vunpack.c.h.b16 %v1233
        %v4488 = vunpack.c.l.b16 %v1234
        %v4489 = vunpack.c.h.b16 %v1234
        %v4490 = vunpack.c.l.b16 %v1235
        %v4491 = vunpack.c.h.b16 %v1235
        %v4492 = vunpack.c.l.b16 %v1236
        %v4493 = vunpack.c.h.b16 %v1236
        %v4494 = vunpack.c.l.b16 %v1237
        %v4495 = vunpack.c.h.b16 %v1237
        %v4496 = vunpack.c.l.b16 %v1238
        %v4497 = vunpack.c.h.b16 %v1238
        %v4498 = vunpack.c.l.b16 %v1239
        %v4499 = vunpack.c.h.b16 %v1239
        %v4500 = vunpack.c.l.b16 %v1240
        %v4501 = vunpack.c.h.b16 %v1240
        %v4502 = vunpack.c.l.b16 %v1241
        %v4503 = vunpack.c.h.b16 %v1241
        %v4504 = vunpack.c.l.b16 %v1242
        %v4505 = vunpack.c.h.b16 %v1242
        %v4506 = vunpack.c.l.b16 %v1243
        %v4507 = vunpack.c.h.b16 %v1243
        %v4508 = vunpack.c.l.b16 %v1244
        %v4509 = vunpack.c.h.b16 %v1244
        %v4510 = vunpack.c.l.b16 %v1245
        %v4511 = vunpack.c.h.b16 %v1245
        %v4512 = vunpack.c.l.b16 %v1246
        %v4513 = vunpack.c.h.b16 %v1246
        %v4514 = vunpack.c.l.b16 %v1247
        %v4515 = vunpack.c.h.b16 %v1247
        %v4516 = vunpack.c.l.b16 %v1248
        %v4517 = vunpack.c.h.b16 %v1248
        %v4518 = vunpack.c.l.b16 %v1249
        %v4519 = vunpack.c.h.b16 %v1249
        %v4520 = vunpack.c.l.b16 %v1250
        %v4521 = vunpack.c.h.b16 %v1250
        %v4522 = vunpack.c.l.b16 %v1251
        %v4523 = vunpack.c.h.b16 %v1251
        %v4524 = vunpack.c.l.b16 %v1252
        %v4525 = vunpack.c.h.b16 %v1252
        %v4526 = vunpack.c.l.b16 %v1253
        %v4527 = vunpack.c.h.b16 %v1253
        %v4528 = vunpack.c.l.b16 %v1254
        %v4529 = vunpack.c.h.b16 %v1254
        %v4530 = vunpack.c.l.b16 %v1255
        %v4531 = vunpack.c.h.b16 %v1255
        %v4532 = vunpack.c.l.b16 %v1256
        %v4533 = vunpack.c.h.b16 %v1256
        %v4534 = vunpack.c.l.b16 %v1257
        %v4535 = vunpack.c.h.b16 %v1257
        %v4536 = vunpack.c.l.b16 %v1258
        %v4537 = vunpack.c.h.b16 %v1258
        %v4538 = vunpack.c.l.b16 %v1259
        %v4539 = vunpack.c.h.b16 %v1259
        %v4540 = vunpack.c.l.b16 %v1260
        %v4541 = vunpack.c.h.b16 %v1260
        %v4542 = vunpack.c.l.b16 %v1261
        %v4543 = vunpack.c.h.b16 %v1261
        %v4544 = vunpack.c.l.b16 %v1262
        %v4545 = vunpack.c.h.b16 %v1262
        %v4546 = vunpack.c.l.b16 %v1263
        %v4547 = vunpack.c.h.b16 %v1263
        %v4548 = vunpack.c.l.b16 %v1264
        %v4549 = vunpack.c.h.b16 %v1264
        %v4550 = vunpack.c.l.b16 %v1265
        %v4551 = vunpack.c.h.b16 %v1265
        %v4552 = vunpack.c.l.b16 %v1266
        %v4553 = vunpack.c.h.b16 %v1266
        %v4554 = vunpack.c.l.b16 %v1267
        %v4555 = vunpack.c.h.b16 %v1267
        %v4556 = vunpack.c.l.b16 %v1268
        %v4557 = vunpack.c.h.b16 %v1268
        %v4558 = vunpack.c.l.b16 %v1269
        %v4559 = vunpack.c.h.b16 %v1269
        %v4560 = vunpack.c.l.b16 %v1270
        %v4561 = vunpack.c.h.b16 %v1270
        %v4562 = vunpack.c.l.b16 %v1271
        %v4563 = vunpack.c.h.b16 %v1271
        %v4564 = vunpack.c.l.b16 %v1272
        %v4565 = vunpack.c.h.b16 %v1272
        %v4566 = vunpack.c.l.b16 %v1273
        %v4567 = vunpack.c.h.b16 %v1273
        %v4568 = vunpack.c.l.b16 %v1274
        %v4569 = vunpack.c.h.b16 %v1274
        %v4570 = vunpack.c.l.b16 %v1275
        %v4571 = vunpack.c.h.b16 %v1275
        %v4572 = vunpack.c.l.b16 %v1276
        %v4573 = vunpack.c.h.b16 %v1276
        %v4574 = vunpack.c.l.b16 %v1277
        %v4575 = vunpack.c.h.b16 %v1277
        %v4576 = vunpack.c.l.b16 %v1278
        %v4577 = vunpack.c.h.b16 %v1278
        %v4578 = vunpack.c.l.b16 %v1279
        %v4579 = vunpack.c.h.b16 %v1279
        %v4580 = vunpack.c.l.b16 %v1280
        %v4581 = vunpack.c.h.b16 %v1280
        %v4582 = vunpack.c.l.b16 %v1281
        %v4583 = vunpack.c.h.b16 %v1281
        %v4584 = vunpack.c.l.b16 %v1282
        %v4585 = vunpack.c.h.b16 %v1282
        %v4586 = vunpack.c.l.b16 %v1283
        %v4587 = vunpack.c.h.b16 %v1283
        %v4588 = vunpack.c.l.b16 %v1284
        %v4589 = vunpack.c.h.b16 %v1284
        %v4590 = vunpack.c.l.b16 %v1285
        %v4591 = vunpack.c.h.b16 %v1285
        %v4592 = vunpack.c.l.b16 %v1286
        %v4593 = vunpack.c.h.b16 %v1286
        %v4594 = vunpack.c.l.b16 %v1287
        %v4595 = vunpack.c.h.b16 %v1287
        %v4596 = vunpack.c.l.b16 %v1288
        %v4597 = vunpack.c.h.b16 %v1288
        %v4598 = vunpack.c.l.b16 %v1289
        %v4599 = vunpack.c.h.b16 %v1289
        %v4600 = vunpack.c.l.b16 %v1290
        %v4601 = vunpack.c.h.b16 %v1290
        %v4602 = vunpack.c.l.b16 %v1291
        %v4603 = vunpack.c.h.b16 %v1291
        %v4604 = vunpack.c.l.b16 %v1292
        %v4605 = vunpack.c.h.b16 %v1292
        %v4606 = vunpack.c.l.b16 %v1293
        %v4607 = vunpack.c.h.b16 %v1293
        %v4608 = vunpack.c.l.b16 %v1294
        %v4609 = vunpack.c.h.b16 %v1294
        %v4610 = vunpack.c.l.b16 %v1295
        %v4611 = vunpack.c.h.b16 %v1295
        %v4612 = vunpack.c.l.b16 %v1296
        %v4613 = vunpack.c.h.b16 %v1296
        %v4614 = vunpack.c.l.b16 %v1297
        %v4615 = vunpack.c.h.b16 %v1297
        %v4616 = vunpack.c.l.b16 %v1298
        %v4617 = vunpack.c.h.b16 %v1298
        %v4618 = vunpack.c.l.b16 %v1299
        %v4619 = vunpack.c.h.b16 %v1299
        %v4620 = vunpack.c.l.b16 %v1300
        %v4621 = vunpack.c.h.b16 %v1300
        %v4622 = vunpack.c.l.b16 %v1301
        %v4623 = vunpack.c.h.b16 %v1301
        %v4624 = vunpack.c.l.b16 %v1302
        %v4625 = vunpack.c.h.b16 %v1302
        %v4626 = vunpack.c.l.b16 %v1303
        %v4627 = vunpack.c.h.b16 %v1303
        %v4628 = vunpack.c.l.b16 %v1304
        %v4629 = vunpack.c.h.b16 %v1304
        %v4630 = vunpack.c.l.b16 %v1305
        %v4631 = vunpack.c.h.b16 %v1305
        %v4632 = vunpack.c.l.b16 %v1306
        %v4633 = vunpack.c.h.b16 %v1306
        %v4634 = vunpack.c.l.b16 %v1307
        %v4635 = vunpack.c.h.b16 %v1307
        %v4636 = vunpack.c.l.b16 %v1308
        %v4637 = vunpack.c.h.b16 %v1308
        %v4638 = vunpack.c.l.b16 %v1309
        %v4639 = vunpack.c.h.b16 %v1309
        %v4640 = vunpack.c.l.b16 %v1310
        %v4641 = vunpack.c.h.b16 %v1310
        %v4642 = vunpack.c.l.b16 %v1311
        %v4643 = vunpack.c.h.b16 %v1311
        %v4644 = vunpack.c.l.b16 %v1312
        %v4645 = vunpack.c.h.b16 %v1312
        %v4646 = vunpack.c.l.b16 %v1313
        %v4647 = vunpack.c.h.b16 %v1313
        %v4648 = vunpack.c.l.b16 %v1314
        %v4649 = vunpack.c.h.b16 %v1314
        %v4650 = vunpack.c.l.b16 %v1315
        %v4651 = vunpack.c.h.b16 %v1315
        %v4652 = vunpack.c.l.b16 %v1316
        %v4653 = vunpack.c.h.b16 %v1316
        %v4654 = vunpack.c.l.b16 %v1317
        %v4655 = vunpack.c.h.b16 %v1317
        %v4656 = vunpack.c.l.b16 %v1318
        %v4657 = vunpack.c.h.b16 %v1318
        %v4658 = vunpack.c.l.b16 %v1319
        %v4659 = vunpack.c.h.b16 %v1319
        %v4660 = vunpack.c.l.b16 %v1320
        %v4661 = vunpack.c.h.b16 %v1320
        %v4662 = vunpack.c.l.b16 %v1321
        %v4663 = vunpack.c.h.b16 %v1321
        %v4664 = vunpack.c.l.b16 %v1322
        %v4665 = vunpack.c.h.b16 %v1322
        %v4666 = vunpack.c.l.b16 %v1323
        %v4667 = vunpack.c.h.b16 %v1323
        %v4668 = vunpack.c.l.b16 %v1324
        %v4669 = vunpack.c.h.b16 %v1324
        %v4670 = vunpack.c.l.b16 %v1325
        %v4671 = vunpack.c.h.b16 %v1325
        %v4672 = vunpack.c.l.b16 %v1326
        %v4673 = vunpack.c.h.b16 %v1326
        %v4674 = vunpack.c.l.b16 %v1327
        %v4675 = vunpack.c.h.b16 %v1327
        %v4676 = vunpack.c.l.b16 %v1328
        %v4677 = vunpack.c.h.b16 %v1328
        %v4678 = vunpack.c.l.b16 %v1329
        %v4679 = vunpack.c.h.b16 %v1329
        %v4680 = vunpack.c.l.b16 %v1330
        %v4681 = vunpack.c.h.b16 %v1330
        %v4682 = vunpack.c.l.b16 %v1331
        %v4683 = vunpack.c.h.b16 %v1331
        %v4684 = vunpack.c.l.b16 %v1332
        %v4685 = vunpack.c.h.b16 %v1332
        %v4686 = vunpack.c.l.b16 %v1333
        %v4687 = vunpack.c.h.b16 %v1333
        %v4688 = vunpack.c.l.b16 %v1334
        %v4689 = vunpack.c.h.b16 %v1334
        %v4690 = vunpack.c.l.b16 %v1335
        %v4691 = vunpack.c.h.b16 %v1335
        %v4692 = vunpack.c.l.b16 %v1336
        %v4693 = vunpack.c.h.b16 %v1336
        %v4694 = vunpack.c.l.b16 %v1337
        %v4695 = vunpack.c.h.b16 %v1337
        %v4696 = vunpack.c.l.b16 %v1338
        %v4697 = vunpack.c.h.b16 %v1338
        %v4698 = vunpack.c.l.b16 %v1339
        %v4699 = vunpack.c.h.b16 %v1339
        %v4700 = vunpack.c.l.b16 %v1340
        %v4701 = vunpack.c.h.b16 %v1340
        %v4702 = vunpack.c.l.b16 %v1341
        %v4703 = vunpack.c.h.b16 %v1341
        %v4704 = vunpack.c.l.b16 %v1342
        %v4705 = vunpack.c.h.b16 %v1342
        %v4706 = vunpack.c.l.b16 %v1343
        %v4707 = vunpack.c.h.b16 %v1343
        %v4708 = vunpack.c.l.b16 %v1344
        %v4709 = vunpack.c.h.b16 %v1344
        %v4710 = vunpack.c.l.b16 %v1345
        %v4711 = vunpack.c.h.b16 %v1345
        %v4712 = vunpack.c.l.b16 %v1346
        %v4713 = vunpack.c.h.b16 %v1346
        %v4714 = vunpack.c.l.b16 %v1347
        %v4715 = vunpack.c.h.b16 %v1347
        %v4716 = vunpack.c.l.b16 %v1348
        %v4717 = vunpack.c.h.b16 %v1348
        %v4718 = vunpack.c.l.b16 %v1349
        %v4719 = vunpack.c.h.b16 %v1349
        %v4720 = vunpack.c.l.b16 %v1350
        %v4721 = vunpack.c.h.b16 %v1350
        %v4722 = vunpack.c.l.b16 %v1351
        %v4723 = vunpack.c.h.b16 %v1351
        %v4724 = vunpack.c.l.b16 %v1352
        %v4725 = vunpack.c.h.b16 %v1352
        %v4726 = vunpack.c.l.b16 %v1353
        %v4727 = vunpack.c.h.b16 %v1353
        %v4728 = vunpack.c.l.b16 %v1354
        %v4729 = vunpack.c.h.b16 %v1354
        %v4730 = vunpack.c.l.b16 %v1355
        %v4731 = vunpack.c.h.b16 %v1355
        %v4732 = vunpack.c.l.b16 %v1356
        %v4733 = vunpack.c.h.b16 %v1356
        %v4734 = vunpack.c.l.b16 %v1357
        %v4735 = vunpack.c.h.b16 %v1357
        %v4736 = vunpack.c.l.b16 %v1358
        %v4737 = vunpack.c.h.b16 %v1358
        %v4738 = vunpack.c.l.b16 %v1359
        %v4739 = vunpack.c.h.b16 %v1359
        %v4740 = vunpack.c.l.b16 %v1360
        %v4741 = vunpack.c.h.b16 %v1360
        %v4742 = vunpack.c.l.b16 %v1361
        %v4743 = vunpack.c.h.b16 %v1361
        %v4744 = vunpack.c.l.b16 %v1362
        %v4745 = vunpack.c.h.b16 %v1362
        %v4746 = vunpack.c.l.b16 %v1363
        %v4747 = vunpack.c.h.b16 %v1363
        %v4748 = vunpack.c.l.b16 %v1364
        %v4749 = vunpack.c.h.b16 %v1364
        %v4750 = vunpack.c.l.b16 %v1365
        %v4751 = vunpack.c.h.b16 %v1365
        %v4752 = vunpack.c.l.b16 %v1366
        %v4753 = vunpack.c.h.b16 %v1366
        %v4754 = vunpack.c.l.b16 %v1367
        %v4755 = vunpack.c.h.b16 %v1367
        %v4756 = vunpack.c.l.b16 %v1368
        %v4757 = vunpack.c.h.b16 %v1368
        %v4758 = vunpack.c.l.b16 %v1369
        %v4759 = vunpack.c.h.b16 %v1369
        %v4760 = vunpack.c.l.b16 %v1370
        %v4761 = vunpack.c.h.b16 %v1370
        %v4762 = vunpack.c.l.b16 %v1371
        %v4763 = vunpack.c.h.b16 %v1371
        %v4764 = vunpack.c.l.b16 %v1372
        %v4765 = vunpack.c.h.b16 %v1372
        %v4766 = vunpack.c.l.b16 %v1373
        %v4767 = vunpack.c.h.b16 %v1373
        %v4768 = vunpack.c.l.b16 %v1374
        %v4769 = vunpack.c.h.b16 %v1374
        %v4770 = vunpack.c.l.b16 %v1375
        %v4771 = vunpack.c.h.b16 %v1375
        %v4772 = vunpack.c.l.b16 %v1376
        %v4773 = vunpack.c.h.b16 %v1376
        %v4774 = vunpack.c.l.b16 %v1377
        %v4775 = vunpack.c.h.b16 %v1377
        %v4776 = vunpack.c.l.b16 %v1378
        %v4777 = vunpack.c.h.b16 %v1378
        %v4778 = vunpack.c.l.b16 %v1379
        %v4779 = vunpack.c.h.b16 %v1379
        %v4780 = vunpack.c.l.b16 %v1380
        %v4781 = vunpack.c.h.b16 %v1380
        %v4782 = vunpack.c.l.b16 %v1381
        %v4783 = vunpack.c.h.b16 %v1381
        %v4784 = vunpack.c.l.b16 %v1382
        %v4785 = vunpack.c.h.b16 %v1382
        %v4786 = vunpack.c.l.b16 %v1383
        %v4787 = vunpack.c.h.b16 %v1383
        %v4788 = vunpack.c.l.b16 %v1384
        %v4789 = vunpack.c.h.b16 %v1384
        %v4790 = vunpack.c.l.b16 %v1385
        %v4791 = vunpack.c.h.b16 %v1385
        %v4792 = vunpack.c.l.b16 %v1386
        %v4793 = vunpack.c.h.b16 %v1386
        %v4794 = vunpack.c.l.b16 %v1387
        %v4795 = vunpack.c.h.b16 %v1387
        %v4796 = vunpack.c.l.b16 %v1388
        %v4797 = vunpack.c.h.b16 %v1388
        %v4798 = vunpack.c.l.b16 %v1389
        %v4799 = vunpack.c.h.b16 %v1389
        %v4800 = vunpack.c.l.b16 %v1390
        %v4801 = vunpack.c.h.b16 %v1390
        %v4802 = vunpack.c.l.b16 %v1391
        %v4803 = vunpack.c.h.b16 %v1391
        %v4804 = vunpack.c.l.b16 %v1392
        %v4805 = vunpack.c.h.b16 %v1392
        %v4806 = vunpack.c.l.b16 %v1393
        %v4807 = vunpack.c.h.b16 %v1393
        %v4808 = vunpack.c.l.b16 %v1394
        %v4809 = vunpack.c.h.b16 %v1394
        %v4810 = vunpack.c.l.b16 %v1395
        %v4811 = vunpack.c.h.b16 %v1395
        %v4812 = vunpack.c.l.b16 %v1396
        %v4813 = vunpack.c.h.b16 %v1396
        %v4814 = vunpack.c.l.b16 %v1397
        %v4815 = vunpack.c.h.b16 %v1397
        %v4816 = vunpack.c.l.b16 %v1398
        %v4817 = vunpack.c.h.b16 %v1398
        %v4818 = vunpack.c.l.b16 %v1399
        %v4819 = vunpack.c.h.b16 %v1399
        %v4820 = vunpack.c.l.b16 %v1400
        %v4821 = vunpack.c.h.b16 %v1400
        %v4822 = vunpack.c.l.b16 %v1401
        %v4823 = vunpack.c.h.b16 %v1401
        %v4824 = vunpack.c.l.b16 %v1402
        %v4825 = vunpack.c.h.b16 %v1402
        %v4826 = vunpack.c.l.b16 %v1403
        %v4827 = vunpack.c.h.b16 %v1403
        %v4828 = vunpack.c.l.b16 %v1404
        %v4829 = vunpack.c.h.b16 %v1404
        %v4830 = vunpack.c.l.b16 %v1405
        %v4831 = vunpack.c.h.b16 %v1405
        %v4832 = vunpack.c.l.b16 %v1406
        %v4833 = vunpack.c.h.b16 %v1406
        %v4834 = vunpack.c.l.b16 %v1407
        %v4835 = vunpack.c.h.b16 %v1407
        %v4836 = vunpack.c.l.b16 %v1408
        %v4837 = vunpack.c.h.b16 %v1408
        %v4838 = vunpack.c.l.b16 %v1409
        %v4839 = vunpack.c.h.b16 %v1409
        %v4840 = vunpack.c.l.b16 %v1410
        %v4841 = vunpack.c.h.b16 %v1410
        %v4842 = vunpack.c.l.b16 %v1411
        %v4843 = vunpack.c.h.b16 %v1411
        %v4844 = vunpack.c.l.b16 %v1412
        %v4845 = vunpack.c.h.b16 %v1412
        %v4846 = vunpack.c.l.b16 %v1413
        %v4847 = vunpack.c.h.b16 %v1413
        %v4848 = vunpack.c.l.b16 %v1414
        %v4849 = vunpack.c.h.b16 %v1414
        %v4850 = vunpack.c.l.b16 %v1415
        %v4851 = vunpack.c.h.b16 %v1415
        %v4852 = vunpack.c.l.b16 %v1416
        %v4853 = vunpack.c.h.b16 %v1416
        %v4854 = vunpack.c.l.b16 %v1417
        %v4855 = vunpack.c.h.b16 %v1417
        %v4856 = vunpack.c.l.b16 %v1418
        %v4857 = vunpack.c.h.b16 %v1418
        %v4858 = vunpack.c.l.b16 %v1419
        %v4859 = vunpack.c.h.b16 %v1419
        %v4860 = vunpack.c.l.b16 %v1420
        %v4861 = vunpack.c.h.b16 %v1420
        %v4862 = vunpack.c.l.b16 %v1421
        %v4863 = vunpack.c.h.b16 %v1421
        %v4864 = vunpack.c.l.b16 %v1422
        %v4865 = vunpack.c.h.b16 %v1422
        %v4866 = vunpack.c.l.b16 %v1423
        %v4867 = vunpack.c.h.b16 %v1423
        %v4868 = vunpack.c.l.b16 %v1424
        %v4869 = vunpack.c.h.b16 %v1424
        %v4870 = vunpack.c.l.b16 %v1425
        %v4871 = vunpack.c.h.b16 %v1425
        %v4872 = vunpack.c.l.b16 %v1426
        %v4873 = vunpack.c.h.b16 %v1426
        %v4874 = vunpack.c.l.b16 %v1427
        %v4875 = vunpack.c.h.b16 %v1427
        %v4876 = vunpack.c.l.b16 %v1428
        %v4877 = vunpack.c.h.b16 %v1428
        %v4878 = vunpack.c.l.b16 %v1429
        %v4879 = vunpack.c.h.b16 %v1429
        %v4880 = vunpack.c.l.b16 %v1430
        %v4881 = vunpack.c.h.b16 %v1430
        %v4882 = vunpack.c.l.b16 %v1431
        %v4883 = vunpack.c.h.b16 %v1431
        %v4884 = vunpack.c.l.b16 %v1432
        %v4885 = vunpack.c.h.b16 %v1432
        %v4886 = vunpack.c.l.b16 %v1433
        %v4887 = vunpack.c.h.b16 %v1433
        %v4888 = vunpack.c.l.b16 %v1434
        %v4889 = vunpack.c.h.b16 %v1434
        %v4890 = vunpack.c.l.b16 %v1435
        %v4891 = vunpack.c.h.b16 %v1435
        %v4892 = vunpack.c.l.b16 %v1436
        %v4893 = vunpack.c.h.b16 %v1436
        %v4894 = vunpack.c.l.b16 %v1437
        %v4895 = vunpack.c.h.b16 %v1437
        %v4896 = vunpack.c.l.b16 %v1438
        %v4897 = vunpack.c.h.b16 %v1438
        %v4898 = vunpack.c.l.b16 %v1439
        %v4899 = vunpack.c.h.b16 %v1439
        %v4900 = vunpack.c.l.b16 %v1440
        %v4901 = vunpack.c.h.b16 %v1440
        %v4902 = vunpack.c.l.b16 %v1441
        %v4903 = vunpack.c.h.b16 %v1441
        %v4904 = vunpack.c.l.b16 %v1442
        %v4905 = vunpack.c.h.b16 %v1442
        %v4906 = vunpack.c.l.b16 %v1443
        %v4907 = vunpack.c.h.b16 %v1443
        %v4908 = vunpack.c.l.b16 %v1444
        %v4909 = vunpack.c.h.b16 %v1444
        %v4910 = vunpack.c.l.b16 %v1445
        %v4911 = vunpack.c.h.b16 %v1445
        %v4912 = vunpack.c.l.b16 %v1446
        %v4913 = vunpack.c.h.b16 %v1446
        %v4914 = vunpack.c.l.b16 %v1447
        %v4915 = vunpack.c.h.b16 %v1447
        %v4916 = vunpack.c.l.b16 %v1448
        %v4917 = vunpack.c.h.b16 %v1448
        %v4918 = vunpack.c.l.b16 %v1449
        %v4919 = vunpack.c.h.b16 %v1449
        %v4920 = vunpack.c.l.b16 %v1450
        %v4921 = vunpack.c.h.b16 %v1450
        %v4922 = vunpack.c.l.b16 %v1451
        %v4923 = vunpack.c.h.b16 %v1451
        %v4924 = vunpack.c.l.b16 %v1452
        %v4925 = vunpack.c.h.b16 %v1452
        %v4926 = vunpack.c.l.b16 %v1453
        %v4927 = vunpack.c.h.b16 %v1453
        %v4928 = vunpack.c.l.b16 %v1454
        %v4929 = vunpack.c.h.b16 %v1454
        %v4930 = vunpack.c.l.b16 %v1455
        %v4931 = vunpack.c.h.b16 %v1455
        %v4932 = vunpack.c.l.b16 %v1456
        %v4933 = vunpack.c.h.b16 %v1456
        %v4934 = vunpack.c.l.b16 %v1457
        %v4935 = vunpack.c.h.b16 %v1457
        %v4936 = vunpack.c.l.b16 %v1458
        %v4937 = vunpack.c.h.b16 %v1458
        %v4938 = vunpack.c.l.b16 %v1459
        %v4939 = vunpack.c.h.b16 %v1459
        %v4940 = vunpack.c.l.b16 %v1460
        %v4941 = vunpack.c.h.b16 %v1460
        %v4942 = vunpack.c.l.b16 %v1461
        %v4943 = vunpack.c.h.b16 %v1461
        %v4944 = vunpack.c.l.b16 %v1462
        %v4945 = vunpack.c.h.b16 %v1462
        %v4946 = vunpack.c.l.b16 %v1463
        %v4947 = vunpack.c.h.b16 %v1463
        %v4948 = vunpack.c.l.b16 %v1464
        %v4949 = vunpack.c.h.b16 %v1464
        %v4950 = vunpack.c.l.b16 %v1465
        %v4951 = vunpack.c.h.b16 %v1465
        %v4952 = vunpack.c.l.b16 %v1466
        %v4953 = vunpack.c.h.b16 %v1466
        %v4954 = vunpack.c.l.b16 %v1467
        %v4955 = vunpack.c.h.b16 %v1467
        %v4956 = vunpack.c.l.b16 %v1468
        %v4957 = vunpack.c.h.b16 %v1468
        %v4958 = vunpack.c.l.b16 %v1469
        %v4959 = vunpack.c.h.b16 %v1469
        %v4960 = vunpack.c.l.b16 %v1470
        %v4961 = vunpack.c.h.b16 %v1470
        %v4962 = vunpack.c.l.b16 %v1471
        %v4963 = vunpack.c.h.b16 %v1471
        %v4964 = vunpack.c.l.b16 %v1472
        %v4965 = vunpack.c.h.b16 %v1472
        %v4966 = vunpack.c.l.b16 %v1473
        %v4967 = vunpack.c.h.b16 %v1473
        %v4968 = vunpack.c.l.b16 %v1474
        %v4969 = vunpack.c.h.b16 %v1474
        %v4970 = vunpack.c.l.b16 %v1475
        %v4971 = vunpack.c.h.b16 %v1475
        %v4972 = vunpack.c.l.b16 %v1476
        %v4973 = vunpack.c.h.b16 %v1476
        %v4974 = vunpack.c.l.b16 %v1477
        %v4975 = vunpack.c.h.b16 %v1477
        %v4976 = vunpack.c.l.b16 %v1478
        %v4977 = vunpack.c.h.b16 %v1478
        %v4978 = vunpack.c.l.b16 %v1479
        %v4979 = vunpack.c.h.b16 %v1479
        %v4980 = vunpack.c.l.b16 %v1480
        %v4981 = vunpack.c.h.b16 %v1480
        %v4982 = vunpack.c.l.b16 %v1481
        %v4983 = vunpack.c.h.b16 %v1481
        %v4984 = vunpack.c.l.b16 %v1482
        %v4985 = vunpack.c.h.b16 %v1482
        %v4986 = vunpack.c.l.b16 %v1483
        %v4987 = vunpack.c.h.b16 %v1483
        %v4988 = vunpack.c.l.b16 %v1484
        %v4989 = vunpack.c.h.b16 %v1484
        %v4990 = vunpack.c.l.b16 %v1485
        %v4991 = vunpack.c.h.b16 %v1485
        %v4992 = vunpack.c.l.b16 %v1486
        %v4993 = vunpack.c.h.b16 %v1486
        %v4994 = vunpack.c.l.b16 %v1487
        %v4995 = vunpack.c.h.b16 %v1487
        %v4996 = vunpack.c.l.b16 %v1488
        %v4997 = vunpack.c.h.b16 %v1488
        %v4998 = vunpack.c.l.b16 %v1489
        %v4999 = vunpack.c.h.b16 %v1489
        %v5000 = vunpack.c.l.b16 %v1490
        %v5001 = vunpack.c.h.b16 %v1490
        %v5002 = vunpack.c.l.b16 %v1491
        %v5003 = vunpack.c.h.b16 %v1491
        %v5004 = vunpack.c.l.b16 %v1492
        %v5005 = vunpack.c.h.b16 %v1492
        %v5006 = vunpack.c.l.b16 %v1493
        %v5007 = vunpack.c.h.b16 %v1493
        %v5008 = vunpack.c.l.b16 %v1494
        %v5009 = vunpack.c.h.b16 %v1494
        %v5010 = vunpack.c.l.b16 %v1495
        %v5011 = vunpack.c.h.b16 %v1495
        %v5012 = vunpack.c.l.b16 %v1496
        %v5013 = vunpack.c.h.b16 %v1496
        %v5014 = vunpack.c.l.b16 %v1497
        %v5015 = vunpack.c.h.b16 %v1497
        %v5016 = vunpack.c.l.b16 %v1498
        %v5017 = vunpack.c.h.b16 %v1498
        %v5018 = vunpack.c.l.b16 %v1499
        %v5019 = vunpack.c.h.b16 %v1499
        %v5020 = vunpack.c.l.b16 %v1500
        %v5021 = vunpack.c.h.b16 %v1500
        %v5022 = vunpack.c.l.b16 %v1501
        %v5023 = vunpack.c.h.b16 %v1501
        %v5024 = vunpack.c.l.b16 %v1502
        %v5025 = vunpack.c.h.b16 %v1502
        %v5026 = vunpack.c.l.b16 %v1503
        %v5027 = vunpack.c.h.b16 %v1503
        %v5028 = vunpack.c.l.b16 %v1504
        %v5029 = vunpack.c.h.b16 %v1504
        %v5030 = vunpack.c.l.b16 %v1505
        %v5031 = vunpack.c.h.b16 %v1505
        %v5032 = vunpack.c.l.b16 %v1506
        %v5033 = vunpack.c.h.b16 %v1506
        %v5034 = vunpack.c.l.b16 %v1507
        %v5035 = vunpack.c.h.b16 %v1507
        %v5036 = vunpack.c.l.b16 %v1508
        %v5037 = vunpack.c.h.b16 %v1508
        %v5038 = vunpack.c.l.b16 %v1509
        %v5039 = vunpack.c.h.b16 %v1509
        %v5040 = vunpack.c.l.b16 %v1510
        %v5041 = vunpack.c.h.b16 %v1510
        %v5042 = vunpack.c.l.b16 %v1511
        %v5043 = vunpack.c.h.b16 %v1511
        %v5044 = vunpack.c.l.b16 %v1512
        %v5045 = vunpack.c.h.b16 %v1512
        %v5046 = vunpack.c.l.b16 %v1513
        %v5047 = vunpack.c.h.b16 %v1513
        %v5048 = vunpack.c.l.b16 %v1514
        %v5049 = vunpack.c.h.b16 %v1514
        %v5050 = vunpack.c.l.b16 %v1515
        %v5051 = vunpack.c.h.b16 %v1515
        %v5052 = vunpack.c.l.b16 %v1516
        %v5053 = vunpack.c.h.b16 %v1516
        %v5054 = vunpack.c.l.b16 %v1517
        %v5055 = vunpack.c.h.b16 %v1517
        %v5056 = vunpack.c.l.b16 %v1518
        %v5057 = vunpack.c.h.b16 %v1518
        %v5058 = vunpack.c.l.b16 %v1519
        %v5059 = vunpack.c.h.b16 %v1519
        %v5060 = vunpack.c.l.b16 %v1520
        %v5061 = vunpack.c.h.b16 %v1520
        %v5062 = vunpack.c.l.b16 %v1521
        %v5063 = vunpack.c.h.b16 %v1521
        %v5064 = vunpack.c.l.b16 %v1522
        %v5065 = vunpack.c.h.b16 %v1522
        %v5066 = vunpack.c.l.b16 %v1523
        %v5067 = vunpack.c.h.b16 %v1523
        %v5068 = vunpack.c.l.b16 %v1524
        %v5069 = vunpack.c.h.b16 %v1524
        %v5070 = vunpack.c.l.b16 %v1525
        %v5071 = vunpack.c.h.b16 %v1525
        %v5072 = vunpack.c.l.b16 %v1526
        %v5073 = vunpack.c.h.b16 %v1526
        %v5074 = vunpack.c.l.b16 %v1527
        %v5075 = vunpack.c.h.b16 %v1527
        %v5076 = vunpack.c.l.b16 %v1528
        %v5077 = vunpack.c.h.b16 %v1528
        %v5078 = vunpack.c.l.b16 %v1529
        %v5079 = vunpack.c.h.b16 %v1529
        %v5080 = vunpack.c.l.b16 %v1530
        %v5081 = vunpack.c.h.b16 %v1530
        %v5082 = vunpack.c.l.b16 %v1531
        %v5083 = vunpack.c.h.b16 %v1531
        %v5084 = vunpack.c.l.b16 %v1532
        %v5085 = vunpack.c.h.b16 %v1532
        %v5086 = vunpack.c.l.b16 %v1533
        %v5087 = vunpack.c.h.b16 %v1533
        %v5088 = vunpack.c.l.b16 %v1534
        %v5089 = vunpack.c.h.b16 %v1534
        %v5090 = vunpack.c.l.b16 %v1535
        %v5091 = vunpack.c.h.b16 %v1535
        %v5092 = vunpack.c.l.b16 %v1536
        %v5093 = vunpack.c.h.b16 %v1536
        %v5094 = vunpack.c.l.b16 %v1537
        %v5095 = vunpack.c.h.b16 %v1537
        %v5096 = vunpack.c.l.b16 %v1538
        %v5097 = vunpack.c.h.b16 %v1538
        %v5098 = vunpack.c.l.b16 %v1539
        %v5099 = vunpack.c.h.b16 %v1539
        %v5100 = vunpack.c.l.b16 %v1540
        %v5101 = vunpack.c.h.b16 %v1540
        %v5102 = vunpack.c.l.b16 %v1541
        %v5103 = vunpack.c.h.b16 %v1541
        %v5104 = vunpack.c.l.b16 %v1542
        %v5105 = vunpack.c.h.b16 %v1542
        %v5106 = vunpack.c.l.b16 %v1543
        %v5107 = vunpack.c.h.b16 %v1543
        %v5108 = vunpack.c.l.b16 %v1544
        %v5109 = vunpack.c.h.b16 %v1544
        %v5110 = vunpack.c.l.b16 %v1545
        %v5111 = vunpack.c.h.b16 %v1545
        %v5112 = vunpack.c.l.b16 %v1546
        %v5113 = vunpack.c.h.b16 %v1546
        %v5114 = vunpack.c.l.b16 %v1547
        %v5115 = vunpack.c.h.b16 %v1547
        %v5116 = vunpack.c.l.b16 %v1548
        %v5117 = vunpack.c.h.b16 %v1548
        %v5118 = vunpack.c.l.b16 %v1549
        %v5119 = vunpack.c.h.b16 %v1549
        %v5120 = vunpack.c.l.b16 %v1550
        %v5121 = vunpack.c.h.b16 %v1550
        %v5122 = vunpack.c.l.b16 %v1551
        %v5123 = vunpack.c.h.b16 %v1551
        %v5124 = vunpack.c.l.b16 %v1552
        %v5125 = vunpack.c.h.b16 %v1552
        %v5126 = vunpack.c.l.b16 %v1553
        %v5127 = vunpack.c.h.b16 %v1553
        %v5128 = vunpack.c.l.b16 %v1554
        %v5129 = vunpack.c.h.b16 %v1554
        %v5130 = vunpack.c.l.b16 %v1555
        %v5131 = vunpack.c.h.b16 %v1555
        %v5132 = vunpack.c.l.b16 %v1556
        %v5133 = vunpack.c.h.b16 %v1556
        %v5134 = vunpack.c.l.b16 %v1557
        %v5135 = vunpack.c.h.b16 %v1557
        %v5136 = vunpack.c.l.b16 %v1558
        %v5137 = vunpack.c.h.b16 %v1558
        %v5138 = vunpack.c.l.b16 %v1559
        %v5139 = vunpack.c.h.b16 %v1559
        %v5140 = vunpack.c.l.b16 %v1560
        %v5141 = vunpack.c.h.b16 %v1560
        %v5142 = vunpack.c.l.b16 %v1561
        %v5143 = vunpack.c.h.b16 %v1561
        %v5144 = vunpack.c.l.b16 %v1562
        %v5145 = vunpack.c.h.b16 %v1562
        %v5146 = vunpack.c.l.b16 %v1563
        %v5147 = vunpack.c.h.b16 %v1563
        %v5148 = vunpack.c.l.b16 %v1564
        %v5149 = vunpack.c.h.b16 %v1564
        %v5150 = vunpack.c.l.b16 %v1565
        %v5151 = vunpack.c.h.b16 %v1565
        %v5152 = vunpack.c.l.b16 %v1566
        %v5153 = vunpack.c.h.b16 %v1566
        %v5154 = vunpack.c.l.b16 %v1567
        %v5155 = vunpack.c.h.b16 %v1567
        %v5156 = vunpack.c.l.b16 %v1568
        %v5157 = vunpack.c.h.b16 %v1568
        %v5158 = vunpack.c.l.b16 %v1569
        %v5159 = vunpack.c.h.b16 %v1569
        %v5160 = vunpack.c.l.b16 %v1570
        %v5161 = vunpack.c.h.b16 %v1570
        %v5162 = vunpack.c.l.b16 %v1571
        %v5163 = vunpack.c.h.b16 %v1571
        %v5164 = vunpack.c.l.b16 %v1572
        %v5165 = vunpack.c.h.b16 %v1572
        %v5166 = vunpack.c.l.b16 %v1573
        %v5167 = vunpack.c.h.b16 %v1573
        %v5168 = vunpack.c.l.b16 %v1574
        %v5169 = vunpack.c.h.b16 %v1574
        %v5170 = vunpack.c.l.b16 %v1575
        %v5171 = vunpack.c.h.b16 %v1575
        %v5172 = vunpack.c.l.b16 %v1576
        %v5173 = vunpack.c.h.b16 %v1576
        %v5174 = vunpack.c.l.b16 %v1577
        %v5175 = vunpack.c.h.b16 %v1577
        %v5176 = vunpack.c.l.b16 %v1578
        %v5177 = vunpack.c.h.b16 %v1578
        %v5178 = vunpack.c.l.b16 %v1579
        %v5179 = vunpack.c.h.b16 %v1579
        %v5180 = vunpack.c.l.b16 %v1580
        %v5181 = vunpack.c.h.b16 %v1580
        %v5182 = vunpack.c.l.b16 %v1581
        %v5183 = vunpack.c.h.b16 %v1581
        %v5184 = vunpack.c.l.b16 %v1582
        %v5185 = vunpack.c.h.b16 %v1582
        %v5186 = vunpack.c.l.b16 %v1583
        %v5187 = vunpack.c.h.b16 %v1583
        %v5188 = vunpack.c.l.b16 %v1584
        %v5189 = vunpack.c.h.b16 %v1584
        %v5190 = vunpack.c.l.b16 %v1585
        %v5191 = vunpack.c.h.b16 %v1585
        %v5192 = vunpack.c.l.b16 %v1586
        %v5193 = vunpack.c.h.b16 %v1586
        %v5194 = vunpack.c.l.b16 %v1587
        %v5195 = vunpack.c.h.b16 %v1587
        %v5196 = vunpack.c.l.b16 %v1588
        %v5197 = vunpack.c.h.b16 %v1588
        %v5198 = vunpack.c.l.b16 %v1589
        %v5199 = vunpack.c.h.b16 %v1589
        %v5200 = vunpack.c.l.b16 %v1590
        %v5201 = vunpack.c.h.b16 %v1590
        %v5202 = vunpack.c.l.b16 %v1591
        %v5203 = vunpack.c.h.b16 %v1591
        %v5204 = vunpack.c.l.b16 %v1592
        %v5205 = vunpack.c.h.b16 %v1592
        %v5206 = vunpack.c.l.b16 %v1593
        %v5207 = vunpack.c.h.b16 %v1593
        %v5208 = vunpack.c.l.b16 %v1594
        %v5209 = vunpack.c.h.b16 %v1594
        %v5210 = vunpack.c.l.b16 %v1595
        %v5211 = vunpack.c.h.b16 %v1595
        %v5212 = vunpack.c.l.b16 %v1596
        %v5213 = vunpack.c.h.b16 %v1596
        %v5214 = vunpack.c.l.b16 %v1597
        %v5215 = vunpack.c.h.b16 %v1597
        %v5216 = vunpack.c.l.b16 %v1598
        %v5217 = vunpack.c.h.b16 %v1598
        %v5218 = vunpack.c.l.b16 %v1599
        %v5219 = vunpack.c.h.b16 %v1599
        %v5220 = vunpack.c.l.b16 %v1600
        %v5221 = vunpack.c.h.b16 %v1600
        %v5222 = vunpack.c.l.b16 %v1601
        %v5223 = vunpack.c.h.b16 %v1601
        %v5224 = vunpack.c.l.b16 %v1602
        %v5225 = vunpack.c.h.b16 %v1602
        %v5226 = vunpack.c.l.b16 %v1603
        %v5227 = vunpack.c.h.b16 %v1603
        %v5228 = vunpack.c.l.b16 %v1604
        %v5229 = vunpack.c.h.b16 %v1604
        %v5230 = vunpack.c.l.b16 %v1605
        %v5231 = vunpack.c.h.b16 %v1605
        %v5232 = vunpack.c.l.b16 %v1606
        %v5233 = vunpack.c.h.b16 %v1606
        %v5234 = vunpack.c.l.b16 %v1607
        %v5235 = vunpack.c.h.b16 %v1607
        %v5236 = vunpack.c.l.b16 %v1608
        %v5237 = vunpack.c.h.b16 %v1608
        %v5238 = vunpack.c.l.b16 %v1609
        %v5239 = vunpack.c.h.b16 %v1609
        %v5240 = vunpack.c.l.b16 %v1610
        %v5241 = vunpack.c.h.b16 %v1610
        %v5242 = vunpack.c.l.b16 %v1611
        %v5243 = vunpack.c.h.b16 %v1611
        %v5244 = vunpack.c.l.b16 %v1612
        %v5245 = vunpack.c.h.b16 %v1612
        %v5246 = vunpack.c.l.b16 %v1613
        %v5247 = vunpack.c.h.b16 %v1613
        %v5248 = vunpack.c.l.b16 %v1614
        %v5249 = vunpack.c.h.b16 %v1614
        %v5250 = vunpack.c.l.b16 %v1615
        %v5251 = vunpack.c.h.b16 %v1615
        %v5252 = vpack.c.b16 %v2952, %v2948
        %v5253 = vpack.c.b16 %v2953, %v2949
        %v5254 = vpack.c.b16 %v2954, %v2950
        %v5255 = vpack.c.b16 %v2955, %v2951
        %v5256 = vpack.c.b16 %v2960, %v2956
        %v5257 = vpack.c.b16 %v2961, %v2957
        %v5258 = vpack.c.b16 %v2962, %v2958
        %v5259 = vpack.c.b16 %v2963, %v2959
        %v5260 = vpack.c.b16 %v2968, %v2964
        %v5261 = vpack.c.b16 %v2969, %v2965
        %v5262 = vpack.c.b16 %v2970, %v2966
        %v5263 = vpack.c.b16 %v2971, %v2967
        %v5264 = vpack.c.b16 %v2976, %v2972
        %v5265 = vpack.c.b16 %v2977, %v2973
        %v5266 = vpack.c.b16 %v2978, %v2974
        %v5267 = vpack.c.b16 %v2979, %v2975
        %v5268 = vpack.c.b16 %v2984, %v2980
        %v5269 = vpack.c.b16 %v2985, %v2981
        %v5270 = vpack.c.b16 %v2986, %v2982
        %v5271 = vpack.c.b16 %v2987, %v2983
        %v5272 = vpack.c.b16 %v2992, %v2988
        %v5273 = vpack.c.b16 %v2993, %v2989
        %v5274 = vpack.c.b16 %v2994, %v2990
        %v5275 = vpack.c.b16 %v2995, %v2991
        %v5276 = vpack.c.b16 %v3000, %v2996
        %v5277 = vpack.c.b16 %v3001, %v2997
        %v5278 = vpack.c.b16 %v3002, %v2998
        %v5279 = vpack.c.b16 %v3003, %v2999
        %v5280 = vpack.c.b16 %v3008, %v3004
        %v5281 = vpack.c.b16 %v3009, %v3005
        %v5282 = vpack.c.b16 %v3010, %v3006
        %v5283 = vpack.c.b16 %v3011, %v3007
        %v5284 = vpack.c.b16 %v3016, %v3012
        %v5285 = vpack.c.b16 %v3017, %v3013
        %v5286 = vpack.c.b16 %v3018, %v3014
        %v5287 = vpack.c.b16 %v3019, %v3015
        %v5288 = vpack.c.b16 %v3024, %v3020
        %v5289 = vpack.c.b16 %v3025, %v3021
        %v5290 = vpack.c.b16 %v3026, %v3022
        %v5291 = vpack.c.b16 %v3027, %v3023
        %v5292 = vpack.c.b16 %v3032, %v3028
        %v5293 = vpack.c.b16 %v3033, %v3029
        %v5294 = vpack.c.b16 %v3034, %v3030
        %v5295 = vpack.c.b16 %v3035, %v3031
        %v5296 = vpack.c.b16 %v3040, %v3036
        %v5297 = vpack.c.b16 %v3041, %v3037
        %v5298 = vpack.c.b16 %v3042, %v3038
        %v5299 = vpack.c.b16 %v3043, %v3039
        %v5300 = vpack.c.b16 %v3048, %v3044
        %v5301 = vpack.c.b16 %v3049, %v3045
        %v5302 = vpack.c.b16 %v3050, %v3046
        %v5303 = vpack.c.b16 %v3051, %v3047
        %v5304 = vpack.c.b16 %v3056, %v3052
        %v5305 = vpack.c.b16 %v3057, %v3053
        %v5306 = vpack.c.b16 %v3058, %v3054
        %v5307 = vpack.c.b16 %v3059, %v3055
        %v5308 = vpack.c.b16 %v3064, %v3060
        %v5309 = vpack.c.b16 %v3065, %v3061
        %v5310 = vpack.c.b16 %v3066, %v3062
        %v5311 = vpack.c.b16 %v3067, %v3063
        %v5312 = vpack.c.b16 %v3072, %v3068
        %v5313 = vpack.c.b16 %v3073, %v3069
        %v5314 = vpack.c.b16 %v3074, %v3070
        %v5315 = vpack.c.b16 %v3075, %v3071
        %v5316 = vpack.c.b16 %v3080, %v3076
        %v5317 = vpack.c.b16 %v3081, %v3077
        %v5318 = vpack.c.b16 %v3082, %v3078
        %v5319 = vpack.c.b16 %v3083, %v3079
        %v5320 = vpack.c.b16 %v3088, %v3084
        %v5321 = vpack.c.b16 %v3089, %v3085
        %v5322 = vpack.c.b16 %v3090, %v3086
        %v5323 = vpack.c.b16 %v3091, %v3087
        %v5324 = vpack.c.b16 %v3096, %v3092
        %v5325 = vpack.c.b16 %v3097, %v3093
        %v5326 = vpack.c.b16 %v3098, %v3094
        %v5327 = vpack.c.b16 %v3099, %v3095
        %v5328 = vpack.c.b16 %v3104, %v3100
        %v5329 = vpack.c.b16 %v3105, %v3101
        %v5330 = vpack.c.b16 %v3106, %v3102
        %v5331 = vpack.c.b16 %v3107, %v3103
        %v5332 = vpack.c.b16 %v3112, %v3108
        %v5333 = vpack.c.b16 %v3113, %v3109
        %v5334 = vpack.c.b16 %v3114, %v3110
        %v5335 = vpack.c.b16 %v3115, %v3111
        %v5336 = vpack.c.b16 %v3120, %v3116
        %v5337 = vpack.c.b16 %v3121, %v3117
        %v5338 = vpack.c.b16 %v3122, %v3118
        %v5339 = vpack.c.b16 %v3123, %v3119
        %v5340 = vpack.c.b16 %v3128, %v3124
        %v5341 = vpack.c.b16 %v3129, %v3125
        %v5342 = vpack.c.b16 %v3130, %v3126
        %v5343 = vpack.c.b16 %v3131, %v3127
        %v5344 = vpack.c.b16 %v3136, %v3132
        %v5345 = vpack.c.b16 %v3137, %v3133
        %v5346 = vpack.c.b16 %v3138, %v3134
        %v5347 = vpack.c.b16 %v3139, %v3135
        %v5348 = vpack.c.b16 %v3144, %v3140
        %v5349 = vpack.c.b16 %v3145, %v3141
        %v5350 = vpack.c.b16 %v3146, %v3142
        %v5351 = vpack.c.b16 %v3147, %v3143
        %v5352 = vpack.c.b16 %v3152, %v3148
        %v5353 = vpack.c.b16 %v3153, %v3149
        %v5354 = vpack.c.b16 %v3154, %v3150
        %v5355 = vpack.c.b16 %v3155, %v3151
        %v5356 = vpack.c.b16 %v3160, %v3156
        %v5357 = vpack.c.b16 %v3161, %v3157
        %v5358 = vpack.c.b16 %v3162, %v3158
        %v5359 = vpack.c.b16 %v3163, %v3159
        %v5360 = vpack.c.b16 %v3168, %v3164
        %v5361 = vpack.c.b16 %v3169, %v3165
        %v5362 = vpack.c.b16 %v3170, %v3166
        %v5363 = vpack.c.b16 %v3171, %v3167
        %v5364 = vpack.c.b16 %v3176, %v3172
        %v5365 = vpack.c.b16 %v3177, %v3173
        %v5366 = vpack.c.b16 %v3178, %v3174
        %v5367 = vpack.c.b16 %v3179, %v3175
        %v5368 = vpack.c.b16 %v3184, %v3180
        %v5369 = vpack.c.b16 %v3185, %v3181
        %v5370 = vpack.c.b16 %v3186, %v3182
        %v5371 = vpack.c.b16 %v3187, %v3183
        %v5372 = vpack.c.b16 %v3192, %v3188
        %v5373 = vpack.c.b16 %v3193, %v3189
        %v5374 = vpack.c.b16 %v3194, %v3190
        %v5375 = vpack.c.b16 %v3195, %v3191
        %v5376 = vpack.c.b16 %v3200, %v3196
        %v5377 = vpack.c.b16 %v3201, %v3197
        %v5378 = vpack.c.b16 %v3202, %v3198
        %v5379 = vpack.c.b16 %v3203, %v3199
        %v5380 = vpack.c.b16 %v3208, %v3204
        %v5381 = vpack.c.b16 %v3209, %v3205
        %v5382 = vpack.c.b16 %v3210, %v3206
        %v5383 = vpack.c.b16 %v3211, %v3207
        %v5384 = vpack.c.b16 %v3216, %v3212
        %v5385 = vpack.c.b16 %v3217, %v3213
        %v5386 = vpack.c.b16 %v3218, %v3214
        %v5387 = vpack.c.b16 %v3219, %v3215
        %v5388 = vpack.c.b16 %v3224, %v3220
        %v5389 = vpack.c.b16 %v3225, %v3221
        %v5390 = vpack.c.b16 %v3226, %v3222
        %v5391 = vpack.c.b16 %v3227, %v3223
        %v5392 = vpack.c.b16 %v3232, %v3228
        %v5393 = vpack.c.b16 %v3233, %v3229
        %v5394 = vpack.c.b16 %v3234, %v3230
        %v5395 = vpack.c.b16 %v3235, %v3231
        %v5396 = vpack.c.b16 %v3240, %v3236
        %v5397 = vpack.c.b16 %v3241, %v3237
        %v5398 = vpack.c.b16 %v3242, %v3238
        %v5399 = vpack.c.b16 %v3243, %v3239
        %v5400 = vpack.c.b16 %v3248, %v3244
        %v5401 = vpack.c.b16 %v3249, %v3245
        %v5402 = vpack.c.b16 %v3250, %v3246
        %v5403 = vpack.c.b16 %v3251, %v3247
        %v5404 = vpack.c.b16 %v3256, %v3252
        %v5405 = vpack.c.b16 %v3257, %v3253
        %v5406 = vpack.c.b16 %v3258, %v3254
        %v5407 = vpack.c.b16 %v3259, %v3255
        %v5408 = vpack.c.b16 %v3264, %v3260
        %v5409 = vpack.c.b16 %v3265, %v3261
        %v5410 = vpack.c.b16 %v3266, %v3262
        %v5411 = vpack.c.b16 %v3267, %v3263
        %v5412 = vpack.c.b16 %v3272, %v3268
        %v5413 = vpack.c.b16 %v3273, %v3269
        %v5414 = vpack.c.b16 %v3274, %v3270
        %v5415 = vpack.c.b16 %v3275, %v3271
        %v5416 = vpack.c.b16 %v3280, %v3276
        %v5417 = vpack.c.b16 %v3281, %v3277
        %v5418 = vpack.c.b16 %v3282, %v3278
        %v5419 = vpack.c.b16 %v3283, %v3279
        %v5420 = vpack.c.b16 %v3288, %v3284
        %v5421 = vpack.c.b16 %v3289, %v3285
        %v5422 = vpack.c.b16 %v3290, %v3286
        %v5423 = vpack.c.b16 %v3291, %v3287
        %v5424 = vpack.c.b16 %v3296, %v3292
        %v5425 = vpack.c.b16 %v3297, %v3293
        %v5426 = vpack.c.b16 %v3298, %v3294
        %v5427 = vpack.c.b16 %v3299, %v3295
        %v5428 = vpack.c.b16 %v3304, %v3300
        %v5429 = vpack.c.b16 %v3305, %v3301
        %v5430 = vpack.c.b16 %v3306, %v3302
        %v5431 = vpack.c.b16 %v3307, %v3303
        %v5432 = vpack.c.b16 %v3312, %v3308
        %v5433 = vpack.c.b16 %v3313, %v3309
        %v5434 = vpack.c.b16 %v3314, %v3310
        %v5435 = vpack.c.b16 %v3315, %v3311
        %v5436 = vpack.c.b16 %v3320, %v3316
        %v5437 = vpack.c.b16 %v3321, %v3317
        %v5438 = vpack.c.b16 %v3322, %v3318
        %v5439 = vpack.c.b16 %v3323, %v3319
        %v5440 = vpack.c.b16 %v3328, %v3324
        %v5441 = vpack.c.b16 %v3329, %v3325
        %v5442 = vpack.c.b16 %v3330, %v3326
        %v5443 = vpack.c.b16 %v3331, %v3327
        %v5444 = vpack.c.b16 %v3336, %v3332
        %v5445 = vpack.c.b16 %v3337, %v3333
        %v5446 = vpack.c.b16 %v3338, %v3334
        %v5447 = vpack.c.b16 %v3339, %v3335
        %v5448 = vpack.c.b16 %v3344, %v3340
        %v5449 = vpack.c.b16 %v3345, %v3341
        %v5450 = vpack.c.b16 %v3346, %v3342
        %v5451 = vpack.c.b16 %v3347, %v3343
        %v5452 = vpack.c.b16 %v3352, %v3348
        %v5453 = vpack.c.b16 %v3353, %v3349
        %v5454 = vpack.c.b16 %v3354, %v3350
        %v5455 = vpack.c.b16 %v3355, %v3351
        %v5456 = vpack.c.b16 %v3360, %v3356
        %v5457 = vpack.c.b16 %v3361, %v3357
        %v5458 = vpack.c.b16 %v3362, %v3358
        %v5459 = vpack.c.b16 %v3363, %v3359
        %v5460 = vpack.c.b16 %v3368, %v3364
        %v5461 = vpack.c.b16 %v3369, %v3365
        %v5462 = vpack.c.b16 %v3370, %v3366
        %v5463 = vpack.c.b16 %v3371, %v3367
        %v5464 = vpack.c.b16 %v3376, %v3372
        %v5465 = vpack.c.b16 %v3377, %v3373
        %v5466 = vpack.c.b16 %v3378, %v3374
        %v5467 = vpack.c.b16 %v3379, %v3375
        %v5468 = vpack.c.b16 %v3384, %v3380
        %v5469 = vpack.c.b16 %v3385, %v3381
        %v5470 = vpack.c.b16 %v3386, %v3382
        %v5471 = vpack.c.b16 %v3387, %v3383
        %v5472 = vpack.c.b16 %v3392, %v3388
        %v5473 = vpack.c.b16 %v3393, %v3389
        %v5474 = vpack.c.b16 %v3394, %v3390
        %v5475 = vpack.c.b16 %v3395, %v3391
        %v5476 = vpack.c.b16 %v3400, %v3396
        %v5477 = vpack.c.b16 %v3401, %v3397
        %v5478 = vpack.c.b16 %v3402, %v3398
        %v5479 = vpack.c.b16 %v3403, %v3399
        %v5480 = vpack.c.b16 %v3408, %v3404
        %v5481 = vpack.c.b16 %v3409, %v3405
        %v5482 = vpack.c.b16 %v3410, %v3406
        %v5483 = vpack.c.b16 %v3411, %v3407
        %v5484 = vpack.c.b16 %v3416, %v3412
        %v5485 = vpack.c.b16 %v3417, %v3413
        %v5486 = vpack.c.b16 %v3418, %v3414
        %v5487 = vpack.c.b16 %v3419, %v3415
        %v5488 = vpack.c.b16 %v3424, %v3420
        %v5489 = vpack.c.b16 %v3425, %v3421
        %v5490 = vpack.c.b16 %v3426, %v3422
        %v5491 = vpack.c.b16 %v3427, %v3423
        %v5492 = vpack.c.b16 %v3432, %v3428
        %v5493 = vpack.c.b16 %v3433, %v3429
        %v5494 = vpack.c.b16 %v3434, %v3430
        %v5495 = vpack.c.b16 %v3435, %v3431
        %v5496 = vpack.c.b16 %v3440, %v3436
        %v5497 = vpack.c.b16 %v3441, %v3437
        %v5498 = vpack.c.b16 %v3442, %v3438
        %v5499 = vpack.c.b16 %v3443, %v3439
        %v5500 = vpack.c.b16 %v3448, %v3444
        %v5501 = vpack.c.b16 %v3449, %v3445
        %v5502 = vpack.c.b16 %v3450, %v3446
        %v5503 = vpack.c.b16 %v3451, %v3447
        %v5504 = vpack.c.b16 %v3456, %v3452
        %v5505 = vpack.c.b16 %v3457, %v3453
        %v5506 = vpack.c.b16 %v3458, %v3454
        %v5507 = vpack.c.b16 %v3459, %v3455
        %v5508 = vpack.c.b16 %v3464, %v3460
        %v5509 = vpack.c.b16 %v3465, %v3461
        %v5510 = vpack.c.b16 %v3466, %v3462
        %v5511 = vpack.c.b16 %v3467, %v3463
        %v5512 = vpack.c.b16 %v3472, %v3468
        %v5513 = vpack.c.b16 %v3473, %v3469
        %v5514 = vpack.c.b16 %v3474, %v3470
        %v5515 = vpack.c.b16 %v3475, %v3471
        %v5516 = vpack.c.b16 %v3480, %v3476
        %v5517 = vpack.c.b16 %v3481, %v3477
        %v5518 = vpack.c.b16 %v3482, %v3478
        %v5519 = vpack.c.b16 %v3483, %v3479
        %v5520 = vpack.c.b16 %v3488, %v3484
        %v5521 = vpack.c.b16 %v3489, %v3485
        %v5522 = vpack.c.b16 %v3490, %v3486
        %v5523 = vpack.c.b16 %v3491, %v3487
        %v5524 = vpack.c.b16 %v3496, %v3492
        %v5525 = vpack.c.b16 %v3497, %v3493
        %v5526 = vpack.c.b16 %v3498, %v3494
        %v5527 = vpack.c.b16 %v3499, %v3495
        %v5528 = vpack.c.b16 %v3504, %v3500
        %v5529 = vpack.c.b16 %v3505, %v3501
        %v5530 = vpack.c.b16 %v3506, %v3502
        %v5531 = vpack.c.b16 %v3507, %v3503
        %v5532 = vpack.c.b16 %v3512, %v3508
        %v5533 = vpack.c.b16 %v3513, %v3509
        %v5534 = vpack.c.b16 %v3514, %v3510
        %v5535 = vpack.c.b16 %v3515, %v3511
        %v5536 = vpack.c.b16 %v3520, %v3516
        %v5537 = vpack.c.b16 %v3521, %v3517
        %v5538 = vpack.c.b16 %v3522, %v3518
        %v5539 = vpack.c.b16 %v3523, %v3519
        %v5540 = vpack.c.b16 %v3528, %v3524
        %v5541 = vpack.c.b16 %v3529, %v3525
        %v5542 = vpack.c.b16 %v3530, %v3526
        %v5543 = vpack.c.b16 %v3531, %v3527
        %v5544 = vpack.c.b16 %v3536, %v3532
        %v5545 = vpack.c.b16 %v3537, %v3533
        %v5546 = vpack.c.b16 %v3538, %v3534
        %v5547 = vpack.c.b16 %v3539, %v3535
        %v5548 = vpack.c.b16 %v3544, %v3540
        %v5549 = vpack.c.b16 %v3545, %v3541
        %v5550 = vpack.c.b16 %v3546, %v3542
        %v5551 = vpack.c.b16 %v3547, %v3543
        %v5552 = vpack.c.b16 %v3552, %v3548
        %v5553 = vpack.c.b16 %v3553, %v3549
        %v5554 = vpack.c.b16 %v3554, %v3550
        %v5555 = vpack.c.b16 %v3555, %v3551
        %v5556 = vpack.c.b16 %v3560, %v3556
        %v5557 = vpack.c.b16 %v3561, %v3557
        %v5558 = vpack.c.b16 %v3562, %v3558
        %v5559 = vpack.c.b16 %v3563, %v3559
        %v5560 = vpack.c.b16 %v3568, %v3564
        %v5561 = vpack.c.b16 %v3569, %v3565
        %v5562 = vpack.c.b16 %v3570, %v3566
        %v5563 = vpack.c.b16 %v3571, %v3567
        %v5564 = vpack.c.b16 %v3576, %v3572
        %v5565 = vpack.c.b16 %v3577, %v3573
        %v5566 = vpack.c.b16 %v3578, %v3574
        %v5567 = vpack.c.b16 %v3579, %v3575
        %v5568 = vpack.c.b16 %v3584, %v3580
        %v5569 = vpack.c.b16 %v3585, %v3581
        %v5570 = vpack.c.b16 %v3586, %v3582
        %v5571 = vpack.c.b16 %v3587, %v3583
        %v5572 = vpack.c.b16 %v3592, %v3588
        %v5573 = vpack.c.b16 %v3593, %v3589
        %v5574 = vpack.c.b16 %v3594, %v3590
        %v5575 = vpack.c.b16 %v3595, %v3591
        %v5576 = vpack.c.b16 %v3600, %v3596
        %v5577 = vpack.c.b16 %v3601, %v3597
        %v5578 = vpack.c.b16 %v3602, %v3598
        %v5579 = vpack.c.b16 %v3603, %v3599
        %v5580 = vpack.c.b16 %v3608, %v3604
        %v5581 = vpack.c.b16 %v3609, %v3605
        %v5582 = vpack.c.b16 %v3610, %v3606
        %v5583 = vpack.c.b16 %v3611, %v3607
        %v5584 = vpack.c.b16 %v3616, %v3612
        %v5585 = vpack.c.b16 %v3617, %v3613
        %v5586 = vpack.c.b16 %v3618, %v3614
        %v5587 = vpack.c.b16 %v3619, %v3615
        %v5588 = vpack.c.b16 %v3624, %v3620
        %v5589 = vpack.c.b16 %v3625, %v3621
        %v5590 = vpack.c.b16 %v3626, %v3622
        %v5591 = vpack.c.b16 %v3627, %v3623
        %v5592 = vpack.c.b16 %v3632, %v3628
        %v5593 = vpack.c.b16 %v3633, %v3629
        %v5594 = vpack.c.b16 %v3634, %v3630
        %v5595 = vpack.c.b16 %v3635, %v3631
        %v5596 = vpack.c.b16 %v3640, %v3636
        %v5597 = vpack.c.b16 %v3641, %v3637
        %v5598 = vpack.c.b16 %v3642, %v3638
        %v5599 = vpack.c.b16 %v3643, %v3639
        %v5600 = vpack.c.b16 %v3648, %v3644
        %v5601 = vpack.c.b16 %v3649, %v3645
        %v5602 = vpack.c.b16 %v3650, %v3646
        %v5603 = vpack.c.b16 %v3651, %v3647
        %v5604 = vpack.c.b16 %v3656, %v3652
        %v5605 = vpack.c.b16 %v3657, %v3653
        %v5606 = vpack.c.b16 %v3658, %v3654
        %v5607 = vpack.c.b16 %v3659, %v3655
        %v5608 = vpack.c.b16 %v3664, %v3660
        %v5609 = vpack.c.b16 %v3665, %v3661
        %v5610 = vpack.c.b16 %v3666, %v3662
        %v5611 = vpack.c.b16 %v3667, %v3663
        %v5612 = vpack.c.b16 %v3672, %v3668
        %v5613 = vpack.c.b16 %v3673, %v3669
        %v5614 = vpack.c.b16 %v3674, %v3670
        %v5615 = vpack.c.b16 %v3675, %v3671
        %v5616 = vpack.c.b16 %v3680, %v3676
        %v5617 = vpack.c.b16 %v3681, %v3677
        %v5618 = vpack.c.b16 %v3682, %v3678
        %v5619 = vpack.c.b16 %v3683, %v3679
        %v5620 = vpack.c.b16 %v3688, %v3684
        %v5621 = vpack.c.b16 %v3689, %v3685
        %v5622 = vpack.c.b16 %v3690, %v3686
        %v5623 = vpack.c.b16 %v3691, %v3687
        %v5624 = vpack.c.b16 %v3696, %v3692
        %v5625 = vpack.c.b16 %v3697, %v3693
        %v5626 = vpack.c.b16 %v3698, %v3694
        %v5627 = vpack.c.b16 %v3699, %v3695
        %v5628 = vpack.c.b16 %v3704, %v3700
        %v5629 = vpack.c.b16 %v3705, %v3701
        %v5630 = vpack.c.b16 %v3706, %v3702
        %v5631 = vpack.c.b16 %v3707, %v3703
        %v5632 = vpack.c.b16 %v3712, %v3708
        %v5633 = vpack.c.b16 %v3713, %v3709
        %v5634 = vpack.c.b16 %v3714, %v3710
        %v5635 = vpack.c.b16 %v3715, %v3711
        %v5636 = vpack.c.b16 %v3720, %v3716
        %v5637 = vpack.c.b16 %v3721, %v3717
        %v5638 = vpack.c.b16 %v3722, %v3718
        %v5639 = vpack.c.b16 %v3723, %v3719
        %v5640 = vpack.c.b16 %v3728, %v3724
        %v5641 = vpack.c.b16 %v3729, %v3725
        %v5642 = vpack.c.b16 %v3730, %v3726
        %v5643 = vpack.c.b16 %v3731, %v3727
        %v5644 = vpack.c.b16 %v3736, %v3732
        %v5645 = vpack.c.b16 %v3737, %v3733
        %v5646 = vpack.c.b16 %v3738, %v3734
        %v5647 = vpack.c.b16 %v3739, %v3735
        %v5648 = vpack.c.b16 %v3744, %v3740
        %v5649 = vpack.c.b16 %v3745, %v3741
        %v5650 = vpack.c.b16 %v3746, %v3742
        %v5651 = vpack.c.b16 %v3747, %v3743
        %v5652 = vpack.c.b16 %v3752, %v3748
        %v5653 = vpack.c.b16 %v3753, %v3749
        %v5654 = vpack.c.b16 %v3754, %v3750
        %v5655 = vpack.c.b16 %v3755, %v3751
        %v5656 = vpack.c.b16 %v3760, %v3756
        %v5657 = vpack.c.b16 %v3761, %v3757
        %v5658 = vpack.c.b16 %v3762, %v3758
        %v5659 = vpack.c.b16 %v3763, %v3759
        %v5660 = vpack.c.b16 %v3768, %v3764
        %v5661 = vpack.c.b16 %v3769, %v3765
        %v5662 = vpack.c.b16 %v3770, %v3766
        %v5663 = vpack.c.b16 %v3771, %v3767
        %v5664 = vpack.c.b16 %v3776, %v3772
        %v5665 = vpack.c.b16 %v3777, %v3773
        %v5666 = vpack.c.b16 %v3778, %v3774
        %v5667 = vpack.c.b16 %v3779, %v3775
        %v5668 = vpack.c.b16 %v3784, %v3780
        %v5669 = vpack.c.b16 %v3785, %v3781
        %v5670 = vpack.c.b16 %v3786, %v3782
        %v5671 = vpack.c.b16 %v3787, %v3783
        %v5672 = vpack.c.b16 %v3792, %v3788
        %v5673 = vpack.c.b16 %v3793, %v3789
        %v5674 = vpack.c.b16 %v3794, %v3790
        %v5675 = vpack.c.b16 %v3795, %v3791
        %v5676 = vpack.c.b16 %v3800, %v3796
        %v5677 = vpack.c.b16 %v3801, %v3797
        %v5678 = vpack.c.b16 %v3802, %v3798
        %v5679 = vpack.c.b16 %v3803, %v3799
        %v5680 = vpack.c.b16 %v3808, %v3804
        %v5681 = vpack.c.b16 %v3809, %v3805
        %v5682 = vpack.c.b16 %v3810, %v3806
        %v5683 = vpack.c.b16 %v3811, %v3807
        %v5684 = vpack.c.b16 %v3816, %v3812
        %v5685 = vpack.c.b16 %v3817, %v3813
        %v5686 = vpack.c.b16 %v3818, %v3814
        %v5687 = vpack.c.b16 %v3819, %v3815
        %v5688 = vpack.c.b16 %v3824, %v3820
        %v5689 = vpack.c.b16 %v3825, %v3821
        %v5690 = vpack.c.b16 %v3826, %v3822
        %v5691 = vpack.c.b16 %v3827, %v3823
        %v5692 = vpack.c.b16 %v3832, %v3828
        %v5693 = vpack.c.b16 %v3833, %v3829
        %v5694 = vpack.c.b16 %v3834, %v3830
        %v5695 = vpack.c.b16 %v3835, %v3831
        %v5696 = vpack.c.b16 %v3840, %v3836
        %v5697 = vpack.c.b16 %v3841, %v3837
        %v5698 = vpack.c.b16 %v3842, %v3838
        %v5699 = vpack.c.b16 %v3843, %v3839
        %v5700 = vpack.c.b16 %v3848, %v3844
        %v5701 = vpack.c.b16 %v3849, %v3845
        %v5702 = vpack.c.b16 %v3850, %v3846
        %v5703 = vpack.c.b16 %v3851, %v3847
        %v5704 = vpack.c.b16 %v3856, %v3852
        %v5705 = vpack.c.b16 %v3857, %v3853
        %v5706 = vpack.c.b16 %v3858, %v3854
        %v5707 = vpack.c.b16 %v3859, %v3855
        %v5708 = vpack.c.b16 %v3864, %v3860
        %v5709 = vpack.c.b16 %v3865, %v3861
        %v5710 = vpack.c.b16 %v3866, %v3862
        %v5711 = vpack.c.b16 %v3867, %v3863
        %v5712 = vpack.c.b16 %v3872, %v3868
        %v5713 = vpack.c.b16 %v3873, %v3869
        %v5714 = vpack.c.b16 %v3874, %v3870
        %v5715 = vpack.c.b16 %v3875, %v3871
        %v5716 = vpack.c.b16 %v3880, %v3876
        %v5717 = vpack.c.b16 %v3881, %v3877
        %v5718 = vpack.c.b16 %v3882, %v3878
        %v5719 = vpack.c.b16 %v3883, %v3879
        %v5720 = vpack.c.b16 %v3888, %v3884
        %v5721 = vpack.c.b16 %v3889, %v3885
        %v5722 = vpack.c.b16 %v3890, %v3886
        %v5723 = vpack.c.b16 %v3891, %v3887
        %v5724 = vpack.c.b16 %v3896, %v3892
        %v5725 = vpack.c.b16 %v3897, %v3893
        %v5726 = vpack.c.b16 %v3898, %v3894
        %v5727 = vpack.c.b16 %v3899, %v3895
        %v5728 = vpack.c.b16 %v3904, %v3900
        %v5729 = vpack.c.b16 %v3905, %v3901
        %v5730 = vpack.c.b16 %v3906, %v3902
        %v5731 = vpack.c.b16 %v3907, %v3903
        %v5732 = vpack.c.b16 %v3912, %v3908
        %v5733 = vpack.c.b16 %v3913, %v3909
        %v5734 = vpack.c.b16 %v3914, %v3910
        %v5735 = vpack.c.b16 %v3915, %v3911
        %v5736 = vpack.c.b16 %v3920, %v3916
        %v5737 = vpack.c.b16 %v3921, %v3917
        %v5738 = vpack.c.b16 %v3922, %v3918
        %v5739 = vpack.c.b16 %v3923, %v3919
        %v5740 = vpack.c.b16 %v3928, %v3924
        %v5741 = vpack.c.b16 %v3929, %v3925
        %v5742 = vpack.c.b16 %v3930, %v3926
        %v5743 = vpack.c.b16 %v3931, %v3927
        %v5744 = vpack.c.b16 %v3936, %v3932
        %v5745 = vpack.c.b16 %v3937, %v3933
        %v5746 = vpack.c.b16 %v3938, %v3934
        %v5747 = vpack.c.b16 %v3939, %v3935
        %v5748 = vpack.c.b16 %v3944, %v3940
        %v5749 = vpack.c.b16 %v3945, %v3941
        %v5750 = vpack.c.b16 %v3946, %v3942
        %v5751 = vpack.c.b16 %v3947, %v3943
        %v5752 = vpack.c.b16 %v3952, %v3948
        %v5753 = vpack.c.b16 %v3953, %v3949
        %v5754 = vpack.c.b16 %v3954, %v3950
        %v5755 = vpack.c.b16 %v3955, %v3951
        %v5756 = vpack.c.b16 %v3960, %v3956
        %v5757 = vpack.c.b16 %v3961, %v3957
        %v5758 = vpack.c.b16 %v3962, %v3958
        %v5759 = vpack.c.b16 %v3963, %v3959
        %v5760 = vpack.c.b16 %v3968, %v3964
        %v5761 = vpack.c.b16 %v3969, %v3965
        %v5762 = vpack.c.b16 %v3970, %v3966
        %v5763 = vpack.c.b16 %v3971, %v3967
        %v5764 = vpack.c.b16 %v3976, %v3972
        %v5765 = vpack.c.b16 %v3977, %v3973
        %v5766 = vpack.c.b16 %v3978, %v3974
        %v5767 = vpack.c.b16 %v3979, %v3975
        %v5768 = vpack.c.b16 %v3984, %v3980
        %v5769 = vpack.c.b16 %v3985, %v3981
        %v5770 = vpack.c.b16 %v3986, %v3982
        %v5771 = vpack.c.b16 %v3987, %v3983
        %v5772 = vpack.c.b16 %v3992, %v3988
        %v5773 = vpack.c.b16 %v3993, %v3989
        %v5774 = vpack.c.b16 %v3994, %v3990
        %v5775 = vpack.c.b16 %v3995, %v3991
        %v5776 = vpack.c.b16 %v4000, %v3996
        %v5777 = vpack.c.b16 %v4001, %v3997
        %v5778 = vpack.c.b16 %v4002, %v3998
        %v5779 = vpack.c.b16 %v4003, %v3999
        %v5780 = vpack.c.b16 %v4008, %v4004
        %v5781 = vpack.c.b16 %v4009, %v4005
        %v5782 = vpack.c.b16 %v4010, %v4006
        %v5783 = vpack.c.b16 %v4011, %v4007
        %v5784 = vpack.c.b16 %v4016, %v4012
        %v5785 = vpack.c.b16 %v4017, %v4013
        %v5786 = vpack.c.b16 %v4018, %v4014
        %v5787 = vpack.c.b16 %v4019, %v4015
        %v5788 = vpack.c.b16 %v4024, %v4020
        %v5789 = vpack.c.b16 %v4025, %v4021
        %v5790 = vpack.c.b16 %v4026, %v4022
        %v5791 = vpack.c.b16 %v4027, %v4023
        %v5792 = vpack.c.b16 %v4032, %v4028
        %v5793 = vpack.c.b16 %v4033, %v4029
        %v5794 = vpack.c.b16 %v4034, %v4030
        %v5795 = vpack.c.b16 %v4035, %v4031
        %v5796 = vpack.c.b16 %v4040, %v4036
        %v5797 = vpack.c.b16 %v4041, %v4037
        %v5798 = vpack.c.b16 %v4042, %v4038
        %v5799 = vpack.c.b16 %v4043, %v4039
        %v5800 = vpack.c.b16 %v4048, %v4044
        %v5801 = vpack.c.b16 %v4049, %v4045
        %v5802 = vpack.c.b16 %v4050, %v4046
        %v5803 = vpack.c.b16 %v4051, %v4047
        %v5804 = vpack.c.b16 %v4056, %v4052
        %v5805 = vpack.c.b16 %v4057, %v4053
        %v5806 = vpack.c.b16 %v4058, %v4054
        %v5807 = vpack.c.b16 %v4059, %v4055
        %v5808 = vpack.c.b16 %v4064, %v4060
        %v5809 = vpack.c.b16 %v4065, %v4061
        %v5810 = vpack.c.b16 %v4066, %v4062
        %v5811 = vpack.c.b16 %v4067, %v4063
        %v5812 = vpack.c.b16 %v4072, %v4068
        %v5813 = vpack.c.b16 %v4073, %v4069
        %v5814 = vpack.c.b16 %v4074, %v4070
        %v5815 = vpack.c.b16 %v4075, %v4071
        %v5816 = vpack.c.b16 %v4080, %v4076
        %v5817 = vpack.c.b16 %v4081, %v4077
        %v5818 = vpack.c.b16 %v4082, %v4078
        %v5819 = vpack.c.b16 %v4083, %v4079
        %v5820 = vpack.c.b16 %v4088, %v4084
        %v5821 = vpack.c.b16 %v4089, %v4085
        %v5822 = vpack.c.b16 %v4090, %v4086
        %v5823 = vpack.c.b16 %v4091, %v4087
        %v5824 = vpack.c.b16 %v4096, %v4092
        %v5825 = vpack.c.b16 %v4097, %v4093
        %v5826 = vpack.c.b16 %v4098, %v4094
        %v5827 = vpack.c.b16 %v4099, %v4095
        %v5828 = vpack.c.b16 %v4104, %v4100
        %v5829 = vpack.c.b16 %v4105, %v4101
        %v5830 = vpack.c.b16 %v4106, %v4102
        %v5831 = vpack.c.b16 %v4107, %v4103
        %v5832 = vpack.c.b16 %v4112, %v4108
        %v5833 = vpack.c.b16 %v4113, %v4109
        %v5834 = vpack.c.b16 %v4114, %v4110
        %v5835 = vpack.c.b16 %v4115, %v4111
        %v5836 = vpack.c.b16 %v4120, %v4116
        %v5837 = vpack.c.b16 %v4121, %v4117
        %v5838 = vpack.c.b16 %v4122, %v4118
        %v5839 = vpack.c.b16 %v4123, %v4119
        %v5840 = vpack.c.b16 %v4128, %v4124
        %v5841 = vpack.c.b16 %v4129, %v4125
        %v5842 = vpack.c.b16 %v4130, %v4126
        %v5843 = vpack.c.b16 %v4131, %v4127
        %v5844 = vpack.c.b16 %v4136, %v4132
        %v5845 = vpack.c.b16 %v4137, %v4133
        %v5846 = vpack.c.b16 %v4138, %v4134
        %v5847 = vpack.c.b16 %v4139, %v4135
        %v5848 = vpack.c.b16 %v4144, %v4140
        %v5849 = vpack.c.b16 %v4145, %v4141
        %v5850 = vpack.c.b16 %v4146, %v4142
        %v5851 = vpack.c.b16 %v4147, %v4143
        %v5852 = vpack.c.b16 %v4152, %v4148
        %v5853 = vpack.c.b16 %v4153, %v4149
        %v5854 = vpack.c.b16 %v4154, %v4150
        %v5855 = vpack.c.b16 %v4155, %v4151
        %v5856 = vpack.c.b16 %v4160, %v4156
        %v5857 = vpack.c.b16 %v4161, %v4157
        %v5858 = vpack.c.b16 %v4162, %v4158
        %v5859 = vpack.c.b16 %v4163, %v4159
        %v5860 = vpack.c.b16 %v4168, %v4164
        %v5861 = vpack.c.b16 %v4169, %v4165
        %v5862 = vpack.c.b16 %v4170, %v4166
        %v5863 = vpack.c.b16 %v4171, %v4167
        %v5864 = vpack.c.b16 %v4176, %v4172
        %v5865 = vpack.c.b16 %v4177, %v4173
        %v5866 = vpack.c.b16 %v4178, %v4174
        %v5867 = vpack.c.b16 %v4179, %v4175
        %v5868 = vpack.c.b16 %v4184, %v4180
        %v5869 = vpack.c.b16 %v4185, %v4181
        %v5870 = vpack.c.b16 %v4186, %v4182
        %v5871 = vpack.c.b16 %v4187, %v4183
        %v5872 = vpack.c.b16 %v4192, %v4188
        %v5873 = vpack.c.b16 %v4193, %v4189
        %v5874 = vpack.c.b16 %v4194, %v4190
        %v5875 = vpack.c.b16 %v4195, %v4191
        %v5876 = vpack.c.b16 %v4200, %v4196
        %v5877 = vpack.c.b16 %v4201, %v4197
        %v5878 = vpack.c.b16 %v4202, %v4198
        %v5879 = vpack.c.b16 %v4203, %v4199
        %v5880 = vpack.c.b16 %v4208, %v4204
        %v5881 = vpack.c.b16 %v4209, %v4205
        %v5882 = vpack.c.b16 %v4210, %v4206
        %v5883 = vpack.c.b16 %v4211, %v4207
        %v5884 = vpack.c.b16 %v4216, %v4212
        %v5885 = vpack.c.b16 %v4217, %v4213
        %v5886 = vpack.c.b16 %v4218, %v4214
        %v5887 = vpack.c.b16 %v4219, %v4215
        %v5888 = vpack.c.b16 %v4224, %v4220
        %v5889 = vpack.c.b16 %v4225, %v4221
        %v5890 = vpack.c.b16 %v4226, %v4222
        %v5891 = vpack.c.b16 %v4227, %v4223
        %v5892 = vpack.c.b16 %v4232, %v4228
        %v5893 = vpack.c.b16 %v4233, %v4229
        %v5894 = vpack.c.b16 %v4234, %v4230
        %v5895 = vpack.c.b16 %v4235, %v4231
        %v5896 = vpack.c.b16 %v4240, %v4236
        %v5897 = vpack.c.b16 %v4241, %v4237
        %v5898 = vpack.c.b16 %v4242, %v4238
        %v5899 = vpack.c.b16 %v4243, %v4239
        %v5900 = vpack.c.b16 %v4248, %v4244
        %v5901 = vpack.c.b16 %v4249, %v4245
        %v5902 = vpack.c.b16 %v4250, %v4246
        %v5903 = vpack.c.b16 %v4251, %v4247
        %v5904 = vpack.c.b16 %v4256, %v4252
        %v5905 = vpack.c.b16 %v4257, %v4253
        %v5906 = vpack.c.b16 %v4258, %v4254
        %v5907 = vpack.c.b16 %v4259, %v4255
        %v5908 = vpack.c.b16 %v4264, %v4260
        %v5909 = vpack.c.b16 %v4265, %v4261
        %v5910 = vpack.c.b16 %v4266, %v4262
        %v5911 = vpack.c.b16 %v4267, %v4263
        %v5912 = vpack.c.b16 %v4272, %v4268
        %v5913 = vpack.c.b16 %v4273, %v4269
        %v5914 = vpack.c.b16 %v4274, %v4270
        %v5915 = vpack.c.b16 %v4275, %v4271
        %v5916 = vpack.c.b16 %v4280, %v4276
        %v5917 = vpack.c.b16 %v4281, %v4277
        %v5918 = vpack.c.b16 %v4282, %v4278
        %v5919 = vpack.c.b16 %v4283, %v4279
        %v5920 = vpack.c.b16 %v4288, %v4284
        %v5921 = vpack.c.b16 %v4289, %v4285
        %v5922 = vpack.c.b16 %v4290, %v4286
        %v5923 = vpack.c.b16 %v4291, %v4287
        %v5924 = vpack.c.b16 %v4296, %v4292
        %v5925 = vpack.c.b16 %v4297, %v4293
        %v5926 = vpack.c.b16 %v4298, %v4294
        %v5927 = vpack.c.b16 %v4299, %v4295
        %v5928 = vpack.c.b16 %v4304, %v4300
        %v5929 = vpack.c.b16 %v4305, %v4301
        %v5930 = vpack.c.b16 %v4306, %v4302
        %v5931 = vpack.c.b16 %v4307, %v4303
        %v5932 = vpack.c.b16 %v4312, %v4308
        %v5933 = vpack.c.b16 %v4313, %v4309
        %v5934 = vpack.c.b16 %v4314, %v4310
        %v5935 = vpack.c.b16 %v4315, %v4311
        %v5936 = vpack.c.b16 %v4320, %v4316
        %v5937 = vpack.c.b16 %v4321, %v4317
        %v5938 = vpack.c.b16 %v4322, %v4318
        %v5939 = vpack.c.b16 %v4323, %v4319
        %v5940 = vpack.c.b16 %v4328, %v4324
        %v5941 = vpack.c.b16 %v4329, %v4325
        %v5942 = vpack.c.b16 %v4330, %v4326
        %v5943 = vpack.c.b16 %v4331, %v4327
        %v5944 = vpack.c.b16 %v4336, %v4332
        %v5945 = vpack.c.b16 %v4337, %v4333
        %v5946 = vpack.c.b16 %v4338, %v4334
        %v5947 = vpack.c.b16 %v4339, %v4335
        %v5948 = vpack.c.b16 %v4344, %v4340
        %v5949 = vpack.c.b16 %v4345, %v4341
        %v5950 = vpack.c.b16 %v4346, %v4342
        %v5951 = vpack.c.b16 %v4347, %v4343
        %v5952 = vpack.c.b16 %v4352, %v4348
        %v5953 = vpack.c.b16 %v4353, %v4349
        %v5954 = vpack.c.b16 %v4354, %v4350
        %v5955 = vpack.c.b16 %v4355, %v4351
        %v5956 = vpack.c.b16 %v4360, %v4356
        %v5957 = vpack.c.b16 %v4361, %v4357
        %v5958 = vpack.c.b16 %v4362, %v4358
        %v5959 = vpack.c.b16 %v4363, %v4359
        %v5960 = vpack.c.b16 %v4368, %v4364
        %v5961 = vpack.c.b16 %v4369, %v4365
        %v5962 = vpack.c.b16 %v4370, %v4366
        %v5963 = vpack.c.b16 %v4371, %v4367
        %v5964 = vpack.c.b16 %v4376, %v4372
        %v5965 = vpack.c.b16 %v4377, %v4373
        %v5966 = vpack.c.b16 %v4378, %v4374
        %v5967 = vpack.c.b16 %v4379, %v4375
        %v5968 = vpack.c.b16 %v4384, %v4380
        %v5969 = vpack.c.b16 %v4385, %v4381
        %v5970 = vpack.c.b16 %v4386, %v4382
        %v5971 = vpack.c.b16 %v4387, %v4383
        %v5972 = vpack.c.b16 %v4392, %v4388
        %v5973 = vpack.c.b16 %v4393, %v4389
        %v5974 = vpack.c.b16 %v4394, %v4390
        %v5975 = vpack.c.b16 %v4395, %v4391
        %v5976 = vpack.c.b16 %v4400, %v4396
        %v5977 = vpack.c.b16 %v4401, %v4397
        %v5978 = vpack.c.b16 %v4402, %v4398
        %v5979 = vpack.c.b16 %v4403, %v4399
        %v5980 = vpack.c.b16 %v4408, %v4404
        %v5981 = vpack.c.b16 %v4409, %v4405
        %v5982 = vpack.c.b16 %v4410, %v4406
        %v5983 = vpack.c.b16 %v4411, %v4407
        %v5984 = vpack.c.b16 %v4416, %v4412
        %v5985 = vpack.c.b16 %v4417, %v4413
        %v5986 = vpack.c.b16 %v4418, %v4414
        %v5987 = vpack.c.b16 %v4419, %v4415
        %v5988 = vpack.c.b16 %v4424, %v4420
        %v5989 = vpack.c.b16 %v4425, %v4421
        %v5990 = vpack.c.b16 %v4426, %v4422
        %v5991 = vpack.c.b16 %v4427, %v4423
        %v5992 = vpack.c.b16 %v4432, %v4428
        %v5993 = vpack.c.b16 %v4433, %v4429
        %v5994 = vpack.c.b16 %v4434, %v4430
        %v5995 = vpack.c.b16 %v4435, %v4431
        %v5996 = vpack.c.b16 %v4440, %v4436
        %v5997 = vpack.c.b16 %v4441, %v4437
        %v5998 = vpack.c.b16 %v4442, %v4438
        %v5999 = vpack.c.b16 %v4443, %v4439
        %v6000 = vpack.c.b16 %v4448, %v4444
        %v6001 = vpack.c.b16 %v4449, %v4445
        %v6002 = vpack.c.b16 %v4450, %v4446
        %v6003 = vpack.c.b16 %v4451, %v4447
        %v6004 = vpack.c.b16 %v4456, %v4452
        %v6005 = vpack.c.b16 %v4457, %v4453
        %v6006 = vpack.c.b16 %v4458, %v4454
        %v6007 = vpack.c.b16 %v4459, %v4455
        %v6008 = vpack.c.b16 %v4464, %v4460
        %v6009 = vpack.c.b16 %v4465, %v4461
        %v6010 = vpack.c.b16 %v4466, %v4462
        %v6011 = vpack.c.b16 %v4467, %v4463
        %v6012 = vpack.c.b16 %v4472, %v4468
        %v6013 = vpack.c.b16 %v4473, %v4469
        %v6014 = vpack.c.b16 %v4474, %v4470
        %v6015 = vpack.c.b16 %v4475, %v4471
        %v6016 = vpack.c.b16 %v4480, %v4476
        %v6017 = vpack.c.b16 %v4481, %v4477
        %v6018 = vpack.c.b16 %v4482, %v4478
        %v6019 = vpack.c.b16 %v4483, %v4479
        %v6020 = vpack.c.b16 %v4488, %v4484
        %v6021 = vpack.c.b16 %v4489, %v4485
        %v6022 = vpack.c.b16 %v4490, %v4486
        %v6023 = vpack.c.b16 %v4491, %v4487
        %v6024 = vpack.c.b16 %v4496, %v4492
        %v6025 = vpack.c.b16 %v4497, %v4493
        %v6026 = vpack.c.b16 %v4498, %v4494
        %v6027 = vpack.c.b16 %v4499, %v4495
        %v6028 = vpack.c.b16 %v4504, %v4500
        %v6029 = vpack.c.b16 %v4505, %v4501
        %v6030 = vpack.c.b16 %v4506, %v4502
        %v6031 = vpack.c.b16 %v4507, %v4503
        %v6032 = vpack.c.b16 %v4512, %v4508
        %v6033 = vpack.c.b16 %v4513, %v4509
        %v6034 = vpack.c.b16 %v4514, %v4510
        %v6035 = vpack.c.b16 %v4515, %v4511
        %v6036 = vpack.c.b16 %v4520, %v4516
        %v6037 = vpack.c.b16 %v4521, %v4517
        %v6038 = vpack.c.b16 %v4522, %v4518
        %v6039 = vpack.c.b16 %v4523, %v4519
        %v6040 = vpack.c.b16 %v4528, %v4524
        %v6041 = vpack.c.b16 %v4529, %v4525
        %v6042 = vpack.c.b16 %v4530, %v4526
        %v6043 = vpack.c.b16 %v4531, %v4527
        %v6044 = vpack.c.b16 %v4536, %v4532
        %v6045 = vpack.c.b16 %v4537, %v4533
        %v6046 = vpack.c.b16 %v4538, %v4534
        %v6047 = vpack.c.b16 %v4539, %v4535
        %v6048 = vpack.c.b16 %v4544, %v4540
        %v6049 = vpack.c.b16 %v4545, %v4541
        %v6050 = vpack.c.b16 %v4546, %v4542
        %v6051 = vpack.c.b16 %v4547, %v4543
        %v6052 = vpack.c.b16 %v4552, %v4548
        %v6053 = vpack.c.b16 %v4553, %v4549
        %v6054 = vpack.c.b16 %v4554, %v4550
        %v6055 = vpack.c.b16 %v4555, %v4551
        %v6056 = vpack.c.b16 %v4560, %v4556
        %v6057 = vpack.c.b16 %v4561, %v4557
        %v6058 = vpack.c.b16 %v4562, %v4558
        %v6059 = vpack.c.b16 %v4563, %v4559
        %v6060 = vpack.c.b16 %v4568, %v4564
        %v6061 = vpack.c.b16 %v4569, %v4565
        %v6062 = vpack.c.b16 %v4570, %v4566
        %v6063 = vpack.c.b16 %v4571, %v4567
        %v6064 = vpack.c.b16 %v4576, %v4572
        %v6065 = vpack.c.b16 %v4577, %v4573
        %v6066 = vpack.c.b16 %v4578, %v4574
        %v6067 = vpack.c.b16 %v4579, %v4575
        %v6068 = vpack.c.b16 %v4584, %v4580
        %v6069 = vpack.c.b16 %v4585, %v4581
        %v6070 = vpack.c.b16 %v4586, %v4582
        %v6071 = vpack.c.b16 %v4587, %v4583
        %v6072 = vpack.c.b16 %v4592, %v4588
        %v6073 = vpack.c.b16 %v4593, %v4589
        %v6074 = vpack.c.b16 %v4594, %v4590
        %v6075 = vpack.c.b16 %v4595, %v4591
        %v6076 = vpack.c.b16 %v4600, %v4596
        %v6077 = vpack.c.b16 %v4601, %v4597
        %v6078 = vpack.c.b16 %v4602, %v4598
        %v6079 = vpack.c.b16 %v4603, %v4599
        %v6080 = vpack.c.b16 %v4608, %v4604
        %v6081 = vpack.c.b16 %v4609, %v4605
        %v6082 = vpack.c.b16 %v4610, %v4606
        %v6083 = vpack.c.b16 %v4611, %v4607
        %v6084 = vpack.c.b16 %v4616, %v4612
        %v6085 = vpack.c.b16 %v4617, %v4613
        %v6086 = vpack.c.b16 %v4618, %v4614
        %v6087 = vpack.c.b16 %v4619, %v4615
        %v6088 = vpack.c.b16 %v4624, %v4620
        %v6089 = vpack.c.b16 %v4625, %v4621
        %v6090 = vpack.c.b16 %v4626, %v4622
        %v6091 = vpack.c.b16 %v4627, %v4623
        %v6092 = vpack.c.b16 %v4632, %v4628
        %v6093 = vpack.c.b16 %v4633, %v4629
        %v6094 = vpack.c.b16 %v4634, %v4630
        %v6095 = vpack.c.b16 %v4635, %v4631
        %v6096 = vpack.c.b16 %v4640, %v4636
        %v6097 = vpack.c.b16 %v4641, %v4637
        %v6098 = vpack.c.b16 %v4642, %v4638
        %v6099 = vpack.c.b16 %v4643, %v4639
        %v6100 = vpack.c.b16 %v4648, %v4644
        %v6101 = vpack.c.b16 %v4649, %v4645
        %v6102 = vpack.c.b16 %v4650, %v4646
        %v6103 = vpack.c.b16 %v4651, %v4647
        %v6104 = vpack.c.b16 %v4656, %v4652
        %v6105 = vpack.c.b16 %v4657, %v4653
        %v6106 = vpack.c.b16 %v4658, %v4654
        %v6107 = vpack.c.b16 %v4659, %v4655
        %v6108 = vpack.c.b16 %v4664, %v4660
        %v6109 = vpack.c.b16 %v4665, %v4661
        %v6110 = vpack.c.b16 %v4666, %v4662
        %v6111 = vpack.c.b16 %v4667, %v4663
        %v6112 = vpack.c.b16 %v4672, %v4668
        %v6113 = vpack.c.b16 %v4673, %v4669
        %v6114 = vpack.c.b16 %v4674, %v4670
        %v6115 = vpack.c.b16 %v4675, %v4671
        %v6116 = vpack.c.b16 %v4680, %v4676
        %v6117 = vpack.c.b16 %v4681, %v4677
        %v6118 = vpack.c.b16 %v4682, %v4678
        %v6119 = vpack.c.b16 %v4683, %v4679
        %v6120 = vpack.c.b16 %v4688, %v4684
        %v6121 = vpack.c.b16 %v4689, %v4685
        %v6122 = vpack.c.b16 %v4690, %v4686
        %v6123 = vpack.c.b16 %v4691, %v4687
        %v6124 = vpack.c.b16 %v4696, %v4692
        %v6125 = vpack.c.b16 %v4697, %v4693
        %v6126 = vpack.c.b16 %v4698, %v4694
        %v6127 = vpack.c.b16 %v4699, %v4695
        %v6128 = vpack.c.b16 %v4704, %v4700
        %v6129 = vpack.c.b16 %v4705, %v4701
        %v6130 = vpack.c.b16 %v4706, %v4702
        %v6131 = vpack.c.b16 %v4707, %v4703
        %v6132 = vpack.c.b16 %v4712, %v4708
        %v6133 = vpack.c.b16 %v4713, %v4709
        %v6134 = vpack.c.b16 %v4714, %v4710
        %v6135 = vpack.c.b16 %v4715, %v4711
        %v6136 = vpack.c.b16 %v4720, %v4716
        %v6137 = vpack.c.b16 %v4721, %v4717
        %v6138 = vpack.c.b16 %v4722, %v4718
        %v6139 = vpack.c.b16 %v4723, %v4719
        %v6140 = vpack.c.b16 %v4728, %v4724
        %v6141 = vpack.c.b16 %v4729, %v4725
        %v6142 = vpack.c.b16 %v4730, %v4726
        %v6143 = vpack.c.b16 %v4731, %v4727
        %v6144 = vpack.c.b16 %v4736, %v4732
        %v6145 = vpack.c.b16 %v4737, %v4733
        %v6146 = vpack.c.b16 %v4738, %v4734
        %v6147 = vpack.c.b16 %v4739, %v4735
        %v6148 = vpack.c.b16 %v4744, %v4740
        %v6149 = vpack.c.b16 %v4745, %v4741
        %v6150 = vpack.c.b16 %v4746, %v4742
        %v6151 = vpack.c.b16 %v4747, %v4743
        %v6152 = vpack.c.b16 %v4752, %v4748
        %v6153 = vpack.c.b16 %v4753, %v4749
        %v6154 = vpack.c.b16 %v4754, %v4750
        %v6155 = vpack.c.b16 %v4755, %v4751
        %v6156 = vpack.c.b16 %v4760, %v4756
        %v6157 = vpack.c.b16 %v4761, %v4757
        %v6158 = vpack.c.b16 %v4762, %v4758
        %v6159 = vpack.c.b16 %v4763, %v4759
        %v6160 = vpack.c.b16 %v4768, %v4764
        %v6161 = vpack.c.b16 %v4769, %v4765
        %v6162 = vpack.c.b16 %v4770, %v4766
        %v6163 = vpack.c.b16 %v4771, %v4767
        %v6164 = vpack.c.b16 %v4776, %v4772
        %v6165 = vpack.c.b16 %v4777, %v4773
        %v6166 = vpack.c.b16 %v4778, %v4774
        %v6167 = vpack.c.b16 %v4779, %v4775
        %v6168 = vpack.c.b16 %v4784, %v4780
        %v6169 = vpack.c.b16 %v4785, %v4781
        %v6170 = vpack.c.b16 %v4786, %v4782
        %v6171 = vpack.c.b16 %v4787, %v4783
        %v6172 = vpack.c.b16 %v4792, %v4788
        %v6173 = vpack.c.b16 %v4793, %v4789
        %v6174 = vpack.c.b16 %v4794, %v4790
        %v6175 = vpack.c.b16 %v4795, %v4791
        %v6176 = vpack.c.b16 %v4800, %v4796
        %v6177 = vpack.c.b16 %v4801, %v4797
        %v6178 = vpack.c.b16 %v4802, %v4798
        %v6179 = vpack.c.b16 %v4803, %v4799
        %v6180 = vpack.c.b16 %v4808, %v4804
        %v6181 = vpack.c.b16 %v4809, %v4805
        %v6182 = vpack.c.b16 %v4810, %v4806
        %v6183 = vpack.c.b16 %v4811, %v4807
        %v6184 = vpack.c.b16 %v4816, %v4812
        %v6185 = vpack.c.b16 %v4817, %v4813
        %v6186 = vpack.c.b16 %v4818, %v4814
        %v6187 = vpack.c.b16 %v4819, %v4815
        %v6188 = vpack.c.b16 %v4824, %v4820
        %v6189 = vpack.c.b16 %v4825, %v4821
        %v6190 = vpack.c.b16 %v4826, %v4822
        %v6191 = vpack.c.b16 %v4827, %v4823
        %v6192 = vpack.c.b16 %v4832, %v4828
        %v6193 = vpack.c.b16 %v4833, %v4829
        %v6194 = vpack.c.b16 %v4834, %v4830
        %v6195 = vpack.c.b16 %v4835, %v4831
        %v6196 = vpack.c.b16 %v4840, %v4836
        %v6197 = vpack.c.b16 %v4841, %v4837
        %v6198 = vpack.c.b16 %v4842, %v4838
        %v6199 = vpack.c.b16 %v4843, %v4839
        %v6200 = vpack.c.b16 %v4848, %v4844
        %v6201 = vpack.c.b16 %v4849, %v4845
        %v6202 = vpack.c.b16 %v4850, %v4846
        %v6203 = vpack.c.b16 %v4851, %v4847
        %v6204 = vpack.c.b16 %v4856, %v4852
        %v6205 = vpack.c.b16 %v4857, %v4853
        %v6206 = vpack.c.b16 %v4858, %v4854
        %v6207 = vpack.c.b16 %v4859, %v4855
        %v6208 = vpack.c.b16 %v4864, %v4860
        %v6209 = vpack.c.b16 %v4865, %v4861
        %v6210 = vpack.c.b16 %v4866, %v4862
        %v6211 = vpack.c.b16 %v4867, %v4863
        %v6212 = vpack.c.b16 %v4872, %v4868
        %v6213 = vpack.c.b16 %v4873, %v4869
        %v6214 = vpack.c.b16 %v4874, %v4870
        %v6215 = vpack.c.b16 %v4875, %v4871
        %v6216 = vpack.c.b16 %v4880, %v4876
        %v6217 = vpack.c.b16 %v4881, %v4877
        %v6218 = vpack.c.b16 %v4882, %v4878
        %v6219 = vpack.c.b16 %v4883, %v4879
        %v6220 = vpack.c.b16 %v4888, %v4884
        %v6221 = vpack.c.b16 %v4889, %v4885
        %v6222 = vpack.c.b16 %v4890, %v4886
        %v6223 = vpack.c.b16 %v4891, %v4887
        %v6224 = vpack.c.b16 %v4896, %v4892
        %v6225 = vpack.c.b16 %v4897, %v4893
        %v6226 = vpack.c.b16 %v4898, %v4894
        %v6227 = vpack.c.b16 %v4899, %v4895
        %v6228 = vpack.c.b16 %v4904, %v4900
        %v6229 = vpack.c.b16 %v4905, %v4901
        %v6230 = vpack.c.b16 %v4906, %v4902
        %v6231 = vpack.c.b16 %v4907, %v4903
        %v6232 = vpack.c.b16 %v4912, %v4908
        %v6233 = vpack.c.b16 %v4913, %v4909
        %v6234 = vpack.c.b16 %v4914, %v4910
        %v6235 = vpack.c.b16 %v4915, %v4911
        %v6236 = vpack.c.b16 %v4920, %v4916
        %v6237 = vpack.c.b16 %v4921, %v4917
        %v6238 = vpack.c.b16 %v4922, %v4918
        %v6239 = vpack.c.b16 %v4923, %v4919
        %v6240 = vpack.c.b16 %v4928, %v4924
        %v6241 = vpack.c.b16 %v4929, %v4925
        %v6242 = vpack.c.b16 %v4930, %v4926
        %v6243 = vpack.c.b16 %v4931, %v4927
        %v6244 = vpack.c.b16 %v4936, %v4932
        %v6245 = vpack.c.b16 %v4937, %v4933
        %v6246 = vpack.c.b16 %v4938, %v4934
        %v6247 = vpack.c.b16 %v4939, %v4935
        %v6248 = vpack.c.b16 %v4944, %v4940
        %v6249 = vpack.c.b16 %v4945, %v4941
        %v6250 = vpack.c.b16 %v4946, %v4942
        %v6251 = vpack.c.b16 %v4947, %v4943
        %v6252 = vpack.c.b16 %v4952, %v4948
        %v6253 = vpack.c.b16 %v4953, %v4949
        %v6254 = vpack.c.b16 %v4954, %v4950
        %v6255 = vpack.c.b16 %v4955, %v4951
        %v6256 = vpack.c.b16 %v4960, %v4956
        %v6257 = vpack.c.b16 %v4961, %v4957
        %v6258 = vpack.c.b16 %v4962, %v4958
        %v6259 = vpack.c.b16 %v4963, %v4959
        %v6260 = vpack.c.b16 %v4968, %v4964
        %v6261 = vpack.c.b16 %v4969, %v4965
        %v6262 = vpack.c.b16 %v4970, %v4966
        %v6263 = vpack.c.b16 %v4971, %v4967
        %v6264 = vpack.c.b16 %v4976, %v4972
        %v6265 = vpack.c.b16 %v4977, %v4973
        %v6266 = vpack.c.b16 %v4978, %v4974
        %v6267 = vpack.c.b16 %v4979, %v4975
        %v6268 = vpack.c.b16 %v4984, %v4980
        %v6269 = vpack.c.b16 %v4985, %v4981
        %v6270 = vpack.c.b16 %v4986, %v4982
        %v6271 = vpack.c.b16 %v4987, %v4983
        %v6272 = vpack.c.b16 %v4992, %v4988
        %v6273 = vpack.c.b16 %v4993, %v4989
        %v6274 = vpack.c.b16 %v4994, %v4990
        %v6275 = vpack.c.b16 %v4995, %v4991
        %v6276 = vpack.c.b16 %v5000, %v4996
        %v6277 = vpack.c.b16 %v5001, %v4997
        %v6278 = vpack.c.b16 %v5002, %v4998
        %v6279 = vpack.c.b16 %v5003, %v4999
        %v6280 = vpack.c.b16 %v5008, %v5004
        %v6281 = vpack.c.b16 %v5009, %v5005
        %v6282 = vpack.c.b16 %v5010, %v5006
        %v6283 = vpack.c.b16 %v5011, %v5007
        %v6284 = vpack.c.b16 %v5016, %v5012
        %v6285 = vpack.c.b16 %v5017, %v5013
        %v6286 = vpack.c.b16 %v5018, %v5014
        %v6287 = vpack.c.b16 %v5019, %v5015
        %v6288 = vpack.c.b16 %v5024, %v5020
        %v6289 = vpack.c.b16 %v5025, %v5021
        %v6290 = vpack.c.b16 %v5026, %v5022
        %v6291 = vpack.c.b16 %v5027, %v5023
        %v6292 = vpack.c.b16 %v5032, %v5028
        %v6293 = vpack.c.b16 %v5033, %v5029
        %v6294 = vpack.c.b16 %v5034, %v5030
        %v6295 = vpack.c.b16 %v5035, %v5031
        %v6296 = vpack.c.b16 %v5040, %v5036
        %v6297 = vpack.c.b16 %v5041, %v5037
        %v6298 = vpack.c.b16 %v5042, %v5038
        %v6299 = vpack.c.b16 %v5043, %v5039
        %v6300 = vpack.c.b16 %v5048, %v5044
        %v6301 = vpack.c.b16 %v5049, %v5045
        %v6302 = vpack.c.b16 %v5050, %v5046
        %v6303 = vpack.c.b16 %v5051, %v5047
        %v6304 = vpack.c.b16 %v5056, %v5052
        %v6305 = vpack.c.b16 %v5057, %v5053
        %v6306 = vpack.c.b16 %v5058, %v5054
        %v6307 = vpack.c.b16 %v5059, %v5055
        %v6308 = vpack.c.b16 %v5064, %v5060
        %v6309 = vpack.c.b16 %v5065, %v5061
        %v6310 = vpack.c.b16 %v5066, %v5062
        %v6311 = vpack.c.b16 %v5067, %v5063
        %v6312 = vpack.c.b16 %v5072, %v5068
        %v6313 = vpack.c.b16 %v5073, %v5069
        %v6314 = vpack.c.b16 %v5074, %v5070
        %v6315 = vpack.c.b16 %v5075, %v5071
        %v6316 = vpack.c.b16 %v5080, %v5076
        %v6317 = vpack.c.b16 %v5081, %v5077
        %v6318 = vpack.c.b16 %v5082, %v5078
        %v6319 = vpack.c.b16 %v5083, %v5079
        %v6320 = vpack.c.b16 %v5088, %v5084
        %v6321 = vpack.c.b16 %v5089, %v5085
        %v6322 = vpack.c.b16 %v5090, %v5086
        %v6323 = vpack.c.b16 %v5091, %v5087
        %v6324 = vpack.c.b16 %v5096, %v5092
        %v6325 = vpack.c.b16 %v5097, %v5093
        %v6326 = vpack.c.b16 %v5098, %v5094
        %v6327 = vpack.c.b16 %v5099, %v5095
        %v6328 = vpack.c.b16 %v5104, %v5100
        %v6329 = vpack.c.b16 %v5105, %v5101
        %v6330 = vpack.c.b16 %v5106, %v5102
        %v6331 = vpack.c.b16 %v5107, %v5103
        %v6332 = vpack.c.b16 %v5112, %v5108
        %v6333 = vpack.c.b16 %v5113, %v5109
        %v6334 = vpack.c.b16 %v5114, %v5110
        %v6335 = vpack.c.b16 %v5115, %v5111
        %v6336 = vpack.c.b16 %v5120, %v5116
        %v6337 = vpack.c.b16 %v5121, %v5117
        %v6338 = vpack.c.b16 %v5122, %v5118
        %v6339 = vpack.c.b16 %v5123, %v5119
        %v6340 = vpack.c.b16 %v5128, %v5124
        %v6341 = vpack.c.b16 %v5129, %v5125
        %v6342 = vpack.c.b16 %v5130, %v5126
        %v6343 = vpack.c.b16 %v5131, %v5127
        %v6344 = vpack.c.b16 %v5136, %v5132
        %v6345 = vpack.c.b16 %v5137, %v5133
        %v6346 = vpack.c.b16 %v5138, %v5134
        %v6347 = vpack.c.b16 %v5139, %v5135
        %v6348 = vpack.c.b16 %v5144, %v5140
        %v6349 = vpack.c.b16 %v5145, %v5141
        %v6350 = vpack.c.b16 %v5146, %v5142
        %v6351 = vpack.c.b16 %v5147, %v5143
        %v6352 = vpack.c.b16 %v5152, %v5148
        %v6353 = vpack.c.b16 %v5153, %v5149
        %v6354 = vpack.c.b16 %v5154, %v5150
        %v6355 = vpack.c.b16 %v5155, %v5151
        %v6356 = vpack.c.b16 %v5160, %v5156
        %v6357 = vpack.c.b16 %v5161, %v5157
        %v6358 = vpack.c.b16 %v5162, %v5158
        %v6359 = vpack.c.b16 %v5163, %v5159
        %v6360 = vpack.c.b16 %v5168, %v5164
        %v6361 = vpack.c.b16 %v5169, %v5165
        %v6362 = vpack.c.b16 %v5170, %v5166
        %v6363 = vpack.c.b16 %v5171, %v5167
        %v6364 = vpack.c.b16 %v5176, %v5172
        %v6365 = vpack.c.b16 %v5177, %v5173
        %v6366 = vpack.c.b16 %v5178, %v5174
        %v6367 = vpack.c.b16 %v5179, %v5175
        %v6368 = vpack.c.b16 %v5184, %v5180
        %v6369 = vpack.c.b16 %v5185, %v5181
        %v6370 = vpack.c.b16 %v5186, %v5182
        %v6371 = vpack.c.b16 %v5187, %v5183
        %v6372 = vpack.c.b16 %v5192, %v5188
        %v6373 = vpack.c.b16 %v5193, %v5189
        %v6374 = vpack.c.b16 %v5194, %v5190
        %v6375 = vpack.c.b16 %v5195, %v5191
        %v6376 = vpack.c.b16 %v5200, %v5196
        %v6377 = vpack.c.b16 %v5201, %v5197
        %v6378 = vpack.c.b16 %v5202, %v5198
        %v6379 = vpack.c.b16 %v5203, %v5199
        %v6380 = vpack.c.b16 %v5208, %v5204
        %v6381 = vpack.c.b16 %v5209, %v5205
        %v6382 = vpack.c.b16 %v5210, %v5206
        %v6383 = vpack.c.b16 %v5211, %v5207
        %v6384 = vpack.c.b16 %v5216, %v5212
        %v6385 = vpack.c.b16 %v5217, %v5213
        %v6386 = vpack.c.b16 %v5218, %v5214
        %v6387 = vpack.c.b16 %v5219, %v5215
        %v6388 = vpack.c.b16 %v5224, %v5220
        %v6389 = vpack.c.b16 %v5225, %v5221
        %v6390 = vpack.c.b16 %v5226, %v5222
        %v6391 = vpack.c.b16 %v5227, %v5223
        %v6392 = vpack.c.b16 %v5232, %v5228
        %v6393 = vpack.c.b16 %v5233, %v5229
        %v6394 = vpack.c.b16 %v5234, %v5230
        %v6395 = vpack.c.b16 %v5235, %v5231
        %v6396 = vpack.c.b16 %v5240, %v5236
        %v6397 = vpack.c.b16 %v5241, %v5237
        %v6398 = vpack.c.b16 %v5242, %v5238
        %v6399 = vpack.c.b16 %v5243, %v5239
        %v6400 = vpack.c.b16 %v5248, %v5244
        %v6401 = vpack.c.b16 %v5249, %v5245
        %v6402 = vpack.c.b16 %v5250, %v5246
        %v6403 = vpack.c.b16 %v5251, %v5247
        %7556 = vmatpush.bf16.msra.mxu0 %v5280
        %7557 = vmatpush.bf16.msra.mxu0 %v5276
        %7558 = vmatpush.bf16.msra.mxu0 %v5272
        %7559 = vmatpush.bf16.msra.mxu0 %v5268
        %7560 = vmatpush.bf16.msra.mxu0 %v5264
        %7561 = vmatpush.bf16.msra.mxu0 %v5260
        %7562 = vmatpush.bf16.msra.mxu0 %v5256
        %7563 = vmatpush.bf16.msra.mxu0 %v5252
        %7564 = vmatmul.bf16.gmra.mxu0 %v1724
        %v7565 = vpop.f32.mrf.mxu0
        %v7566 = vadd.f32 0.0, %v7565
        %v7567 = vpop.f32.mrf.mxu0
        %v7568 = vadd.f32 0.0, %v7567
        %7569 = vdwg.mxu0
        %7570 = vmatpush.bf16.msra.mxu0 %v5312
        %7571 = vmatpush.bf16.msra.mxu0 %v5308
        %7572 = vmatpush.bf16.msra.mxu0 %v5304
        %7573 = vmatpush.bf16.msra.mxu0 %v5300
        %7574 = vmatpush.bf16.msra.mxu0 %v5296
        %7575 = vmatpush.bf16.msra.mxu0 %v5292
        %7576 = vmatpush.bf16.msra.mxu0 %v5288
        %7577 = vmatpush.bf16.msra.mxu0 %v5284
        %7578 = vmatmul.bf16.gmra.mxu0 %v1725
        %v7579 = vpop.f32.mrf.mxu0
        %v7580 = vadd.f32 %v7566, %v7579
        %v7581 = vpop.f32.mrf.mxu0
        %v7582 = vadd.f32 %v7568, %v7581
        %7583 = vdwg.mxu0
        %7584 = vmatpush.bf16.msra.mxu0 %v5344
        %7585 = vmatpush.bf16.msra.mxu0 %v5340
        %7586 = vmatpush.bf16.msra.mxu0 %v5336
        %7587 = vmatpush.bf16.msra.mxu0 %v5332
        %7588 = vmatpush.bf16.msra.mxu0 %v5328
        %7589 = vmatpush.bf16.msra.mxu0 %v5324
        %7590 = vmatpush.bf16.msra.mxu0 %v5320
        %7591 = vmatpush.bf16.msra.mxu0 %v5316
        %7592 = vmatmul.bf16.gmra.mxu0 %v1726
        %v7593 = vpop.f32.mrf.mxu0
        %v7594 = vadd.f32 %v7580, %v7593
        %v7595 = vpop.f32.mrf.mxu0
        %v7596 = vadd.f32 %v7582, %v7595
        %7597 = vdwg.mxu0
        %7598 = vmatpush.bf16.msra.mxu0 %v5376
        %7599 = vmatpush.bf16.msra.mxu0 %v5372
        %7600 = vmatpush.bf16.msra.mxu0 %v5368
        %7601 = vmatpush.bf16.msra.mxu0 %v5364
        %7602 = vmatpush.bf16.msra.mxu0 %v5360
        %7603 = vmatpush.bf16.msra.mxu0 %v5356
        %7604 = vmatpush.bf16.msra.mxu0 %v5352
        %7605 = vmatpush.bf16.msra.mxu0 %v5348
        %7606 = vmatmul.bf16.gmra.mxu0 %v1727
        %v7607 = vpop.f32.mrf.mxu0
        %v7608 = vadd.f32 %v7594, %v7607
        %v7609 = vpop.f32.mrf.mxu0
        %v7610 = vadd.f32 %v7596, %v7609
        %7611 = vdwg.mxu0
        %7612 = vmatpush.bf16.msra.mxu0 %v5408
        %7613 = vmatpush.bf16.msra.mxu0 %v5404
        %7614 = vmatpush.bf16.msra.mxu0 %v5400
        %7615 = vmatpush.bf16.msra.mxu0 %v5396
        %7616 = vmatpush.bf16.msra.mxu0 %v5392
        %7617 = vmatpush.bf16.msra.mxu0 %v5388
        %7618 = vmatpush.bf16.msra.mxu0 %v5384
        %7619 = vmatpush.bf16.msra.mxu0 %v5380
        %7620 = vmatmul.bf16.gmra.mxu0 %v1728
        %v7621 = vpop.f32.mrf.mxu0
        %v7622 = vadd.f32 %v7608, %v7621
        %v7623 = vpop.f32.mrf.mxu0
        %v7624 = vadd.f32 %v7610, %v7623
        %7625 = vdwg.mxu0
        %7626 = vmatpush.bf16.msra.mxu0 %v5440
        %7627 = vmatpush.bf16.msra.mxu0 %v5436
        %7628 = vmatpush.bf16.msra.mxu0 %v5432
        %7629 = vmatpush.bf16.msra.mxu0 %v5428
        %7630 = vmatpush.bf16.msra.mxu0 %v5424
        %7631 = vmatpush.bf16.msra.mxu0 %v5420
        %7632 = vmatpush.bf16.msra.mxu0 %v5416
        %7633 = vmatpush.bf16.msra.mxu0 %v5412
        %7634 = vmatmul.bf16.gmra.mxu0 %v1729
        %v7635 = vpop.f32.mrf.mxu0
        %v7636 = vadd.f32 %v7622, %v7635
        %v7637 = vpop.f32.mrf.mxu0
        %v7638 = vadd.f32 %v7624, %v7637
        %7639 = vdwg.mxu0
        %7640 = vmatpush.bf16.msra.mxu0 %v5472
        %7641 = vmatpush.bf16.msra.mxu0 %v5468
        %7642 = vmatpush.bf16.msra.mxu0 %v5464
        %7643 = vmatpush.bf16.msra.mxu0 %v5460
        %7644 = vmatpush.bf16.msra.mxu0 %v5456
        %7645 = vmatpush.bf16.msra.mxu0 %v5452
        %7646 = vmatpush.bf16.msra.mxu0 %v5448
        %7647 = vmatpush.bf16.msra.mxu0 %v5444
        %7648 = vmatmul.bf16.gmra.mxu0 %v1730
        %v7649 = vpop.f32.mrf.mxu0
        %v7650 = vadd.f32 %v7636, %v7649
        %v7651 = vpop.f32.mrf.mxu0
        %v7652 = vadd.f32 %v7638, %v7651
        %7653 = vdwg.mxu0
        %7654 = vmatpush.bf16.msra.mxu0 %v5504
        %7655 = vmatpush.bf16.msra.mxu0 %v5500
        %7656 = vmatpush.bf16.msra.mxu0 %v5496
        %7657 = vmatpush.bf16.msra.mxu0 %v5492
        %7658 = vmatpush.bf16.msra.mxu0 %v5488
        %7659 = vmatpush.bf16.msra.mxu0 %v5484
        %7660 = vmatpush.bf16.msra.mxu0 %v5480
        %7661 = vmatpush.bf16.msra.mxu0 %v5476
        %7662 = vmatmul.bf16.gmra.mxu0 %v1731
        %v7663 = vpop.f32.mrf.mxu0
        %v7664 = vadd.f32 %v7650, %v7663
        %v7665 = vpop.f32.mrf.mxu0
        %v7666 = vadd.f32 %v7652, %v7665
        %7667 = vdwg.mxu0
        %7668 = vmatpush.bf16.msra.mxu0 %v5536
        %7669 = vmatpush.bf16.msra.mxu0 %v5532
        %7670 = vmatpush.bf16.msra.mxu0 %v5528
        %7671 = vmatpush.bf16.msra.mxu0 %v5524
        %7672 = vmatpush.bf16.msra.mxu0 %v5520
        %7673 = vmatpush.bf16.msra.mxu0 %v5516
        %7674 = vmatpush.bf16.msra.mxu0 %v5512
        %7675 = vmatpush.bf16.msra.mxu0 %v5508
        %7676 = vmatmul.bf16.gmra.mxu0 %v1732
        %v7677 = vpop.f32.mrf.mxu0
        %v7678 = vadd.f32 %v7664, %v7677
        %v7679 = vpop.f32.mrf.mxu0
        %v7680 = vadd.f32 %v7666, %v7679
        %7681 = vdwg.mxu0
        %7682 = vmatpush.bf16.msra.mxu0 %v5568
        %7683 = vmatpush.bf16.msra.mxu0 %v5564
        %7684 = vmatpush.bf16.msra.mxu0 %v5560
        %7685 = vmatpush.bf16.msra.mxu0 %v5556
        %7686 = vmatpush.bf16.msra.mxu0 %v5552
        %7687 = vmatpush.bf16.msra.mxu0 %v5548
        %7688 = vmatpush.bf16.msra.mxu0 %v5544
        %7689 = vmatpush.bf16.msra.mxu0 %v5540
        %7690 = vmatmul.bf16.gmra.mxu0 %v1733
        %v7691 = vpop.f32.mrf.mxu0
        %v7692 = vadd.f32 %v7678, %v7691
        %v7693 = vpop.f32.mrf.mxu0
        %v7694 = vadd.f32 %v7680, %v7693
        %7695 = vdwg.mxu0
        %7696 = vmatpush.bf16.msra.mxu0 %v5600
        %7697 = vmatpush.bf16.msra.mxu0 %v5596
        %7698 = vmatpush.bf16.msra.mxu0 %v5592
        %7699 = vmatpush.bf16.msra.mxu0 %v5588
        %7700 = vmatpush.bf16.msra.mxu0 %v5584
        %7701 = vmatpush.bf16.msra.mxu0 %v5580
        %7702 = vmatpush.bf16.msra.mxu0 %v5576
        %7703 = vmatpush.bf16.msra.mxu0 %v5572
        %7704 = vmatmul.bf16.gmra.mxu0 %v1734
        %v7705 = vpop.f32.mrf.mxu0
        %v7706 = vadd.f32 %v7692, %v7705
        %v7707 = vpop.f32.mrf.mxu0
        %v7708 = vadd.f32 %v7694, %v7707
        %7709 = vdwg.mxu0
        %7710 = vmatpush.bf16.msra.mxu0 %v5632
        %7711 = vmatpush.bf16.msra.mxu0 %v5628
        %7712 = vmatpush.bf16.msra.mxu0 %v5624
        %7713 = vmatpush.bf16.msra.mxu0 %v5620
        %7714 = vmatpush.bf16.msra.mxu0 %v5616
        %7715 = vmatpush.bf16.msra.mxu0 %v5612
        %7716 = vmatpush.bf16.msra.mxu0 %v5608
        %7717 = vmatpush.bf16.msra.mxu0 %v5604
        %7718 = vmatmul.bf16.gmra.mxu0 %v1735
        %v7719 = vpop.f32.mrf.mxu0
        %v7720 = vadd.f32 %v7706, %v7719
        %v7721 = vpop.f32.mrf.mxu0
        %v7722 = vadd.f32 %v7708, %v7721
        %7723 = vdwg.mxu0
        %7724 = vmatpush.bf16.msra.mxu0 %v5664
        %7725 = vmatpush.bf16.msra.mxu0 %v5660
        %7726 = vmatpush.bf16.msra.mxu0 %v5656
        %7727 = vmatpush.bf16.msra.mxu0 %v5652
        %7728 = vmatpush.bf16.msra.mxu0 %v5648
        %7729 = vmatpush.bf16.msra.mxu0 %v5644
        %7730 = vmatpush.bf16.msra.mxu0 %v5640
        %7731 = vmatpush.bf16.msra.mxu0 %v5636
        %7732 = vmatmul.bf16.gmra.mxu0 %v1736
        %v7733 = vpop.f32.mrf.mxu0
        %v7734 = vadd.f32 %v7720, %v7733
        %v7735 = vpop.f32.mrf.mxu0
        %v7736 = vadd.f32 %v7722, %v7735
        %7737 = vdwg.mxu0
        %7738 = vmatpush.bf16.msra.mxu0 %v5696
        %7739 = vmatpush.bf16.msra.mxu0 %v5692
        %7740 = vmatpush.bf16.msra.mxu0 %v5688
        %7741 = vmatpush.bf16.msra.mxu0 %v5684
        %7742 = vmatpush.bf16.msra.mxu0 %v5680
        %7743 = vmatpush.bf16.msra.mxu0 %v5676
        %7744 = vmatpush.bf16.msra.mxu0 %v5672
        %7745 = vmatpush.bf16.msra.mxu0 %v5668
        %7746 = vmatmul.bf16.gmra.mxu0 %v1737
        %v7747 = vpop.f32.mrf.mxu0
        %v7748 = vadd.f32 %v7734, %v7747
        %v7749 = vpop.f32.mrf.mxu0
        %v7750 = vadd.f32 %v7736, %v7749
        %7751 = vdwg.mxu0
        %7752 = vmatpush.bf16.msra.mxu0 %v5728
        %7753 = vmatpush.bf16.msra.mxu0 %v5724
        %7754 = vmatpush.bf16.msra.mxu0 %v5720
        %7755 = vmatpush.bf16.msra.mxu0 %v5716
        %7756 = vmatpush.bf16.msra.mxu0 %v5712
        %7757 = vmatpush.bf16.msra.mxu0 %v5708
        %7758 = vmatpush.bf16.msra.mxu0 %v5704
        %7759 = vmatpush.bf16.msra.mxu0 %v5700
        %7760 = vmatmul.bf16.gmra.mxu0 %v1738
        %v7761 = vpop.f32.mrf.mxu0
        %v7762 = vadd.f32 %v7748, %v7761
        %v7763 = vpop.f32.mrf.mxu0
        %v7764 = vadd.f32 %v7750, %v7763
        %7765 = vdwg.mxu0
        %7766 = vmatpush.bf16.msra.mxu0 %v5760
        %7767 = vmatpush.bf16.msra.mxu0 %v5756
        %7768 = vmatpush.bf16.msra.mxu0 %v5752
        %7769 = vmatpush.bf16.msra.mxu0 %v5748
        %7770 = vmatpush.bf16.msra.mxu0 %v5744
        %7771 = vmatpush.bf16.msra.mxu0 %v5740
        %7772 = vmatpush.bf16.msra.mxu0 %v5736
        %7773 = vmatpush.bf16.msra.mxu0 %v5732
        %7774 = vmatmul.bf16.gmra.mxu0 %v1739
        %v7775 = vpop.f32.mrf.mxu0
        %v7776 = vadd.f32 %v7762, %v7775
        %v7777 = vpop.f32.mrf.mxu0
        %v7778 = vadd.f32 %v7764, %v7777
        %7779 = vdwg.mxu0
        %7780 = vmatpush.bf16.msra.mxu0 %v5792
        %7781 = vmatpush.bf16.msra.mxu0 %v5788
        %7782 = vmatpush.bf16.msra.mxu0 %v5784
        %7783 = vmatpush.bf16.msra.mxu0 %v5780
        %7784 = vmatpush.bf16.msra.mxu0 %v5776
        %7785 = vmatpush.bf16.msra.mxu0 %v5772
        %7786 = vmatpush.bf16.msra.mxu0 %v5768
        %7787 = vmatpush.bf16.msra.mxu0 %v5764
        %7788 = vmatmul.bf16.gmra.mxu0 %v1740
        %v7789 = vpop.f32.mrf.mxu0
        %v7790 = vadd.f32 %v7776, %v7789
        %v7791 = vpop.f32.mrf.mxu0
        %v7792 = vadd.f32 %v7778, %v7791
        %7793 = vdwg.mxu0
        %7794 = vmatpush.bf16.msra.mxu0 %v5824
        %7795 = vmatpush.bf16.msra.mxu0 %v5820
        %7796 = vmatpush.bf16.msra.mxu0 %v5816
        %7797 = vmatpush.bf16.msra.mxu0 %v5812
        %7798 = vmatpush.bf16.msra.mxu0 %v5808
        %7799 = vmatpush.bf16.msra.mxu0 %v5804
        %7800 = vmatpush.bf16.msra.mxu0 %v5800
        %7801 = vmatpush.bf16.msra.mxu0 %v5796
        %7802 = vmatmul.bf16.gmra.mxu0 %v1741
        %v7803 = vpop.f32.mrf.mxu0
        %v7804 = vadd.f32 %v7790, %v7803
        %v7805 = vpop.f32.mrf.mxu0
        %v7806 = vadd.f32 %v7792, %v7805
        %7807 = vdwg.mxu0
        %7808 = vmatpush.bf16.msra.mxu0 %v5856
        %7809 = vmatpush.bf16.msra.mxu0 %v5852
        %7810 = vmatpush.bf16.msra.mxu0 %v5848
        %7811 = vmatpush.bf16.msra.mxu0 %v5844
        %7812 = vmatpush.bf16.msra.mxu0 %v5840
        %7813 = vmatpush.bf16.msra.mxu0 %v5836
        %7814 = vmatpush.bf16.msra.mxu0 %v5832
        %7815 = vmatpush.bf16.msra.mxu0 %v5828
        %7816 = vmatmul.bf16.gmra.mxu0 %v1742
        %v7817 = vpop.f32.mrf.mxu0
        %v7818 = vadd.f32 %v7804, %v7817
        %v7819 = vpop.f32.mrf.mxu0
        %v7820 = vadd.f32 %v7806, %v7819
        %7821 = vdwg.mxu0
        %7822 = vmatpush.bf16.msra.mxu0 %v5888
        %7823 = vmatpush.bf16.msra.mxu0 %v5884
        %7824 = vmatpush.bf16.msra.mxu0 %v5880
        %7825 = vmatpush.bf16.msra.mxu0 %v5876
        %7826 = vmatpush.bf16.msra.mxu0 %v5872
        %7827 = vmatpush.bf16.msra.mxu0 %v5868
        %7828 = vmatpush.bf16.msra.mxu0 %v5864
        %7829 = vmatpush.bf16.msra.mxu0 %v5860
        %7830 = vmatmul.bf16.gmra.mxu0 %v1743
        %v7831 = vpop.f32.mrf.mxu0
        %v7832 = vadd.f32 %v7818, %v7831
        %v7833 = vpop.f32.mrf.mxu0
        %v7834 = vadd.f32 %v7820, %v7833
        %7835 = vdwg.mxu0
        %7836 = vmatpush.bf16.msra.mxu0 %v5920
        %7837 = vmatpush.bf16.msra.mxu0 %v5916
        %7838 = vmatpush.bf16.msra.mxu0 %v5912
        %7839 = vmatpush.bf16.msra.mxu0 %v5908
        %7840 = vmatpush.bf16.msra.mxu0 %v5904
        %7841 = vmatpush.bf16.msra.mxu0 %v5900
        %7842 = vmatpush.bf16.msra.mxu0 %v5896
        %7843 = vmatpush.bf16.msra.mxu0 %v5892
        %7844 = vmatmul.bf16.gmra.mxu0 %v1744
        %v7845 = vpop.f32.mrf.mxu0
        %v7846 = vadd.f32 %v7832, %v7845
        %v7847 = vpop.f32.mrf.mxu0
        %v7848 = vadd.f32 %v7834, %v7847
        %7849 = vdwg.mxu0
        %7850 = vmatpush.bf16.msra.mxu0 %v5952
        %7851 = vmatpush.bf16.msra.mxu0 %v5948
        %7852 = vmatpush.bf16.msra.mxu0 %v5944
        %7853 = vmatpush.bf16.msra.mxu0 %v5940
        %7854 = vmatpush.bf16.msra.mxu0 %v5936
        %7855 = vmatpush.bf16.msra.mxu0 %v5932
        %7856 = vmatpush.bf16.msra.mxu0 %v5928
        %7857 = vmatpush.bf16.msra.mxu0 %v5924
        %7858 = vmatmul.bf16.gmra.mxu0 %v1745
        %v7859 = vpop.f32.mrf.mxu0
        %v7860 = vadd.f32 %v7846, %v7859
        %v7861 = vpop.f32.mrf.mxu0
        %v7862 = vadd.f32 %v7848, %v7861
        %7863 = vdwg.mxu0
        %7864 = vmatpush.bf16.msra.mxu0 %v5984
        %7865 = vmatpush.bf16.msra.mxu0 %v5980
        %7866 = vmatpush.bf16.msra.mxu0 %v5976
        %7867 = vmatpush.bf16.msra.mxu0 %v5972
        %7868 = vmatpush.bf16.msra.mxu0 %v5968
        %7869 = vmatpush.bf16.msra.mxu0 %v5964
        %7870 = vmatpush.bf16.msra.mxu0 %v5960
        %7871 = vmatpush.bf16.msra.mxu0 %v5956
        %7872 = vmatmul.bf16.gmra.mxu0 %v1746
        %v7873 = vpop.f32.mrf.mxu0
        %v7874 = vadd.f32 %v7860, %v7873
        %v7875 = vpop.f32.mrf.mxu0
        %v7876 = vadd.f32 %v7862, %v7875
        %7877 = vdwg.mxu0
        %7878 = vmatpush.bf16.msra.mxu0 %v6016
        %7879 = vmatpush.bf16.msra.mxu0 %v6012
        %7880 = vmatpush.bf16.msra.mxu0 %v6008
        %7881 = vmatpush.bf16.msra.mxu0 %v6004
        %7882 = vmatpush.bf16.msra.mxu0 %v6000
        %7883 = vmatpush.bf16.msra.mxu0 %v5996
        %7884 = vmatpush.bf16.msra.mxu0 %v5992
        %7885 = vmatpush.bf16.msra.mxu0 %v5988
        %7886 = vmatmul.bf16.gmra.mxu0 %v1747
        %v7887 = vpop.f32.mrf.mxu0
        %v7888 = vadd.f32 %v7874, %v7887
        %v7889 = vpop.f32.mrf.mxu0
        %v7890 = vadd.f32 %v7876, %v7889
        %7891 = vdwg.mxu0
        %7892 = vmatpush.bf16.msra.mxu0 %v6048
        %7893 = vmatpush.bf16.msra.mxu0 %v6044
        %7894 = vmatpush.bf16.msra.mxu0 %v6040
        %7895 = vmatpush.bf16.msra.mxu0 %v6036
        %7896 = vmatpush.bf16.msra.mxu0 %v6032
        %7897 = vmatpush.bf16.msra.mxu0 %v6028
        %7898 = vmatpush.bf16.msra.mxu0 %v6024
        %7899 = vmatpush.bf16.msra.mxu0 %v6020
        %7900 = vmatmul.bf16.gmra.mxu0 %v1748
        %v7901 = vpop.f32.mrf.mxu0
        %v7902 = vadd.f32 %v7888, %v7901
        %v7903 = vpop.f32.mrf.mxu0
        %v7904 = vadd.f32 %v7890, %v7903
        %7905 = vdwg.mxu0
        %7906 = vmatpush.bf16.msra.mxu0 %v6080
        %7907 = vmatpush.bf16.msra.mxu0 %v6076
        %7908 = vmatpush.bf16.msra.mxu0 %v6072
        %7909 = vmatpush.bf16.msra.mxu0 %v6068
        %7910 = vmatpush.bf16.msra.mxu0 %v6064
        %7911 = vmatpush.bf16.msra.mxu0 %v6060
        %7912 = vmatpush.bf16.msra.mxu0 %v6056
        %7913 = vmatpush.bf16.msra.mxu0 %v6052
        %7914 = vmatmul.bf16.gmra.mxu0 %v1749
        %v7915 = vpop.f32.mrf.mxu0
        %v7916 = vadd.f32 %v7902, %v7915
        %v7917 = vpop.f32.mrf.mxu0
        %v7918 = vadd.f32 %v7904, %v7917
        %7919 = vdwg.mxu0
        %7920 = vmatpush.bf16.msra.mxu0 %v6112
        %7921 = vmatpush.bf16.msra.mxu0 %v6108
        %7922 = vmatpush.bf16.msra.mxu0 %v6104
        %7923 = vmatpush.bf16.msra.mxu0 %v6100
        %7924 = vmatpush.bf16.msra.mxu0 %v6096
        %7925 = vmatpush.bf16.msra.mxu0 %v6092
        %7926 = vmatpush.bf16.msra.mxu0 %v6088
        %7927 = vmatpush.bf16.msra.mxu0 %v6084
        %7928 = vmatmul.bf16.gmra.mxu0 %v1750
        %v7929 = vpop.f32.mrf.mxu0
        %v7930 = vadd.f32 %v7916, %v7929
        %v7931 = vpop.f32.mrf.mxu0
        %v7932 = vadd.f32 %v7918, %v7931
        %7933 = vdwg.mxu0
        %7934 = vmatpush.bf16.msra.mxu0 %v6144
        %7935 = vmatpush.bf16.msra.mxu0 %v6140
        %7936 = vmatpush.bf16.msra.mxu0 %v6136
        %7937 = vmatpush.bf16.msra.mxu0 %v6132
        %7938 = vmatpush.bf16.msra.mxu0 %v6128
        %7939 = vmatpush.bf16.msra.mxu0 %v6124
        %7940 = vmatpush.bf16.msra.mxu0 %v6120
        %7941 = vmatpush.bf16.msra.mxu0 %v6116
        %7942 = vmatmul.bf16.gmra.mxu0 %v1751
        %v7943 = vpop.f32.mrf.mxu0
        %v7944 = vadd.f32 %v7930, %v7943
        %v7945 = vpop.f32.mrf.mxu0
        %v7946 = vadd.f32 %v7932, %v7945
        %7947 = vdwg.mxu0
        %7948 = vmatpush.bf16.msra.mxu0 %v6176
        %7949 = vmatpush.bf16.msra.mxu0 %v6172
        %7950 = vmatpush.bf16.msra.mxu0 %v6168
        %7951 = vmatpush.bf16.msra.mxu0 %v6164
        %7952 = vmatpush.bf16.msra.mxu0 %v6160
        %7953 = vmatpush.bf16.msra.mxu0 %v6156
        %7954 = vmatpush.bf16.msra.mxu0 %v6152
        %7955 = vmatpush.bf16.msra.mxu0 %v6148
        %7956 = vmatmul.bf16.gmra.mxu0 %v1752
        %v7957 = vpop.f32.mrf.mxu0
        %v7958 = vadd.f32 %v7944, %v7957
        %v7959 = vpop.f32.mrf.mxu0
        %v7960 = vadd.f32 %v7946, %v7959
        %7961 = vdwg.mxu0
        %7962 = vmatpush.bf16.msra.mxu0 %v6208
        %7963 = vmatpush.bf16.msra.mxu0 %v6204
        %7964 = vmatpush.bf16.msra.mxu0 %v6200
        %7965 = vmatpush.bf16.msra.mxu0 %v6196
        %7966 = vmatpush.bf16.msra.mxu0 %v6192
        %7967 = vmatpush.bf16.msra.mxu0 %v6188
        %7968 = vmatpush.bf16.msra.mxu0 %v6184
        %7969 = vmatpush.bf16.msra.mxu0 %v6180
        %7970 = vmatmul.bf16.gmra.mxu0 %v1753
        %v7971 = vpop.f32.mrf.mxu0
        %v7972 = vadd.f32 %v7958, %v7971
        %v7973 = vpop.f32.mrf.mxu0
        %v7974 = vadd.f32 %v7960, %v7973
        %7975 = vdwg.mxu0
        %7976 = vmatpush.bf16.msra.mxu0 %v6240
        %7977 = vmatpush.bf16.msra.mxu0 %v6236
        %7978 = vmatpush.bf16.msra.mxu0 %v6232
        %7979 = vmatpush.bf16.msra.mxu0 %v6228
        %7980 = vmatpush.bf16.msra.mxu0 %v6224
        %7981 = vmatpush.bf16.msra.mxu0 %v6220
        %7982 = vmatpush.bf16.msra.mxu0 %v6216
        %7983 = vmatpush.bf16.msra.mxu0 %v6212
        %7984 = vmatmul.bf16.gmra.mxu0 %v1754
        %v7985 = vpop.f32.mrf.mxu0
        %v7986 = vadd.f32 %v7972, %v7985
        %v7987 = vpop.f32.mrf.mxu0
        %v7988 = vadd.f32 %v7974, %v7987
        %7989 = vdwg.mxu0
        %7990 = vmatpush.bf16.msra.mxu0 %v6272
        %7991 = vmatpush.bf16.msra.mxu0 %v6268
        %7992 = vmatpush.bf16.msra.mxu0 %v6264
        %7993 = vmatpush.bf16.msra.mxu0 %v6260
        %7994 = vmatpush.bf16.msra.mxu0 %v6256
        %7995 = vmatpush.bf16.msra.mxu0 %v6252
        %7996 = vmatpush.bf16.msra.mxu0 %v6248
        %7997 = vmatpush.bf16.msra.mxu0 %v6244
        %7998 = vmatmul.bf16.gmra.mxu0 %v1755
        %v7999 = vpop.f32.mrf.mxu0
        %v8000 = vadd.f32 %v7986, %v7999
        %v8001 = vpop.f32.mrf.mxu0
        %v8002 = vadd.f32 %v7988, %v8001
        %8003 = vdwg.mxu0
        %8004 = vmatpush.bf16.msra.mxu0 %v6304
        %8005 = vmatpush.bf16.msra.mxu0 %v6300
        %8006 = vmatpush.bf16.msra.mxu0 %v6296
        %8007 = vmatpush.bf16.msra.mxu0 %v6292
        %8008 = vmatpush.bf16.msra.mxu0 %v6288
        %8009 = vmatpush.bf16.msra.mxu0 %v6284
        %8010 = vmatpush.bf16.msra.mxu0 %v6280
        %8011 = vmatpush.bf16.msra.mxu0 %v6276
        %8012 = vmatmul.bf16.gmra.mxu0 %v1756
        %v8013 = vpop.f32.mrf.mxu0
        %v8014 = vadd.f32 %v8000, %v8013
        %v8015 = vpop.f32.mrf.mxu0
        %v8016 = vadd.f32 %v8002, %v8015
        %8017 = vdwg.mxu0
        %8018 = vmatpush.bf16.msra.mxu0 %v6336
        %8019 = vmatpush.bf16.msra.mxu0 %v6332
        %8020 = vmatpush.bf16.msra.mxu0 %v6328
        %8021 = vmatpush.bf16.msra.mxu0 %v6324
        %8022 = vmatpush.bf16.msra.mxu0 %v6320
        %8023 = vmatpush.bf16.msra.mxu0 %v6316
        %8024 = vmatpush.bf16.msra.mxu0 %v6312
        %8025 = vmatpush.bf16.msra.mxu0 %v6308
        %8026 = vmatmul.bf16.gmra.mxu0 %v1757
        %v8027 = vpop.f32.mrf.mxu0
        %v8028 = vadd.f32 %v8014, %v8027
        %v8029 = vpop.f32.mrf.mxu0
        %v8030 = vadd.f32 %v8016, %v8029
        %8031 = vdwg.mxu0
        %8032 = vmatpush.bf16.msra.mxu0 %v6368
        %8033 = vmatpush.bf16.msra.mxu0 %v6364
        %8034 = vmatpush.bf16.msra.mxu0 %v6360
        %8035 = vmatpush.bf16.msra.mxu0 %v6356
        %8036 = vmatpush.bf16.msra.mxu0 %v6352
        %8037 = vmatpush.bf16.msra.mxu0 %v6348
        %8038 = vmatpush.bf16.msra.mxu0 %v6344
        %8039 = vmatpush.bf16.msra.mxu0 %v6340
        %8040 = vmatmul.bf16.gmra.mxu0 %v1758
        %v8041 = vpop.f32.mrf.mxu0
        %v8042 = vadd.f32 %v8028, %v8041
        %v8043 = vpop.f32.mrf.mxu0
        %v8044 = vadd.f32 %v8030, %v8043
        %8045 = vdwg.mxu0
        %8046 = vmatpush.bf16.msra.mxu0 %v6400
        %8047 = vmatpush.bf16.msra.mxu0 %v6396
        %8048 = vmatpush.bf16.msra.mxu0 %v6392
        %8049 = vmatpush.bf16.msra.mxu0 %v6388
        %8050 = vmatpush.bf16.msra.mxu0 %v6384
        %8051 = vmatpush.bf16.msra.mxu0 %v6380
        %8052 = vmatpush.bf16.msra.mxu0 %v6376
        %8053 = vmatpush.bf16.msra.mxu0 %v6372
        %8054 = vmatmul.bf16.gmra.mxu0 %v1759
        %v8055 = vpop.f32.mrf.mxu0
        %v8056 = vadd.f32 %v8042, %v8055
        %v8057 = vpop.f32.mrf.mxu0
        %v8058 = vadd.f32 %v8044, %v8057
        %8059 = vdwg.mxu0
        %8060 = vmatpush.bf16.msra.mxu0 %v5281
        %8061 = vmatpush.bf16.msra.mxu0 %v5277
        %8062 = vmatpush.bf16.msra.mxu0 %v5273
        %8063 = vmatpush.bf16.msra.mxu0 %v5269
        %8064 = vmatpush.bf16.msra.mxu0 %v5265
        %8065 = vmatpush.bf16.msra.mxu0 %v5261
        %8066 = vmatpush.bf16.msra.mxu0 %v5257
        %8067 = vmatpush.bf16.msra.mxu0 %v5253
        %8068 = vmatmul.bf16.gmra.mxu0 %v1724
        %v8069 = vpop.f32.mrf.mxu0
        %v8070 = vadd.f32 0.0, %v8069
        %v8071 = vpop.f32.mrf.mxu0
        %v8072 = vadd.f32 0.0, %v8071
        %8073 = vdwg.mxu0
        %8074 = vmatpush.bf16.msra.mxu0 %v5313
        %8075 = vmatpush.bf16.msra.mxu0 %v5309
        %8076 = vmatpush.bf16.msra.mxu0 %v5305
        %8077 = vmatpush.bf16.msra.mxu0 %v5301
        %8078 = vmatpush.bf16.msra.mxu0 %v5297
        %8079 = vmatpush.bf16.msra.mxu0 %v5293
        %8080 = vmatpush.bf16.msra.mxu0 %v5289
        %8081 = vmatpush.bf16.msra.mxu0 %v5285
        %8082 = vmatmul.bf16.gmra.mxu0 %v1725
        %v8083 = vpop.f32.mrf.mxu0
        %v8084 = vadd.f32 %v8070, %v8083
        %v8085 = vpop.f32.mrf.mxu0
        %v8086 = vadd.f32 %v8072, %v8085
        %8087 = vdwg.mxu0
        %8088 = vmatpush.bf16.msra.mxu0 %v5345
        %8089 = vmatpush.bf16.msra.mxu0 %v5341
        %8090 = vmatpush.bf16.msra.mxu0 %v5337
        %8091 = vmatpush.bf16.msra.mxu0 %v5333
        %8092 = vmatpush.bf16.msra.mxu0 %v5329
        %8093 = vmatpush.bf16.msra.mxu0 %v5325
        %8094 = vmatpush.bf16.msra.mxu0 %v5321
        %8095 = vmatpush.bf16.msra.mxu0 %v5317
        %8096 = vmatmul.bf16.gmra.mxu0 %v1726
        %v8097 = vpop.f32.mrf.mxu0
        %v8098 = vadd.f32 %v8084, %v8097
        %v8099 = vpop.f32.mrf.mxu0
        %v8100 = vadd.f32 %v8086, %v8099
        %8101 = vdwg.mxu0
        %8102 = vmatpush.bf16.msra.mxu0 %v5377
        %8103 = vmatpush.bf16.msra.mxu0 %v5373
        %8104 = vmatpush.bf16.msra.mxu0 %v5369
        %8105 = vmatpush.bf16.msra.mxu0 %v5365
        %8106 = vmatpush.bf16.msra.mxu0 %v5361
        %8107 = vmatpush.bf16.msra.mxu0 %v5357
        %8108 = vmatpush.bf16.msra.mxu0 %v5353
        %8109 = vmatpush.bf16.msra.mxu0 %v5349
        %8110 = vmatmul.bf16.gmra.mxu0 %v1727
        %v8111 = vpop.f32.mrf.mxu0
        %v8112 = vadd.f32 %v8098, %v8111
        %v8113 = vpop.f32.mrf.mxu0
        %v8114 = vadd.f32 %v8100, %v8113
        %8115 = vdwg.mxu0
        %8116 = vmatpush.bf16.msra.mxu0 %v5409
        %8117 = vmatpush.bf16.msra.mxu0 %v5405
        %8118 = vmatpush.bf16.msra.mxu0 %v5401
        %8119 = vmatpush.bf16.msra.mxu0 %v5397
        %8120 = vmatpush.bf16.msra.mxu0 %v5393
        %8121 = vmatpush.bf16.msra.mxu0 %v5389
        %8122 = vmatpush.bf16.msra.mxu0 %v5385
        %8123 = vmatpush.bf16.msra.mxu0 %v5381
        %8124 = vmatmul.bf16.gmra.mxu0 %v1728
        %v8125 = vpop.f32.mrf.mxu0
        %v8126 = vadd.f32 %v8112, %v8125
        %v8127 = vpop.f32.mrf.mxu0
        %v8128 = vadd.f32 %v8114, %v8127
        %8129 = vdwg.mxu0
        %8130 = vmatpush.bf16.msra.mxu0 %v5441
        %8131 = vmatpush.bf16.msra.mxu0 %v5437
        %8132 = vmatpush.bf16.msra.mxu0 %v5433
        %8133 = vmatpush.bf16.msra.mxu0 %v5429
        %8134 = vmatpush.bf16.msra.mxu0 %v5425
        %8135 = vmatpush.bf16.msra.mxu0 %v5421
        %8136 = vmatpush.bf16.msra.mxu0 %v5417
        %8137 = vmatpush.bf16.msra.mxu0 %v5413
        %8138 = vmatmul.bf16.gmra.mxu0 %v1729
        %v8139 = vpop.f32.mrf.mxu0
        %v8140 = vadd.f32 %v8126, %v8139
        %v8141 = vpop.f32.mrf.mxu0
        %v8142 = vadd.f32 %v8128, %v8141
        %8143 = vdwg.mxu0
        %8144 = vmatpush.bf16.msra.mxu0 %v5473
        %8145 = vmatpush.bf16.msra.mxu0 %v5469
        %8146 = vmatpush.bf16.msra.mxu0 %v5465
        %8147 = vmatpush.bf16.msra.mxu0 %v5461
        %8148 = vmatpush.bf16.msra.mxu0 %v5457
        %8149 = vmatpush.bf16.msra.mxu0 %v5453
        %8150 = vmatpush.bf16.msra.mxu0 %v5449
        %8151 = vmatpush.bf16.msra.mxu0 %v5445
        %8152 = vmatmul.bf16.gmra.mxu0 %v1730
        %v8153 = vpop.f32.mrf.mxu0
        %v8154 = vadd.f32 %v8140, %v8153
        %v8155 = vpop.f32.mrf.mxu0
        %v8156 = vadd.f32 %v8142, %v8155
        %8157 = vdwg.mxu0
        %8158 = vmatpush.bf16.msra.mxu0 %v5505
        %8159 = vmatpush.bf16.msra.mxu0 %v5501
        %8160 = vmatpush.bf16.msra.mxu0 %v5497
        %8161 = vmatpush.bf16.msra.mxu0 %v5493
        %8162 = vmatpush.bf16.msra.mxu0 %v5489
        %8163 = vmatpush.bf16.msra.mxu0 %v5485
        %8164 = vmatpush.bf16.msra.mxu0 %v5481
        %8165 = vmatpush.bf16.msra.mxu0 %v5477
        %8166 = vmatmul.bf16.gmra.mxu0 %v1731
        %v8167 = vpop.f32.mrf.mxu0
        %v8168 = vadd.f32 %v8154, %v8167
        %v8169 = vpop.f32.mrf.mxu0
        %v8170 = vadd.f32 %v8156, %v8169
        %8171 = vdwg.mxu0
        %8172 = vmatpush.bf16.msra.mxu0 %v5537
        %8173 = vmatpush.bf16.msra.mxu0 %v5533
        %8174 = vmatpush.bf16.msra.mxu0 %v5529
        %8175 = vmatpush.bf16.msra.mxu0 %v5525
        %8176 = vmatpush.bf16.msra.mxu0 %v5521
        %8177 = vmatpush.bf16.msra.mxu0 %v5517
        %8178 = vmatpush.bf16.msra.mxu0 %v5513
        %8179 = vmatpush.bf16.msra.mxu0 %v5509
        %8180 = vmatmul.bf16.gmra.mxu0 %v1732
        %v8181 = vpop.f32.mrf.mxu0
        %v8182 = vadd.f32 %v8168, %v8181
        %v8183 = vpop.f32.mrf.mxu0
        %v8184 = vadd.f32 %v8170, %v8183
        %8185 = vdwg.mxu0
        %8186 = vmatpush.bf16.msra.mxu0 %v5569
        %8187 = vmatpush.bf16.msra.mxu0 %v5565
        %8188 = vmatpush.bf16.msra.mxu0 %v5561
        %8189 = vmatpush.bf16.msra.mxu0 %v5557
        %8190 = vmatpush.bf16.msra.mxu0 %v5553
        %8191 = vmatpush.bf16.msra.mxu0 %v5549
        %8192 = vmatpush.bf16.msra.mxu0 %v5545
        %8193 = vmatpush.bf16.msra.mxu0 %v5541
        %8194 = vmatmul.bf16.gmra.mxu0 %v1733
        %v8195 = vpop.f32.mrf.mxu0
        %v8196 = vadd.f32 %v8182, %v8195
        %v8197 = vpop.f32.mrf.mxu0
        %v8198 = vadd.f32 %v8184, %v8197
        %8199 = vdwg.mxu0
        %8200 = vmatpush.bf16.msra.mxu0 %v5601
        %8201 = vmatpush.bf16.msra.mxu0 %v5597
        %8202 = vmatpush.bf16.msra.mxu0 %v5593
        %8203 = vmatpush.bf16.msra.mxu0 %v5589
        %8204 = vmatpush.bf16.msra.mxu0 %v5585
        %8205 = vmatpush.bf16.msra.mxu0 %v5581
        %8206 = vmatpush.bf16.msra.mxu0 %v5577
        %8207 = vmatpush.bf16.msra.mxu0 %v5573
        %8208 = vmatmul.bf16.gmra.mxu0 %v1734
        %v8209 = vpop.f32.mrf.mxu0
        %v8210 = vadd.f32 %v8196, %v8209
        %v8211 = vpop.f32.mrf.mxu0
        %v8212 = vadd.f32 %v8198, %v8211
        %8213 = vdwg.mxu0
        %8214 = vmatpush.bf16.msra.mxu0 %v5633
        %8215 = vmatpush.bf16.msra.mxu0 %v5629
        %8216 = vmatpush.bf16.msra.mxu0 %v5625
        %8217 = vmatpush.bf16.msra.mxu0 %v5621
        %8218 = vmatpush.bf16.msra.mxu0 %v5617
        %8219 = vmatpush.bf16.msra.mxu0 %v5613
        %8220 = vmatpush.bf16.msra.mxu0 %v5609
        %8221 = vmatpush.bf16.msra.mxu0 %v5605
        %8222 = vmatmul.bf16.gmra.mxu0 %v1735
        %v8223 = vpop.f32.mrf.mxu0
        %v8224 = vadd.f32 %v8210, %v8223
        %v8225 = vpop.f32.mrf.mxu0
        %v8226 = vadd.f32 %v8212, %v8225
        %8227 = vdwg.mxu0
        %8228 = vmatpush.bf16.msra.mxu0 %v5665
        %8229 = vmatpush.bf16.msra.mxu0 %v5661
        %8230 = vmatpush.bf16.msra.mxu0 %v5657
        %8231 = vmatpush.bf16.msra.mxu0 %v5653
        %8232 = vmatpush.bf16.msra.mxu0 %v5649
        %8233 = vmatpush.bf16.msra.mxu0 %v5645
        %8234 = vmatpush.bf16.msra.mxu0 %v5641
        %8235 = vmatpush.bf16.msra.mxu0 %v5637
        %8236 = vmatmul.bf16.gmra.mxu0 %v1736
        %v8237 = vpop.f32.mrf.mxu0
        %v8238 = vadd.f32 %v8224, %v8237
        %v8239 = vpop.f32.mrf.mxu0
        %v8240 = vadd.f32 %v8226, %v8239
        %8241 = vdwg.mxu0
        %8242 = vmatpush.bf16.msra.mxu0 %v5697
        %8243 = vmatpush.bf16.msra.mxu0 %v5693
        %8244 = vmatpush.bf16.msra.mxu0 %v5689
        %8245 = vmatpush.bf16.msra.mxu0 %v5685
        %8246 = vmatpush.bf16.msra.mxu0 %v5681
        %8247 = vmatpush.bf16.msra.mxu0 %v5677
        %8248 = vmatpush.bf16.msra.mxu0 %v5673
        %8249 = vmatpush.bf16.msra.mxu0 %v5669
        %8250 = vmatmul.bf16.gmra.mxu0 %v1737
        %v8251 = vpop.f32.mrf.mxu0
        %v8252 = vadd.f32 %v8238, %v8251
        %v8253 = vpop.f32.mrf.mxu0
        %v8254 = vadd.f32 %v8240, %v8253
        %8255 = vdwg.mxu0
        %8256 = vmatpush.bf16.msra.mxu0 %v5729
        %8257 = vmatpush.bf16.msra.mxu0 %v5725
        %8258 = vmatpush.bf16.msra.mxu0 %v5721
        %8259 = vmatpush.bf16.msra.mxu0 %v5717
        %8260 = vmatpush.bf16.msra.mxu0 %v5713
        %8261 = vmatpush.bf16.msra.mxu0 %v5709
        %8262 = vmatpush.bf16.msra.mxu0 %v5705
        %8263 = vmatpush.bf16.msra.mxu0 %v5701
        %8264 = vmatmul.bf16.gmra.mxu0 %v1738
        %v8265 = vpop.f32.mrf.mxu0
        %v8266 = vadd.f32 %v8252, %v8265
        %v8267 = vpop.f32.mrf.mxu0
        %v8268 = vadd.f32 %v8254, %v8267
        %8269 = vdwg.mxu0
        %8270 = vmatpush.bf16.msra.mxu0 %v5761
        %8271 = vmatpush.bf16.msra.mxu0 %v5757
        %8272 = vmatpush.bf16.msra.mxu0 %v5753
        %8273 = vmatpush.bf16.msra.mxu0 %v5749
        %8274 = vmatpush.bf16.msra.mxu0 %v5745
        %8275 = vmatpush.bf16.msra.mxu0 %v5741
        %8276 = vmatpush.bf16.msra.mxu0 %v5737
        %8277 = vmatpush.bf16.msra.mxu0 %v5733
        %8278 = vmatmul.bf16.gmra.mxu0 %v1739
        %v8279 = vpop.f32.mrf.mxu0
        %v8280 = vadd.f32 %v8266, %v8279
        %v8281 = vpop.f32.mrf.mxu0
        %v8282 = vadd.f32 %v8268, %v8281
        %8283 = vdwg.mxu0
        %8284 = vmatpush.bf16.msra.mxu0 %v5793
        %8285 = vmatpush.bf16.msra.mxu0 %v5789
        %8286 = vmatpush.bf16.msra.mxu0 %v5785
        %8287 = vmatpush.bf16.msra.mxu0 %v5781
        %8288 = vmatpush.bf16.msra.mxu0 %v5777
        %8289 = vmatpush.bf16.msra.mxu0 %v5773
        %8290 = vmatpush.bf16.msra.mxu0 %v5769
        %8291 = vmatpush.bf16.msra.mxu0 %v5765
        %8292 = vmatmul.bf16.gmra.mxu0 %v1740
        %v8293 = vpop.f32.mrf.mxu0
        %v8294 = vadd.f32 %v8280, %v8293
        %v8295 = vpop.f32.mrf.mxu0
        %v8296 = vadd.f32 %v8282, %v8295
        %8297 = vdwg.mxu0
        %8298 = vmatpush.bf16.msra.mxu0 %v5825
        %8299 = vmatpush.bf16.msra.mxu0 %v5821
        %8300 = vmatpush.bf16.msra.mxu0 %v5817
        %8301 = vmatpush.bf16.msra.mxu0 %v5813
        %8302 = vmatpush.bf16.msra.mxu0 %v5809
        %8303 = vmatpush.bf16.msra.mxu0 %v5805
        %8304 = vmatpush.bf16.msra.mxu0 %v5801
        %8305 = vmatpush.bf16.msra.mxu0 %v5797
        %8306 = vmatmul.bf16.gmra.mxu0 %v1741
        %v8307 = vpop.f32.mrf.mxu0
        %v8308 = vadd.f32 %v8294, %v8307
        %v8309 = vpop.f32.mrf.mxu0
        %v8310 = vadd.f32 %v8296, %v8309
        %8311 = vdwg.mxu0
        %8312 = vmatpush.bf16.msra.mxu0 %v5857
        %8313 = vmatpush.bf16.msra.mxu0 %v5853
        %8314 = vmatpush.bf16.msra.mxu0 %v5849
        %8315 = vmatpush.bf16.msra.mxu0 %v5845
        %8316 = vmatpush.bf16.msra.mxu0 %v5841
        %8317 = vmatpush.bf16.msra.mxu0 %v5837
        %8318 = vmatpush.bf16.msra.mxu0 %v5833
        %8319 = vmatpush.bf16.msra.mxu0 %v5829
        %8320 = vmatmul.bf16.gmra.mxu0 %v1742
        %v8321 = vpop.f32.mrf.mxu0
        %v8322 = vadd.f32 %v8308, %v8321
        %v8323 = vpop.f32.mrf.mxu0
        %v8324 = vadd.f32 %v8310, %v8323
        %8325 = vdwg.mxu0
        %8326 = vmatpush.bf16.msra.mxu0 %v5889
        %8327 = vmatpush.bf16.msra.mxu0 %v5885
        %8328 = vmatpush.bf16.msra.mxu0 %v5881
        %8329 = vmatpush.bf16.msra.mxu0 %v5877
        %8330 = vmatpush.bf16.msra.mxu0 %v5873
        %8331 = vmatpush.bf16.msra.mxu0 %v5869
        %8332 = vmatpush.bf16.msra.mxu0 %v5865
        %8333 = vmatpush.bf16.msra.mxu0 %v5861
        %8334 = vmatmul.bf16.gmra.mxu0 %v1743
        %v8335 = vpop.f32.mrf.mxu0
        %v8336 = vadd.f32 %v8322, %v8335
        %v8337 = vpop.f32.mrf.mxu0
        %v8338 = vadd.f32 %v8324, %v8337
        %8339 = vdwg.mxu0
        %8340 = vmatpush.bf16.msra.mxu0 %v5921
        %8341 = vmatpush.bf16.msra.mxu0 %v5917
        %8342 = vmatpush.bf16.msra.mxu0 %v5913
        %8343 = vmatpush.bf16.msra.mxu0 %v5909
        %8344 = vmatpush.bf16.msra.mxu0 %v5905
        %8345 = vmatpush.bf16.msra.mxu0 %v5901
        %8346 = vmatpush.bf16.msra.mxu0 %v5897
        %8347 = vmatpush.bf16.msra.mxu0 %v5893
        %8348 = vmatmul.bf16.gmra.mxu0 %v1744
        %v8349 = vpop.f32.mrf.mxu0
        %v8350 = vadd.f32 %v8336, %v8349
        %v8351 = vpop.f32.mrf.mxu0
        %v8352 = vadd.f32 %v8338, %v8351
        %8353 = vdwg.mxu0
        %8354 = vmatpush.bf16.msra.mxu0 %v5953
        %8355 = vmatpush.bf16.msra.mxu0 %v5949
        %8356 = vmatpush.bf16.msra.mxu0 %v5945
        %8357 = vmatpush.bf16.msra.mxu0 %v5941
        %8358 = vmatpush.bf16.msra.mxu0 %v5937
        %8359 = vmatpush.bf16.msra.mxu0 %v5933
        %8360 = vmatpush.bf16.msra.mxu0 %v5929
        %8361 = vmatpush.bf16.msra.mxu0 %v5925
        %8362 = vmatmul.bf16.gmra.mxu0 %v1745
        %v8363 = vpop.f32.mrf.mxu0
        %v8364 = vadd.f32 %v8350, %v8363
        %v8365 = vpop.f32.mrf.mxu0
        %v8366 = vadd.f32 %v8352, %v8365
        %8367 = vdwg.mxu0
        %8368 = vmatpush.bf16.msra.mxu0 %v5985
        %8369 = vmatpush.bf16.msra.mxu0 %v5981
        %8370 = vmatpush.bf16.msra.mxu0 %v5977
        %8371 = vmatpush.bf16.msra.mxu0 %v5973
        %8372 = vmatpush.bf16.msra.mxu0 %v5969
        %8373 = vmatpush.bf16.msra.mxu0 %v5965
        %8374 = vmatpush.bf16.msra.mxu0 %v5961
        %8375 = vmatpush.bf16.msra.mxu0 %v5957
        %8376 = vmatmul.bf16.gmra.mxu0 %v1746
        %v8377 = vpop.f32.mrf.mxu0
        %v8378 = vadd.f32 %v8364, %v8377
        %v8379 = vpop.f32.mrf.mxu0
        %v8380 = vadd.f32 %v8366, %v8379
        %8381 = vdwg.mxu0
        %8382 = vmatpush.bf16.msra.mxu0 %v6017
        %8383 = vmatpush.bf16.msra.mxu0 %v6013
        %8384 = vmatpush.bf16.msra.mxu0 %v6009
        %8385 = vmatpush.bf16.msra.mxu0 %v6005
        %8386 = vmatpush.bf16.msra.mxu0 %v6001
        %8387 = vmatpush.bf16.msra.mxu0 %v5997
        %8388 = vmatpush.bf16.msra.mxu0 %v5993
        %8389 = vmatpush.bf16.msra.mxu0 %v5989
        %8390 = vmatmul.bf16.gmra.mxu0 %v1747
        %v8391 = vpop.f32.mrf.mxu0
        %v8392 = vadd.f32 %v8378, %v8391
        %v8393 = vpop.f32.mrf.mxu0
        %v8394 = vadd.f32 %v8380, %v8393
        %8395 = vdwg.mxu0
        %8396 = vmatpush.bf16.msra.mxu0 %v6049
        %8397 = vmatpush.bf16.msra.mxu0 %v6045
        %8398 = vmatpush.bf16.msra.mxu0 %v6041
        %8399 = vmatpush.bf16.msra.mxu0 %v6037
        %8400 = vmatpush.bf16.msra.mxu0 %v6033
        %8401 = vmatpush.bf16.msra.mxu0 %v6029
        %8402 = vmatpush.bf16.msra.mxu0 %v6025
        %8403 = vmatpush.bf16.msra.mxu0 %v6021
        %8404 = vmatmul.bf16.gmra.mxu0 %v1748
        %v8405 = vpop.f32.mrf.mxu0
        %v8406 = vadd.f32 %v8392, %v8405
        %v8407 = vpop.f32.mrf.mxu0
        %v8408 = vadd.f32 %v8394, %v8407
        %8409 = vdwg.mxu0
        %8410 = vmatpush.bf16.msra.mxu0 %v6081
        %8411 = vmatpush.bf16.msra.mxu0 %v6077
        %8412 = vmatpush.bf16.msra.mxu0 %v6073
        %8413 = vmatpush.bf16.msra.mxu0 %v6069
        %8414 = vmatpush.bf16.msra.mxu0 %v6065
        %8415 = vmatpush.bf16.msra.mxu0 %v6061
        %8416 = vmatpush.bf16.msra.mxu0 %v6057
        %8417 = vmatpush.bf16.msra.mxu0 %v6053
        %8418 = vmatmul.bf16.gmra.mxu0 %v1749
        %v8419 = vpop.f32.mrf.mxu0
        %v8420 = vadd.f32 %v8406, %v8419
        %v8421 = vpop.f32.mrf.mxu0
        %v8422 = vadd.f32 %v8408, %v8421
        %8423 = vdwg.mxu0
        %8424 = vmatpush.bf16.msra.mxu0 %v6113
        %8425 = vmatpush.bf16.msra.mxu0 %v6109
        %8426 = vmatpush.bf16.msra.mxu0 %v6105
        %8427 = vmatpush.bf16.msra.mxu0 %v6101
        %8428 = vmatpush.bf16.msra.mxu0 %v6097
        %8429 = vmatpush.bf16.msra.mxu0 %v6093
        %8430 = vmatpush.bf16.msra.mxu0 %v6089
        %8431 = vmatpush.bf16.msra.mxu0 %v6085
        %8432 = vmatmul.bf16.gmra.mxu0 %v1750
        %v8433 = vpop.f32.mrf.mxu0
        %v8434 = vadd.f32 %v8420, %v8433
        %v8435 = vpop.f32.mrf.mxu0
        %v8436 = vadd.f32 %v8422, %v8435
        %8437 = vdwg.mxu0
        %8438 = vmatpush.bf16.msra.mxu0 %v6145
        %8439 = vmatpush.bf16.msra.mxu0 %v6141
        %8440 = vmatpush.bf16.msra.mxu0 %v6137
        %8441 = vmatpush.bf16.msra.mxu0 %v6133
        %8442 = vmatpush.bf16.msra.mxu0 %v6129
        %8443 = vmatpush.bf16.msra.mxu0 %v6125
        %8444 = vmatpush.bf16.msra.mxu0 %v6121
        %8445 = vmatpush.bf16.msra.mxu0 %v6117
        %8446 = vmatmul.bf16.gmra.mxu0 %v1751
        %v8447 = vpop.f32.mrf.mxu0
        %v8448 = vadd.f32 %v8434, %v8447
        %v8449 = vpop.f32.mrf.mxu0
        %v8450 = vadd.f32 %v8436, %v8449
        %8451 = vdwg.mxu0
        %8452 = vmatpush.bf16.msra.mxu0 %v6177
        %8453 = vmatpush.bf16.msra.mxu0 %v6173
        %8454 = vmatpush.bf16.msra.mxu0 %v6169
        %8455 = vmatpush.bf16.msra.mxu0 %v6165
        %8456 = vmatpush.bf16.msra.mxu0 %v6161
        %8457 = vmatpush.bf16.msra.mxu0 %v6157
        %8458 = vmatpush.bf16.msra.mxu0 %v6153
        %8459 = vmatpush.bf16.msra.mxu0 %v6149
        %8460 = vmatmul.bf16.gmra.mxu0 %v1752
        %v8461 = vpop.f32.mrf.mxu0
        %v8462 = vadd.f32 %v8448, %v8461
        %v8463 = vpop.f32.mrf.mxu0
        %v8464 = vadd.f32 %v8450, %v8463
        %8465 = vdwg.mxu0
        %8466 = vmatpush.bf16.msra.mxu0 %v6209
        %8467 = vmatpush.bf16.msra.mxu0 %v6205
        %8468 = vmatpush.bf16.msra.mxu0 %v6201
        %8469 = vmatpush.bf16.msra.mxu0 %v6197
        %8470 = vmatpush.bf16.msra.mxu0 %v6193
        %8471 = vmatpush.bf16.msra.mxu0 %v6189
        %8472 = vmatpush.bf16.msra.mxu0 %v6185
        %8473 = vmatpush.bf16.msra.mxu0 %v6181
        %8474 = vmatmul.bf16.gmra.mxu0 %v1753
        %v8475 = vpop.f32.mrf.mxu0
        %v8476 = vadd.f32 %v8462, %v8475
        %v8477 = vpop.f32.mrf.mxu0
        %v8478 = vadd.f32 %v8464, %v8477
        %8479 = vdwg.mxu0
        %8480 = vmatpush.bf16.msra.mxu0 %v6241
        %8481 = vmatpush.bf16.msra.mxu0 %v6237
        %8482 = vmatpush.bf16.msra.mxu0 %v6233
        %8483 = vmatpush.bf16.msra.mxu0 %v6229
        %8484 = vmatpush.bf16.msra.mxu0 %v6225
        %8485 = vmatpush.bf16.msra.mxu0 %v6221
        %8486 = vmatpush.bf16.msra.mxu0 %v6217
        %8487 = vmatpush.bf16.msra.mxu0 %v6213
        %8488 = vmatmul.bf16.gmra.mxu0 %v1754
        %v8489 = vpop.f32.mrf.mxu0
        %v8490 = vadd.f32 %v8476, %v8489
        %v8491 = vpop.f32.mrf.mxu0
        %v8492 = vadd.f32 %v8478, %v8491
        %8493 = vdwg.mxu0
        %8494 = vmatpush.bf16.msra.mxu0 %v6273
        %8495 = vmatpush.bf16.msra.mxu0 %v6269
        %8496 = vmatpush.bf16.msra.mxu0 %v6265
        %8497 = vmatpush.bf16.msra.mxu0 %v6261
        %8498 = vmatpush.bf16.msra.mxu0 %v6257
        %8499 = vmatpush.bf16.msra.mxu0 %v6253
        %8500 = vmatpush.bf16.msra.mxu0 %v6249
        %8501 = vmatpush.bf16.msra.mxu0 %v6245
        %8502 = vmatmul.bf16.gmra.mxu0 %v1755
        %v8503 = vpop.f32.mrf.mxu0
        %v8504 = vadd.f32 %v8490, %v8503
        %v8505 = vpop.f32.mrf.mxu0
        %v8506 = vadd.f32 %v8492, %v8505
        %8507 = vdwg.mxu0
        %8508 = vmatpush.bf16.msra.mxu0 %v6305
        %8509 = vmatpush.bf16.msra.mxu0 %v6301
        %8510 = vmatpush.bf16.msra.mxu0 %v6297
        %8511 = vmatpush.bf16.msra.mxu0 %v6293
        %8512 = vmatpush.bf16.msra.mxu0 %v6289
        %8513 = vmatpush.bf16.msra.mxu0 %v6285
        %8514 = vmatpush.bf16.msra.mxu0 %v6281
        %8515 = vmatpush.bf16.msra.mxu0 %v6277
        %8516 = vmatmul.bf16.gmra.mxu0 %v1756
        %v8517 = vpop.f32.mrf.mxu0
        %v8518 = vadd.f32 %v8504, %v8517
        %v8519 = vpop.f32.mrf.mxu0
        %v8520 = vadd.f32 %v8506, %v8519
        %8521 = vdwg.mxu0
        %8522 = vmatpush.bf16.msra.mxu0 %v6337
        %8523 = vmatpush.bf16.msra.mxu0 %v6333
        %8524 = vmatpush.bf16.msra.mxu0 %v6329
        %8525 = vmatpush.bf16.msra.mxu0 %v6325
        %8526 = vmatpush.bf16.msra.mxu0 %v6321
        %8527 = vmatpush.bf16.msra.mxu0 %v6317
        %8528 = vmatpush.bf16.msra.mxu0 %v6313
        %8529 = vmatpush.bf16.msra.mxu0 %v6309
        %8530 = vmatmul.bf16.gmra.mxu0 %v1757
        %v8531 = vpop.f32.mrf.mxu0
        %v8532 = vadd.f32 %v8518, %v8531
        %v8533 = vpop.f32.mrf.mxu0
        %v8534 = vadd.f32 %v8520, %v8533
        %8535 = vdwg.mxu0
        %8536 = vmatpush.bf16.msra.mxu0 %v6369
        %8537 = vmatpush.bf16.msra.mxu0 %v6365
        %8538 = vmatpush.bf16.msra.mxu0 %v6361
        %8539 = vmatpush.bf16.msra.mxu0 %v6357
        %8540 = vmatpush.bf16.msra.mxu0 %v6353
        %8541 = vmatpush.bf16.msra.mxu0 %v6349
        %8542 = vmatpush.bf16.msra.mxu0 %v6345
        %8543 = vmatpush.bf16.msra.mxu0 %v6341
        %8544 = vmatmul.bf16.gmra.mxu0 %v1758
        %v8545 = vpop.f32.mrf.mxu0
        %v8546 = vadd.f32 %v8532, %v8545
        %v8547 = vpop.f32.mrf.mxu0
        %v8548 = vadd.f32 %v8534, %v8547
        %8549 = vdwg.mxu0
        %8550 = vmatpush.bf16.msra.mxu0 %v6401
        %8551 = vmatpush.bf16.msra.mxu0 %v6397
        %8552 = vmatpush.bf16.msra.mxu0 %v6393
        %8553 = vmatpush.bf16.msra.mxu0 %v6389
        %8554 = vmatpush.bf16.msra.mxu0 %v6385
        %8555 = vmatpush.bf16.msra.mxu0 %v6381
        %8556 = vmatpush.bf16.msra.mxu0 %v6377
        %8557 = vmatpush.bf16.msra.mxu0 %v6373
        %8558 = vmatmul.bf16.gmra.mxu0 %v1759
        %v8559 = vpop.f32.mrf.mxu0
        %v8560 = vadd.f32 %v8546, %v8559
        %v8561 = vpop.f32.mrf.mxu0
        %v8562 = vadd.f32 %v8548, %v8561
        %8563 = vdwg.mxu0
        %8564 = vmatpush.bf16.msra.mxu0 %v5282
        %8565 = vmatpush.bf16.msra.mxu0 %v5278
        %8566 = vmatpush.bf16.msra.mxu0 %v5274
        %8567 = vmatpush.bf16.msra.mxu0 %v5270
        %8568 = vmatpush.bf16.msra.mxu0 %v5266
        %8569 = vmatpush.bf16.msra.mxu0 %v5262
        %8570 = vmatpush.bf16.msra.mxu0 %v5258
        %8571 = vmatpush.bf16.msra.mxu0 %v5254
        %8572 = vmatmul.bf16.gmra.mxu0 %v1724
        %v8573 = vpop.f32.mrf.mxu0
        %v8574 = vadd.f32 0.0, %v8573
        %v8575 = vpop.f32.mrf.mxu0
        %v8576 = vadd.f32 0.0, %v8575
        %8577 = vdwg.mxu0
        %8578 = vmatpush.bf16.msra.mxu0 %v5314
        %8579 = vmatpush.bf16.msra.mxu0 %v5310
        %8580 = vmatpush.bf16.msra.mxu0 %v5306
        %8581 = vmatpush.bf16.msra.mxu0 %v5302
        %8582 = vmatpush.bf16.msra.mxu0 %v5298
        %8583 = vmatpush.bf16.msra.mxu0 %v5294
        %8584 = vmatpush.bf16.msra.mxu0 %v5290
        %8585 = vmatpush.bf16.msra.mxu0 %v5286
        %8586 = vmatmul.bf16.gmra.mxu0 %v1725
        %v8587 = vpop.f32.mrf.mxu0
        %v8588 = vadd.f32 %v8574, %v8587
        %v8589 = vpop.f32.mrf.mxu0
        %v8590 = vadd.f32 %v8576, %v8589
        %8591 = vdwg.mxu0
        %8592 = vmatpush.bf16.msra.mxu0 %v5346
        %8593 = vmatpush.bf16.msra.mxu0 %v5342
        %8594 = vmatpush.bf16.msra.mxu0 %v5338
        %8595 = vmatpush.bf16.msra.mxu0 %v5334
        %8596 = vmatpush.bf16.msra.mxu0 %v5330
        %8597 = vmatpush.bf16.msra.mxu0 %v5326
        %8598 = vmatpush.bf16.msra.mxu0 %v5322
        %8599 = vmatpush.bf16.msra.mxu0 %v5318
        %8600 = vmatmul.bf16.gmra.mxu0 %v1726
        %v8601 = vpop.f32.mrf.mxu0
        %v8602 = vadd.f32 %v8588, %v8601
        %v8603 = vpop.f32.mrf.mxu0
        %v8604 = vadd.f32 %v8590, %v8603
        %8605 = vdwg.mxu0
        %8606 = vmatpush.bf16.msra.mxu0 %v5378
        %8607 = vmatpush.bf16.msra.mxu0 %v5374
        %8608 = vmatpush.bf16.msra.mxu0 %v5370
        %8609 = vmatpush.bf16.msra.mxu0 %v5366
        %8610 = vmatpush.bf16.msra.mxu0 %v5362
        %8611 = vmatpush.bf16.msra.mxu0 %v5358
        %8612 = vmatpush.bf16.msra.mxu0 %v5354
        %8613 = vmatpush.bf16.msra.mxu0 %v5350
        %8614 = vmatmul.bf16.gmra.mxu0 %v1727
        %v8615 = vpop.f32.mrf.mxu0
        %v8616 = vadd.f32 %v8602, %v8615
        %v8617 = vpop.f32.mrf.mxu0
        %v8618 = vadd.f32 %v8604, %v8617
        %8619 = vdwg.mxu0
        %8620 = vmatpush.bf16.msra.mxu0 %v5410
        %8621 = vmatpush.bf16.msra.mxu0 %v5406
        %8622 = vmatpush.bf16.msra.mxu0 %v5402
        %8623 = vmatpush.bf16.msra.mxu0 %v5398
        %8624 = vmatpush.bf16.msra.mxu0 %v5394
        %8625 = vmatpush.bf16.msra.mxu0 %v5390
        %8626 = vmatpush.bf16.msra.mxu0 %v5386
        %8627 = vmatpush.bf16.msra.mxu0 %v5382
        %8628 = vmatmul.bf16.gmra.mxu0 %v1728
        %v8629 = vpop.f32.mrf.mxu0
        %v8630 = vadd.f32 %v8616, %v8629
        %v8631 = vpop.f32.mrf.mxu0
        %v8632 = vadd.f32 %v8618, %v8631
        %8633 = vdwg.mxu0
        %8634 = vmatpush.bf16.msra.mxu0 %v5442
        %8635 = vmatpush.bf16.msra.mxu0 %v5438
        %8636 = vmatpush.bf16.msra.mxu0 %v5434
        %8637 = vmatpush.bf16.msra.mxu0 %v5430
        %8638 = vmatpush.bf16.msra.mxu0 %v5426
        %8639 = vmatpush.bf16.msra.mxu0 %v5422
        %8640 = vmatpush.bf16.msra.mxu0 %v5418
        %8641 = vmatpush.bf16.msra.mxu0 %v5414
        %8642 = vmatmul.bf16.gmra.mxu0 %v1729
        %v8643 = vpop.f32.mrf.mxu0
        %v8644 = vadd.f32 %v8630, %v8643
        %v8645 = vpop.f32.mrf.mxu0
        %v8646 = vadd.f32 %v8632, %v8645
        %8647 = vdwg.mxu0
        %8648 = vmatpush.bf16.msra.mxu0 %v5474
        %8649 = vmatpush.bf16.msra.mxu0 %v5470
        %8650 = vmatpush.bf16.msra.mxu0 %v5466
        %8651 = vmatpush.bf16.msra.mxu0 %v5462
        %8652 = vmatpush.bf16.msra.mxu0 %v5458
        %8653 = vmatpush.bf16.msra.mxu0 %v5454
        %8654 = vmatpush.bf16.msra.mxu0 %v5450
        %8655 = vmatpush.bf16.msra.mxu0 %v5446
        %8656 = vmatmul.bf16.gmra.mxu0 %v1730
        %v8657 = vpop.f32.mrf.mxu0
        %v8658 = vadd.f32 %v8644, %v8657
        %v8659 = vpop.f32.mrf.mxu0
        %v8660 = vadd.f32 %v8646, %v8659
        %8661 = vdwg.mxu0
        %8662 = vmatpush.bf16.msra.mxu0 %v5506
        %8663 = vmatpush.bf16.msra.mxu0 %v5502
        %8664 = vmatpush.bf16.msra.mxu0 %v5498
        %8665 = vmatpush.bf16.msra.mxu0 %v5494
        %8666 = vmatpush.bf16.msra.mxu0 %v5490
        %8667 = vmatpush.bf16.msra.mxu0 %v5486
        %8668 = vmatpush.bf16.msra.mxu0 %v5482
        %8669 = vmatpush.bf16.msra.mxu0 %v5478
        %8670 = vmatmul.bf16.gmra.mxu0 %v1731
        %v8671 = vpop.f32.mrf.mxu0
        %v8672 = vadd.f32 %v8658, %v8671
        %v8673 = vpop.f32.mrf.mxu0
        %v8674 = vadd.f32 %v8660, %v8673
        %8675 = vdwg.mxu0
        %8676 = vmatpush.bf16.msra.mxu0 %v5538
        %8677 = vmatpush.bf16.msra.mxu0 %v5534
        %8678 = vmatpush.bf16.msra.mxu0 %v5530
        %8679 = vmatpush.bf16.msra.mxu0 %v5526
        %8680 = vmatpush.bf16.msra.mxu0 %v5522
        %8681 = vmatpush.bf16.msra.mxu0 %v5518
        %8682 = vmatpush.bf16.msra.mxu0 %v5514
        %8683 = vmatpush.bf16.msra.mxu0 %v5510
        %8684 = vmatmul.bf16.gmra.mxu0 %v1732
        %v8685 = vpop.f32.mrf.mxu0
        %v8686 = vadd.f32 %v8672, %v8685
        %v8687 = vpop.f32.mrf.mxu0
        %v8688 = vadd.f32 %v8674, %v8687
        %8689 = vdwg.mxu0
        %8690 = vmatpush.bf16.msra.mxu0 %v5570
        %8691 = vmatpush.bf16.msra.mxu0 %v5566
        %8692 = vmatpush.bf16.msra.mxu0 %v5562
        %8693 = vmatpush.bf16.msra.mxu0 %v5558
        %8694 = vmatpush.bf16.msra.mxu0 %v5554
        %8695 = vmatpush.bf16.msra.mxu0 %v5550
        %8696 = vmatpush.bf16.msra.mxu0 %v5546
        %8697 = vmatpush.bf16.msra.mxu0 %v5542
        %8698 = vmatmul.bf16.gmra.mxu0 %v1733
        %v8699 = vpop.f32.mrf.mxu0
        %v8700 = vadd.f32 %v8686, %v8699
        %v8701 = vpop.f32.mrf.mxu0
        %v8702 = vadd.f32 %v8688, %v8701
        %8703 = vdwg.mxu0
        %8704 = vmatpush.bf16.msra.mxu0 %v5602
        %8705 = vmatpush.bf16.msra.mxu0 %v5598
        %8706 = vmatpush.bf16.msra.mxu0 %v5594
        %8707 = vmatpush.bf16.msra.mxu0 %v5590
        %8708 = vmatpush.bf16.msra.mxu0 %v5586
        %8709 = vmatpush.bf16.msra.mxu0 %v5582
        %8710 = vmatpush.bf16.msra.mxu0 %v5578
        %8711 = vmatpush.bf16.msra.mxu0 %v5574
        %8712 = vmatmul.bf16.gmra.mxu0 %v1734
        %v8713 = vpop.f32.mrf.mxu0
        %v8714 = vadd.f32 %v8700, %v8713
        %v8715 = vpop.f32.mrf.mxu0
        %v8716 = vadd.f32 %v8702, %v8715
        %8717 = vdwg.mxu0
        %8718 = vmatpush.bf16.msra.mxu0 %v5634
        %8719 = vmatpush.bf16.msra.mxu0 %v5630
        %8720 = vmatpush.bf16.msra.mxu0 %v5626
        %8721 = vmatpush.bf16.msra.mxu0 %v5622
        %8722 = vmatpush.bf16.msra.mxu0 %v5618
        %8723 = vmatpush.bf16.msra.mxu0 %v5614
        %8724 = vmatpush.bf16.msra.mxu0 %v5610
        %8725 = vmatpush.bf16.msra.mxu0 %v5606
        %8726 = vmatmul.bf16.gmra.mxu0 %v1735
        %v8727 = vpop.f32.mrf.mxu0
        %v8728 = vadd.f32 %v8714, %v8727
        %v8729 = vpop.f32.mrf.mxu0
        %v8730 = vadd.f32 %v8716, %v8729
        %8731 = vdwg.mxu0
        %8732 = vmatpush.bf16.msra.mxu0 %v5666
        %8733 = vmatpush.bf16.msra.mxu0 %v5662
        %8734 = vmatpush.bf16.msra.mxu0 %v5658
        %8735 = vmatpush.bf16.msra.mxu0 %v5654
        %8736 = vmatpush.bf16.msra.mxu0 %v5650
        %8737 = vmatpush.bf16.msra.mxu0 %v5646
        %8738 = vmatpush.bf16.msra.mxu0 %v5642
        %8739 = vmatpush.bf16.msra.mxu0 %v5638
        %8740 = vmatmul.bf16.gmra.mxu0 %v1736
        %v8741 = vpop.f32.mrf.mxu0
        %v8742 = vadd.f32 %v8728, %v8741
        %v8743 = vpop.f32.mrf.mxu0
        %v8744 = vadd.f32 %v8730, %v8743
        %8745 = vdwg.mxu0
        %8746 = vmatpush.bf16.msra.mxu0 %v5698
        %8747 = vmatpush.bf16.msra.mxu0 %v5694
        %8748 = vmatpush.bf16.msra.mxu0 %v5690
        %8749 = vmatpush.bf16.msra.mxu0 %v5686
        %8750 = vmatpush.bf16.msra.mxu0 %v5682
        %8751 = vmatpush.bf16.msra.mxu0 %v5678
        %8752 = vmatpush.bf16.msra.mxu0 %v5674
        %8753 = vmatpush.bf16.msra.mxu0 %v5670
        %8754 = vmatmul.bf16.gmra.mxu0 %v1737
        %v8755 = vpop.f32.mrf.mxu0
        %v8756 = vadd.f32 %v8742, %v8755
        %v8757 = vpop.f32.mrf.mxu0
        %v8758 = vadd.f32 %v8744, %v8757
        %8759 = vdwg.mxu0
        %8760 = vmatpush.bf16.msra.mxu0 %v5730
        %8761 = vmatpush.bf16.msra.mxu0 %v5726
        %8762 = vmatpush.bf16.msra.mxu0 %v5722
        %8763 = vmatpush.bf16.msra.mxu0 %v5718
        %8764 = vmatpush.bf16.msra.mxu0 %v5714
        %8765 = vmatpush.bf16.msra.mxu0 %v5710
        %8766 = vmatpush.bf16.msra.mxu0 %v5706
        %8767 = vmatpush.bf16.msra.mxu0 %v5702
        %8768 = vmatmul.bf16.gmra.mxu0 %v1738
        %v8769 = vpop.f32.mrf.mxu0
        %v8770 = vadd.f32 %v8756, %v8769
        %v8771 = vpop.f32.mrf.mxu0
        %v8772 = vadd.f32 %v8758, %v8771
        %8773 = vdwg.mxu0
        %8774 = vmatpush.bf16.msra.mxu0 %v5762
        %8775 = vmatpush.bf16.msra.mxu0 %v5758
        %8776 = vmatpush.bf16.msra.mxu0 %v5754
        %8777 = vmatpush.bf16.msra.mxu0 %v5750
        %8778 = vmatpush.bf16.msra.mxu0 %v5746
        %8779 = vmatpush.bf16.msra.mxu0 %v5742
        %8780 = vmatpush.bf16.msra.mxu0 %v5738
        %8781 = vmatpush.bf16.msra.mxu0 %v5734
        %8782 = vmatmul.bf16.gmra.mxu0 %v1739
        %v8783 = vpop.f32.mrf.mxu0
        %v8784 = vadd.f32 %v8770, %v8783
        %v8785 = vpop.f32.mrf.mxu0
        %v8786 = vadd.f32 %v8772, %v8785
        %8787 = vdwg.mxu0
        %8788 = vmatpush.bf16.msra.mxu0 %v5794
        %8789 = vmatpush.bf16.msra.mxu0 %v5790
        %8790 = vmatpush.bf16.msra.mxu0 %v5786
        %8791 = vmatpush.bf16.msra.mxu0 %v5782
        %8792 = vmatpush.bf16.msra.mxu0 %v5778
        %8793 = vmatpush.bf16.msra.mxu0 %v5774
        %8794 = vmatpush.bf16.msra.mxu0 %v5770
        %8795 = vmatpush.bf16.msra.mxu0 %v5766
        %8796 = vmatmul.bf16.gmra.mxu0 %v1740
        %v8797 = vpop.f32.mrf.mxu0
        %v8798 = vadd.f32 %v8784, %v8797
        %v8799 = vpop.f32.mrf.mxu0
        %v8800 = vadd.f32 %v8786, %v8799
        %8801 = vdwg.mxu0
        %8802 = vmatpush.bf16.msra.mxu0 %v5826
        %8803 = vmatpush.bf16.msra.mxu0 %v5822
        %8804 = vmatpush.bf16.msra.mxu0 %v5818
        %8805 = vmatpush.bf16.msra.mxu0 %v5814
        %8806 = vmatpush.bf16.msra.mxu0 %v5810
        %8807 = vmatpush.bf16.msra.mxu0 %v5806
        %8808 = vmatpush.bf16.msra.mxu0 %v5802
        %8809 = vmatpush.bf16.msra.mxu0 %v5798
        %8810 = vmatmul.bf16.gmra.mxu0 %v1741
        %v8811 = vpop.f32.mrf.mxu0
        %v8812 = vadd.f32 %v8798, %v8811
        %v8813 = vpop.f32.mrf.mxu0
        %v8814 = vadd.f32 %v8800, %v8813
        %8815 = vdwg.mxu0
        %8816 = vmatpush.bf16.msra.mxu0 %v5858
        %8817 = vmatpush.bf16.msra.mxu0 %v5854
        %8818 = vmatpush.bf16.msra.mxu0 %v5850
        %8819 = vmatpush.bf16.msra.mxu0 %v5846
        %8820 = vmatpush.bf16.msra.mxu0 %v5842
        %8821 = vmatpush.bf16.msra.mxu0 %v5838
        %8822 = vmatpush.bf16.msra.mxu0 %v5834
        %8823 = vmatpush.bf16.msra.mxu0 %v5830
        %8824 = vmatmul.bf16.gmra.mxu0 %v1742
        %v8825 = vpop.f32.mrf.mxu0
        %v8826 = vadd.f32 %v8812, %v8825
        %v8827 = vpop.f32.mrf.mxu0
        %v8828 = vadd.f32 %v8814, %v8827
        %8829 = vdwg.mxu0
        %8830 = vmatpush.bf16.msra.mxu0 %v5890
        %8831 = vmatpush.bf16.msra.mxu0 %v5886
        %8832 = vmatpush.bf16.msra.mxu0 %v5882
        %8833 = vmatpush.bf16.msra.mxu0 %v5878
        %8834 = vmatpush.bf16.msra.mxu0 %v5874
        %8835 = vmatpush.bf16.msra.mxu0 %v5870
        %8836 = vmatpush.bf16.msra.mxu0 %v5866
        %8837 = vmatpush.bf16.msra.mxu0 %v5862
        %8838 = vmatmul.bf16.gmra.mxu0 %v1743
        %v8839 = vpop.f32.mrf.mxu0
        %v8840 = vadd.f32 %v8826, %v8839
        %v8841 = vpop.f32.mrf.mxu0
        %v8842 = vadd.f32 %v8828, %v8841
        %8843 = vdwg.mxu0
        %8844 = vmatpush.bf16.msra.mxu0 %v5922
        %8845 = vmatpush.bf16.msra.mxu0 %v5918
        %8846 = vmatpush.bf16.msra.mxu0 %v5914
        %8847 = vmatpush.bf16.msra.mxu0 %v5910
        %8848 = vmatpush.bf16.msra.mxu0 %v5906
        %8849 = vmatpush.bf16.msra.mxu0 %v5902
        %8850 = vmatpush.bf16.msra.mxu0 %v5898
        %8851 = vmatpush.bf16.msra.mxu0 %v5894
        %8852 = vmatmul.bf16.gmra.mxu0 %v1744
        %v8853 = vpop.f32.mrf.mxu0
        %v8854 = vadd.f32 %v8840, %v8853
        %v8855 = vpop.f32.mrf.mxu0
        %v8856 = vadd.f32 %v8842, %v8855
        %8857 = vdwg.mxu0
        %8858 = vmatpush.bf16.msra.mxu0 %v5954
        %8859 = vmatpush.bf16.msra.mxu0 %v5950
        %8860 = vmatpush.bf16.msra.mxu0 %v5946
        %8861 = vmatpush.bf16.msra.mxu0 %v5942
        %8862 = vmatpush.bf16.msra.mxu0 %v5938
        %8863 = vmatpush.bf16.msra.mxu0 %v5934
        %8864 = vmatpush.bf16.msra.mxu0 %v5930
        %8865 = vmatpush.bf16.msra.mxu0 %v5926
        %8866 = vmatmul.bf16.gmra.mxu0 %v1745
        %v8867 = vpop.f32.mrf.mxu0
        %v8868 = vadd.f32 %v8854, %v8867
        %v8869 = vpop.f32.mrf.mxu0
        %v8870 = vadd.f32 %v8856, %v8869
        %8871 = vdwg.mxu0
        %8872 = vmatpush.bf16.msra.mxu0 %v5986
        %8873 = vmatpush.bf16.msra.mxu0 %v5982
        %8874 = vmatpush.bf16.msra.mxu0 %v5978
        %8875 = vmatpush.bf16.msra.mxu0 %v5974
        %8876 = vmatpush.bf16.msra.mxu0 %v5970
        %8877 = vmatpush.bf16.msra.mxu0 %v5966
        %8878 = vmatpush.bf16.msra.mxu0 %v5962
        %8879 = vmatpush.bf16.msra.mxu0 %v5958
        %8880 = vmatmul.bf16.gmra.mxu0 %v1746
        %v8881 = vpop.f32.mrf.mxu0
        %v8882 = vadd.f32 %v8868, %v8881
        %v8883 = vpop.f32.mrf.mxu0
        %v8884 = vadd.f32 %v8870, %v8883
        %8885 = vdwg.mxu0
        %8886 = vmatpush.bf16.msra.mxu0 %v6018
        %8887 = vmatpush.bf16.msra.mxu0 %v6014
        %8888 = vmatpush.bf16.msra.mxu0 %v6010
        %8889 = vmatpush.bf16.msra.mxu0 %v6006
        %8890 = vmatpush.bf16.msra.mxu0 %v6002
        %8891 = vmatpush.bf16.msra.mxu0 %v5998
        %8892 = vmatpush.bf16.msra.mxu0 %v5994
        %8893 = vmatpush.bf16.msra.mxu0 %v5990
        %8894 = vmatmul.bf16.gmra.mxu0 %v1747
        %v8895 = vpop.f32.mrf.mxu0
        %v8896 = vadd.f32 %v8882, %v8895
        %v8897 = vpop.f32.mrf.mxu0
        %v8898 = vadd.f32 %v8884, %v8897
        %8899 = vdwg.mxu0
        %8900 = vmatpush.bf16.msra.mxu0 %v6050
        %8901 = vmatpush.bf16.msra.mxu0 %v6046
        %8902 = vmatpush.bf16.msra.mxu0 %v6042
        %8903 = vmatpush.bf16.msra.mxu0 %v6038
        %8904 = vmatpush.bf16.msra.mxu0 %v6034
        %8905 = vmatpush.bf16.msra.mxu0 %v6030
        %8906 = vmatpush.bf16.msra.mxu0 %v6026
        %8907 = vmatpush.bf16.msra.mxu0 %v6022
        %8908 = vmatmul.bf16.gmra.mxu0 %v1748
        %v8909 = vpop.f32.mrf.mxu0
        %v8910 = vadd.f32 %v8896, %v8909
        %v8911 = vpop.f32.mrf.mxu0
        %v8912 = vadd.f32 %v8898, %v8911
        %8913 = vdwg.mxu0
        %8914 = vmatpush.bf16.msra.mxu0 %v6082
        %8915 = vmatpush.bf16.msra.mxu0 %v6078
        %8916 = vmatpush.bf16.msra.mxu0 %v6074
        %8917 = vmatpush.bf16.msra.mxu0 %v6070
        %8918 = vmatpush.bf16.msra.mxu0 %v6066
        %8919 = vmatpush.bf16.msra.mxu0 %v6062
        %8920 = vmatpush.bf16.msra.mxu0 %v6058
        %8921 = vmatpush.bf16.msra.mxu0 %v6054
        %8922 = vmatmul.bf16.gmra.mxu0 %v1749
        %v8923 = vpop.f32.mrf.mxu0
        %v8924 = vadd.f32 %v8910, %v8923
        %v8925 = vpop.f32.mrf.mxu0
        %v8926 = vadd.f32 %v8912, %v8925
        %8927 = vdwg.mxu0
        %8928 = vmatpush.bf16.msra.mxu0 %v6114
        %8929 = vmatpush.bf16.msra.mxu0 %v6110
        %8930 = vmatpush.bf16.msra.mxu0 %v6106
        %8931 = vmatpush.bf16.msra.mxu0 %v6102
        %8932 = vmatpush.bf16.msra.mxu0 %v6098
        %8933 = vmatpush.bf16.msra.mxu0 %v6094
        %8934 = vmatpush.bf16.msra.mxu0 %v6090
        %8935 = vmatpush.bf16.msra.mxu0 %v6086
        %8936 = vmatmul.bf16.gmra.mxu0 %v1750
        %v8937 = vpop.f32.mrf.mxu0
        %v8938 = vadd.f32 %v8924, %v8937
        %v8939 = vpop.f32.mrf.mxu0
        %v8940 = vadd.f32 %v8926, %v8939
        %8941 = vdwg.mxu0
        %8942 = vmatpush.bf16.msra.mxu0 %v6146
        %8943 = vmatpush.bf16.msra.mxu0 %v6142
        %8944 = vmatpush.bf16.msra.mxu0 %v6138
        %8945 = vmatpush.bf16.msra.mxu0 %v6134
        %8946 = vmatpush.bf16.msra.mxu0 %v6130
        %8947 = vmatpush.bf16.msra.mxu0 %v6126
        %8948 = vmatpush.bf16.msra.mxu0 %v6122
        %8949 = vmatpush.bf16.msra.mxu0 %v6118
        %8950 = vmatmul.bf16.gmra.mxu0 %v1751
        %v8951 = vpop.f32.mrf.mxu0
        %v8952 = vadd.f32 %v8938, %v8951
        %v8953 = vpop.f32.mrf.mxu0
        %v8954 = vadd.f32 %v8940, %v8953
        %8955 = vdwg.mxu0
        %8956 = vmatpush.bf16.msra.mxu0 %v6178
        %8957 = vmatpush.bf16.msra.mxu0 %v6174
        %8958 = vmatpush.bf16.msra.mxu0 %v6170
        %8959 = vmatpush.bf16.msra.mxu0 %v6166
        %8960 = vmatpush.bf16.msra.mxu0 %v6162
        %8961 = vmatpush.bf16.msra.mxu0 %v6158
        %8962 = vmatpush.bf16.msra.mxu0 %v6154
        %8963 = vmatpush.bf16.msra.mxu0 %v6150
        %8964 = vmatmul.bf16.gmra.mxu0 %v1752
        %v8965 = vpop.f32.mrf.mxu0
        %v8966 = vadd.f32 %v8952, %v8965
        %v8967 = vpop.f32.mrf.mxu0
        %v8968 = vadd.f32 %v8954, %v8967
        %8969 = vdwg.mxu0
        %8970 = vmatpush.bf16.msra.mxu0 %v6210
        %8971 = vmatpush.bf16.msra.mxu0 %v6206
        %8972 = vmatpush.bf16.msra.mxu0 %v6202
        %8973 = vmatpush.bf16.msra.mxu0 %v6198
        %8974 = vmatpush.bf16.msra.mxu0 %v6194
        %8975 = vmatpush.bf16.msra.mxu0 %v6190
        %8976 = vmatpush.bf16.msra.mxu0 %v6186
        %8977 = vmatpush.bf16.msra.mxu0 %v6182
        %8978 = vmatmul.bf16.gmra.mxu0 %v1753
        %v8979 = vpop.f32.mrf.mxu0
        %v8980 = vadd.f32 %v8966, %v8979
        %v8981 = vpop.f32.mrf.mxu0
        %v8982 = vadd.f32 %v8968, %v8981
        %8983 = vdwg.mxu0
        %8984 = vmatpush.bf16.msra.mxu0 %v6242
        %8985 = vmatpush.bf16.msra.mxu0 %v6238
        %8986 = vmatpush.bf16.msra.mxu0 %v6234
        %8987 = vmatpush.bf16.msra.mxu0 %v6230
        %8988 = vmatpush.bf16.msra.mxu0 %v6226
        %8989 = vmatpush.bf16.msra.mxu0 %v6222
        %8990 = vmatpush.bf16.msra.mxu0 %v6218
        %8991 = vmatpush.bf16.msra.mxu0 %v6214
        %8992 = vmatmul.bf16.gmra.mxu0 %v1754
        %v8993 = vpop.f32.mrf.mxu0
        %v8994 = vadd.f32 %v8980, %v8993
        %v8995 = vpop.f32.mrf.mxu0
        %v8996 = vadd.f32 %v8982, %v8995
        %8997 = vdwg.mxu0
        %8998 = vmatpush.bf16.msra.mxu0 %v6274
        %8999 = vmatpush.bf16.msra.mxu0 %v6270
        %9000 = vmatpush.bf16.msra.mxu0 %v6266
        %9001 = vmatpush.bf16.msra.mxu0 %v6262
        %9002 = vmatpush.bf16.msra.mxu0 %v6258
        %9003 = vmatpush.bf16.msra.mxu0 %v6254
        %9004 = vmatpush.bf16.msra.mxu0 %v6250
        %9005 = vmatpush.bf16.msra.mxu0 %v6246
        %9006 = vmatmul.bf16.gmra.mxu0 %v1755
        %v9007 = vpop.f32.mrf.mxu0
        %v9008 = vadd.f32 %v8994, %v9007
        %v9009 = vpop.f32.mrf.mxu0
        %v9010 = vadd.f32 %v8996, %v9009
        %9011 = vdwg.mxu0
        %9012 = vmatpush.bf16.msra.mxu0 %v6306
        %9013 = vmatpush.bf16.msra.mxu0 %v6302
        %9014 = vmatpush.bf16.msra.mxu0 %v6298
        %9015 = vmatpush.bf16.msra.mxu0 %v6294
        %9016 = vmatpush.bf16.msra.mxu0 %v6290
        %9017 = vmatpush.bf16.msra.mxu0 %v6286
        %9018 = vmatpush.bf16.msra.mxu0 %v6282
        %9019 = vmatpush.bf16.msra.mxu0 %v6278
        %9020 = vmatmul.bf16.gmra.mxu0 %v1756
        %v9021 = vpop.f32.mrf.mxu0
        %v9022 = vadd.f32 %v9008, %v9021
        %v9023 = vpop.f32.mrf.mxu0
        %v9024 = vadd.f32 %v9010, %v9023
        %9025 = vdwg.mxu0
        %9026 = vmatpush.bf16.msra.mxu0 %v6338
        %9027 = vmatpush.bf16.msra.mxu0 %v6334
        %9028 = vmatpush.bf16.msra.mxu0 %v6330
        %9029 = vmatpush.bf16.msra.mxu0 %v6326
        %9030 = vmatpush.bf16.msra.mxu0 %v6322
        %9031 = vmatpush.bf16.msra.mxu0 %v6318
        %9032 = vmatpush.bf16.msra.mxu0 %v6314
        %9033 = vmatpush.bf16.msra.mxu0 %v6310
        %9034 = vmatmul.bf16.gmra.mxu0 %v1757
        %v9035 = vpop.f32.mrf.mxu0
        %v9036 = vadd.f32 %v9022, %v9035
        %v9037 = vpop.f32.mrf.mxu0
        %v9038 = vadd.f32 %v9024, %v9037
        %9039 = vdwg.mxu0
        %9040 = vmatpush.bf16.msra.mxu0 %v6370
        %9041 = vmatpush.bf16.msra.mxu0 %v6366
        %9042 = vmatpush.bf16.msra.mxu0 %v6362
        %9043 = vmatpush.bf16.msra.mxu0 %v6358
        %9044 = vmatpush.bf16.msra.mxu0 %v6354
        %9045 = vmatpush.bf16.msra.mxu0 %v6350
        %9046 = vmatpush.bf16.msra.mxu0 %v6346
        %9047 = vmatpush.bf16.msra.mxu0 %v6342
        %9048 = vmatmul.bf16.gmra.mxu0 %v1758
        %v9049 = vpop.f32.mrf.mxu0
        %v9050 = vadd.f32 %v9036, %v9049
        %v9051 = vpop.f32.mrf.mxu0
        %v9052 = vadd.f32 %v9038, %v9051
        %9053 = vdwg.mxu0
        %9054 = vmatpush.bf16.msra.mxu0 %v6402
        %9055 = vmatpush.bf16.msra.mxu0 %v6398
        %9056 = vmatpush.bf16.msra.mxu0 %v6394
        %9057 = vmatpush.bf16.msra.mxu0 %v6390
        %9058 = vmatpush.bf16.msra.mxu0 %v6386
        %9059 = vmatpush.bf16.msra.mxu0 %v6382
        %9060 = vmatpush.bf16.msra.mxu0 %v6378
        %9061 = vmatpush.bf16.msra.mxu0 %v6374
        %9062 = vmatmul.bf16.gmra.mxu0 %v1759
        %v9063 = vpop.f32.mrf.mxu0
        %v9064 = vadd.f32 %v9050, %v9063
        %v9065 = vpop.f32.mrf.mxu0
        %v9066 = vadd.f32 %v9052, %v9065
        %9067 = vdwg.mxu0
        %9068 = vmatpush.bf16.msra.mxu0 %v5283
        %9069 = vmatpush.bf16.msra.mxu0 %v5279
        %9070 = vmatpush.bf16.msra.mxu0 %v5275
        %9071 = vmatpush.bf16.msra.mxu0 %v5271
        %9072 = vmatpush.bf16.msra.mxu0 %v5267
        %9073 = vmatpush.bf16.msra.mxu0 %v5263
        %9074 = vmatpush.bf16.msra.mxu0 %v5259
        %9075 = vmatpush.bf16.msra.mxu0 %v5255
        %9076 = vmatmul.bf16.gmra.mxu0 %v1724
        %v9077 = vpop.f32.mrf.mxu0
        %v9078 = vadd.f32 0.0, %v9077
        %v9079 = vpop.f32.mrf.mxu0
        %v9080 = vadd.f32 0.0, %v9079
        %9081 = vdwg.mxu0
        %9082 = vmatpush.bf16.msra.mxu0 %v5315
        %9083 = vmatpush.bf16.msra.mxu0 %v5311
        %9084 = vmatpush.bf16.msra.mxu0 %v5307
        %9085 = vmatpush.bf16.msra.mxu0 %v5303
        %9086 = vmatpush.bf16.msra.mxu0 %v5299
        %9087 = vmatpush.bf16.msra.mxu0 %v5295
        %9088 = vmatpush.bf16.msra.mxu0 %v5291
        %9089 = vmatpush.bf16.msra.mxu0 %v5287
        %9090 = vmatmul.bf16.gmra.mxu0 %v1725
        %v9091 = vpop.f32.mrf.mxu0
        %v9092 = vadd.f32 %v9078, %v9091
        %v9093 = vpop.f32.mrf.mxu0
        %v9094 = vadd.f32 %v9080, %v9093
        %9095 = vdwg.mxu0
        %9096 = vmatpush.bf16.msra.mxu0 %v5347
        %9097 = vmatpush.bf16.msra.mxu0 %v5343
        %9098 = vmatpush.bf16.msra.mxu0 %v5339
        %9099 = vmatpush.bf16.msra.mxu0 %v5335
        %9100 = vmatpush.bf16.msra.mxu0 %v5331
        %9101 = vmatpush.bf16.msra.mxu0 %v5327
        %9102 = vmatpush.bf16.msra.mxu0 %v5323
        %9103 = vmatpush.bf16.msra.mxu0 %v5319
        %9104 = vmatmul.bf16.gmra.mxu0 %v1726
        %v9105 = vpop.f32.mrf.mxu0
        %v9106 = vadd.f32 %v9092, %v9105
        %v9107 = vpop.f32.mrf.mxu0
        %v9108 = vadd.f32 %v9094, %v9107
        %9109 = vdwg.mxu0
        %9110 = vmatpush.bf16.msra.mxu0 %v5379
        %9111 = vmatpush.bf16.msra.mxu0 %v5375
        %9112 = vmatpush.bf16.msra.mxu0 %v5371
        %9113 = vmatpush.bf16.msra.mxu0 %v5367
        %9114 = vmatpush.bf16.msra.mxu0 %v5363
        %9115 = vmatpush.bf16.msra.mxu0 %v5359
        %9116 = vmatpush.bf16.msra.mxu0 %v5355
        %9117 = vmatpush.bf16.msra.mxu0 %v5351
        %9118 = vmatmul.bf16.gmra.mxu0 %v1727
        %v9119 = vpop.f32.mrf.mxu0
        %v9120 = vadd.f32 %v9106, %v9119
        %v9121 = vpop.f32.mrf.mxu0
        %v9122 = vadd.f32 %v9108, %v9121
        %9123 = vdwg.mxu0
        %9124 = vmatpush.bf16.msra.mxu0 %v5411
        %9125 = vmatpush.bf16.msra.mxu0 %v5407
        %9126 = vmatpush.bf16.msra.mxu0 %v5403
        %9127 = vmatpush.bf16.msra.mxu0 %v5399
        %9128 = vmatpush.bf16.msra.mxu0 %v5395
        %9129 = vmatpush.bf16.msra.mxu0 %v5391
        %9130 = vmatpush.bf16.msra.mxu0 %v5387
        %9131 = vmatpush.bf16.msra.mxu0 %v5383
        %9132 = vmatmul.bf16.gmra.mxu0 %v1728
        %v9133 = vpop.f32.mrf.mxu0
        %v9134 = vadd.f32 %v9120, %v9133
        %v9135 = vpop.f32.mrf.mxu0
        %v9136 = vadd.f32 %v9122, %v9135
        %9137 = vdwg.mxu0
        %9138 = vmatpush.bf16.msra.mxu0 %v5443
        %9139 = vmatpush.bf16.msra.mxu0 %v5439
        %9140 = vmatpush.bf16.msra.mxu0 %v5435
        %9141 = vmatpush.bf16.msra.mxu0 %v5431
        %9142 = vmatpush.bf16.msra.mxu0 %v5427
        %9143 = vmatpush.bf16.msra.mxu0 %v5423
        %9144 = vmatpush.bf16.msra.mxu0 %v5419
        %9145 = vmatpush.bf16.msra.mxu0 %v5415
        %9146 = vmatmul.bf16.gmra.mxu0 %v1729
        %v9147 = vpop.f32.mrf.mxu0
        %v9148 = vadd.f32 %v9134, %v9147
        %v9149 = vpop.f32.mrf.mxu0
        %v9150 = vadd.f32 %v9136, %v9149
        %9151 = vdwg.mxu0
        %9152 = vmatpush.bf16.msra.mxu0 %v5475
        %9153 = vmatpush.bf16.msra.mxu0 %v5471
        %9154 = vmatpush.bf16.msra.mxu0 %v5467
        %9155 = vmatpush.bf16.msra.mxu0 %v5463
        %9156 = vmatpush.bf16.msra.mxu0 %v5459
        %9157 = vmatpush.bf16.msra.mxu0 %v5455
        %9158 = vmatpush.bf16.msra.mxu0 %v5451
        %9159 = vmatpush.bf16.msra.mxu0 %v5447
        %9160 = vmatmul.bf16.gmra.mxu0 %v1730
        %v9161 = vpop.f32.mrf.mxu0
        %v9162 = vadd.f32 %v9148, %v9161
        %v9163 = vpop.f32.mrf.mxu0
        %v9164 = vadd.f32 %v9150, %v9163
        %9165 = vdwg.mxu0
        %9166 = vmatpush.bf16.msra.mxu0 %v5507
        %9167 = vmatpush.bf16.msra.mxu0 %v5503
        %9168 = vmatpush.bf16.msra.mxu0 %v5499
        %9169 = vmatpush.bf16.msra.mxu0 %v5495
        %9170 = vmatpush.bf16.msra.mxu0 %v5491
        %9171 = vmatpush.bf16.msra.mxu0 %v5487
        %9172 = vmatpush.bf16.msra.mxu0 %v5483
        %9173 = vmatpush.bf16.msra.mxu0 %v5479
        %9174 = vmatmul.bf16.gmra.mxu0 %v1731
        %v9175 = vpop.f32.mrf.mxu0
        %v9176 = vadd.f32 %v9162, %v9175
        %v9177 = vpop.f32.mrf.mxu0
        %v9178 = vadd.f32 %v9164, %v9177
        %9179 = vdwg.mxu0
        %9180 = vmatpush.bf16.msra.mxu0 %v5539
        %9181 = vmatpush.bf16.msra.mxu0 %v5535
        %9182 = vmatpush.bf16.msra.mxu0 %v5531
        %9183 = vmatpush.bf16.msra.mxu0 %v5527
        %9184 = vmatpush.bf16.msra.mxu0 %v5523
        %9185 = vmatpush.bf16.msra.mxu0 %v5519
        %9186 = vmatpush.bf16.msra.mxu0 %v5515
        %9187 = vmatpush.bf16.msra.mxu0 %v5511
        %9188 = vmatmul.bf16.gmra.mxu0 %v1732
        %v9189 = vpop.f32.mrf.mxu0
        %v9190 = vadd.f32 %v9176, %v9189
        %v9191 = vpop.f32.mrf.mxu0
        %v9192 = vadd.f32 %v9178, %v9191
        %9193 = vdwg.mxu0
        %9194 = vmatpush.bf16.msra.mxu0 %v5571
        %9195 = vmatpush.bf16.msra.mxu0 %v5567
        %9196 = vmatpush.bf16.msra.mxu0 %v5563
        %9197 = vmatpush.bf16.msra.mxu0 %v5559
        %9198 = vmatpush.bf16.msra.mxu0 %v5555
        %9199 = vmatpush.bf16.msra.mxu0 %v5551
        %9200 = vmatpush.bf16.msra.mxu0 %v5547
        %9201 = vmatpush.bf16.msra.mxu0 %v5543
        %9202 = vmatmul.bf16.gmra.mxu0 %v1733
        %v9203 = vpop.f32.mrf.mxu0
        %v9204 = vadd.f32 %v9190, %v9203
        %v9205 = vpop.f32.mrf.mxu0
        %v9206 = vadd.f32 %v9192, %v9205
        %9207 = vdwg.mxu0
        %9208 = vmatpush.bf16.msra.mxu0 %v5603
        %9209 = vmatpush.bf16.msra.mxu0 %v5599
        %9210 = vmatpush.bf16.msra.mxu0 %v5595
        %9211 = vmatpush.bf16.msra.mxu0 %v5591
        %9212 = vmatpush.bf16.msra.mxu0 %v5587
        %9213 = vmatpush.bf16.msra.mxu0 %v5583
        %9214 = vmatpush.bf16.msra.mxu0 %v5579
        %9215 = vmatpush.bf16.msra.mxu0 %v5575
        %9216 = vmatmul.bf16.gmra.mxu0 %v1734
        %v9217 = vpop.f32.mrf.mxu0
        %v9218 = vadd.f32 %v9204, %v9217
        %v9219 = vpop.f32.mrf.mxu0
        %v9220 = vadd.f32 %v9206, %v9219
        %9221 = vdwg.mxu0
        %9222 = vmatpush.bf16.msra.mxu0 %v5635
        %9223 = vmatpush.bf16.msra.mxu0 %v5631
        %9224 = vmatpush.bf16.msra.mxu0 %v5627
        %9225 = vmatpush.bf16.msra.mxu0 %v5623
        %9226 = vmatpush.bf16.msra.mxu0 %v5619
        %9227 = vmatpush.bf16.msra.mxu0 %v5615
        %9228 = vmatpush.bf16.msra.mxu0 %v5611
        %9229 = vmatpush.bf16.msra.mxu0 %v5607
        %9230 = vmatmul.bf16.gmra.mxu0 %v1735
        %v9231 = vpop.f32.mrf.mxu0
        %v9232 = vadd.f32 %v9218, %v9231
        %v9233 = vpop.f32.mrf.mxu0
        %v9234 = vadd.f32 %v9220, %v9233
        %9235 = vdwg.mxu0
        %9236 = vmatpush.bf16.msra.mxu0 %v5667
        %9237 = vmatpush.bf16.msra.mxu0 %v5663
        %9238 = vmatpush.bf16.msra.mxu0 %v5659
        %9239 = vmatpush.bf16.msra.mxu0 %v5655
        %9240 = vmatpush.bf16.msra.mxu0 %v5651
        %9241 = vmatpush.bf16.msra.mxu0 %v5647
        %9242 = vmatpush.bf16.msra.mxu0 %v5643
        %9243 = vmatpush.bf16.msra.mxu0 %v5639
        %9244 = vmatmul.bf16.gmra.mxu0 %v1736
        %v9245 = vpop.f32.mrf.mxu0
        %v9246 = vadd.f32 %v9232, %v9245
        %v9247 = vpop.f32.mrf.mxu0
        %v9248 = vadd.f32 %v9234, %v9247
        %9249 = vdwg.mxu0
        %9250 = vmatpush.bf16.msra.mxu0 %v5699
        %9251 = vmatpush.bf16.msra.mxu0 %v5695
        %9252 = vmatpush.bf16.msra.mxu0 %v5691
        %9253 = vmatpush.bf16.msra.mxu0 %v5687
        %9254 = vmatpush.bf16.msra.mxu0 %v5683
        %9255 = vmatpush.bf16.msra.mxu0 %v5679
        %9256 = vmatpush.bf16.msra.mxu0 %v5675
        %9257 = vmatpush.bf16.msra.mxu0 %v5671
        %9258 = vmatmul.bf16.gmra.mxu0 %v1737
        %v9259 = vpop.f32.mrf.mxu0
        %v9260 = vadd.f32 %v9246, %v9259
        %v9261 = vpop.f32.mrf.mxu0
        %v9262 = vadd.f32 %v9248, %v9261
        %9263 = vdwg.mxu0
        %9264 = vmatpush.bf16.msra.mxu0 %v5731
        %9265 = vmatpush.bf16.msra.mxu0 %v5727
        %9266 = vmatpush.bf16.msra.mxu0 %v5723
        %9267 = vmatpush.bf16.msra.mxu0 %v5719
        %9268 = vmatpush.bf16.msra.mxu0 %v5715
        %9269 = vmatpush.bf16.msra.mxu0 %v5711
        %9270 = vmatpush.bf16.msra.mxu0 %v5707
        %9271 = vmatpush.bf16.msra.mxu0 %v5703
        %9272 = vmatmul.bf16.gmra.mxu0 %v1738
        %v9273 = vpop.f32.mrf.mxu0
        %v9274 = vadd.f32 %v9260, %v9273
        %v9275 = vpop.f32.mrf.mxu0
        %v9276 = vadd.f32 %v9262, %v9275
        %9277 = vdwg.mxu0
        %9278 = vmatpush.bf16.msra.mxu0 %v5763
        %9279 = vmatpush.bf16.msra.mxu0 %v5759
        %9280 = vmatpush.bf16.msra.mxu0 %v5755
        %9281 = vmatpush.bf16.msra.mxu0 %v5751
        %9282 = vmatpush.bf16.msra.mxu0 %v5747
        %9283 = vmatpush.bf16.msra.mxu0 %v5743
        %9284 = vmatpush.bf16.msra.mxu0 %v5739
        %9285 = vmatpush.bf16.msra.mxu0 %v5735
        %9286 = vmatmul.bf16.gmra.mxu0 %v1739
        %v9287 = vpop.f32.mrf.mxu0
        %v9288 = vadd.f32 %v9274, %v9287
        %v9289 = vpop.f32.mrf.mxu0
        %v9290 = vadd.f32 %v9276, %v9289
        %9291 = vdwg.mxu0
        %9292 = vmatpush.bf16.msra.mxu0 %v5795
        %9293 = vmatpush.bf16.msra.mxu0 %v5791
        %9294 = vmatpush.bf16.msra.mxu0 %v5787
        %9295 = vmatpush.bf16.msra.mxu0 %v5783
        %9296 = vmatpush.bf16.msra.mxu0 %v5779
        %9297 = vmatpush.bf16.msra.mxu0 %v5775
        %9298 = vmatpush.bf16.msra.mxu0 %v5771
        %9299 = vmatpush.bf16.msra.mxu0 %v5767
        %9300 = vmatmul.bf16.gmra.mxu0 %v1740
        %v9301 = vpop.f32.mrf.mxu0
        %v9302 = vadd.f32 %v9288, %v9301
        %v9303 = vpop.f32.mrf.mxu0
        %v9304 = vadd.f32 %v9290, %v9303
        %9305 = vdwg.mxu0
        %9306 = vmatpush.bf16.msra.mxu0 %v5827
        %9307 = vmatpush.bf16.msra.mxu0 %v5823
        %9308 = vmatpush.bf16.msra.mxu0 %v5819
        %9309 = vmatpush.bf16.msra.mxu0 %v5815
        %9310 = vmatpush.bf16.msra.mxu0 %v5811
        %9311 = vmatpush.bf16.msra.mxu0 %v5807
        %9312 = vmatpush.bf16.msra.mxu0 %v5803
        %9313 = vmatpush.bf16.msra.mxu0 %v5799
        %9314 = vmatmul.bf16.gmra.mxu0 %v1741
        %v9315 = vpop.f32.mrf.mxu0
        %v9316 = vadd.f32 %v9302, %v9315
        %v9317 = vpop.f32.mrf.mxu0
        %v9318 = vadd.f32 %v9304, %v9317
        %9319 = vdwg.mxu0
        %9320 = vmatpush.bf16.msra.mxu0 %v5859
        %9321 = vmatpush.bf16.msra.mxu0 %v5855
        %9322 = vmatpush.bf16.msra.mxu0 %v5851
        %9323 = vmatpush.bf16.msra.mxu0 %v5847
        %9324 = vmatpush.bf16.msra.mxu0 %v5843
        %9325 = vmatpush.bf16.msra.mxu0 %v5839
        %9326 = vmatpush.bf16.msra.mxu0 %v5835
        %9327 = vmatpush.bf16.msra.mxu0 %v5831
        %9328 = vmatmul.bf16.gmra.mxu0 %v1742
        %v9329 = vpop.f32.mrf.mxu0
        %v9330 = vadd.f32 %v9316, %v9329
        %v9331 = vpop.f32.mrf.mxu0
        %v9332 = vadd.f32 %v9318, %v9331
        %9333 = vdwg.mxu0
        %9334 = vmatpush.bf16.msra.mxu0 %v5891
        %9335 = vmatpush.bf16.msra.mxu0 %v5887
        %9336 = vmatpush.bf16.msra.mxu0 %v5883
        %9337 = vmatpush.bf16.msra.mxu0 %v5879
        %9338 = vmatpush.bf16.msra.mxu0 %v5875
        %9339 = vmatpush.bf16.msra.mxu0 %v5871
        %9340 = vmatpush.bf16.msra.mxu0 %v5867
        %9341 = vmatpush.bf16.msra.mxu0 %v5863
        %9342 = vmatmul.bf16.gmra.mxu0 %v1743
        %v9343 = vpop.f32.mrf.mxu0
        %v9344 = vadd.f32 %v9330, %v9343
        %v9345 = vpop.f32.mrf.mxu0
        %v9346 = vadd.f32 %v9332, %v9345
        %9347 = vdwg.mxu0
        %9348 = vmatpush.bf16.msra.mxu0 %v5923
        %9349 = vmatpush.bf16.msra.mxu0 %v5919
        %9350 = vmatpush.bf16.msra.mxu0 %v5915
        %9351 = vmatpush.bf16.msra.mxu0 %v5911
        %9352 = vmatpush.bf16.msra.mxu0 %v5907
        %9353 = vmatpush.bf16.msra.mxu0 %v5903
        %9354 = vmatpush.bf16.msra.mxu0 %v5899
        %9355 = vmatpush.bf16.msra.mxu0 %v5895
        %9356 = vmatmul.bf16.gmra.mxu0 %v1744
        %v9357 = vpop.f32.mrf.mxu0
        %v9358 = vadd.f32 %v9344, %v9357
        %v9359 = vpop.f32.mrf.mxu0
        %v9360 = vadd.f32 %v9346, %v9359
        %9361 = vdwg.mxu0
        %9362 = vmatpush.bf16.msra.mxu0 %v5955
        %9363 = vmatpush.bf16.msra.mxu0 %v5951
        %9364 = vmatpush.bf16.msra.mxu0 %v5947
        %9365 = vmatpush.bf16.msra.mxu0 %v5943
        %9366 = vmatpush.bf16.msra.mxu0 %v5939
        %9367 = vmatpush.bf16.msra.mxu0 %v5935
        %9368 = vmatpush.bf16.msra.mxu0 %v5931
        %9369 = vmatpush.bf16.msra.mxu0 %v5927
        %9370 = vmatmul.bf16.gmra.mxu0 %v1745
        %v9371 = vpop.f32.mrf.mxu0
        %v9372 = vadd.f32 %v9358, %v9371
        %v9373 = vpop.f32.mrf.mxu0
        %v9374 = vadd.f32 %v9360, %v9373
        %9375 = vdwg.mxu0
        %9376 = vmatpush.bf16.msra.mxu0 %v5987
        %9377 = vmatpush.bf16.msra.mxu0 %v5983
        %9378 = vmatpush.bf16.msra.mxu0 %v5979
        %9379 = vmatpush.bf16.msra.mxu0 %v5975
        %9380 = vmatpush.bf16.msra.mxu0 %v5971
        %9381 = vmatpush.bf16.msra.mxu0 %v5967
        %9382 = vmatpush.bf16.msra.mxu0 %v5963
        %9383 = vmatpush.bf16.msra.mxu0 %v5959
        %9384 = vmatmul.bf16.gmra.mxu0 %v1746
        %v9385 = vpop.f32.mrf.mxu0
        %v9386 = vadd.f32 %v9372, %v9385
        %v9387 = vpop.f32.mrf.mxu0
        %v9388 = vadd.f32 %v9374, %v9387
        %9389 = vdwg.mxu0
        %9390 = vmatpush.bf16.msra.mxu0 %v6019
        %9391 = vmatpush.bf16.msra.mxu0 %v6015
        %9392 = vmatpush.bf16.msra.mxu0 %v6011
        %9393 = vmatpush.bf16.msra.mxu0 %v6007
        %9394 = vmatpush.bf16.msra.mxu0 %v6003
        %9395 = vmatpush.bf16.msra.mxu0 %v5999
        %9396 = vmatpush.bf16.msra.mxu0 %v5995
        %9397 = vmatpush.bf16.msra.mxu0 %v5991
        %9398 = vmatmul.bf16.gmra.mxu0 %v1747
        %v9399 = vpop.f32.mrf.mxu0
        %v9400 = vadd.f32 %v9386, %v9399
        %v9401 = vpop.f32.mrf.mxu0
        %v9402 = vadd.f32 %v9388, %v9401
        %9403 = vdwg.mxu0
        %9404 = vmatpush.bf16.msra.mxu0 %v6051
        %9405 = vmatpush.bf16.msra.mxu0 %v6047
        %9406 = vmatpush.bf16.msra.mxu0 %v6043
        %9407 = vmatpush.bf16.msra.mxu0 %v6039
        %9408 = vmatpush.bf16.msra.mxu0 %v6035
        %9409 = vmatpush.bf16.msra.mxu0 %v6031
        %9410 = vmatpush.bf16.msra.mxu0 %v6027
        %9411 = vmatpush.bf16.msra.mxu0 %v6023
        %9412 = vmatmul.bf16.gmra.mxu0 %v1748
        %v9413 = vpop.f32.mrf.mxu0
        %v9414 = vadd.f32 %v9400, %v9413
        %v9415 = vpop.f32.mrf.mxu0
        %v9416 = vadd.f32 %v9402, %v9415
        %9417 = vdwg.mxu0
        %9418 = vmatpush.bf16.msra.mxu0 %v6083
        %9419 = vmatpush.bf16.msra.mxu0 %v6079
        %9420 = vmatpush.bf16.msra.mxu0 %v6075
        %9421 = vmatpush.bf16.msra.mxu0 %v6071
        %9422 = vmatpush.bf16.msra.mxu0 %v6067
        %9423 = vmatpush.bf16.msra.mxu0 %v6063
        %9424 = vmatpush.bf16.msra.mxu0 %v6059
        %9425 = vmatpush.bf16.msra.mxu0 %v6055
        %9426 = vmatmul.bf16.gmra.mxu0 %v1749
        %v9427 = vpop.f32.mrf.mxu0
        %v9428 = vadd.f32 %v9414, %v9427
        %v9429 = vpop.f32.mrf.mxu0
        %v9430 = vadd.f32 %v9416, %v9429
        %9431 = vdwg.mxu0
        %9432 = vmatpush.bf16.msra.mxu0 %v6115
        %9433 = vmatpush.bf16.msra.mxu0 %v6111
        %9434 = vmatpush.bf16.msra.mxu0 %v6107
        %9435 = vmatpush.bf16.msra.mxu0 %v6103
        %9436 = vmatpush.bf16.msra.mxu0 %v6099
        %9437 = vmatpush.bf16.msra.mxu0 %v6095
        %9438 = vmatpush.bf16.msra.mxu0 %v6091
        %9439 = vmatpush.bf16.msra.mxu0 %v6087
        %9440 = vmatmul.bf16.gmra.mxu0 %v1750
        %v9441 = vpop.f32.mrf.mxu0
        %v9442 = vadd.f32 %v9428, %v9441
        %v9443 = vpop.f32.mrf.mxu0
        %v9444 = vadd.f32 %v9430, %v9443
        %9445 = vdwg.mxu0
        %9446 = vmatpush.bf16.msra.mxu0 %v6147
        %9447 = vmatpush.bf16.msra.mxu0 %v6143
        %9448 = vmatpush.bf16.msra.mxu0 %v6139
        %9449 = vmatpush.bf16.msra.mxu0 %v6135
        %9450 = vmatpush.bf16.msra.mxu0 %v6131
        %9451 = vmatpush.bf16.msra.mxu0 %v6127
        %9452 = vmatpush.bf16.msra.mxu0 %v6123
        %9453 = vmatpush.bf16.msra.mxu0 %v6119
        %9454 = vmatmul.bf16.gmra.mxu0 %v1751
        %v9455 = vpop.f32.mrf.mxu0
        %v9456 = vadd.f32 %v9442, %v9455
        %v9457 = vpop.f32.mrf.mxu0
        %v9458 = vadd.f32 %v9444, %v9457
        %9459 = vdwg.mxu0
        %9460 = vmatpush.bf16.msra.mxu0 %v6179
        %9461 = vmatpush.bf16.msra.mxu0 %v6175
        %9462 = vmatpush.bf16.msra.mxu0 %v6171
        %9463 = vmatpush.bf16.msra.mxu0 %v6167
        %9464 = vmatpush.bf16.msra.mxu0 %v6163
        %9465 = vmatpush.bf16.msra.mxu0 %v6159
        %9466 = vmatpush.bf16.msra.mxu0 %v6155
        %9467 = vmatpush.bf16.msra.mxu0 %v6151
        %9468 = vmatmul.bf16.gmra.mxu0 %v1752
        %v9469 = vpop.f32.mrf.mxu0
        %v9470 = vadd.f32 %v9456, %v9469
        %v9471 = vpop.f32.mrf.mxu0
        %v9472 = vadd.f32 %v9458, %v9471
        %9473 = vdwg.mxu0
        %9474 = vmatpush.bf16.msra.mxu0 %v6211
        %9475 = vmatpush.bf16.msra.mxu0 %v6207
        %9476 = vmatpush.bf16.msra.mxu0 %v6203
        %9477 = vmatpush.bf16.msra.mxu0 %v6199
        %9478 = vmatpush.bf16.msra.mxu0 %v6195
        %9479 = vmatpush.bf16.msra.mxu0 %v6191
        %9480 = vmatpush.bf16.msra.mxu0 %v6187
        %9481 = vmatpush.bf16.msra.mxu0 %v6183
        %9482 = vmatmul.bf16.gmra.mxu0 %v1753
        %v9483 = vpop.f32.mrf.mxu0
        %v9484 = vadd.f32 %v9470, %v9483
        %v9485 = vpop.f32.mrf.mxu0
        %v9486 = vadd.f32 %v9472, %v9485
        %9487 = vdwg.mxu0
        %9488 = vmatpush.bf16.msra.mxu0 %v6243
        %9489 = vmatpush.bf16.msra.mxu0 %v6239
        %9490 = vmatpush.bf16.msra.mxu0 %v6235
        %9491 = vmatpush.bf16.msra.mxu0 %v6231
        %9492 = vmatpush.bf16.msra.mxu0 %v6227
        %9493 = vmatpush.bf16.msra.mxu0 %v6223
        %9494 = vmatpush.bf16.msra.mxu0 %v6219
        %9495 = vmatpush.bf16.msra.mxu0 %v6215
        %9496 = vmatmul.bf16.gmra.mxu0 %v1754
        %v9497 = vpop.f32.mrf.mxu0
        %v9498 = vadd.f32 %v9484, %v9497
        %v9499 = vpop.f32.mrf.mxu0
        %v9500 = vadd.f32 %v9486, %v9499
        %9501 = vdwg.mxu0
        %9502 = vmatpush.bf16.msra.mxu0 %v6275
        %9503 = vmatpush.bf16.msra.mxu0 %v6271
        %9504 = vmatpush.bf16.msra.mxu0 %v6267
        %9505 = vmatpush.bf16.msra.mxu0 %v6263
        %9506 = vmatpush.bf16.msra.mxu0 %v6259
        %9507 = vmatpush.bf16.msra.mxu0 %v6255
        %9508 = vmatpush.bf16.msra.mxu0 %v6251
        %9509 = vmatpush.bf16.msra.mxu0 %v6247
        %9510 = vmatmul.bf16.gmra.mxu0 %v1755
        %v9511 = vpop.f32.mrf.mxu0
        %v9512 = vadd.f32 %v9498, %v9511
        %v9513 = vpop.f32.mrf.mxu0
        %v9514 = vadd.f32 %v9500, %v9513
        %9515 = vdwg.mxu0
        %9516 = vmatpush.bf16.msra.mxu0 %v6307
        %9517 = vmatpush.bf16.msra.mxu0 %v6303
        %9518 = vmatpush.bf16.msra.mxu0 %v6299
        %9519 = vmatpush.bf16.msra.mxu0 %v6295
        %9520 = vmatpush.bf16.msra.mxu0 %v6291
        %9521 = vmatpush.bf16.msra.mxu0 %v6287
        %9522 = vmatpush.bf16.msra.mxu0 %v6283
        %9523 = vmatpush.bf16.msra.mxu0 %v6279
        %9524 = vmatmul.bf16.gmra.mxu0 %v1756
        %v9525 = vpop.f32.mrf.mxu0
        %v9526 = vadd.f32 %v9512, %v9525
        %v9527 = vpop.f32.mrf.mxu0
        %v9528 = vadd.f32 %v9514, %v9527
        %9529 = vdwg.mxu0
        %9530 = vmatpush.bf16.msra.mxu0 %v6339
        %9531 = vmatpush.bf16.msra.mxu0 %v6335
        %9532 = vmatpush.bf16.msra.mxu0 %v6331
        %9533 = vmatpush.bf16.msra.mxu0 %v6327
        %9534 = vmatpush.bf16.msra.mxu0 %v6323
        %9535 = vmatpush.bf16.msra.mxu0 %v6319
        %9536 = vmatpush.bf16.msra.mxu0 %v6315
        %9537 = vmatpush.bf16.msra.mxu0 %v6311
        %9538 = vmatmul.bf16.gmra.mxu0 %v1757
        %v9539 = vpop.f32.mrf.mxu0
        %v9540 = vadd.f32 %v9526, %v9539
        %v9541 = vpop.f32.mrf.mxu0
        %v9542 = vadd.f32 %v9528, %v9541
        %9543 = vdwg.mxu0
        %9544 = vmatpush.bf16.msra.mxu0 %v6371
        %9545 = vmatpush.bf16.msra.mxu0 %v6367
        %9546 = vmatpush.bf16.msra.mxu0 %v6363
        %9547 = vmatpush.bf16.msra.mxu0 %v6359
        %9548 = vmatpush.bf16.msra.mxu0 %v6355
        %9549 = vmatpush.bf16.msra.mxu0 %v6351
        %9550 = vmatpush.bf16.msra.mxu0 %v6347
        %9551 = vmatpush.bf16.msra.mxu0 %v6343
        %9552 = vmatmul.bf16.gmra.mxu0 %v1758
        %v9553 = vpop.f32.mrf.mxu0
        %v9554 = vadd.f32 %v9540, %v9553
        %v9555 = vpop.f32.mrf.mxu0
        %v9556 = vadd.f32 %v9542, %v9555
        %9557 = vdwg.mxu0
        %9558 = vmatpush.bf16.msra.mxu0 %v6403
        %9559 = vmatpush.bf16.msra.mxu0 %v6399
        %9560 = vmatpush.bf16.msra.mxu0 %v6395
        %9561 = vmatpush.bf16.msra.mxu0 %v6391
        %9562 = vmatpush.bf16.msra.mxu0 %v6387
        %9563 = vmatpush.bf16.msra.mxu0 %v6383
        %9564 = vmatpush.bf16.msra.mxu0 %v6379
        %9565 = vmatpush.bf16.msra.mxu0 %v6375
        %9566 = vmatmul.bf16.gmra.mxu0 %v1759
        %v9567 = vpop.f32.mrf.mxu0
        %v9568 = vadd.f32 %v9554, %v9567
        %v9569 = vpop.f32.mrf.mxu0
        %v9570 = vadd.f32 %v9556, %v9569
        %9571 = vdwg.mxu0
        %v9572 = vadd.f32 %v420, %v8056
        %v9573 = vadd.f32 %v421, %v8560
        %v9574 = vadd.f32 %v422, %v9064
        %v9575 = vadd.f32 %v423, %v9568
        %v9576 = vadd.f32 %v424, %v8058
        %v9577 = vadd.f32 %v425, %v8562
        %v9578 = vadd.f32 %v426, %v9066
        %v9579 = vadd.f32 %v427, %v9570
        %9580 = vst [vmem:[%s405] sm:$0xff] %v9572
        %9581 = vst [vmem:[%s405 + $0x8] sm:$0xff] %v9573
        %9582 = vst [vmem:[%s405 + $0x10] sm:$0xff] %v9574
        %9583 = vst [vmem:[%s405 + $0x18] sm:$0xff] %v9575
        %9584 = vst [vmem:[%s405 + $0x20] sm:$0xff] %v9576
        %9585 = vst [vmem:[%s405 + $0x28] sm:$0xff] %v9577
        %9586 = vst [vmem:[%s405 + $0x30] sm:$0xff] %v9578
        %9587 = vst [vmem:[%s405 + $0x38] sm:$0xff] %v9579
        %p9588 = scmp.eq.s32.totalorder %s26, 2
        // Predicated region
        $region64: #{aggregation_feature_forward.4} parent=50 // pred_check
          %p9589 = pneg %p9588
        $region65: #{aggregation_feature_forward.4} parent=50 // pred_check_branch
          %9591 = sbr.rel (%p9589) target = $region67
        $region66: #{aggregation_feature_forward.4} parent=50 // pred_region
          %v9592 = vld [vmem:[%s405] sm:$0xff]
          %v9593 = vld [vmem:[%s405 + $0x8] sm:$0xff]
          %v9594 = vld [vmem:[%s405 + $0x10] sm:$0xff]
          %v9595 = vld [vmem:[%s405 + $0x18] sm:$0xff]
          %v9596 = vld [vmem:[%s405 + $0x20] sm:$0xff]
          %v9597 = vld [vmem:[%s405 + $0x28] sm:$0xff]
          %v9598 = vld [vmem:[%s405 + $0x30] sm:$0xff]
          %v9599 = vld [vmem:[%s405 + $0x38] sm:$0xff]
          %v9600 = vld [vmem:[%s390] sm:$0xf]
          %v9602 = vperm.slane %v9600, 0
          %v9603 = vperm.slane %v9600, 1
          %v9604 = vperm.slane %v9600, 2
          %v9605 = vperm.slane %v9600, 3
          %v9610 = vadd.f32 %v9592, %v9602
          %v9611 = vadd.f32 %v9593, %v9603
          %v9612 = vadd.f32 %v9594, %v9604
          %v9613 = vadd.f32 %v9595, %v9605
          %v9614 = vadd.f32 %v9596, %v9602
          %v9615 = vadd.f32 %v9597, %v9603
          %v9616 = vadd.f32 %v9598, %v9604
          %v9617 = vadd.f32 %v9599, %v9605
          %v9618 = vmax.f32 %v9610, 0.0
          %v9619 = vmax.f32 %v9611, 0.0
          %v9620 = vmax.f32 %v9612, 0.0
          %v9621 = vmax.f32 %v9613, 0.0
          %v9622 = vmax.f32 %v9614, 0.0
          %v9623 = vmax.f32 %v9615, 0.0
          %v9624 = vmax.f32 %v9616, 0.0
          %v9625 = vmax.f32 %v9617, 0.0
          %9626 = vst [vmem:[%s405] sm:$0xff] %v9618
          %9627 = vst [vmem:[%s405 + $0x8] sm:$0xff] %v9619
          %9628 = vst [vmem:[%s405 + $0x10] sm:$0xff] %v9620
          %9629 = vst [vmem:[%s405 + $0x18] sm:$0xff] %v9621
          %9630 = vst [vmem:[%s405 + $0x20] sm:$0xff] %v9622
          %9631 = vst [vmem:[%s405 + $0x28] sm:$0xff] %v9623
          %9632 = vst [vmem:[%s405 + $0x30] sm:$0xff] %v9624
          %9633 = vst [vmem:[%s405 + $0x38] sm:$0xff] %v9625
        $region67: #{aggregation_feature_forward.4} parent=50 // pred_fallthru
          _
        %s9634 = smul.u32 2, %s24
        %s9635 = smul.u32 4, %s25
        %p9636 = scmp.lt.s32.totalorder %s23, 3
        %s9637 = scalar_select %p9636, %s23, 3
        %p9638 = scmp.lt.s32.totalorder %s9634, 1
        %s9639 = scalar_select %p9638, %s9634, 1
        %p9640 = scmp.lt.s32.totalorder %s9635, 3
        %s9641 = scalar_select %p9640, %s9635, 3
        %s9642 = smul.addr %s9639, 4
        %s9643 = sadd.s32 %s9641, %s9642
        %s9644 = smul.addr %s9637, 8
        %s9645 = sadd.s32 %s9643, %s9644
        %s9646 = smul.addr %s9645, 8
        %s9647 = scalar_lea.vmem %s3, %s9646
        // Predicated region
        $region68: #{aggregation_feature_forward.4} parent=50 // pred_check
          %p9648 = pneg %p153
        $region69: #{aggregation_feature_forward.4} parent=50 // pred_check_branch
          %9650 = sbr.rel (%p9648) target = $region71
        $region70: #{aggregation_feature_forward.4} parent=50 // pred_region
          %s9651 = smul.u32 2, %s24
          %s9652 = smul.u32 4, %s25
        $region71: #{aggregation_feature_forward.4} parent=50 // pred_fallthru
          _
      $region51: #{aggregation_feature_forward.4} parent=5 // pred_fallthru
        _
      %p9653 = scmp.le.s32.totalorder 2, %s12
      // Predicated region
      $region72: #{aggregation_feature_forward.4} parent=5 // pred_check
        %p9654 = pneg %p9653
      $region73: #{aggregation_feature_forward.4} parent=5 // pred_check_branch
        %9656 = sbr.rel (%p9654) target = $region75
      $region74: #{aggregation_feature_forward.4} parent=5 // pred_region
        %s9657 = ssub.s32 %s12, 2
        // Predicated region
        $region76: #{aggregation_feature_forward.4} parent=74 // pred_check
          %p9658 = pneg %p159
        $region77: #{aggregation_feature_forward.4} parent=74 // pred_check_branch
          %9660 = sbr.rel (%p9658) target = $region79
        $region78: #{aggregation_feature_forward.4} parent=74 // pred_region
          %s9661 = smul.u32 2, %s28
          %s9662 = smul.u32 4, %s29
          %p9663 = scmp.lt.s32.totalorder %s27, 3
          %s9664 = scalar_select %p9663, %s27, 3
          %p9665 = scmp.lt.s32.totalorder %s9661, 1
          %s9666 = scalar_select %p9665, %s9661, 1
          %p9667 = scmp.lt.s32.totalorder %s9662, 3
          %s9668 = scalar_select %p9667, %s9662, 3
          %s9669 = smul.addr %s9666, 4
          %s9670 = sadd.s32 %s9668, %s9669
          %s9671 = smul.addr %s9664, 8
          %s9672 = sadd.s32 %s9670, %s9671
          %s9673 = smul.addr %s9672, 8
          %s9674 = scalar_lea.vmem %s3, %s9673
        $region79: #{aggregation_feature_forward.4} parent=74 // pred_fallthru
          _
      $region75: #{aggregation_feature_forward.4} parent=5 // pred_fallthru
        _
    $region6: #{aggregation_feature_forward.4} parent=1 // loop_footer
      %s16 = sadd.s32 1, %s12
    $region7: #{aggregation_feature_forward.4} parent=1 // loop_footer_branch
      %11 = sbr.rel target = $region3
    $region8: #{aggregation_feature_forward.4} parent=1 // loop_exit
      _
    %9675 = vsyncpa [#allocation4], 1
    %s9676 = scalar_lea.sflag [#allocation4], 1
    %9677 = vsyncpa %s9676, 1

</llo_original>
